<compile_context>
chip_gen: v7x
topology: tpu7x:2x2x1
jax: 0.10.0
libtpu: 0.0.40
codegen_flags: <defaults>
</compile_context>

<pallas_src>
import functools

import jax
import jax.numpy as jnp
from jax.experimental import pallas as pl
from jax.experimental.pallas import tpu as pltpu

# ------------------------- tiny CLIP-like config -------------------------
IMG = 16          # image size
PATCH = 8         # patch size
CIN = 3           # image channels
N_PATCH = (IMG // PATCH) ** 2
V_SEQ = N_PATCH + 1                 # +1 class token (= 5)
V_PAD = 8                           # vision sequence padded to sublane multiple
CPP = CIN * PATCH * PATCH           # flattened patch length (= 192)
HID = 32          # hidden size (both towers)
HEADS = 4
HD = HID // HEADS
MLP = 64
LAYERS = 2
VOCAB = 64
T_SEQ = 8
PROJ = 16         # projection dim
LN_EPS = 1e-5
NEG_INF = -1e9


# ------------------------------ helpers ------------------------------
def _full_spec(shape):
    """BlockSpec covering the whole array (single grid step)."""
    nd = len(shape)
    return pl.BlockSpec(shape, lambda i, nd=nd: (0,) * nd)


# ------------------------------ fused kernel ------------------------------
def _clip_fused_kernel(B,
                       patches_ref, patch_w_ref, v_emb_ref,
                       v_qkv_ref, v_ow_ref, v_fc1_ref, v_fc2_ref, v_slab_ref,
                       t_x_ref, t_mask_ref, eos_ref,
                       t_qkv_ref, t_ow_ref, t_fc1_ref, t_fc2_ref, t_slab_ref,
                       proj_ref, misc_ref,
                       img_ref, txt_ref, lt_ref):
    f32 = jnp.float32
    misc = misc_ref[...]

    def ln(x, g, b):
        mu = jnp.mean(x, axis=-1, keepdims=True)
        var = jnp.mean((x - mu) * (x - mu), axis=-1, keepdims=True)
        return (x - mu) * jax.lax.rsqrt(var + LN_EPS) * g + b

    def encoder_layer(x, S, bias, qkv_w, o_w, fc1_w, fc2_w, slab):
        """Pre-LN CLIP encoder layer; x:(B*S, HID); scale pre-folded into q weights."""
        N = B * S
        ln1_g = slab[0:1, :HID]
        ln1_b = slab[1:2, :HID]
        ln2_g = slab[2:3, :HID]
        ln2_b = slab[3:4, :HID]
        qkv_b = slab[4:5, :3 * HID]
        o_b = slab[5:6, :HID]
        fc1_b = slab[6:7, :MLP]
        fc2_b = slab[7:8, :HID]

        # ---- attention block (fused QKV; O-proj folded per head -> no lane concat) ----
        xn = ln(x, ln1_g, ln1_b)
        qkv = jnp.dot(xn, qkv_w, preferred_element_type=f32) + qkv_b      # (N, 3*HID)
        qkv3 = qkv.reshape(B, S, 3 * HID)                                  # aligned split
        attn = jnp.zeros((N, HID), f32)
        for hh in range(HEADS):                                            # static unroll
            qh = qkv3[:, :, hh * HD:(hh + 1) * HD]                         # pre-scaled
            kh = qkv3[:, :, HID + hh * HD:HID + (hh + 1) * HD]
            vh = qkv3[:, :, 2 * HID + hh * HD:2 * HID + (hh + 1) * HD]
            s = jnp.einsum('bqd,bkd->bqk', qh, kh, preferred_element_type=f32)
            s = s + bias
            s = s - jnp.max(s, axis=-1, keepdims=True)
            p = jnp.exp(s)
            p = p * pl.reciprocal(jnp.sum(p, axis=-1, keepdims=True), approx=True)
            ctx = jnp.einsum('bqk,bkd->bqd', p, vh, preferred_element_type=f32)
            attn = attn + jnp.dot(ctx.reshape(N, HD),
                                  o_w[hh * HD:(hh + 1) * HD, :],
                                  preferred_element_type=f32)
        h1 = x + attn + o_b

        # ---- MLP block (quick-GELU, CLIP) ----
        xn2 = ln(h1, ln2_g, ln2_b)
        m = jnp.dot(xn2, fc1_w, preferred_element_type=f32) + fc1_b
        m = m * jax.nn.sigmoid(1.702 * m)
        m = jnp.dot(m, fc2_w, preferred_element_type=f32) + fc2_b
        return h1 + m

    # ---------------- vision tower ----------------
    xp = patches_ref[...].astype(f32).reshape(B * V_PAD, CPP)
    h = jnp.dot(xp, patch_w_ref[...], preferred_element_type=f32)          # patch embed
    h = (h.reshape(B, V_PAD, HID) + v_emb_ref[...][None]).reshape(B * V_PAD, HID)
    h = ln(h, misc[0:1, :HID], misc[1:2, :HID])                            # pre-LN
    kcol = jax.lax.broadcasted_iota(jnp.int32, (1, 1, V_PAD), 2)
    v_bias = jnp.where(kcol < V_SEQ, 0.0, NEG_INF).astype(f32)             # mask padded keys
    for l in range(LAYERS):
        h = encoder_layer(h, V_PAD, v_bias, v_qkv_ref[l], v_ow_ref[l],
                          v_fc1_ref[l], v_fc2_ref[l], v_slab_ref[l])
    pooled_v = h.reshape(B, V_PAD, HID)[:, 0:1, :].reshape(B, HID)         # class token
    pooled_v = ln(pooled_v, misc[2:3, :HID], misc[3:4, :HID])              # post-LN

    # ---------------- text tower ----------------
    xt = t_x_ref[...].astype(f32).reshape(B * T_SEQ, HID)
    rows = jax.lax.broadcasted_iota(jnp.int32, (T_SEQ, T_SEQ), 0)
    cols = jax.lax.broadcasted_iota(jnp.int32, (T_SEQ, T_SEQ), 1)
    causal = jnp.where(cols > rows, NEG_INF, 0.0).astype(f32)
    pad = (1.0 - t_mask_ref[...]) * NEG_INF                                # (B, S)
    t_bias = causal[None, :, :] + pad[:, None, :]                          # (B, S, S)
    for l in range(LAYERS):
        xt = encoder_layer(xt, T_SEQ, t_bias, t_qkv_ref[l], t_ow_ref[l],
                           t_fc1_ref[l], t_fc2_ref[l], t_slab_ref[l])
    h3 = xt.reshape(B, T_SEQ, HID)
    pooled_t = jnp.sum(eos_ref[...][:, :, None] * h3, axis=1)              # EOS pooling
    pooled_t = ln(pooled_t, misc[4:5, :HID], misc[5:6, :HID])              # final LN

    # ---------------- contrastive head ----------------
    proj = proj_ref[...]
    ie = jnp.dot(pooled_v, proj[:, :PROJ], preferred_element_type=f32)     # (B, PROJ)
    te = jnp.dot(pooled_t, proj[:, PROJ:], preferred_element_type=f32)
    ie = ie * jax.lax.rsqrt(jnp.sum(ie * ie, axis=-1, keepdims=True) + 1e-12)
    te = te * jax.lax.rsqrt(jnp.sum(te * te, axis=-1, keepdims=True) + 1e-12)
    scale = jnp.exp(misc[6:7, 0:1])                                        # logit scale
    lt = jnp.einsum('td,id->ti', te, ie, preferred_element_type=f32) * scale

    img_ref[...] = ie.astype(img_ref.dtype)
    txt_ref[...] = te.astype(txt_ref.dtype)
    lt_ref[...] = lt.astype(lt_ref.dtype)


# -------------------- one-time parameter preparation --------------------
def prepare_params(params):
    """Hoisted out of the hot path: QKV fusion, scale folding, slab packing, padding."""
    scale = 1.0 / (HD ** 0.5)

    def prep_tower(layers):
        qkv_w, o_w, fc1_w, fc2_w, slabs = [], [], [], [], []
        for p in layers:
            qkv_w.append(jnp.concatenate([p["q_w"] * scale, p["k_w"], p["v_w"]], axis=1))
            o_w.append(p["o_w"])
            fc1_w.append(p["fc1_w"])
            fc2_w.append(p["fc2_w"])
            slab = jnp.zeros((8, 128), jnp.float32)
            slab = slab.at[0, :HID].set(p["ln1_g"])
            slab = slab.at[1, :HID].set(p["ln1_b"])
            slab = slab.at[2, :HID].set(p["ln2_g"])
            slab = slab.at[3, :HID].set(p["ln2_b"])
            slab = slab.at[4, :3 * HID].set(
                jnp.concatenate([p["q_b"] * scale, p["k_b"], p["v_b"]]))
            slab = slab.at[5, :HID].set(p["o_b"])
            slab = slab.at[6, :MLP].set(p["fc1_b"])
            slab = slab.at[7, :HID].set(p["fc2_b"])
            slabs.append(slab)
        return (jnp.stack(qkv_w), jnp.stack(o_w), jnp.stack(fc1_w),
                jnp.stack(fc2_w), jnp.stack(slabs))

    v_qkv, v_ow, v_fc1, v_fc2, v_slab = prep_tower(params["v_layers"])
    t_qkv, t_ow, t_fc1, t_fc2, t_slab = prep_tower(params["t_layers"])

    # vision embedding table: positions padded to V_PAD rows, cls folded into row 0
    v_emb = (jnp.zeros((V_PAD, HID), jnp.float32)
             .at[:V_SEQ].set(params["v_pos"])
             .at[0].add(params["v_cls"]))
    patch_w = params["v_patch_w"].reshape(HID, CPP).T                      # conv has no bias

    misc = jnp.zeros((8, 128), jnp.float32)
    misc = misc.at[0, :HID].set(params["v_pre_ln_g"])
    misc = misc.at[1, :HID].set(params["v_pre_ln_b"])
    misc = misc.at[2, :HID].set(params["v_post_ln_g"])
    misc = misc.at[3, :HID].set(params["v_post_ln_b"])
    misc = misc.at[4, :HID].set(params["t_final_ln_g"])
    misc = misc.at[5, :HID].set(params["t_final_ln_b"])
    misc = misc.at[6, 0].set(params["logit_scale"])

    proj_w = jnp.concatenate([params["visual_proj_w"], params["text_proj_w"]], axis=1)

    return {
        "patch_w": patch_w, "v_emb": v_emb,
        "v_qkv": v_qkv, "v_ow": v_ow, "v_fc1": v_fc1, "v_fc2": v_fc2, "v_slab": v_slab,
        "t_qkv": t_qkv, "t_ow": t_ow, "t_fc1": t_fc1, "t_fc2": t_fc2, "t_slab": t_slab,
        "proj_w": proj_w, "misc": misc,
        "t_tok": params["t_tok"], "t_pos": params["t_pos"],
    }


# --------------------------- forward (single launch) ---------------------------
def clip_forward(prep, input_ids, attention_mask, pixel_values):
    B = pixel_values.shape[0]
    g = IMG // PATCH

    # patchify NCHW -> (B, N_PATCH, C*P*P); pad to V_PAD rows (row 0 = cls slot)
    x = pixel_values.reshape(B, CIN, g, PATCH, g, PATCH)
    x = x.transpose(0, 2, 4, 1, 3, 5).reshape(B, N_PATCH, CPP)
    patches = jnp.zeros((B, V_PAD, CPP), jnp.float32).at[:, 1:1 + N_PATCH, :].set(x)

    # text embeddings + EOS one-hot (EOT assumed to be the highest token id, old HF CLIP)
    t_x = jnp.take(prep["t_tok"], input_ids, axis=0) + prep["t_pos"][None]
    mask_f = attention_mask.astype(jnp.float32)
    eos_oh = jax.nn.one_hot(jnp.argmax(input_ids, axis=-1), T_SEQ, dtype=jnp.float32)

    inputs = [
        patches, prep["patch_w"], prep["v_emb"],
        prep["v_qkv"], prep["v_ow"], prep["v_fc1"], prep["v_fc2"], prep["v_slab"],
        t_x, mask_f, eos_oh,
        prep["t_qkv"], prep["t_ow"], prep["t_fc1"], prep["t_fc2"], prep["t_slab"],
        prep["proj_w"], prep["misc"],
    ]
    out_shape = (jax.ShapeDtypeStruct((B, PROJ), jnp.float32),
                 jax.ShapeDtypeStruct((B, PROJ), jnp.float32),
                 jax.ShapeDtypeStruct((B, B), jnp.float32))

    # TODO(synk): on v7x the vision/text towers could run on separate TensorCores via a
    # size-2 'parallel' grid axis; kept single-core here for portability/simplicity.
    image_embeds, text_embeds, logits_per_text = pl.pallas_call(
        functools.partial(_clip_fused_kernel, B),
        grid=(1,),
        in_specs=[_full_spec(a.shape) for a in inputs],
        out_specs=tuple(_full_spec(s.shape) for s in out_shape),
        out_shape=out_shape,
        compiler_params=pltpu.CompilerParams(dimension_semantics=("arbitrary",)),
    )(*inputs)

    logits_per_image = logits_per_text.T
    return {
        "logits_per_image": logits_per_image,
        "logits_per_text": logits_per_text,
        "text_embeds": text_embeds,
        "image_embeds": image_embeds,
    }


# ----------------------------- parameter init -----------------------------
def init_params(key):
    keys = iter(jax.random.split(key, 256))

    def nrm(shape, std=0.02):
        return jax.random.normal(next(keys), shape, jnp.float32) * std

    def layer_params():
        return {
            "ln1_g": jnp.ones((HID,), jnp.float32), "ln1_b": jnp.zeros((HID,), jnp.float32),
            "q_w": nrm((HID, HID)), "q_b": jnp.zeros((HID,), jnp.float32),
            "k_w": nrm((HID, HID)), "k_b": jnp.zeros((HID,), jnp.float32),
            "v_w": nrm((HID, HID)), "v_b": jnp.zeros((HID,), jnp.float32),
            "o_w": nrm((HID, HID)), "o_b": jnp.zeros((HID,), jnp.float32),
            "ln2_g": jnp.ones((HID,), jnp.float32), "ln2_b": jnp.zeros((HID,), jnp.float32),
            "fc1_w": nrm((HID, MLP)), "fc1_b": jnp.zeros((MLP,), jnp.float32),
            "fc2_w": nrm((MLP, HID)), "fc2_b": jnp.zeros((HID,), jnp.float32),
        }

    return {
        # vision
        "v_patch_w": nrm((HID, CIN, PATCH, PATCH)),
        "v_cls": nrm((HID,)),
        "v_pos": nrm((V_SEQ, HID)),
        "v_pre_ln_g": jnp.ones((HID,), jnp.float32), "v_pre_ln_b": jnp.zeros((HID,), jnp.float32),
        "v_layers": [layer_params() for _ in range(LAYERS)],
        "v_post_ln_g": jnp.ones((HID,), jnp.float32), "v_post_ln_b": jnp.zeros((HID,), jnp.float32),
        "visual_proj_w": nrm((HID, PROJ)),
        # text
        "t_tok": nrm((VOCAB, HID)),
        "t_pos": nrm((T_SEQ, HID)),
        "t_layers": [layer_params() for _ in range(LAYERS)],
        "t_final_ln_g": jnp.ones((HID,), jnp.float32), "t_final_ln_b": jnp.zeros((HID,), jnp.float32),
        "text_proj_w": nrm((HID, PROJ)),
        # logit scale (ln(1/0.07), standard CLIP init)
        "logit_scale": jnp.array(2.6592, jnp.float32),
    }


# ----------------------------------- main -----------------------------------
if __name__ == "__main__":
    # TODO(synk): CLIPModel.from_pretrained checkpoint loading has no Pallas equivalent;
    # parameters are synthesized deterministically instead.
    key = jax.random.PRNGKey(0)
    pkey, ikey, xkey = jax.random.split(key, 3)
    params = init_params(pkey)
    prep = prepare_params(params)          # one-time prep, outside the hot path
    prep = jax.tree_util.tree_map(jax.block_until_ready, prep)

    B = 2
    input_ids = jax.random.randint(ikey, (B, T_SEQ), 0, VOCAB, dtype=jnp.int32)
    attention_mask = jnp.ones((B, T_SEQ), jnp.int32)
    pixel_values = jax.random.normal(xkey, (B, CIN, IMG, IMG), jnp.float32)

    forward = jax.jit(clip_forward)
    out = forward(prep, input_ids, attention_mask, pixel_values)
    jax.block_until_ready(out)

    assert out["logits_per_image"].shape == (B, B)
    assert out["logits_per_text"].shape == (B, B)
    assert out["image_embeds"].shape == (B, PROJ)
    assert out["text_embeds"].shape == (B, PROJ)
    assert bool(jnp.all(jnp.isfinite(out["logits_per_text"])))
    assert bool(jnp.all(jnp.isfinite(out["logits_per_image"])))
    print("KERNEL_OK")
</pallas_src>

<mosaic_0001>
module attributes {stable_mosaic.version = 11 : i64} {
  func.func @_clip_fused_kernel(%arg0: i32, %arg1: memref<2x8x192xf32, #tpu.memory_space<vmem>>, %arg2: memref<192x32xf32, #tpu.memory_space<vmem>>, %arg3: memref<8x32xf32, #tpu.memory_space<vmem>>, %arg4: memref<2x32x96xf32, #tpu.memory_space<vmem>>, %arg5: memref<2x32x32xf32, #tpu.memory_space<vmem>>, %arg6: memref<2x32x64xf32, #tpu.memory_space<vmem>>, %arg7: memref<2x64x32xf32, #tpu.memory_space<vmem>>, %arg8: memref<2x8x128xf32, #tpu.memory_space<vmem>>, %arg9: memref<2x8x32xf32, #tpu.memory_space<vmem>>, %arg10: memref<2x8xf32, #tpu.memory_space<vmem>>, %arg11: memref<2x8xf32, #tpu.memory_space<vmem>>, %arg12: memref<2x32x96xf32, #tpu.memory_space<vmem>>, %arg13: memref<2x32x32xf32, #tpu.memory_space<vmem>>, %arg14: memref<2x32x64xf32, #tpu.memory_space<vmem>>, %arg15: memref<2x64x32xf32, #tpu.memory_space<vmem>>, %arg16: memref<2x8x128xf32, #tpu.memory_space<vmem>>, %arg17: memref<32x32xf32, #tpu.memory_space<vmem>>, %arg18: memref<8x128xf32, #tpu.memory_space<vmem>>, %arg19: memref<2x16xf32, #tpu.memory_space<vmem>>, %arg20: memref<2x16xf32, #tpu.memory_space<vmem>>, %arg21: memref<2x2xf32, #tpu.memory_space<vmem>>) attributes {dimension_semantics = [#tpu.dimension_semantics<arbitrary>], iteration_bounds = array<i64: 1>, scalar_prefetch = 0 : i64, scratch_operands = 0 : i64, tpu.core_type = #tpu.core_type<tc>, window_params = [{pipeline_mode = #tpu.pipeline_mode<synchronous>, transform_indices = @transform_0, window_bounds = array<i64: 2, 8, 192>}, {pipeline_mode = #tpu.pipeline_mode<synchronous>, transform_indices = @transform_1, window_bounds = array<i64: 192, 32>}, {pipeline_mode = #tpu.pipeline_mode<synchronous>, transform_indices = @transform_2, window_bounds = array<i64: 8, 32>}, {pipeline_mode = #tpu.pipeline_mode<synchronous>, transform_indices = @transform_3, window_bounds = array<i64: 2, 32, 96>}, {pipeline_mode = #tpu.pipeline_mode<synchronous>, transform_indices = @transform_4, window_bounds = array<i64: 2, 32, 32>}, {pipeline_mode = #tpu.pipeline_mode<synchronous>, transform_indices = @transform_5, window_bounds = array<i64: 2, 32, 64>}, {pipeline_mode = #tpu.pipeline_mode<synchronous>, transform_indices = @transform_6, window_bounds = array<i64: 2, 64, 32>}, {pipeline_mode = #tpu.pipeline_mode<synchronous>, transform_indices = @transform_7, window_bounds = array<i64: 2, 8, 128>}, {pipeline_mode = #tpu.pipeline_mode<synchronous>, transform_indices = @transform_8, window_bounds = array<i64: 2, 8, 32>}, {pipeline_mode = #tpu.pipeline_mode<synchronous>, transform_indices = @transform_9, window_bounds = array<i64: 2, 8>}, {pipeline_mode = #tpu.pipeline_mode<synchronous>, transform_indices = @transform_10, window_bounds = array<i64: 2, 8>}, {pipeline_mode = #tpu.pipeline_mode<synchronous>, transform_indices = @transform_11, window_bounds = array<i64: 2, 32, 96>}, {pipeline_mode = #tpu.pipeline_mode<synchronous>, transform_indices = @transform_12, window_bounds = array<i64: 2, 32, 32>}, {pipeline_mode = #tpu.pipeline_mode<synchronous>, transform_indices = @transform_13, window_bounds = array<i64: 2, 32, 64>}, {pipeline_mode = #tpu.pipeline_mode<synchronous>, transform_indices = @transform_14, window_bounds = array<i64: 2, 64, 32>}, {pipeline_mode = #tpu.pipeline_mode<synchronous>, transform_indices = @transform_15, window_bounds = array<i64: 2, 8, 128>}, {pipeline_mode = #tpu.pipeline_mode<synchronous>, transform_indices = @transform_16, window_bounds = array<i64: 32, 32>}, {pipeline_mode = #tpu.pipeline_mode<synchronous>, transform_indices = @transform_17, window_bounds = array<i64: 8, 128>}, {pipeline_mode = #tpu.pipeline_mode<synchronous>, transform_indices = @transform_18, window_bounds = array<i64: 2, 16>}, {pipeline_mode = #tpu.pipeline_mode<synchronous>, transform_indices = @transform_19, window_bounds = array<i64: 2, 16>}, {pipeline_mode = #tpu.pipeline_mode<synchronous>, transform_indices = @transform_20, window_bounds = array<i64: 2, 2>}]} {
    %c0 = arith.constant 0 : index
    %c0_0 = arith.constant 0 : index
    %0 = vector.load %arg18[%c0, %c0_0] : memref<8x128xf32, #tpu.memory_space<vmem>>, vector<8x128xf32>
    %c0_1 = arith.constant 0 : index
    %c0_2 = arith.constant 0 : index
    %c0_3 = arith.constant 0 : index
    %1 = vector.load %arg1[%c0_1, %c0_2, %c0_3] : memref<2x8x192xf32, #tpu.memory_space<vmem>>, vector<2x8x192xf32>
    %2 = vector.shape_cast %1 : vector<2x8x192xf32> to vector<16x192xf32>
    %c0_4 = arith.constant 0 : index
    %c0_5 = arith.constant 0 : index
    %3 = vector.load %arg2[%c0_4, %c0_5] : memref<192x32xf32, #tpu.memory_space<vmem>>, vector<192x32xf32>
    %cst = arith.constant dense<0.000000e+00> : vector<16x32xf32>
    %4 = tpu.matmul %2, %3, %cst {dimension_numbers = #tpu.dot_dimension_numbers<[1], [0], [0], [1], [0, 0, 1, 1], [], []>} : vector<16x192xf32>, vector<192x32xf32>, vector<16x32xf32> -> vector<16x32xf32>
    %5 = vector.shape_cast %4 : vector<16x32xf32> to vector<2x8x32xf32>
    %c0_6 = arith.constant 0 : index
    %c0_7 = arith.constant 0 : index
    %6 = vector.load %arg3[%c0_6, %c0_7] : memref<8x32xf32, #tpu.memory_space<vmem>>, vector<8x32xf32>
    %7 = vector.shape_cast %6 : vector<8x32xf32> to vector<1x8x32xf32>
    %8 = vector.broadcast %7 : vector<1x8x32xf32> to vector<2x8x32xf32>
    %9 = arith.addf %5, %8 : vector<2x8x32xf32>
    %10 = vector.shape_cast %9 : vector<2x8x32xf32> to vector<16x32xf32>
    %11 = vector.extract_strided_slice %0 {offsets = [0, 0], sizes = [1, 32], strides = [1, 1]} : vector<8x128xf32> to vector<1x32xf32>
    %12 = vector.extract_strided_slice %0 {offsets = [1, 0], sizes = [1, 32], strides = [1, 1]} : vector<8x128xf32> to vector<1x32xf32>
    %cst_8 = arith.constant dense<0.000000e+00> : vector<16xf32>
    %13 = vector.multi_reduction <add>, %10, %cst_8 [1] : vector<16x32xf32> to vector<16xf32>
    %14 = vector.shape_cast %13 : vector<16xf32> to vector<16x1xf32>
    %cst_9 = arith.constant 3.200000e+01 : f32
    %15 = vector.broadcast %cst_9 : f32 to vector<16x1xf32>
    %16 = arith.divf %14, %15 : vector<16x1xf32>
    %17 = vector.broadcast %16 : vector<16x1xf32> to vector<16x32xf32>
    %18 = arith.subf %10, %17 : vector<16x32xf32>
    %19 = vector.broadcast %16 : vector<16x1xf32> to vector<16x32xf32>
    %20 = arith.subf %10, %19 : vector<16x32xf32>
    %21 = arith.mulf %18, %20 : vector<16x32xf32>
    %cst_10 = arith.constant dense<0.000000e+00> : vector<16xf32>
    %22 = vector.multi_reduction <add>, %21, %cst_10 [1] : vector<16x32xf32> to vector<16xf32>
    %23 = vector.shape_cast %22 : vector<16xf32> to vector<16x1xf32>
    %cst_11 = arith.constant 3.200000e+01 : f32
    %24 = vector.broadcast %cst_11 : f32 to vector<16x1xf32>
    %25 = arith.divf %23, %24 : vector<16x1xf32>
    %26 = vector.broadcast %16 : vector<16x1xf32> to vector<16x32xf32>
    %27 = arith.subf %10, %26 : vector<16x32xf32>
    %cst_12 = arith.constant 9.99999974E-6 : f32
    %28 = vector.broadcast %cst_12 : f32 to vector<16x1xf32>
    %29 = arith.addf %25, %28 : vector<16x1xf32>
    %30 = math.rsqrt %29 : vector<16x1xf32>
    %31 = vector.broadcast %30 : vector<16x1xf32> to vector<16x32xf32>
    %32 = arith.mulf %27, %31 : vector<16x32xf32>
    %33 = vector.broadcast %11 : vector<1x32xf32> to vector<16x32xf32>
    %34 = arith.mulf %32, %33 : vector<16x32xf32>
    %35 = vector.broadcast %12 : vector<1x32xf32> to vector<16x32xf32>
    %36 = arith.addf %34, %35 : vector<16x32xf32>
    %37 = tpu.iota {dimensions = array<i32: 2>} : vector<1x1x8xi32>
    %c5_i32 = arith.constant 5 : i32
    %38 = vector.broadcast %c5_i32 : i32 to vector<1x1x8xi32>
    %39 = arith.cmpi slt, %37, %38 : vector<1x1x8xi32>
    %cst_13 = arith.constant 0.000000e+00 : f32
    %cst_14 = arith.constant -1.000000e+09 : f32
    %40 = vector.broadcast %cst_13 : f32 to vector<1x1x8xf32>
    %41 = vector.broadcast %cst_14 : f32 to vector<1x1x8xf32>
    %42 = arith.select %39, %40, %41 : vector<1x1x8xi1>, vector<1x1x8xf32>
    %c0_15 = arith.constant 0 : index
    %c0_16 = arith.constant 0 : index
    %c0_17 = arith.constant 0 : index
    %43 = vector.load %arg4[%c0_15, %c0_16, %c0_17] : memref<2x32x96xf32, #tpu.memory_space<vmem>>, vector<1x32x96xf32>
    %44 = vector.shape_cast %43 : vector<1x32x96xf32> to vector<32x96xf32>
    %c0_18 = arith.constant 0 : index
    %c0_19 = arith.constant 0 : index
    %c0_20 = arith.constant 0 : index
    %45 = vector.load %arg5[%c0_18, %c0_19, %c0_20] : memref<2x32x32xf32, #tpu.memory_space<vmem>>, vector<1x32x32xf32>
    %46 = vector.shape_cast %45 : vector<1x32x32xf32> to vector<32x32xf32>
    %c0_21 = arith.constant 0 : index
    %c0_22 = arith.constant 0 : index
    %c0_23 = arith.constant 0 : index
    %47 = vector.load %arg6[%c0_21, %c0_22, %c0_23] : memref<2x32x64xf32, #tpu.memory_space<vmem>>, vector<1x32x64xf32>
    %48 = vector.shape_cast %47 : vector<1x32x64xf32> to vector<32x64xf32>
    %c0_24 = arith.constant 0 : index
    %c0_25 = arith.constant 0 : index
    %c0_26 = arith.constant 0 : index
    %49 = vector.load %arg7[%c0_24, %c0_25, %c0_26] : memref<2x64x32xf32, #tpu.memory_space<vmem>>, vector<1x64x32xf32>
    %50 = vector.shape_cast %49 : vector<1x64x32xf32> to vector<64x32xf32>
    %c0_27 = arith.constant 0 : index
    %c0_28 = arith.constant 0 : index
    %c0_29 = arith.constant 0 : index
    %51 = vector.load %arg8[%c0_27, %c0_28, %c0_29] : memref<2x8x128xf32, #tpu.memory_space<vmem>>, vector<1x8x128xf32>
    %52 = vector.shape_cast %51 : vector<1x8x128xf32> to vector<8x128xf32>
    %53 = vector.extract_strided_slice %52 {offsets = [0, 0], sizes = [1, 32], strides = [1, 1]} : vector<8x128xf32> to vector<1x32xf32>
    %54 = vector.extract_strided_slice %52 {offsets = [1, 0], sizes = [1, 32], strides = [1, 1]} : vector<8x128xf32> to vector<1x32xf32>
    %55 = vector.extract_strided_slice %52 {offsets = [2, 0], sizes = [1, 32], strides = [1, 1]} : vector<8x128xf32> to vector<1x32xf32>
    %56 = vector.extract_strided_slice %52 {offsets = [3, 0], sizes = [1, 32], strides = [1, 1]} : vector<8x128xf32> to vector<1x32xf32>
    %57 = vector.extract_strided_slice %52 {offsets = [4, 0], sizes = [1, 96], strides = [1, 1]} : vector<8x128xf32> to vector<1x96xf32>
    %58 = vector.extract_strided_slice %52 {offsets = [5, 0], sizes = [1, 32], strides = [1, 1]} : vector<8x128xf32> to vector<1x32xf32>
    %59 = vector.extract_strided_slice %52 {offsets = [6, 0], sizes = [1, 64], strides = [1, 1]} : vector<8x128xf32> to vector<1x64xf32>
    %60 = vector.extract_strided_slice %52 {offsets = [7, 0], sizes = [1, 32], strides = [1, 1]} : vector<8x128xf32> to vector<1x32xf32>
    %cst_30 = arith.constant dense<0.000000e+00> : vector<16xf32>
    %61 = vector.multi_reduction <add>, %36, %cst_30 [1] : vector<16x32xf32> to vector<16xf32>
    %62 = vector.shape_cast %61 : vector<16xf32> to vector<16x1xf32>
    %cst_31 = arith.constant 3.200000e+01 : f32
    %63 = vector.broadcast %cst_31 : f32 to vector<16x1xf32>
    %64 = arith.divf %62, %63 : vector<16x1xf32>
    %65 = vector.broadcast %64 : vector<16x1xf32> to vector<16x32xf32>
    %66 = arith.subf %36, %65 : vector<16x32xf32>
    %67 = vector.broadcast %64 : vector<16x1xf32> to vector<16x32xf32>
    %68 = arith.subf %36, %67 : vector<16x32xf32>
    %69 = arith.mulf %66, %68 : vector<16x32xf32>
    %cst_32 = arith.constant dense<0.000000e+00> : vector<16xf32>
    %70 = vector.multi_reduction <add>, %69, %cst_32 [1] : vector<16x32xf32> to vector<16xf32>
    %71 = vector.shape_cast %70 : vector<16xf32> to vector<16x1xf32>
    %cst_33 = arith.constant 3.200000e+01 : f32
    %72 = vector.broadcast %cst_33 : f32 to vector<16x1xf32>
    %73 = arith.divf %71, %72 : vector<16x1xf32>
    %74 = vector.broadcast %64 : vector<16x1xf32> to vector<16x32xf32>
    %75 = arith.subf %36, %74 : vector<16x32xf32>
    %cst_34 = arith.constant 9.99999974E-6 : f32
    %76 = vector.broadcast %cst_34 : f32 to vector<16x1xf32>
    %77 = arith.addf %73, %76 : vector<16x1xf32>
    %78 = math.rsqrt %77 : vector<16x1xf32>
    %79 = vector.broadcast %78 : vector<16x1xf32> to vector<16x32xf32>
    %80 = arith.mulf %75, %79 : vector<16x32xf32>
    %81 = vector.broadcast %53 : vector<1x32xf32> to vector<16x32xf32>
    %82 = arith.mulf %80, %81 : vector<16x32xf32>
    %83 = vector.broadcast %54 : vector<1x32xf32> to vector<16x32xf32>
    %84 = arith.addf %82, %83 : vector<16x32xf32>
    %cst_35 = arith.constant dense<0.000000e+00> : vector<16x96xf32>
    %85 = tpu.matmul %84, %44, %cst_35 {dimension_numbers = #tpu.dot_dimension_numbers<[1], [0], [0], [1], [0, 0, 1, 1], [], []>} : vector<16x32xf32>, vector<32x96xf32>, vector<16x96xf32> -> vector<16x96xf32>
    %86 = vector.broadcast %57 : vector<1x96xf32> to vector<16x96xf32>
    %87 = arith.addf %85, %86 : vector<16x96xf32>
    %88 = vector.shape_cast %87 : vector<16x96xf32> to vector<2x8x96xf32>
    %cst_36 = arith.constant 0.000000e+00 : f32
    %89 = vector.broadcast %cst_36 : f32 to vector<16x32xf32>
    %90 = vector.extract_strided_slice %88 {offsets = [0, 0, 0], sizes = [2, 8, 8], strides = [1, 1, 1]} : vector<2x8x96xf32> to vector<2x8x8xf32>
    %91 = vector.extract_strided_slice %88 {offsets = [0, 0, 32], sizes = [2, 8, 8], strides = [1, 1, 1]} : vector<2x8x96xf32> to vector<2x8x8xf32>
    %92 = vector.extract_strided_slice %88 {offsets = [0, 0, 64], sizes = [2, 8, 8], strides = [1, 1, 1]} : vector<2x8x96xf32> to vector<2x8x8xf32>
    "tpu.trace_start"() <{level = 10 : i32, message = "bqd,bkd->bqk"}> : () -> ()
    %cst_37 = arith.constant dense<0.000000e+00> : vector<2x8x8xf32>
    %93 = tpu.matmul %90, %91, %cst_37 {dimension_numbers = #tpu.dot_dimension_numbers<[2], [2], [1], [1], [0, 0, 0, 1, 1, 1], [0], [0]>} : vector<2x8x8xf32>, vector<2x8x8xf32>, vector<2x8x8xf32> -> vector<2x8x8xf32>
    "tpu.trace_stop"() : () -> ()
    %94 = vector.broadcast %42 : vector<1x1x8xf32> to vector<2x8x8xf32>
    %95 = arith.addf %93, %94 : vector<2x8x8xf32>
    %cst_38 = arith.constant dense<0xFF800000> : vector<2x8xf32>
    %96 = vector.multi_reduction <maximumf>, %95, %cst_38 [2] : vector<2x8x8xf32> to vector<2x8xf32>
    %97 = vector.shape_cast %96 : vector<2x8xf32> to vector<2x8x1xf32>
    %98 = vector.broadcast %97 : vector<2x8x1xf32> to vector<2x8x8xf32>
    %99 = arith.subf %95, %98 : vector<2x8x8xf32>
    %100 = math.exp %99 : vector<2x8x8xf32>
    %cst_39 = arith.constant dense<0.000000e+00> : vector<2x8xf32>
    %101 = vector.multi_reduction <add>, %100, %cst_39 [2] : vector<2x8x8xf32> to vector<2x8xf32>
    %102 = vector.shape_cast %101 : vector<2x8xf32> to vector<2x8x1xf32>
    %103 = tpu.reciprocal %102 {approx = true} : vector<2x8x1xf32> -> vector<2x8x1xf32>
    %104 = vector.broadcast %103 : vector<2x8x1xf32> to vector<2x8x8xf32>
    %105 = arith.mulf %100, %104 : vector<2x8x8xf32>
    "tpu.trace_start"() <{level = 10 : i32, message = "bqk,bkd->bqd"}> : () -> ()
    %cst_40 = arith.constant dense<0.000000e+00> : vector<2x8x8xf32>
    %106 = tpu.matmul %105, %92, %cst_40 {dimension_numbers = #tpu.dot_dimension_numbers<[2], [1], [1], [2], [0, 0, 0, 1, 1, 2], [0], [0]>} : vector<2x8x8xf32>, vector<2x8x8xf32>, vector<2x8x8xf32> -> vector<2x8x8xf32>
    "tpu.trace_stop"() : () -> ()
    %107 = vector.shape_cast %106 : vector<2x8x8xf32> to vector<16x8xf32>
    %108 = vector.extract_strided_slice %46 {offsets = [0, 0], sizes = [8, 32], strides = [1, 1]} : vector<32x32xf32> to vector<8x32xf32>
    %cst_41 = arith.constant dense<0.000000e+00> : vector<16x32xf32>
    %109 = tpu.matmul %107, %108, %cst_41 {dimension_numbers = #tpu.dot_dimension_numbers<[1], [0], [0], [1], [0, 0, 1, 1], [], []>} : vector<16x8xf32>, vector<8x32xf32>, vector<16x32xf32> -> vector<16x32xf32>
    %110 = arith.addf %89, %109 : vector<16x32xf32>
    %111 = vector.extract_strided_slice %88 {offsets = [0, 0, 8], sizes = [2, 8, 8], strides = [1, 1, 1]} : vector<2x8x96xf32> to vector<2x8x8xf32>
    %112 = vector.extract_strided_slice %88 {offsets = [0, 0, 40], sizes = [2, 8, 8], strides = [1, 1, 1]} : vector<2x8x96xf32> to vector<2x8x8xf32>
    %113 = vector.extract_strided_slice %88 {offsets = [0, 0, 72], sizes = [2, 8, 8], strides = [1, 1, 1]} : vector<2x8x96xf32> to vector<2x8x8xf32>
    "tpu.trace_start"() <{level = 10 : i32, message = "bqd,bkd->bqk"}> : () -> ()
    %cst_42 = arith.constant dense<0.000000e+00> : vector<2x8x8xf32>
    %114 = tpu.matmul %111, %112, %cst_42 {dimension_numbers = #tpu.dot_dimension_numbers<[2], [2], [1], [1], [0, 0, 0, 1, 1, 1], [0], [0]>} : vector<2x8x8xf32>, vector<2x8x8xf32>, vector<2x8x8xf32> -> vector<2x8x8xf32>
    "tpu.trace_stop"() : () -> ()
    %115 = vector.broadcast %42 : vector<1x1x8xf32> to vector<2x8x8xf32>
    %116 = arith.addf %114, %115 : vector<2x8x8xf32>
    %cst_43 = arith.constant dense<0xFF800000> : vector<2x8xf32>
    %117 = vector.multi_reduction <maximumf>, %116, %cst_43 [2] : vector<2x8x8xf32> to vector<2x8xf32>
    %118 = vector.shape_cast %117 : vector<2x8xf32> to vector<2x8x1xf32>
    %119 = vector.broadcast %118 : vector<2x8x1xf32> to vector<2x8x8xf32>
    %120 = arith.subf %116, %119 : vector<2x8x8xf32>
    %121 = math.exp %120 : vector<2x8x8xf32>
    %cst_44 = arith.constant dense<0.000000e+00> : vector<2x8xf32>
    %122 = vector.multi_reduction <add>, %121, %cst_44 [2] : vector<2x8x8xf32> to vector<2x8xf32>
    %123 = vector.shape_cast %122 : vector<2x8xf32> to vector<2x8x1xf32>
    %124 = tpu.reciprocal %123 {approx = true} : vector<2x8x1xf32> -> vector<2x8x1xf32>
    %125 = vector.broadcast %124 : vector<2x8x1xf32> to vector<2x8x8xf32>
    %126 = arith.mulf %121, %125 : vector<2x8x8xf32>
    "tpu.trace_start"() <{level = 10 : i32, message = "bqk,bkd->bqd"}> : () -> ()
    %cst_45 = arith.constant dense<0.000000e+00> : vector<2x8x8xf32>
    %127 = tpu.matmul %126, %113, %cst_45 {dimension_numbers = #tpu.dot_dimension_numbers<[2], [1], [1], [2], [0, 0, 0, 1, 1, 2], [0], [0]>} : vector<2x8x8xf32>, vector<2x8x8xf32>, vector<2x8x8xf32> -> vector<2x8x8xf32>
    "tpu.trace_stop"() : () -> ()
    %128 = vector.shape_cast %127 : vector<2x8x8xf32> to vector<16x8xf32>
    %129 = vector.extract_strided_slice %46 {offsets = [8, 0], sizes = [8, 32], strides = [1, 1]} : vector<32x32xf32> to vector<8x32xf32>
    %cst_46 = arith.constant dense<0.000000e+00> : vector<16x32xf32>
    %130 = tpu.matmul %128, %129, %cst_46 {dimension_numbers = #tpu.dot_dimension_numbers<[1], [0], [0], [1], [0, 0, 1, 1], [], []>} : vector<16x8xf32>, vector<8x32xf32>, vector<16x32xf32> -> vector<16x32xf32>
    %131 = arith.addf %110, %130 : vector<16x32xf32>
    %132 = vector.extract_strided_slice %88 {offsets = [0, 0, 16], sizes = [2, 8, 8], strides = [1, 1, 1]} : vector<2x8x96xf32> to vector<2x8x8xf32>
    %133 = vector.extract_strided_slice %88 {offsets = [0, 0, 48], sizes = [2, 8, 8], strides = [1, 1, 1]} : vector<2x8x96xf32> to vector<2x8x8xf32>
    %134 = vector.extract_strided_slice %88 {offsets = [0, 0, 80], sizes = [2, 8, 8], strides = [1, 1, 1]} : vector<2x8x96xf32> to vector<2x8x8xf32>
    "tpu.trace_start"() <{level = 10 : i32, message = "bqd,bkd->bqk"}> : () -> ()
    %cst_47 = arith.constant dense<0.000000e+00> : vector<2x8x8xf32>
    %135 = tpu.matmul %132, %133, %cst_47 {dimension_numbers = #tpu.dot_dimension_numbers<[2], [2], [1], [1], [0, 0, 0, 1, 1, 1], [0], [0]>} : vector<2x8x8xf32>, vector<2x8x8xf32>, vector<2x8x8xf32> -> vector<2x8x8xf32>
    "tpu.trace_stop"() : () -> ()
    %136 = vector.broadcast %42 : vector<1x1x8xf32> to vector<2x8x8xf32>
    %137 = arith.addf %135, %136 : vector<2x8x8xf32>
    %cst_48 = arith.constant dense<0xFF800000> : vector<2x8xf32>
    %138 = vector.multi_reduction <maximumf>, %137, %cst_48 [2] : vector<2x8x8xf32> to vector<2x8xf32>
    %139 = vector.shape_cast %138 : vector<2x8xf32> to vector<2x8x1xf32>
    %140 = vector.broadcast %139 : vector<2x8x1xf32> to vector<2x8x8xf32>
    %141 = arith.subf %137, %140 : vector<2x8x8xf32>
    %142 = math.exp %141 : vector<2x8x8xf32>
    %cst_49 = arith.constant dense<0.000000e+00> : vector<2x8xf32>
    %143 = vector.multi_reduction <add>, %142, %cst_49 [2] : vector<2x8x8xf32> to vector<2x8xf32>
    %144 = vector.shape_cast %143 : vector<2x8xf32> to vector<2x8x1xf32>
    %145 = tpu.reciprocal %144 {approx = true} : vector<2x8x1xf32> -> vector<2x8x1xf32>
    %146 = vector.broadcast %145 : vector<2x8x1xf32> to vector<2x8x8xf32>
    %147 = arith.mulf %142, %146 : vector<2x8x8xf32>
    "tpu.trace_start"() <{level = 10 : i32, message = "bqk,bkd->bqd"}> : () -> ()
    %cst_50 = arith.constant dense<0.000000e+00> : vector<2x8x8xf32>
    %148 = tpu.matmul %147, %134, %cst_50 {dimension_numbers = #tpu.dot_dimension_numbers<[2], [1], [1], [2], [0, 0, 0, 1, 1, 2], [0], [0]>} : vector<2x8x8xf32>, vector<2x8x8xf32>, vector<2x8x8xf32> -> vector<2x8x8xf32>
    "tpu.trace_stop"() : () -> ()
    %149 = vector.shape_cast %148 : vector<2x8x8xf32> to vector<16x8xf32>
    %150 = vector.extract_strided_slice %46 {offsets = [16, 0], sizes = [8, 32], strides = [1, 1]} : vector<32x32xf32> to vector<8x32xf32>
    %cst_51 = arith.constant dense<0.000000e+00> : vector<16x32xf32>
    %151 = tpu.matmul %149, %150, %cst_51 {dimension_numbers = #tpu.dot_dimension_numbers<[1], [0], [0], [1], [0, 0, 1, 1], [], []>} : vector<16x8xf32>, vector<8x32xf32>, vector<16x32xf32> -> vector<16x32xf32>
    %152 = arith.addf %131, %151 : vector<16x32xf32>
    %153 = vector.extract_strided_slice %88 {offsets = [0, 0, 24], sizes = [2, 8, 8], strides = [1, 1, 1]} : vector<2x8x96xf32> to vector<2x8x8xf32>
    %154 = vector.extract_strided_slice %88 {offsets = [0, 0, 56], sizes = [2, 8, 8], strides = [1, 1, 1]} : vector<2x8x96xf32> to vector<2x8x8xf32>
    %155 = vector.extract_strided_slice %88 {offsets = [0, 0, 88], sizes = [2, 8, 8], strides = [1, 1, 1]} : vector<2x8x96xf32> to vector<2x8x8xf32>
    "tpu.trace_start"() <{level = 10 : i32, message = "bqd,bkd->bqk"}> : () -> ()
    %cst_52 = arith.constant dense<0.000000e+00> : vector<2x8x8xf32>
    %156 = tpu.matmul %153, %154, %cst_52 {dimension_numbers = #tpu.dot_dimension_numbers<[2], [2], [1], [1], [0, 0, 0, 1, 1, 1], [0], [0]>} : vector<2x8x8xf32>, vector<2x8x8xf32>, vector<2x8x8xf32> -> vector<2x8x8xf32>
    "tpu.trace_stop"() : () -> ()
    %157 = vector.broadcast %42 : vector<1x1x8xf32> to vector<2x8x8xf32>
    %158 = arith.addf %156, %157 : vector<2x8x8xf32>
    %cst_53 = arith.constant dense<0xFF800000> : vector<2x8xf32>
    %159 = vector.multi_reduction <maximumf>, %158, %cst_53 [2] : vector<2x8x8xf32> to vector<2x8xf32>
    %160 = vector.shape_cast %159 : vector<2x8xf32> to vector<2x8x1xf32>
    %161 = vector.broadcast %160 : vector<2x8x1xf32> to vector<2x8x8xf32>
    %162 = arith.subf %158, %161 : vector<2x8x8xf32>
    %163 = math.exp %162 : vector<2x8x8xf32>
    %cst_54 = arith.constant dense<0.000000e+00> : vector<2x8xf32>
    %164 = vector.multi_reduction <add>, %163, %cst_54 [2] : vector<2x8x8xf32> to vector<2x8xf32>
    %165 = vector.shape_cast %164 : vector<2x8xf32> to vector<2x8x1xf32>
    %166 = tpu.reciprocal %165 {approx = true} : vector<2x8x1xf32> -> vector<2x8x1xf32>
    %167 = vector.broadcast %166 : vector<2x8x1xf32> to vector<2x8x8xf32>
    %168 = arith.mulf %163, %167 : vector<2x8x8xf32>
    "tpu.trace_start"() <{level = 10 : i32, message = "bqk,bkd->bqd"}> : () -> ()
    %cst_55 = arith.constant dense<0.000000e+00> : vector<2x8x8xf32>
    %169 = tpu.matmul %168, %155, %cst_55 {dimension_numbers = #tpu.dot_dimension_numbers<[2], [1], [1], [2], [0, 0, 0, 1, 1, 2], [0], [0]>} : vector<2x8x8xf32>, vector<2x8x8xf32>, vector<2x8x8xf32> -> vector<2x8x8xf32>
    "tpu.trace_stop"() : () -> ()
    %170 = vector.shape_cast %169 : vector<2x8x8xf32> to vector<16x8xf32>
    %171 = vector.extract_strided_slice %46 {offsets = [24, 0], sizes = [8, 32], strides = [1, 1]} : vector<32x32xf32> to vector<8x32xf32>
    %cst_56 = arith.constant dense<0.000000e+00> : vector<16x32xf32>
    %172 = tpu.matmul %170, %171, %cst_56 {dimension_numbers = #tpu.dot_dimension_numbers<[1], [0], [0], [1], [0, 0, 1, 1], [], []>} : vector<16x8xf32>, vector<8x32xf32>, vector<16x32xf32> -> vector<16x32xf32>
    %173 = arith.addf %152, %172 : vector<16x32xf32>
    %174 = arith.addf %36, %173 : vector<16x32xf32>
    %175 = vector.broadcast %58 : vector<1x32xf32> to vector<16x32xf32>
    %176 = arith.addf %174, %175 : vector<16x32xf32>
    %cst_57 = arith.constant dense<0.000000e+00> : vector<16xf32>
    %177 = vector.multi_reduction <add>, %176, %cst_57 [1] : vector<16x32xf32> to vector<16xf32>
    %178 = vector.shape_cast %177 : vector<16xf32> to vector<16x1xf32>
    %cst_58 = arith.constant 3.200000e+01 : f32
    %179 = vector.broadcast %cst_58 : f32 to vector<16x1xf32>
    %180 = arith.divf %178, %179 : vector<16x1xf32>
    %181 = vector.broadcast %180 : vector<16x1xf32> to vector<16x32xf32>
    %182 = arith.subf %176, %181 : vector<16x32xf32>
    %183 = vector.broadcast %180 : vector<16x1xf32> to vector<16x32xf32>
    %184 = arith.subf %176, %183 : vector<16x32xf32>
    %185 = arith.mulf %182, %184 : vector<16x32xf32>
    %cst_59 = arith.constant dense<0.000000e+00> : vector<16xf32>
    %186 = vector.multi_reduction <add>, %185, %cst_59 [1] : vector<16x32xf32> to vector<16xf32>
    %187 = vector.shape_cast %186 : vector<16xf32> to vector<16x1xf32>
    %cst_60 = arith.constant 3.200000e+01 : f32
    %188 = vector.broadcast %cst_60 : f32 to vector<16x1xf32>
    %189 = arith.divf %187, %188 : vector<16x1xf32>
    %190 = vector.broadcast %180 : vector<16x1xf32> to vector<16x32xf32>
    %191 = arith.subf %176, %190 : vector<16x32xf32>
    %cst_61 = arith.constant 9.99999974E-6 : f32
    %192 = vector.broadcast %cst_61 : f32 to vector<16x1xf32>
    %193 = arith.addf %189, %192 : vector<16x1xf32>
    %194 = math.rsqrt %193 : vector<16x1xf32>
    %195 = vector.broadcast %194 : vector<16x1xf32> to vector<16x32xf32>
    %196 = arith.mulf %191, %195 : vector<16x32xf32>
    %197 = vector.broadcast %55 : vector<1x32xf32> to vector<16x32xf32>
    %198 = arith.mulf %196, %197 : vector<16x32xf32>
    %199 = vector.broadcast %56 : vector<1x32xf32> to vector<16x32xf32>
    %200 = arith.addf %198, %199 : vector<16x32xf32>
    %cst_62 = arith.constant dense<0.000000e+00> : vector<16x64xf32>
    %201 = tpu.matmul %200, %48, %cst_62 {dimension_numbers = #tpu.dot_dimension_numbers<[1], [0], [0], [1], [0, 0, 1, 1], [], []>} : vector<16x32xf32>, vector<32x64xf32>, vector<16x64xf32> -> vector<16x64xf32>
    %202 = vector.broadcast %59 : vector<1x64xf32> to vector<16x64xf32>
    %203 = arith.addf %201, %202 : vector<16x64xf32>
    %cst_63 = arith.constant 1.702000e+00 : f32
    %204 = vector.broadcast %cst_63 : f32 to vector<16x64xf32>
    %205 = arith.mulf %204, %203 : vector<16x64xf32>
    %206 = arith.negf %205 : vector<16x64xf32>
    %207 = math.exp %206 : vector<16x64xf32>
    %cst_64 = arith.constant 1.000000e+00 : f32
    %208 = vector.broadcast %cst_64 : f32 to vector<16x64xf32>
    %209 = arith.addf %208, %207 : vector<16x64xf32>
    %210 = arith.divf %208, %209 : vector<16x64xf32>
    %211 = arith.mulf %203, %210 : vector<16x64xf32>
    %cst_65 = arith.constant dense<0.000000e+00> : vector<16x32xf32>
    %212 = tpu.matmul %211, %50, %cst_65 {dimension_numbers = #tpu.dot_dimension_numbers<[1], [0], [0], [1], [0, 0, 1, 1], [], []>} : vector<16x64xf32>, vector<64x32xf32>, vector<16x32xf32> -> vector<16x32xf32>
    %213 = vector.broadcast %60 : vector<1x32xf32> to vector<16x32xf32>
    %214 = arith.addf %212, %213 : vector<16x32xf32>
    %215 = arith.addf %176, %214 : vector<16x32xf32>
    %c1 = arith.constant 1 : index
    %c0_66 = arith.constant 0 : index
    %c0_67 = arith.constant 0 : index
    %216 = vector.load %arg4[%c1, %c0_66, %c0_67] : memref<2x32x96xf32, #tpu.memory_space<vmem>>, vector<1x32x96xf32>
    %217 = vector.shape_cast %216 : vector<1x32x96xf32> to vector<32x96xf32>
    %c1_68 = arith.constant 1 : index
    %c0_69 = arith.constant 0 : index
    %c0_70 = arith.constant 0 : index
    %218 = vector.load %arg5[%c1_68, %c0_69, %c0_70] : memref<2x32x32xf32, #tpu.memory_space<vmem>>, vector<1x32x32xf32>
    %219 = vector.shape_cast %218 : vector<1x32x32xf32> to vector<32x32xf32>
    %c1_71 = arith.constant 1 : index
    %c0_72 = arith.constant 0 : index
    %c0_73 = arith.constant 0 : index
    %220 = vector.load %arg6[%c1_71, %c0_72, %c0_73] : memref<2x32x64xf32, #tpu.memory_space<vmem>>, vector<1x32x64xf32>
    %221 = vector.shape_cast %220 : vector<1x32x64xf32> to vector<32x64xf32>
    %c1_74 = arith.constant 1 : index
    %c0_75 = arith.constant 0 : index
    %c0_76 = arith.constant 0 : index
    %222 = vector.load %arg7[%c1_74, %c0_75, %c0_76] : memref<2x64x32xf32, #tpu.memory_space<vmem>>, vector<1x64x32xf32>
    %223 = vector.shape_cast %222 : vector<1x64x32xf32> to vector<64x32xf32>
    %c1_77 = arith.constant 1 : index
    %c0_78 = arith.constant 0 : index
    %c0_79 = arith.constant 0 : index
    %224 = vector.load %arg8[%c1_77, %c0_78, %c0_79] : memref<2x8x128xf32, #tpu.memory_space<vmem>>, vector<1x8x128xf32>
    %225 = vector.shape_cast %224 : vector<1x8x128xf32> to vector<8x128xf32>
    %226 = vector.extract_strided_slice %225 {offsets = [0, 0], sizes = [1, 32], strides = [1, 1]} : vector<8x128xf32> to vector<1x32xf32>
    %227 = vector.extract_strided_slice %225 {offsets = [1, 0], sizes = [1, 32], strides = [1, 1]} : vector<8x128xf32> to vector<1x32xf32>
    %228 = vector.extract_strided_slice %225 {offsets = [2, 0], sizes = [1, 32], strides = [1, 1]} : vector<8x128xf32> to vector<1x32xf32>
    %229 = vector.extract_strided_slice %225 {offsets = [3, 0], sizes = [1, 32], strides = [1, 1]} : vector<8x128xf32> to vector<1x32xf32>
    %230 = vector.extract_strided_slice %225 {offsets = [4, 0], sizes = [1, 96], strides = [1, 1]} : vector<8x128xf32> to vector<1x96xf32>
    %231 = vector.extract_strided_slice %225 {offsets = [5, 0], sizes = [1, 32], strides = [1, 1]} : vector<8x128xf32> to vector<1x32xf32>
    %232 = vector.extract_strided_slice %225 {offsets = [6, 0], sizes = [1, 64], strides = [1, 1]} : vector<8x128xf32> to vector<1x64xf32>
    %233 = vector.extract_strided_slice %225 {offsets = [7, 0], sizes = [1, 32], strides = [1, 1]} : vector<8x128xf32> to vector<1x32xf32>
    %cst_80 = arith.constant dense<0.000000e+00> : vector<16xf32>
    %234 = vector.multi_reduction <add>, %215, %cst_80 [1] : vector<16x32xf32> to vector<16xf32>
    %235 = vector.shape_cast %234 : vector<16xf32> to vector<16x1xf32>
    %cst_81 = arith.constant 3.200000e+01 : f32
    %236 = vector.broadcast %cst_81 : f32 to vector<16x1xf32>
    %237 = arith.divf %235, %236 : vector<16x1xf32>
    %238 = vector.broadcast %237 : vector<16x1xf32> to vector<16x32xf32>
    %239 = arith.subf %215, %238 : vector<16x32xf32>
    %240 = vector.broadcast %237 : vector<16x1xf32> to vector<16x32xf32>
    %241 = arith.subf %215, %240 : vector<16x32xf32>
    %242 = arith.mulf %239, %241 : vector<16x32xf32>
    %cst_82 = arith.constant dense<0.000000e+00> : vector<16xf32>
    %243 = vector.multi_reduction <add>, %242, %cst_82 [1] : vector<16x32xf32> to vector<16xf32>
    %244 = vector.shape_cast %243 : vector<16xf32> to vector<16x1xf32>
    %cst_83 = arith.constant 3.200000e+01 : f32
    %245 = vector.broadcast %cst_83 : f32 to vector<16x1xf32>
    %246 = arith.divf %244, %245 : vector<16x1xf32>
    %247 = vector.broadcast %237 : vector<16x1xf32> to vector<16x32xf32>
    %248 = arith.subf %215, %247 : vector<16x32xf32>
    %cst_84 = arith.constant 9.99999974E-6 : f32
    %249 = vector.broadcast %cst_84 : f32 to vector<16x1xf32>
    %250 = arith.addf %246, %249 : vector<16x1xf32>
    %251 = math.rsqrt %250 : vector<16x1xf32>
    %252 = vector.broadcast %251 : vector<16x1xf32> to vector<16x32xf32>
    %253 = arith.mulf %248, %252 : vector<16x32xf32>
    %254 = vector.broadcast %226 : vector<1x32xf32> to vector<16x32xf32>
    %255 = arith.mulf %253, %254 : vector<16x32xf32>
    %256 = vector.broadcast %227 : vector<1x32xf32> to vector<16x32xf32>
    %257 = arith.addf %255, %256 : vector<16x32xf32>
    %cst_85 = arith.constant dense<0.000000e+00> : vector<16x96xf32>
    %258 = tpu.matmul %257, %217, %cst_85 {dimension_numbers = #tpu.dot_dimension_numbers<[1], [0], [0], [1], [0, 0, 1, 1], [], []>} : vector<16x32xf32>, vector<32x96xf32>, vector<16x96xf32> -> vector<16x96xf32>
    %259 = vector.broadcast %230 : vector<1x96xf32> to vector<16x96xf32>
    %260 = arith.addf %258, %259 : vector<16x96xf32>
    %261 = vector.shape_cast %260 : vector<16x96xf32> to vector<2x8x96xf32>
    %cst_86 = arith.constant 0.000000e+00 : f32
    %262 = vector.broadcast %cst_86 : f32 to vector<16x32xf32>
    %263 = vector.extract_strided_slice %261 {offsets = [0, 0, 0], sizes = [2, 8, 8], strides = [1, 1, 1]} : vector<2x8x96xf32> to vector<2x8x8xf32>
    %264 = vector.extract_strided_slice %261 {offsets = [0, 0, 32], sizes = [2, 8, 8], strides = [1, 1, 1]} : vector<2x8x96xf32> to vector<2x8x8xf32>
    %265 = vector.extract_strided_slice %261 {offsets = [0, 0, 64], sizes = [2, 8, 8], strides = [1, 1, 1]} : vector<2x8x96xf32> to vector<2x8x8xf32>
    "tpu.trace_start"() <{level = 10 : i32, message = "bqd,bkd->bqk"}> : () -> ()
    %cst_87 = arith.constant dense<0.000000e+00> : vector<2x8x8xf32>
    %266 = tpu.matmul %263, %264, %cst_87 {dimension_numbers = #tpu.dot_dimension_numbers<[2], [2], [1], [1], [0, 0, 0, 1, 1, 1], [0], [0]>} : vector<2x8x8xf32>, vector<2x8x8xf32>, vector<2x8x8xf32> -> vector<2x8x8xf32>
    "tpu.trace_stop"() : () -> ()
    %267 = vector.broadcast %42 : vector<1x1x8xf32> to vector<2x8x8xf32>
    %268 = arith.addf %266, %267 : vector<2x8x8xf32>
    %cst_88 = arith.constant dense<0xFF800000> : vector<2x8xf32>
    %269 = vector.multi_reduction <maximumf>, %268, %cst_88 [2] : vector<2x8x8xf32> to vector<2x8xf32>
    %270 = vector.shape_cast %269 : vector<2x8xf32> to vector<2x8x1xf32>
    %271 = vector.broadcast %270 : vector<2x8x1xf32> to vector<2x8x8xf32>
    %272 = arith.subf %268, %271 : vector<2x8x8xf32>
    %273 = math.exp %272 : vector<2x8x8xf32>
    %cst_89 = arith.constant dense<0.000000e+00> : vector<2x8xf32>
    %274 = vector.multi_reduction <add>, %273, %cst_89 [2] : vector<2x8x8xf32> to vector<2x8xf32>
    %275 = vector.shape_cast %274 : vector<2x8xf32> to vector<2x8x1xf32>
    %276 = tpu.reciprocal %275 {approx = true} : vector<2x8x1xf32> -> vector<2x8x1xf32>
    %277 = vector.broadcast %276 : vector<2x8x1xf32> to vector<2x8x8xf32>
    %278 = arith.mulf %273, %277 : vector<2x8x8xf32>
    "tpu.trace_start"() <{level = 10 : i32, message = "bqk,bkd->bqd"}> : () -> ()
    %cst_90 = arith.constant dense<0.000000e+00> : vector<2x8x8xf32>
    %279 = tpu.matmul %278, %265, %cst_90 {dimension_numbers = #tpu.dot_dimension_numbers<[2], [1], [1], [2], [0, 0, 0, 1, 1, 2], [0], [0]>} : vector<2x8x8xf32>, vector<2x8x8xf32>, vector<2x8x8xf32> -> vector<2x8x8xf32>
    "tpu.trace_stop"() : () -> ()
    %280 = vector.shape_cast %279 : vector<2x8x8xf32> to vector<16x8xf32>
    %281 = vector.extract_strided_slice %219 {offsets = [0, 0], sizes = [8, 32], strides = [1, 1]} : vector<32x32xf32> to vector<8x32xf32>
    %cst_91 = arith.constant dense<0.000000e+00> : vector<16x32xf32>
    %282 = tpu.matmul %280, %281, %cst_91 {dimension_numbers = #tpu.dot_dimension_numbers<[1], [0], [0], [1], [0, 0, 1, 1], [], []>} : vector<16x8xf32>, vector<8x32xf32>, vector<16x32xf32> -> vector<16x32xf32>
    %283 = arith.addf %262, %282 : vector<16x32xf32>
    %284 = vector.extract_strided_slice %261 {offsets = [0, 0, 8], sizes = [2, 8, 8], strides = [1, 1, 1]} : vector<2x8x96xf32> to vector<2x8x8xf32>
    %285 = vector.extract_strided_slice %261 {offsets = [0, 0, 40], sizes = [2, 8, 8], strides = [1, 1, 1]} : vector<2x8x96xf32> to vector<2x8x8xf32>
    %286 = vector.extract_strided_slice %261 {offsets = [0, 0, 72], sizes = [2, 8, 8], strides = [1, 1, 1]} : vector<2x8x96xf32> to vector<2x8x8xf32>
    "tpu.trace_start"() <{level = 10 : i32, message = "bqd,bkd->bqk"}> : () -> ()
    %cst_92 = arith.constant dense<0.000000e+00> : vector<2x8x8xf32>
    %287 = tpu.matmul %284, %285, %cst_92 {dimension_numbers = #tpu.dot_dimension_numbers<[2], [2], [1], [1], [0, 0, 0, 1, 1, 1], [0], [0]>} : vector<2x8x8xf32>, vector<2x8x8xf32>, vector<2x8x8xf32> -> vector<2x8x8xf32>
    "tpu.trace_stop"() : () -> ()
    %288 = vector.broadcast %42 : vector<1x1x8xf32> to vector<2x8x8xf32>
    %289 = arith.addf %287, %288 : vector<2x8x8xf32>
    %cst_93 = arith.constant dense<0xFF800000> : vector<2x8xf32>
    %290 = vector.multi_reduction <maximumf>, %289, %cst_93 [2] : vector<2x8x8xf32> to vector<2x8xf32>
    %291 = vector.shape_cast %290 : vector<2x8xf32> to vector<2x8x1xf32>
    %292 = vector.broadcast %291 : vector<2x8x1xf32> to vector<2x8x8xf32>
    %293 = arith.subf %289, %292 : vector<2x8x8xf32>
    %294 = math.exp %293 : vector<2x8x8xf32>
    %cst_94 = arith.constant dense<0.000000e+00> : vector<2x8xf32>
    %295 = vector.multi_reduction <add>, %294, %cst_94 [2] : vector<2x8x8xf32> to vector<2x8xf32>
    %296 = vector.shape_cast %295 : vector<2x8xf32> to vector<2x8x1xf32>
    %297 = tpu.reciprocal %296 {approx = true} : vector<2x8x1xf32> -> vector<2x8x1xf32>
    %298 = vector.broadcast %297 : vector<2x8x1xf32> to vector<2x8x8xf32>
    %299 = arith.mulf %294, %298 : vector<2x8x8xf32>
    "tpu.trace_start"() <{level = 10 : i32, message = "bqk,bkd->bqd"}> : () -> ()
    %cst_95 = arith.constant dense<0.000000e+00> : vector<2x8x8xf32>
    %300 = tpu.matmul %299, %286, %cst_95 {dimension_numbers = #tpu.dot_dimension_numbers<[2], [1], [1], [2], [0, 0, 0, 1, 1, 2], [0], [0]>} : vector<2x8x8xf32>, vector<2x8x8xf32>, vector<2x8x8xf32> -> vector<2x8x8xf32>
    "tpu.trace_stop"() : () -> ()
    %301 = vector.shape_cast %300 : vector<2x8x8xf32> to vector<16x8xf32>
    %302 = vector.extract_strided_slice %219 {offsets = [8, 0], sizes = [8, 32], strides = [1, 1]} : vector<32x32xf32> to vector<8x32xf32>
    %cst_96 = arith.constant dense<0.000000e+00> : vector<16x32xf32>
    %303 = tpu.matmul %301, %302, %cst_96 {dimension_numbers = #tpu.dot_dimension_numbers<[1], [0], [0], [1], [0, 0, 1, 1], [], []>} : vector<16x8xf32>, vector<8x32xf32>, vector<16x32xf32> -> vector<16x32xf32>
    %304 = arith.addf %283, %303 : vector<16x32xf32>
    %305 = vector.extract_strided_slice %261 {offsets = [0, 0, 16], sizes = [2, 8, 8], strides = [1, 1, 1]} : vector<2x8x96xf32> to vector<2x8x8xf32>
    %306 = vector.extract_strided_slice %261 {offsets = [0, 0, 48], sizes = [2, 8, 8], strides = [1, 1, 1]} : vector<2x8x96xf32> to vector<2x8x8xf32>
    %307 = vector.extract_strided_slice %261 {offsets = [0, 0, 80], sizes = [2, 8, 8], strides = [1, 1, 1]} : vector<2x8x96xf32> to vector<2x8x8xf32>
    "tpu.trace_start"() <{level = 10 : i32, message = "bqd,bkd->bqk"}> : () -> ()
    %cst_97 = arith.constant dense<0.000000e+00> : vector<2x8x8xf32>
    %308 = tpu.matmul %305, %306, %cst_97 {dimension_numbers = #tpu.dot_dimension_numbers<[2], [2], [1], [1], [0, 0, 0, 1, 1, 1], [0], [0]>} : vector<2x8x8xf32>, vector<2x8x8xf32>, vector<2x8x8xf32> -> vector<2x8x8xf32>
    "tpu.trace_stop"() : () -> ()
    %309 = vector.broadcast %42 : vector<1x1x8xf32> to vector<2x8x8xf32>
    %310 = arith.addf %308, %309 : vector<2x8x8xf32>
    %cst_98 = arith.constant dense<0xFF800000> : vector<2x8xf32>
    %311 = vector.multi_reduction <maximumf>, %310, %cst_98 [2] : vector<2x8x8xf32> to vector<2x8xf32>
    %312 = vector.shape_cast %311 : vector<2x8xf32> to vector<2x8x1xf32>
    %313 = vector.broadcast %312 : vector<2x8x1xf32> to vector<2x8x8xf32>
    %314 = arith.subf %310, %313 : vector<2x8x8xf32>
    %315 = math.exp %314 : vector<2x8x8xf32>
    %cst_99 = arith.constant dense<0.000000e+00> : vector<2x8xf32>
    %316 = vector.multi_reduction <add>, %315, %cst_99 [2] : vector<2x8x8xf32> to vector<2x8xf32>
    %317 = vector.shape_cast %316 : vector<2x8xf32> to vector<2x8x1xf32>
    %318 = tpu.reciprocal %317 {approx = true} : vector<2x8x1xf32> -> vector<2x8x1xf32>
    %319 = vector.broadcast %318 : vector<2x8x1xf32> to vector<2x8x8xf32>
    %320 = arith.mulf %315, %319 : vector<2x8x8xf32>
    "tpu.trace_start"() <{level = 10 : i32, message = "bqk,bkd->bqd"}> : () -> ()
    %cst_100 = arith.constant dense<0.000000e+00> : vector<2x8x8xf32>
    %321 = tpu.matmul %320, %307, %cst_100 {dimension_numbers = #tpu.dot_dimension_numbers<[2], [1], [1], [2], [0, 0, 0, 1, 1, 2], [0], [0]>} : vector<2x8x8xf32>, vector<2x8x8xf32>, vector<2x8x8xf32> -> vector<2x8x8xf32>
    "tpu.trace_stop"() : () -> ()
    %322 = vector.shape_cast %321 : vector<2x8x8xf32> to vector<16x8xf32>
    %323 = vector.extract_strided_slice %219 {offsets = [16, 0], sizes = [8, 32], strides = [1, 1]} : vector<32x32xf32> to vector<8x32xf32>
    %cst_101 = arith.constant dense<0.000000e+00> : vector<16x32xf32>
    %324 = tpu.matmul %322, %323, %cst_101 {dimension_numbers = #tpu.dot_dimension_numbers<[1], [0], [0], [1], [0, 0, 1, 1], [], []>} : vector<16x8xf32>, vector<8x32xf32>, vector<16x32xf32> -> vector<16x32xf32>
    %325 = arith.addf %304, %324 : vector<16x32xf32>
    %326 = vector.extract_strided_slice %261 {offsets = [0, 0, 24], sizes = [2, 8, 8], strides = [1, 1, 1]} : vector<2x8x96xf32> to vector<2x8x8xf32>
    %327 = vector.extract_strided_slice %261 {offsets = [0, 0, 56], sizes = [2, 8, 8], strides = [1, 1, 1]} : vector<2x8x96xf32> to vector<2x8x8xf32>
    %328 = vector.extract_strided_slice %261 {offsets = [0, 0, 88], sizes = [2, 8, 8], strides = [1, 1, 1]} : vector<2x8x96xf32> to vector<2x8x8xf32>
    "tpu.trace_start"() <{level = 10 : i32, message = "bqd,bkd->bqk"}> : () -> ()
    %cst_102 = arith.constant dense<0.000000e+00> : vector<2x8x8xf32>
    %329 = tpu.matmul %326, %327, %cst_102 {dimension_numbers = #tpu.dot_dimension_numbers<[2], [2], [1], [1], [0, 0, 0, 1, 1, 1], [0], [0]>} : vector<2x8x8xf32>, vector<2x8x8xf32>, vector<2x8x8xf32> -> vector<2x8x8xf32>
    "tpu.trace_stop"() : () -> ()
    %330 = vector.broadcast %42 : vector<1x1x8xf32> to vector<2x8x8xf32>
    %331 = arith.addf %329, %330 : vector<2x8x8xf32>
    %cst_103 = arith.constant dense<0xFF800000> : vector<2x8xf32>
    %332 = vector.multi_reduction <maximumf>, %331, %cst_103 [2] : vector<2x8x8xf32> to vector<2x8xf32>
    %333 = vector.shape_cast %332 : vector<2x8xf32> to vector<2x8x1xf32>
    %334 = vector.broadcast %333 : vector<2x8x1xf32> to vector<2x8x8xf32>
    %335 = arith.subf %331, %334 : vector<2x8x8xf32>
    %336 = math.exp %335 : vector<2x8x8xf32>
    %cst_104 = arith.constant dense<0.000000e+00> : vector<2x8xf32>
    %337 = vector.multi_reduction <add>, %336, %cst_104 [2] : vector<2x8x8xf32> to vector<2x8xf32>
    %338 = vector.shape_cast %337 : vector<2x8xf32> to vector<2x8x1xf32>
    %339 = tpu.reciprocal %338 {approx = true} : vector<2x8x1xf32> -> vector<2x8x1xf32>
    %340 = vector.broadcast %339 : vector<2x8x1xf32> to vector<2x8x8xf32>
    %341 = arith.mulf %336, %340 : vector<2x8x8xf32>
    "tpu.trace_start"() <{level = 10 : i32, message = "bqk,bkd->bqd"}> : () -> ()
    %cst_105 = arith.constant dense<0.000000e+00> : vector<2x8x8xf32>
    %342 = tpu.matmul %341, %328, %cst_105 {dimension_numbers = #tpu.dot_dimension_numbers<[2], [1], [1], [2], [0, 0, 0, 1, 1, 2], [0], [0]>} : vector<2x8x8xf32>, vector<2x8x8xf32>, vector<2x8x8xf32> -> vector<2x8x8xf32>
    "tpu.trace_stop"() : () -> ()
    %343 = vector.shape_cast %342 : vector<2x8x8xf32> to vector<16x8xf32>
    %344 = vector.extract_strided_slice %219 {offsets = [24, 0], sizes = [8, 32], strides = [1, 1]} : vector<32x32xf32> to vector<8x32xf32>
    %cst_106 = arith.constant dense<0.000000e+00> : vector<16x32xf32>
    %345 = tpu.matmul %343, %344, %cst_106 {dimension_numbers = #tpu.dot_dimension_numbers<[1], [0], [0], [1], [0, 0, 1, 1], [], []>} : vector<16x8xf32>, vector<8x32xf32>, vector<16x32xf32> -> vector<16x32xf32>
    %346 = arith.addf %325, %345 : vector<16x32xf32>
    %347 = arith.addf %215, %346 : vector<16x32xf32>
    %348 = vector.broadcast %231 : vector<1x32xf32> to vector<16x32xf32>
    %349 = arith.addf %347, %348 : vector<16x32xf32>
    %cst_107 = arith.constant dense<0.000000e+00> : vector<16xf32>
    %350 = vector.multi_reduction <add>, %349, %cst_107 [1] : vector<16x32xf32> to vector<16xf32>
    %351 = vector.shape_cast %350 : vector<16xf32> to vector<16x1xf32>
    %cst_108 = arith.constant 3.200000e+01 : f32
    %352 = vector.broadcast %cst_108 : f32 to vector<16x1xf32>
    %353 = arith.divf %351, %352 : vector<16x1xf32>
    %354 = vector.broadcast %353 : vector<16x1xf32> to vector<16x32xf32>
    %355 = arith.subf %349, %354 : vector<16x32xf32>
    %356 = vector.broadcast %353 : vector<16x1xf32> to vector<16x32xf32>
    %357 = arith.subf %349, %356 : vector<16x32xf32>
    %358 = arith.mulf %355, %357 : vector<16x32xf32>
    %cst_109 = arith.constant dense<0.000000e+00> : vector<16xf32>
    %359 = vector.multi_reduction <add>, %358, %cst_109 [1] : vector<16x32xf32> to vector<16xf32>
    %360 = vector.shape_cast %359 : vector<16xf32> to vector<16x1xf32>
    %cst_110 = arith.constant 3.200000e+01 : f32
    %361 = vector.broadcast %cst_110 : f32 to vector<16x1xf32>
    %362 = arith.divf %360, %361 : vector<16x1xf32>
    %363 = vector.broadcast %353 : vector<16x1xf32> to vector<16x32xf32>
    %364 = arith.subf %349, %363 : vector<16x32xf32>
    %cst_111 = arith.constant 9.99999974E-6 : f32
    %365 = vector.broadcast %cst_111 : f32 to vector<16x1xf32>
    %366 = arith.addf %362, %365 : vector<16x1xf32>
    %367 = math.rsqrt %366 : vector<16x1xf32>
    %368 = vector.broadcast %367 : vector<16x1xf32> to vector<16x32xf32>
    %369 = arith.mulf %364, %368 : vector<16x32xf32>
    %370 = vector.broadcast %228 : vector<1x32xf32> to vector<16x32xf32>
    %371 = arith.mulf %369, %370 : vector<16x32xf32>
    %372 = vector.broadcast %229 : vector<1x32xf32> to vector<16x32xf32>
    %373 = arith.addf %371, %372 : vector<16x32xf32>
    %cst_112 = arith.constant dense<0.000000e+00> : vector<16x64xf32>
    %374 = tpu.matmul %373, %221, %cst_112 {dimension_numbers = #tpu.dot_dimension_numbers<[1], [0], [0], [1], [0, 0, 1, 1], [], []>} : vector<16x32xf32>, vector<32x64xf32>, vector<16x64xf32> -> vector<16x64xf32>
    %375 = vector.broadcast %232 : vector<1x64xf32> to vector<16x64xf32>
    %376 = arith.addf %374, %375 : vector<16x64xf32>
    %cst_113 = arith.constant 1.702000e+00 : f32
    %377 = vector.broadcast %cst_113 : f32 to vector<16x64xf32>
    %378 = arith.mulf %377, %376 : vector<16x64xf32>
    %379 = arith.negf %378 : vector<16x64xf32>
    %380 = math.exp %379 : vector<16x64xf32>
    %cst_114 = arith.constant 1.000000e+00 : f32
    %381 = vector.broadcast %cst_114 : f32 to vector<16x64xf32>
    %382 = arith.addf %381, %380 : vector<16x64xf32>
    %383 = arith.divf %381, %382 : vector<16x64xf32>
    %384 = arith.mulf %376, %383 : vector<16x64xf32>
    %cst_115 = arith.constant dense<0.000000e+00> : vector<16x32xf32>
    %385 = tpu.matmul %384, %223, %cst_115 {dimension_numbers = #tpu.dot_dimension_numbers<[1], [0], [0], [1], [0, 0, 1, 1], [], []>} : vector<16x64xf32>, vector<64x32xf32>, vector<16x32xf32> -> vector<16x32xf32>
    %386 = vector.broadcast %233 : vector<1x32xf32> to vector<16x32xf32>
    %387 = arith.addf %385, %386 : vector<16x32xf32>
    %388 = arith.addf %349, %387 : vector<16x32xf32>
    %389 = vector.shape_cast %388 : vector<16x32xf32> to vector<2x8x32xf32>
    %390 = vector.extract_strided_slice %389 {offsets = [0, 0, 0], sizes = [2, 1, 32], strides = [1, 1, 1]} : vector<2x8x32xf32> to vector<2x1x32xf32>
    %391 = vector.shape_cast %390 : vector<2x1x32xf32> to vector<2x32xf32>
    %392 = vector.extract_strided_slice %0 {offsets = [2, 0], sizes = [1, 32], strides = [1, 1]} : vector<8x128xf32> to vector<1x32xf32>
    %393 = vector.extract_strided_slice %0 {offsets = [3, 0], sizes = [1, 32], strides = [1, 1]} : vector<8x128xf32> to vector<1x32xf32>
    %cst_116 = arith.constant dense<0.000000e+00> : vector<2xf32>
    %394 = vector.multi_reduction <add>, %391, %cst_116 [1] : vector<2x32xf32> to vector<2xf32>
    %395 = vector.shape_cast %394 : vector<2xf32> to vector<2x1xf32>
    %cst_117 = arith.constant 3.200000e+01 : f32
    %396 = vector.broadcast %cst_117 : f32 to vector<2x1xf32>
    %397 = arith.divf %395, %396 : vector<2x1xf32>
    %398 = vector.broadcast %397 : vector<2x1xf32> to vector<2x32xf32>
    %399 = arith.subf %391, %398 : vector<2x32xf32>
    %400 = vector.broadcast %397 : vector<2x1xf32> to vector<2x32xf32>
    %401 = arith.subf %391, %400 : vector<2x32xf32>
    %402 = arith.mulf %399, %401 : vector<2x32xf32>
    %cst_118 = arith.constant dense<0.000000e+00> : vector<2xf32>
    %403 = vector.multi_reduction <add>, %402, %cst_118 [1] : vector<2x32xf32> to vector<2xf32>
    %404 = vector.shape_cast %403 : vector<2xf32> to vector<2x1xf32>
    %cst_119 = arith.constant 3.200000e+01 : f32
    %405 = vector.broadcast %cst_119 : f32 to vector<2x1xf32>
    %406 = arith.divf %404, %405 : vector<2x1xf32>
    %407 = vector.broadcast %397 : vector<2x1xf32> to vector<2x32xf32>
    %408 = arith.subf %391, %407 : vector<2x32xf32>
    %cst_120 = arith.constant 9.99999974E-6 : f32
    %409 = vector.broadcast %cst_120 : f32 to vector<2x1xf32>
    %410 = arith.addf %406, %409 : vector<2x1xf32>
    %411 = math.rsqrt %410 : vector<2x1xf32>
    %412 = vector.broadcast %411 : vector<2x1xf32> to vector<2x32xf32>
    %413 = arith.mulf %408, %412 : vector<2x32xf32>
    %414 = vector.broadcast %392 : vector<1x32xf32> to vector<2x32xf32>
    %415 = arith.mulf %413, %414 : vector<2x32xf32>
    %416 = vector.broadcast %393 : vector<1x32xf32> to vector<2x32xf32>
    %417 = arith.addf %415, %416 : vector<2x32xf32>
    %c0_121 = arith.constant 0 : index
    %c0_122 = arith.constant 0 : index
    %c0_123 = arith.constant 0 : index
    %418 = vector.load %arg9[%c0_121, %c0_122, %c0_123] : memref<2x8x32xf32, #tpu.memory_space<vmem>>, vector<2x8x32xf32>
    %419 = vector.shape_cast %418 : vector<2x8x32xf32> to vector<16x32xf32>
    %420 = tpu.iota {dimensions = array<i32: 0>} : vector<8x8xi32>
    %421 = tpu.iota {dimensions = array<i32: 1>} : vector<8x8xi32>
    %422 = arith.cmpi sgt, %421, %420 : vector<8x8xi32>
    %cst_124 = arith.constant -1.000000e+09 : f32
    %cst_125 = arith.constant 0.000000e+00 : f32
    %423 = vector.broadcast %cst_124 : f32 to vector<8x8xf32>
    %424 = vector.broadcast %cst_125 : f32 to vector<8x8xf32>
    %425 = arith.select %422, %423, %424 : vector<8x8xi1>, vector<8x8xf32>
    %c0_126 = arith.constant 0 : index
    %c0_127 = arith.constant 0 : index
    %426 = vector.load %arg10[%c0_126, %c0_127] : memref<2x8xf32, #tpu.memory_space<vmem>>, vector<2x8xf32>
    %cst_128 = arith.constant 1.000000e+00 : f32
    %427 = vector.broadcast %cst_128 : f32 to vector<2x8xf32>
    %428 = arith.subf %427, %426 : vector<2x8xf32>
    %cst_129 = arith.constant -1.000000e+09 : f32
    %429 = vector.broadcast %cst_129 : f32 to vector<2x8xf32>
    %430 = arith.mulf %428, %429 : vector<2x8xf32>
    %431 = vector.shape_cast %425 : vector<8x8xf32> to vector<1x8x8xf32>
    %432 = vector.shape_cast %430 : vector<2x8xf32> to vector<2x1x8xf32>
    %433 = vector.broadcast %431 : vector<1x8x8xf32> to vector<2x8x8xf32>
    %434 = vector.broadcast %432 : vector<2x1x8xf32> to vector<2x8x8xf32>
    %435 = arith.addf %433, %434 : vector<2x8x8xf32>
    %c0_130 = arith.constant 0 : index
    %c0_131 = arith.constant 0 : index
    %c0_132 = arith.constant 0 : index
    %436 = vector.load %arg12[%c0_130, %c0_131, %c0_132] : memref<2x32x96xf32, #tpu.memory_space<vmem>>, vector<1x32x96xf32>
    %437 = vector.shape_cast %436 : vector<1x32x96xf32> to vector<32x96xf32>
    %c0_133 = arith.constant 0 : index
    %c0_134 = arith.constant 0 : index
    %c0_135 = arith.constant 0 : index
    %438 = vector.load %arg13[%c0_133, %c0_134, %c0_135] : memref<2x32x32xf32, #tpu.memory_space<vmem>>, vector<1x32x32xf32>
    %439 = vector.shape_cast %438 : vector<1x32x32xf32> to vector<32x32xf32>
    %c0_136 = arith.constant 0 : index
    %c0_137 = arith.constant 0 : index
    %c0_138 = arith.constant 0 : index
    %440 = vector.load %arg14[%c0_136, %c0_137, %c0_138] : memref<2x32x64xf32, #tpu.memory_space<vmem>>, vector<1x32x64xf32>
    %441 = vector.shape_cast %440 : vector<1x32x64xf32> to vector<32x64xf32>
    %c0_139 = arith.constant 0 : index
    %c0_140 = arith.constant 0 : index
    %c0_141 = arith.constant 0 : index
    %442 = vector.load %arg15[%c0_139, %c0_140, %c0_141] : memref<2x64x32xf32, #tpu.memory_space<vmem>>, vector<1x64x32xf32>
    %443 = vector.shape_cast %442 : vector<1x64x32xf32> to vector<64x32xf32>
    %c0_142 = arith.constant 0 : index
    %c0_143 = arith.constant 0 : index
    %c0_144 = arith.constant 0 : index
    %444 = vector.load %arg16[%c0_142, %c0_143, %c0_144] : memref<2x8x128xf32, #tpu.memory_space<vmem>>, vector<1x8x128xf32>
    %445 = vector.shape_cast %444 : vector<1x8x128xf32> to vector<8x128xf32>
    %446 = vector.extract_strided_slice %445 {offsets = [0, 0], sizes = [1, 32], strides = [1, 1]} : vector<8x128xf32> to vector<1x32xf32>
    %447 = vector.extract_strided_slice %445 {offsets = [1, 0], sizes = [1, 32], strides = [1, 1]} : vector<8x128xf32> to vector<1x32xf32>
    %448 = vector.extract_strided_slice %445 {offsets = [2, 0], sizes = [1, 32], strides = [1, 1]} : vector<8x128xf32> to vector<1x32xf32>
    %449 = vector.extract_strided_slice %445 {offsets = [3, 0], sizes = [1, 32], strides = [1, 1]} : vector<8x128xf32> to vector<1x32xf32>
    %450 = vector.extract_strided_slice %445 {offsets = [4, 0], sizes = [1, 96], strides = [1, 1]} : vector<8x128xf32> to vector<1x96xf32>
    %451 = vector.extract_strided_slice %445 {offsets = [5, 0], sizes = [1, 32], strides = [1, 1]} : vector<8x128xf32> to vector<1x32xf32>
    %452 = vector.extract_strided_slice %445 {offsets = [6, 0], sizes = [1, 64], strides = [1, 1]} : vector<8x128xf32> to vector<1x64xf32>
    %453 = vector.extract_strided_slice %445 {offsets = [7, 0], sizes = [1, 32], strides = [1, 1]} : vector<8x128xf32> to vector<1x32xf32>
    %cst_145 = arith.constant dense<0.000000e+00> : vector<16xf32>
    %454 = vector.multi_reduction <add>, %419, %cst_145 [1] : vector<16x32xf32> to vector<16xf32>
    %455 = vector.shape_cast %454 : vector<16xf32> to vector<16x1xf32>
    %cst_146 = arith.constant 3.200000e+01 : f32
    %456 = vector.broadcast %cst_146 : f32 to vector<16x1xf32>
    %457 = arith.divf %455, %456 : vector<16x1xf32>
    %458 = vector.broadcast %457 : vector<16x1xf32> to vector<16x32xf32>
    %459 = arith.subf %419, %458 : vector<16x32xf32>
    %460 = vector.broadcast %457 : vector<16x1xf32> to vector<16x32xf32>
    %461 = arith.subf %419, %460 : vector<16x32xf32>
    %462 = arith.mulf %459, %461 : vector<16x32xf32>
    %cst_147 = arith.constant dense<0.000000e+00> : vector<16xf32>
    %463 = vector.multi_reduction <add>, %462, %cst_147 [1] : vector<16x32xf32> to vector<16xf32>
    %464 = vector.shape_cast %463 : vector<16xf32> to vector<16x1xf32>
    %cst_148 = arith.constant 3.200000e+01 : f32
    %465 = vector.broadcast %cst_148 : f32 to vector<16x1xf32>
    %466 = arith.divf %464, %465 : vector<16x1xf32>
    %467 = vector.broadcast %457 : vector<16x1xf32> to vector<16x32xf32>
    %468 = arith.subf %419, %467 : vector<16x32xf32>
    %cst_149 = arith.constant 9.99999974E-6 : f32
    %469 = vector.broadcast %cst_149 : f32 to vector<16x1xf32>
    %470 = arith.addf %466, %469 : vector<16x1xf32>
    %471 = math.rsqrt %470 : vector<16x1xf32>
    %472 = vector.broadcast %471 : vector<16x1xf32> to vector<16x32xf32>
    %473 = arith.mulf %468, %472 : vector<16x32xf32>
    %474 = vector.broadcast %446 : vector<1x32xf32> to vector<16x32xf32>
    %475 = arith.mulf %473, %474 : vector<16x32xf32>
    %476 = vector.broadcast %447 : vector<1x32xf32> to vector<16x32xf32>
    %477 = arith.addf %475, %476 : vector<16x32xf32>
    %cst_150 = arith.constant dense<0.000000e+00> : vector<16x96xf32>
    %478 = tpu.matmul %477, %437, %cst_150 {dimension_numbers = #tpu.dot_dimension_numbers<[1], [0], [0], [1], [0, 0, 1, 1], [], []>} : vector<16x32xf32>, vector<32x96xf32>, vector<16x96xf32> -> vector<16x96xf32>
    %479 = vector.broadcast %450 : vector<1x96xf32> to vector<16x96xf32>
    %480 = arith.addf %478, %479 : vector<16x96xf32>
    %481 = vector.shape_cast %480 : vector<16x96xf32> to vector<2x8x96xf32>
    %cst_151 = arith.constant 0.000000e+00 : f32
    %482 = vector.broadcast %cst_151 : f32 to vector<16x32xf32>
    %483 = vector.extract_strided_slice %481 {offsets = [0, 0, 0], sizes = [2, 8, 8], strides = [1, 1, 1]} : vector<2x8x96xf32> to vector<2x8x8xf32>
    %484 = vector.extract_strided_slice %481 {offsets = [0, 0, 32], sizes = [2, 8, 8], strides = [1, 1, 1]} : vector<2x8x96xf32> to vector<2x8x8xf32>
    %485 = vector.extract_strided_slice %481 {offsets = [0, 0, 64], sizes = [2, 8, 8], strides = [1, 1, 1]} : vector<2x8x96xf32> to vector<2x8x8xf32>
    "tpu.trace_start"() <{level = 10 : i32, message = "bqd,bkd->bqk"}> : () -> ()
    %cst_152 = arith.constant dense<0.000000e+00> : vector<2x8x8xf32>
    %486 = tpu.matmul %483, %484, %cst_152 {dimension_numbers = #tpu.dot_dimension_numbers<[2], [2], [1], [1], [0, 0, 0, 1, 1, 1], [0], [0]>} : vector<2x8x8xf32>, vector<2x8x8xf32>, vector<2x8x8xf32> -> vector<2x8x8xf32>
    "tpu.trace_stop"() : () -> ()
    %487 = arith.addf %486, %435 : vector<2x8x8xf32>
    %cst_153 = arith.constant dense<0xFF800000> : vector<2x8xf32>
    %488 = vector.multi_reduction <maximumf>, %487, %cst_153 [2] : vector<2x8x8xf32> to vector<2x8xf32>
    %489 = vector.shape_cast %488 : vector<2x8xf32> to vector<2x8x1xf32>
    %490 = vector.broadcast %489 : vector<2x8x1xf32> to vector<2x8x8xf32>
    %491 = arith.subf %487, %490 : vector<2x8x8xf32>
    %492 = math.exp %491 : vector<2x8x8xf32>
    %cst_154 = arith.constant dense<0.000000e+00> : vector<2x8xf32>
    %493 = vector.multi_reduction <add>, %492, %cst_154 [2] : vector<2x8x8xf32> to vector<2x8xf32>
    %494 = vector.shape_cast %493 : vector<2x8xf32> to vector<2x8x1xf32>
    %495 = tpu.reciprocal %494 {approx = true} : vector<2x8x1xf32> -> vector<2x8x1xf32>
    %496 = vector.broadcast %495 : vector<2x8x1xf32> to vector<2x8x8xf32>
    %497 = arith.mulf %492, %496 : vector<2x8x8xf32>
    "tpu.trace_start"() <{level = 10 : i32, message = "bqk,bkd->bqd"}> : () -> ()
    %cst_155 = arith.constant dense<0.000000e+00> : vector<2x8x8xf32>
    %498 = tpu.matmul %497, %485, %cst_155 {dimension_numbers = #tpu.dot_dimension_numbers<[2], [1], [1], [2], [0, 0, 0, 1, 1, 2], [0], [0]>} : vector<2x8x8xf32>, vector<2x8x8xf32>, vector<2x8x8xf32> -> vector<2x8x8xf32>
    "tpu.trace_stop"() : () -> ()
    %499 = vector.shape_cast %498 : vector<2x8x8xf32> to vector<16x8xf32>
    %500 = vector.extract_strided_slice %439 {offsets = [0, 0], sizes = [8, 32], strides = [1, 1]} : vector<32x32xf32> to vector<8x32xf32>
    %cst_156 = arith.constant dense<0.000000e+00> : vector<16x32xf32>
    %501 = tpu.matmul %499, %500, %cst_156 {dimension_numbers = #tpu.dot_dimension_numbers<[1], [0], [0], [1], [0, 0, 1, 1], [], []>} : vector<16x8xf32>, vector<8x32xf32>, vector<16x32xf32> -> vector<16x32xf32>
    %502 = arith.addf %482, %501 : vector<16x32xf32>
    %503 = vector.extract_strided_slice %481 {offsets = [0, 0, 8], sizes = [2, 8, 8], strides = [1, 1, 1]} : vector<2x8x96xf32> to vector<2x8x8xf32>
    %504 = vector.extract_strided_slice %481 {offsets = [0, 0, 40], sizes = [2, 8, 8], strides = [1, 1, 1]} : vector<2x8x96xf32> to vector<2x8x8xf32>
    %505 = vector.extract_strided_slice %481 {offsets = [0, 0, 72], sizes = [2, 8, 8], strides = [1, 1, 1]} : vector<2x8x96xf32> to vector<2x8x8xf32>
    "tpu.trace_start"() <{level = 10 : i32, message = "bqd,bkd->bqk"}> : () -> ()
    %cst_157 = arith.constant dense<0.000000e+00> : vector<2x8x8xf32>
    %506 = tpu.matmul %503, %504, %cst_157 {dimension_numbers = #tpu.dot_dimension_numbers<[2], [2], [1], [1], [0, 0, 0, 1, 1, 1], [0], [0]>} : vector<2x8x8xf32>, vector<2x8x8xf32>, vector<2x8x8xf32> -> vector<2x8x8xf32>
    "tpu.trace_stop"() : () -> ()
    %507 = arith.addf %506, %435 : vector<2x8x8xf32>
    %cst_158 = arith.constant dense<0xFF800000> : vector<2x8xf32>
    %508 = vector.multi_reduction <maximumf>, %507, %cst_158 [2] : vector<2x8x8xf32> to vector<2x8xf32>
    %509 = vector.shape_cast %508 : vector<2x8xf32> to vector<2x8x1xf32>
    %510 = vector.broadcast %509 : vector<2x8x1xf32> to vector<2x8x8xf32>
    %511 = arith.subf %507, %510 : vector<2x8x8xf32>
    %512 = math.exp %511 : vector<2x8x8xf32>
    %cst_159 = arith.constant dense<0.000000e+00> : vector<2x8xf32>
    %513 = vector.multi_reduction <add>, %512, %cst_159 [2] : vector<2x8x8xf32> to vector<2x8xf32>
    %514 = vector.shape_cast %513 : vector<2x8xf32> to vector<2x8x1xf32>
    %515 = tpu.reciprocal %514 {approx = true} : vector<2x8x1xf32> -> vector<2x8x1xf32>
    %516 = vector.broadcast %515 : vector<2x8x1xf32> to vector<2x8x8xf32>
    %517 = arith.mulf %512, %516 : vector<2x8x8xf32>
    "tpu.trace_start"() <{level = 10 : i32, message = "bqk,bkd->bqd"}> : () -> ()
    %cst_160 = arith.constant dense<0.000000e+00> : vector<2x8x8xf32>
    %518 = tpu.matmul %517, %505, %cst_160 {dimension_numbers = #tpu.dot_dimension_numbers<[2], [1], [1], [2], [0, 0, 0, 1, 1, 2], [0], [0]>} : vector<2x8x8xf32>, vector<2x8x8xf32>, vector<2x8x8xf32> -> vector<2x8x8xf32>
    "tpu.trace_stop"() : () -> ()
    %519 = vector.shape_cast %518 : vector<2x8x8xf32> to vector<16x8xf32>
    %520 = vector.extract_strided_slice %439 {offsets = [8, 0], sizes = [8, 32], strides = [1, 1]} : vector<32x32xf32> to vector<8x32xf32>
    %cst_161 = arith.constant dense<0.000000e+00> : vector<16x32xf32>
    %521 = tpu.matmul %519, %520, %cst_161 {dimension_numbers = #tpu.dot_dimension_numbers<[1], [0], [0], [1], [0, 0, 1, 1], [], []>} : vector<16x8xf32>, vector<8x32xf32>, vector<16x32xf32> -> vector<16x32xf32>
    %522 = arith.addf %502, %521 : vector<16x32xf32>
    %523 = vector.extract_strided_slice %481 {offsets = [0, 0, 16], sizes = [2, 8, 8], strides = [1, 1, 1]} : vector<2x8x96xf32> to vector<2x8x8xf32>
    %524 = vector.extract_strided_slice %481 {offsets = [0, 0, 48], sizes = [2, 8, 8], strides = [1, 1, 1]} : vector<2x8x96xf32> to vector<2x8x8xf32>
    %525 = vector.extract_strided_slice %481 {offsets = [0, 0, 80], sizes = [2, 8, 8], strides = [1, 1, 1]} : vector<2x8x96xf32> to vector<2x8x8xf32>
    "tpu.trace_start"() <{level = 10 : i32, message = "bqd,bkd->bqk"}> : () -> ()
    %cst_162 = arith.constant dense<0.000000e+00> : vector<2x8x8xf32>
    %526 = tpu.matmul %523, %524, %cst_162 {dimension_numbers = #tpu.dot_dimension_numbers<[2], [2], [1], [1], [0, 0, 0, 1, 1, 1], [0], [0]>} : vector<2x8x8xf32>, vector<2x8x8xf32>, vector<2x8x8xf32> -> vector<2x8x8xf32>
    "tpu.trace_stop"() : () -> ()
    %527 = arith.addf %526, %435 : vector<2x8x8xf32>
    %cst_163 = arith.constant dense<0xFF800000> : vector<2x8xf32>
    %528 = vector.multi_reduction <maximumf>, %527, %cst_163 [2] : vector<2x8x8xf32> to vector<2x8xf32>
    %529 = vector.shape_cast %528 : vector<2x8xf32> to vector<2x8x1xf32>
    %530 = vector.broadcast %529 : vector<2x8x1xf32> to vector<2x8x8xf32>
    %531 = arith.subf %527, %530 : vector<2x8x8xf32>
    %532 = math.exp %531 : vector<2x8x8xf32>
    %cst_164 = arith.constant dense<0.000000e+00> : vector<2x8xf32>
    %533 = vector.multi_reduction <add>, %532, %cst_164 [2] : vector<2x8x8xf32> to vector<2x8xf32>
    %534 = vector.shape_cast %533 : vector<2x8xf32> to vector<2x8x1xf32>
    %535 = tpu.reciprocal %534 {approx = true} : vector<2x8x1xf32> -> vector<2x8x1xf32>
    %536 = vector.broadcast %535 : vector<2x8x1xf32> to vector<2x8x8xf32>
    %537 = arith.mulf %532, %536 : vector<2x8x8xf32>
    "tpu.trace_start"() <{level = 10 : i32, message = "bqk,bkd->bqd"}> : () -> ()
    %cst_165 = arith.constant dense<0.000000e+00> : vector<2x8x8xf32>
    %538 = tpu.matmul %537, %525, %cst_165 {dimension_numbers = #tpu.dot_dimension_numbers<[2], [1], [1], [2], [0, 0, 0, 1, 1, 2], [0], [0]>} : vector<2x8x8xf32>, vector<2x8x8xf32>, vector<2x8x8xf32> -> vector<2x8x8xf32>
    "tpu.trace_stop"() : () -> ()
    %539 = vector.shape_cast %538 : vector<2x8x8xf32> to vector<16x8xf32>
    %540 = vector.extract_strided_slice %439 {offsets = [16, 0], sizes = [8, 32], strides = [1, 1]} : vector<32x32xf32> to vector<8x32xf32>
    %cst_166 = arith.constant dense<0.000000e+00> : vector<16x32xf32>
    %541 = tpu.matmul %539, %540, %cst_166 {dimension_numbers = #tpu.dot_dimension_numbers<[1], [0], [0], [1], [0, 0, 1, 1], [], []>} : vector<16x8xf32>, vector<8x32xf32>, vector<16x32xf32> -> vector<16x32xf32>
    %542 = arith.addf %522, %541 : vector<16x32xf32>
    %543 = vector.extract_strided_slice %481 {offsets = [0, 0, 24], sizes = [2, 8, 8], strides = [1, 1, 1]} : vector<2x8x96xf32> to vector<2x8x8xf32>
    %544 = vector.extract_strided_slice %481 {offsets = [0, 0, 56], sizes = [2, 8, 8], strides = [1, 1, 1]} : vector<2x8x96xf32> to vector<2x8x8xf32>
    %545 = vector.extract_strided_slice %481 {offsets = [0, 0, 88], sizes = [2, 8, 8], strides = [1, 1, 1]} : vector<2x8x96xf32> to vector<2x8x8xf32>
    "tpu.trace_start"() <{level = 10 : i32, message = "bqd,bkd->bqk"}> : () -> ()
    %cst_167 = arith.constant dense<0.000000e+00> : vector<2x8x8xf32>
    %546 = tpu.matmul %543, %544, %cst_167 {dimension_numbers = #tpu.dot_dimension_numbers<[2], [2], [1], [1], [0, 0, 0, 1, 1, 1], [0], [0]>} : vector<2x8x8xf32>, vector<2x8x8xf32>, vector<2x8x8xf32> -> vector<2x8x8xf32>
    "tpu.trace_stop"() : () -> ()
    %547 = arith.addf %546, %435 : vector<2x8x8xf32>
    %cst_168 = arith.constant dense<0xFF800000> : vector<2x8xf32>
    %548 = vector.multi_reduction <maximumf>, %547, %cst_168 [2] : vector<2x8x8xf32> to vector<2x8xf32>
    %549 = vector.shape_cast %548 : vector<2x8xf32> to vector<2x8x1xf32>
    %550 = vector.broadcast %549 : vector<2x8x1xf32> to vector<2x8x8xf32>
    %551 = arith.subf %547, %550 : vector<2x8x8xf32>
    %552 = math.exp %551 : vector<2x8x8xf32>
    %cst_169 = arith.constant dense<0.000000e+00> : vector<2x8xf32>
    %553 = vector.multi_reduction <add>, %552, %cst_169 [2] : vector<2x8x8xf32> to vector<2x8xf32>
    %554 = vector.shape_cast %553 : vector<2x8xf32> to vector<2x8x1xf32>
    %555 = tpu.reciprocal %554 {approx = true} : vector<2x8x1xf32> -> vector<2x8x1xf32>
    %556 = vector.broadcast %555 : vector<2x8x1xf32> to vector<2x8x8xf32>
    %557 = arith.mulf %552, %556 : vector<2x8x8xf32>
    "tpu.trace_start"() <{level = 10 : i32, message = "bqk,bkd->bqd"}> : () -> ()
    %cst_170 = arith.constant dense<0.000000e+00> : vector<2x8x8xf32>
    %558 = tpu.matmul %557, %545, %cst_170 {dimension_numbers = #tpu.dot_dimension_numbers<[2], [1], [1], [2], [0, 0, 0, 1, 1, 2], [0], [0]>} : vector<2x8x8xf32>, vector<2x8x8xf32>, vector<2x8x8xf32> -> vector<2x8x8xf32>
    "tpu.trace_stop"() : () -> ()
    %559 = vector.shape_cast %558 : vector<2x8x8xf32> to vector<16x8xf32>
    %560 = vector.extract_strided_slice %439 {offsets = [24, 0], sizes = [8, 32], strides = [1, 1]} : vector<32x32xf32> to vector<8x32xf32>
    %cst_171 = arith.constant dense<0.000000e+00> : vector<16x32xf32>
    %561 = tpu.matmul %559, %560, %cst_171 {dimension_numbers = #tpu.dot_dimension_numbers<[1], [0], [0], [1], [0, 0, 1, 1], [], []>} : vector<16x8xf32>, vector<8x32xf32>, vector<16x32xf32> -> vector<16x32xf32>
    %562 = arith.addf %542, %561 : vector<16x32xf32>
    %563 = arith.addf %419, %562 : vector<16x32xf32>
    %564 = vector.broadcast %451 : vector<1x32xf32> to vector<16x32xf32>
    %565 = arith.addf %563, %564 : vector<16x32xf32>
    %cst_172 = arith.constant dense<0.000000e+00> : vector<16xf32>
    %566 = vector.multi_reduction <add>, %565, %cst_172 [1] : vector<16x32xf32> to vector<16xf32>
    %567 = vector.shape_cast %566 : vector<16xf32> to vector<16x1xf32>
    %cst_173 = arith.constant 3.200000e+01 : f32
    %568 = vector.broadcast %cst_173 : f32 to vector<16x1xf32>
    %569 = arith.divf %567, %568 : vector<16x1xf32>
    %570 = vector.broadcast %569 : vector<16x1xf32> to vector<16x32xf32>
    %571 = arith.subf %565, %570 : vector<16x32xf32>
    %572 = vector.broadcast %569 : vector<16x1xf32> to vector<16x32xf32>
    %573 = arith.subf %565, %572 : vector<16x32xf32>
    %574 = arith.mulf %571, %573 : vector<16x32xf32>
    %cst_174 = arith.constant dense<0.000000e+00> : vector<16xf32>
    %575 = vector.multi_reduction <add>, %574, %cst_174 [1] : vector<16x32xf32> to vector<16xf32>
    %576 = vector.shape_cast %575 : vector<16xf32> to vector<16x1xf32>
    %cst_175 = arith.constant 3.200000e+01 : f32
    %577 = vector.broadcast %cst_175 : f32 to vector<16x1xf32>
    %578 = arith.divf %576, %577 : vector<16x1xf32>
    %579 = vector.broadcast %569 : vector<16x1xf32> to vector<16x32xf32>
    %580 = arith.subf %565, %579 : vector<16x32xf32>
    %cst_176 = arith.constant 9.99999974E-6 : f32
    %581 = vector.broadcast %cst_176 : f32 to vector<16x1xf32>
    %582 = arith.addf %578, %581 : vector<16x1xf32>
    %583 = math.rsqrt %582 : vector<16x1xf32>
    %584 = vector.broadcast %583 : vector<16x1xf32> to vector<16x32xf32>
    %585 = arith.mulf %580, %584 : vector<16x32xf32>
    %586 = vector.broadcast %448 : vector<1x32xf32> to vector<16x32xf32>
    %587 = arith.mulf %585, %586 : vector<16x32xf32>
    %588 = vector.broadcast %449 : vector<1x32xf32> to vector<16x32xf32>
    %589 = arith.addf %587, %588 : vector<16x32xf32>
    %cst_177 = arith.constant dense<0.000000e+00> : vector<16x64xf32>
    %590 = tpu.matmul %589, %441, %cst_177 {dimension_numbers = #tpu.dot_dimension_numbers<[1], [0], [0], [1], [0, 0, 1, 1], [], []>} : vector<16x32xf32>, vector<32x64xf32>, vector<16x64xf32> -> vector<16x64xf32>
    %591 = vector.broadcast %452 : vector<1x64xf32> to vector<16x64xf32>
    %592 = arith.addf %590, %591 : vector<16x64xf32>
    %cst_178 = arith.constant 1.702000e+00 : f32
    %593 = vector.broadcast %cst_178 : f32 to vector<16x64xf32>
    %594 = arith.mulf %593, %592 : vector<16x64xf32>
    %595 = arith.negf %594 : vector<16x64xf32>
    %596 = math.exp %595 : vector<16x64xf32>
    %cst_179 = arith.constant 1.000000e+00 : f32
    %597 = vector.broadcast %cst_179 : f32 to vector<16x64xf32>
    %598 = arith.addf %597, %596 : vector<16x64xf32>
    %599 = arith.divf %597, %598 : vector<16x64xf32>
    %600 = arith.mulf %592, %599 : vector<16x64xf32>
    %cst_180 = arith.constant dense<0.000000e+00> : vector<16x32xf32>
    %601 = tpu.matmul %600, %443, %cst_180 {dimension_numbers = #tpu.dot_dimension_numbers<[1], [0], [0], [1], [0, 0, 1, 1], [], []>} : vector<16x64xf32>, vector<64x32xf32>, vector<16x32xf32> -> vector<16x32xf32>
    %602 = vector.broadcast %453 : vector<1x32xf32> to vector<16x32xf32>
    %603 = arith.addf %601, %602 : vector<16x32xf32>
    %604 = arith.addf %565, %603 : vector<16x32xf32>
    %c1_181 = arith.constant 1 : index
    %c0_182 = arith.constant 0 : index
    %c0_183 = arith.constant 0 : index
    %605 = vector.load %arg12[%c1_181, %c0_182, %c0_183] : memref<2x32x96xf32, #tpu.memory_space<vmem>>, vector<1x32x96xf32>
    %606 = vector.shape_cast %605 : vector<1x32x96xf32> to vector<32x96xf32>
    %c1_184 = arith.constant 1 : index
    %c0_185 = arith.constant 0 : index
    %c0_186 = arith.constant 0 : index
    %607 = vector.load %arg13[%c1_184, %c0_185, %c0_186] : memref<2x32x32xf32, #tpu.memory_space<vmem>>, vector<1x32x32xf32>
    %608 = vector.shape_cast %607 : vector<1x32x32xf32> to vector<32x32xf32>
    %c1_187 = arith.constant 1 : index
    %c0_188 = arith.constant 0 : index
    %c0_189 = arith.constant 0 : index
    %609 = vector.load %arg14[%c1_187, %c0_188, %c0_189] : memref<2x32x64xf32, #tpu.memory_space<vmem>>, vector<1x32x64xf32>
    %610 = vector.shape_cast %609 : vector<1x32x64xf32> to vector<32x64xf32>
    %c1_190 = arith.constant 1 : index
    %c0_191 = arith.constant 0 : index
    %c0_192 = arith.constant 0 : index
    %611 = vector.load %arg15[%c1_190, %c0_191, %c0_192] : memref<2x64x32xf32, #tpu.memory_space<vmem>>, vector<1x64x32xf32>
    %612 = vector.shape_cast %611 : vector<1x64x32xf32> to vector<64x32xf32>
    %c1_193 = arith.constant 1 : index
    %c0_194 = arith.constant 0 : index
    %c0_195 = arith.constant 0 : index
    %613 = vector.load %arg16[%c1_193, %c0_194, %c0_195] : memref<2x8x128xf32, #tpu.memory_space<vmem>>, vector<1x8x128xf32>
    %614 = vector.shape_cast %613 : vector<1x8x128xf32> to vector<8x128xf32>
    %615 = vector.extract_strided_slice %614 {offsets = [0, 0], sizes = [1, 32], strides = [1, 1]} : vector<8x128xf32> to vector<1x32xf32>
    %616 = vector.extract_strided_slice %614 {offsets = [1, 0], sizes = [1, 32], strides = [1, 1]} : vector<8x128xf32> to vector<1x32xf32>
    %617 = vector.extract_strided_slice %614 {offsets = [2, 0], sizes = [1, 32], strides = [1, 1]} : vector<8x128xf32> to vector<1x32xf32>
    %618 = vector.extract_strided_slice %614 {offsets = [3, 0], sizes = [1, 32], strides = [1, 1]} : vector<8x128xf32> to vector<1x32xf32>
    %619 = vector.extract_strided_slice %614 {offsets = [4, 0], sizes = [1, 96], strides = [1, 1]} : vector<8x128xf32> to vector<1x96xf32>
    %620 = vector.extract_strided_slice %614 {offsets = [5, 0], sizes = [1, 32], strides = [1, 1]} : vector<8x128xf32> to vector<1x32xf32>
    %621 = vector.extract_strided_slice %614 {offsets = [6, 0], sizes = [1, 64], strides = [1, 1]} : vector<8x128xf32> to vector<1x64xf32>
    %622 = vector.extract_strided_slice %614 {offsets = [7, 0], sizes = [1, 32], strides = [1, 1]} : vector<8x128xf32> to vector<1x32xf32>
    %cst_196 = arith.constant dense<0.000000e+00> : vector<16xf32>
    %623 = vector.multi_reduction <add>, %604, %cst_196 [1] : vector<16x32xf32> to vector<16xf32>
    %624 = vector.shape_cast %623 : vector<16xf32> to vector<16x1xf32>
    %cst_197 = arith.constant 3.200000e+01 : f32
    %625 = vector.broadcast %cst_197 : f32 to vector<16x1xf32>
    %626 = arith.divf %624, %625 : vector<16x1xf32>
    %627 = vector.broadcast %626 : vector<16x1xf32> to vector<16x32xf32>
    %628 = arith.subf %604, %627 : vector<16x32xf32>
    %629 = vector.broadcast %626 : vector<16x1xf32> to vector<16x32xf32>
    %630 = arith.subf %604, %629 : vector<16x32xf32>
    %631 = arith.mulf %628, %630 : vector<16x32xf32>
    %cst_198 = arith.constant dense<0.000000e+00> : vector<16xf32>
    %632 = vector.multi_reduction <add>, %631, %cst_198 [1] : vector<16x32xf32> to vector<16xf32>
    %633 = vector.shape_cast %632 : vector<16xf32> to vector<16x1xf32>
    %cst_199 = arith.constant 3.200000e+01 : f32
    %634 = vector.broadcast %cst_199 : f32 to vector<16x1xf32>
    %635 = arith.divf %633, %634 : vector<16x1xf32>
    %636 = vector.broadcast %626 : vector<16x1xf32> to vector<16x32xf32>
    %637 = arith.subf %604, %636 : vector<16x32xf32>
    %cst_200 = arith.constant 9.99999974E-6 : f32
    %638 = vector.broadcast %cst_200 : f32 to vector<16x1xf32>
    %639 = arith.addf %635, %638 : vector<16x1xf32>
    %640 = math.rsqrt %639 : vector<16x1xf32>
    %641 = vector.broadcast %640 : vector<16x1xf32> to vector<16x32xf32>
    %642 = arith.mulf %637, %641 : vector<16x32xf32>
    %643 = vector.broadcast %615 : vector<1x32xf32> to vector<16x32xf32>
    %644 = arith.mulf %642, %643 : vector<16x32xf32>
    %645 = vector.broadcast %616 : vector<1x32xf32> to vector<16x32xf32>
    %646 = arith.addf %644, %645 : vector<16x32xf32>
    %cst_201 = arith.constant dense<0.000000e+00> : vector<16x96xf32>
    %647 = tpu.matmul %646, %606, %cst_201 {dimension_numbers = #tpu.dot_dimension_numbers<[1], [0], [0], [1], [0, 0, 1, 1], [], []>} : vector<16x32xf32>, vector<32x96xf32>, vector<16x96xf32> -> vector<16x96xf32>
    %648 = vector.broadcast %619 : vector<1x96xf32> to vector<16x96xf32>
    %649 = arith.addf %647, %648 : vector<16x96xf32>
    %650 = vector.shape_cast %649 : vector<16x96xf32> to vector<2x8x96xf32>
    %cst_202 = arith.constant 0.000000e+00 : f32
    %651 = vector.broadcast %cst_202 : f32 to vector<16x32xf32>
    %652 = vector.extract_strided_slice %650 {offsets = [0, 0, 0], sizes = [2, 8, 8], strides = [1, 1, 1]} : vector<2x8x96xf32> to vector<2x8x8xf32>
    %653 = vector.extract_strided_slice %650 {offsets = [0, 0, 32], sizes = [2, 8, 8], strides = [1, 1, 1]} : vector<2x8x96xf32> to vector<2x8x8xf32>
    %654 = vector.extract_strided_slice %650 {offsets = [0, 0, 64], sizes = [2, 8, 8], strides = [1, 1, 1]} : vector<2x8x96xf32> to vector<2x8x8xf32>
    "tpu.trace_start"() <{level = 10 : i32, message = "bqd,bkd->bqk"}> : () -> ()
    %cst_203 = arith.constant dense<0.000000e+00> : vector<2x8x8xf32>
    %655 = tpu.matmul %652, %653, %cst_203 {dimension_numbers = #tpu.dot_dimension_numbers<[2], [2], [1], [1], [0, 0, 0, 1, 1, 1], [0], [0]>} : vector<2x8x8xf32>, vector<2x8x8xf32>, vector<2x8x8xf32> -> vector<2x8x8xf32>
    "tpu.trace_stop"() : () -> ()
    %656 = arith.addf %655, %435 : vector<2x8x8xf32>
    %cst_204 = arith.constant dense<0xFF800000> : vector<2x8xf32>
    %657 = vector.multi_reduction <maximumf>, %656, %cst_204 [2] : vector<2x8x8xf32> to vector<2x8xf32>
    %658 = vector.shape_cast %657 : vector<2x8xf32> to vector<2x8x1xf32>
    %659 = vector.broadcast %658 : vector<2x8x1xf32> to vector<2x8x8xf32>
    %660 = arith.subf %656, %659 : vector<2x8x8xf32>
    %661 = math.exp %660 : vector<2x8x8xf32>
    %cst_205 = arith.constant dense<0.000000e+00> : vector<2x8xf32>
    %662 = vector.multi_reduction <add>, %661, %cst_205 [2] : vector<2x8x8xf32> to vector<2x8xf32>
    %663 = vector.shape_cast %662 : vector<2x8xf32> to vector<2x8x1xf32>
    %664 = tpu.reciprocal %663 {approx = true} : vector<2x8x1xf32> -> vector<2x8x1xf32>
    %665 = vector.broadcast %664 : vector<2x8x1xf32> to vector<2x8x8xf32>
    %666 = arith.mulf %661, %665 : vector<2x8x8xf32>
    "tpu.trace_start"() <{level = 10 : i32, message = "bqk,bkd->bqd"}> : () -> ()
    %cst_206 = arith.constant dense<0.000000e+00> : vector<2x8x8xf32>
    %667 = tpu.matmul %666, %654, %cst_206 {dimension_numbers = #tpu.dot_dimension_numbers<[2], [1], [1], [2], [0, 0, 0, 1, 1, 2], [0], [0]>} : vector<2x8x8xf32>, vector<2x8x8xf32>, vector<2x8x8xf32> -> vector<2x8x8xf32>
    "tpu.trace_stop"() : () -> ()
    %668 = vector.shape_cast %667 : vector<2x8x8xf32> to vector<16x8xf32>
    %669 = vector.extract_strided_slice %608 {offsets = [0, 0], sizes = [8, 32], strides = [1, 1]} : vector<32x32xf32> to vector<8x32xf32>
    %cst_207 = arith.constant dense<0.000000e+00> : vector<16x32xf32>
    %670 = tpu.matmul %668, %669, %cst_207 {dimension_numbers = #tpu.dot_dimension_numbers<[1], [0], [0], [1], [0, 0, 1, 1], [], []>} : vector<16x8xf32>, vector<8x32xf32>, vector<16x32xf32> -> vector<16x32xf32>
    %671 = arith.addf %651, %670 : vector<16x32xf32>
    %672 = vector.extract_strided_slice %650 {offsets = [0, 0, 8], sizes = [2, 8, 8], strides = [1, 1, 1]} : vector<2x8x96xf32> to vector<2x8x8xf32>
    %673 = vector.extract_strided_slice %650 {offsets = [0, 0, 40], sizes = [2, 8, 8], strides = [1, 1, 1]} : vector<2x8x96xf32> to vector<2x8x8xf32>
    %674 = vector.extract_strided_slice %650 {offsets = [0, 0, 72], sizes = [2, 8, 8], strides = [1, 1, 1]} : vector<2x8x96xf32> to vector<2x8x8xf32>
    "tpu.trace_start"() <{level = 10 : i32, message = "bqd,bkd->bqk"}> : () -> ()
    %cst_208 = arith.constant dense<0.000000e+00> : vector<2x8x8xf32>
    %675 = tpu.matmul %672, %673, %cst_208 {dimension_numbers = #tpu.dot_dimension_numbers<[2], [2], [1], [1], [0, 0, 0, 1, 1, 1], [0], [0]>} : vector<2x8x8xf32>, vector<2x8x8xf32>, vector<2x8x8xf32> -> vector<2x8x8xf32>
    "tpu.trace_stop"() : () -> ()
    %676 = arith.addf %675, %435 : vector<2x8x8xf32>
    %cst_209 = arith.constant dense<0xFF800000> : vector<2x8xf32>
    %677 = vector.multi_reduction <maximumf>, %676, %cst_209 [2] : vector<2x8x8xf32> to vector<2x8xf32>
    %678 = vector.shape_cast %677 : vector<2x8xf32> to vector<2x8x1xf32>
    %679 = vector.broadcast %678 : vector<2x8x1xf32> to vector<2x8x8xf32>
    %680 = arith.subf %676, %679 : vector<2x8x8xf32>
    %681 = math.exp %680 : vector<2x8x8xf32>
    %cst_210 = arith.constant dense<0.000000e+00> : vector<2x8xf32>
    %682 = vector.multi_reduction <add>, %681, %cst_210 [2] : vector<2x8x8xf32> to vector<2x8xf32>
    %683 = vector.shape_cast %682 : vector<2x8xf32> to vector<2x8x1xf32>
    %684 = tpu.reciprocal %683 {approx = true} : vector<2x8x1xf32> -> vector<2x8x1xf32>
    %685 = vector.broadcast %684 : vector<2x8x1xf32> to vector<2x8x8xf32>
    %686 = arith.mulf %681, %685 : vector<2x8x8xf32>
    "tpu.trace_start"() <{level = 10 : i32, message = "bqk,bkd->bqd"}> : () -> ()
    %cst_211 = arith.constant dense<0.000000e+00> : vector<2x8x8xf32>
    %687 = tpu.matmul %686, %674, %cst_211 {dimension_numbers = #tpu.dot_dimension_numbers<[2], [1], [1], [2], [0, 0, 0, 1, 1, 2], [0], [0]>} : vector<2x8x8xf32>, vector<2x8x8xf32>, vector<2x8x8xf32> -> vector<2x8x8xf32>
    "tpu.trace_stop"() : () -> ()
    %688 = vector.shape_cast %687 : vector<2x8x8xf32> to vector<16x8xf32>
    %689 = vector.extract_strided_slice %608 {offsets = [8, 0], sizes = [8, 32], strides = [1, 1]} : vector<32x32xf32> to vector<8x32xf32>
    %cst_212 = arith.constant dense<0.000000e+00> : vector<16x32xf32>
    %690 = tpu.matmul %688, %689, %cst_212 {dimension_numbers = #tpu.dot_dimension_numbers<[1], [0], [0], [1], [0, 0, 1, 1], [], []>} : vector<16x8xf32>, vector<8x32xf32>, vector<16x32xf32> -> vector<16x32xf32>
    %691 = arith.addf %671, %690 : vector<16x32xf32>
    %692 = vector.extract_strided_slice %650 {offsets = [0, 0, 16], sizes = [2, 8, 8], strides = [1, 1, 1]} : vector<2x8x96xf32> to vector<2x8x8xf32>
    %693 = vector.extract_strided_slice %650 {offsets = [0, 0, 48], sizes = [2, 8, 8], strides = [1, 1, 1]} : vector<2x8x96xf32> to vector<2x8x8xf32>
    %694 = vector.extract_strided_slice %650 {offsets = [0, 0, 80], sizes = [2, 8, 8], strides = [1, 1, 1]} : vector<2x8x96xf32> to vector<2x8x8xf32>
    "tpu.trace_start"() <{level = 10 : i32, message = "bqd,bkd->bqk"}> : () -> ()
    %cst_213 = arith.constant dense<0.000000e+00> : vector<2x8x8xf32>
    %695 = tpu.matmul %692, %693, %cst_213 {dimension_numbers = #tpu.dot_dimension_numbers<[2], [2], [1], [1], [0, 0, 0, 1, 1, 1], [0], [0]>} : vector<2x8x8xf32>, vector<2x8x8xf32>, vector<2x8x8xf32> -> vector<2x8x8xf32>
    "tpu.trace_stop"() : () -> ()
    %696 = arith.addf %695, %435 : vector<2x8x8xf32>
    %cst_214 = arith.constant dense<0xFF800000> : vector<2x8xf32>
    %697 = vector.multi_reduction <maximumf>, %696, %cst_214 [2] : vector<2x8x8xf32> to vector<2x8xf32>
    %698 = vector.shape_cast %697 : vector<2x8xf32> to vector<2x8x1xf32>
    %699 = vector.broadcast %698 : vector<2x8x1xf32> to vector<2x8x8xf32>
    %700 = arith.subf %696, %699 : vector<2x8x8xf32>
    %701 = math.exp %700 : vector<2x8x8xf32>
    %cst_215 = arith.constant dense<0.000000e+00> : vector<2x8xf32>
    %702 = vector.multi_reduction <add>, %701, %cst_215 [2] : vector<2x8x8xf32> to vector<2x8xf32>
    %703 = vector.shape_cast %702 : vector<2x8xf32> to vector<2x8x1xf32>
    %704 = tpu.reciprocal %703 {approx = true} : vector<2x8x1xf32> -> vector<2x8x1xf32>
    %705 = vector.broadcast %704 : vector<2x8x1xf32> to vector<2x8x8xf32>
    %706 = arith.mulf %701, %705 : vector<2x8x8xf32>
    "tpu.trace_start"() <{level = 10 : i32, message = "bqk,bkd->bqd"}> : () -> ()
    %cst_216 = arith.constant dense<0.000000e+00> : vector<2x8x8xf32>
    %707 = tpu.matmul %706, %694, %cst_216 {dimension_numbers = #tpu.dot_dimension_numbers<[2], [1], [1], [2], [0, 0, 0, 1, 1, 2], [0], [0]>} : vector<2x8x8xf32>, vector<2x8x8xf32>, vector<2x8x8xf32> -> vector<2x8x8xf32>
    "tpu.trace_stop"() : () -> ()
    %708 = vector.shape_cast %707 : vector<2x8x8xf32> to vector<16x8xf32>
    %709 = vector.extract_strided_slice %608 {offsets = [16, 0], sizes = [8, 32], strides = [1, 1]} : vector<32x32xf32> to vector<8x32xf32>
    %cst_217 = arith.constant dense<0.000000e+00> : vector<16x32xf32>
    %710 = tpu.matmul %708, %709, %cst_217 {dimension_numbers = #tpu.dot_dimension_numbers<[1], [0], [0], [1], [0, 0, 1, 1], [], []>} : vector<16x8xf32>, vector<8x32xf32>, vector<16x32xf32> -> vector<16x32xf32>
    %711 = arith.addf %691, %710 : vector<16x32xf32>
    %712 = vector.extract_strided_slice %650 {offsets = [0, 0, 24], sizes = [2, 8, 8], strides = [1, 1, 1]} : vector<2x8x96xf32> to vector<2x8x8xf32>
    %713 = vector.extract_strided_slice %650 {offsets = [0, 0, 56], sizes = [2, 8, 8], strides = [1, 1, 1]} : vector<2x8x96xf32> to vector<2x8x8xf32>
    %714 = vector.extract_strided_slice %650 {offsets = [0, 0, 88], sizes = [2, 8, 8], strides = [1, 1, 1]} : vector<2x8x96xf32> to vector<2x8x8xf32>
    "tpu.trace_start"() <{level = 10 : i32, message = "bqd,bkd->bqk"}> : () -> ()
    %cst_218 = arith.constant dense<0.000000e+00> : vector<2x8x8xf32>
    %715 = tpu.matmul %712, %713, %cst_218 {dimension_numbers = #tpu.dot_dimension_numbers<[2], [2], [1], [1], [0, 0, 0, 1, 1, 1], [0], [0]>} : vector<2x8x8xf32>, vector<2x8x8xf32>, vector<2x8x8xf32> -> vector<2x8x8xf32>
    "tpu.trace_stop"() : () -> ()
    %716 = arith.addf %715, %435 : vector<2x8x8xf32>
    %cst_219 = arith.constant dense<0xFF800000> : vector<2x8xf32>
    %717 = vector.multi_reduction <maximumf>, %716, %cst_219 [2] : vector<2x8x8xf32> to vector<2x8xf32>
    %718 = vector.shape_cast %717 : vector<2x8xf32> to vector<2x8x1xf32>
    %719 = vector.broadcast %718 : vector<2x8x1xf32> to vector<2x8x8xf32>
    %720 = arith.subf %716, %719 : vector<2x8x8xf32>
    %721 = math.exp %720 : vector<2x8x8xf32>
    %cst_220 = arith.constant dense<0.000000e+00> : vector<2x8xf32>
    %722 = vector.multi_reduction <add>, %721, %cst_220 [2] : vector<2x8x8xf32> to vector<2x8xf32>
    %723 = vector.shape_cast %722 : vector<2x8xf32> to vector<2x8x1xf32>
    %724 = tpu.reciprocal %723 {approx = true} : vector<2x8x1xf32> -> vector<2x8x1xf32>
    %725 = vector.broadcast %724 : vector<2x8x1xf32> to vector<2x8x8xf32>
    %726 = arith.mulf %721, %725 : vector<2x8x8xf32>
    "tpu.trace_start"() <{level = 10 : i32, message = "bqk,bkd->bqd"}> : () -> ()
    %cst_221 = arith.constant dense<0.000000e+00> : vector<2x8x8xf32>
    %727 = tpu.matmul %726, %714, %cst_221 {dimension_numbers = #tpu.dot_dimension_numbers<[2], [1], [1], [2], [0, 0, 0, 1, 1, 2], [0], [0]>} : vector<2x8x8xf32>, vector<2x8x8xf32>, vector<2x8x8xf32> -> vector<2x8x8xf32>
    "tpu.trace_stop"() : () -> ()
    %728 = vector.shape_cast %727 : vector<2x8x8xf32> to vector<16x8xf32>
    %729 = vector.extract_strided_slice %608 {offsets = [24, 0], sizes = [8, 32], strides = [1, 1]} : vector<32x32xf32> to vector<8x32xf32>
    %cst_222 = arith.constant dense<0.000000e+00> : vector<16x32xf32>
    %730 = tpu.matmul %728, %729, %cst_222 {dimension_numbers = #tpu.dot_dimension_numbers<[1], [0], [0], [1], [0, 0, 1, 1], [], []>} : vector<16x8xf32>, vector<8x32xf32>, vector<16x32xf32> -> vector<16x32xf32>
    %731 = arith.addf %711, %730 : vector<16x32xf32>
    %732 = arith.addf %604, %731 : vector<16x32xf32>
    %733 = vector.broadcast %620 : vector<1x32xf32> to vector<16x32xf32>
    %734 = arith.addf %732, %733 : vector<16x32xf32>
    %cst_223 = arith.constant dense<0.000000e+00> : vector<16xf32>
    %735 = vector.multi_reduction <add>, %734, %cst_223 [1] : vector<16x32xf32> to vector<16xf32>
    %736 = vector.shape_cast %735 : vector<16xf32> to vector<16x1xf32>
    %cst_224 = arith.constant 3.200000e+01 : f32
    %737 = vector.broadcast %cst_224 : f32 to vector<16x1xf32>
    %738 = arith.divf %736, %737 : vector<16x1xf32>
    %739 = vector.broadcast %738 : vector<16x1xf32> to vector<16x32xf32>
    %740 = arith.subf %734, %739 : vector<16x32xf32>
    %741 = vector.broadcast %738 : vector<16x1xf32> to vector<16x32xf32>
    %742 = arith.subf %734, %741 : vector<16x32xf32>
    %743 = arith.mulf %740, %742 : vector<16x32xf32>
    %cst_225 = arith.constant dense<0.000000e+00> : vector<16xf32>
    %744 = vector.multi_reduction <add>, %743, %cst_225 [1] : vector<16x32xf32> to vector<16xf32>
    %745 = vector.shape_cast %744 : vector<16xf32> to vector<16x1xf32>
    %cst_226 = arith.constant 3.200000e+01 : f32
    %746 = vector.broadcast %cst_226 : f32 to vector<16x1xf32>
    %747 = arith.divf %745, %746 : vector<16x1xf32>
    %748 = vector.broadcast %738 : vector<16x1xf32> to vector<16x32xf32>
    %749 = arith.subf %734, %748 : vector<16x32xf32>
    %cst_227 = arith.constant 9.99999974E-6 : f32
    %750 = vector.broadcast %cst_227 : f32 to vector<16x1xf32>
    %751 = arith.addf %747, %750 : vector<16x1xf32>
    %752 = math.rsqrt %751 : vector<16x1xf32>
    %753 = vector.broadcast %752 : vector<16x1xf32> to vector<16x32xf32>
    %754 = arith.mulf %749, %753 : vector<16x32xf32>
    %755 = vector.broadcast %617 : vector<1x32xf32> to vector<16x32xf32>
    %756 = arith.mulf %754, %755 : vector<16x32xf32>
    %757 = vector.broadcast %618 : vector<1x32xf32> to vector<16x32xf32>
    %758 = arith.addf %756, %757 : vector<16x32xf32>
    %cst_228 = arith.constant dense<0.000000e+00> : vector<16x64xf32>
    %759 = tpu.matmul %758, %610, %cst_228 {dimension_numbers = #tpu.dot_dimension_numbers<[1], [0], [0], [1], [0, 0, 1, 1], [], []>} : vector<16x32xf32>, vector<32x64xf32>, vector<16x64xf32> -> vector<16x64xf32>
    %760 = vector.broadcast %621 : vector<1x64xf32> to vector<16x64xf32>
    %761 = arith.addf %759, %760 : vector<16x64xf32>
    %cst_229 = arith.constant 1.702000e+00 : f32
    %762 = vector.broadcast %cst_229 : f32 to vector<16x64xf32>
    %763 = arith.mulf %762, %761 : vector<16x64xf32>
    %764 = arith.negf %763 : vector<16x64xf32>
    %765 = math.exp %764 : vector<16x64xf32>
    %cst_230 = arith.constant 1.000000e+00 : f32
    %766 = vector.broadcast %cst_230 : f32 to vector<16x64xf32>
    %767 = arith.addf %766, %765 : vector<16x64xf32>
    %768 = arith.divf %766, %767 : vector<16x64xf32>
    %769 = arith.mulf %761, %768 : vector<16x64xf32>
    %cst_231 = arith.constant dense<0.000000e+00> : vector<16x32xf32>
    %770 = tpu.matmul %769, %612, %cst_231 {dimension_numbers = #tpu.dot_dimension_numbers<[1], [0], [0], [1], [0, 0, 1, 1], [], []>} : vector<16x64xf32>, vector<64x32xf32>, vector<16x32xf32> -> vector<16x32xf32>
    %771 = vector.broadcast %622 : vector<1x32xf32> to vector<16x32xf32>
    %772 = arith.addf %770, %771 : vector<16x32xf32>
    %773 = arith.addf %734, %772 : vector<16x32xf32>
    %774 = vector.shape_cast %773 : vector<16x32xf32> to vector<2x8x32xf32>
    %c0_232 = arith.constant 0 : index
    %c0_233 = arith.constant 0 : index
    %775 = vector.load %arg11[%c0_232, %c0_233] : memref<2x8xf32, #tpu.memory_space<vmem>>, vector<2x8xf32>
    %776 = vector.shape_cast %775 : vector<2x8xf32> to vector<2x8x1xf32>
    %777 = vector.broadcast %776 : vector<2x8x1xf32> to vector<2x8x32xf32>
    %778 = arith.mulf %777, %774 : vector<2x8x32xf32>
    %cst_234 = arith.constant dense<0.000000e+00> : vector<2x32xf32>
    %779 = vector.multi_reduction <add>, %778, %cst_234 [1] : vector<2x8x32xf32> to vector<2x32xf32>
    %780 = vector.extract_strided_slice %0 {offsets = [4, 0], sizes = [1, 32], strides = [1, 1]} : vector<8x128xf32> to vector<1x32xf32>
    %781 = vector.extract_strided_slice %0 {offsets = [5, 0], sizes = [1, 32], strides = [1, 1]} : vector<8x128xf32> to vector<1x32xf32>
    %cst_235 = arith.constant dense<0.000000e+00> : vector<2xf32>
    %782 = vector.multi_reduction <add>, %779, %cst_235 [1] : vector<2x32xf32> to vector<2xf32>
    %783 = vector.shape_cast %782 : vector<2xf32> to vector<2x1xf32>
    %cst_236 = arith.constant 3.200000e+01 : f32
    %784 = vector.broadcast %cst_236 : f32 to vector<2x1xf32>
    %785 = arith.divf %783, %784 : vector<2x1xf32>
    %786 = vector.broadcast %785 : vector<2x1xf32> to vector<2x32xf32>
    %787 = arith.subf %779, %786 : vector<2x32xf32>
    %788 = vector.broadcast %785 : vector<2x1xf32> to vector<2x32xf32>
    %789 = arith.subf %779, %788 : vector<2x32xf32>
    %790 = arith.mulf %787, %789 : vector<2x32xf32>
    %cst_237 = arith.constant dense<0.000000e+00> : vector<2xf32>
    %791 = vector.multi_reduction <add>, %790, %cst_237 [1] : vector<2x32xf32> to vector<2xf32>
    %792 = vector.shape_cast %791 : vector<2xf32> to vector<2x1xf32>
    %cst_238 = arith.constant 3.200000e+01 : f32
    %793 = vector.broadcast %cst_238 : f32 to vector<2x1xf32>
    %794 = arith.divf %792, %793 : vector<2x1xf32>
    %795 = vector.broadcast %785 : vector<2x1xf32> to vector<2x32xf32>
    %796 = arith.subf %779, %795 : vector<2x32xf32>
    %cst_239 = arith.constant 9.99999974E-6 : f32
    %797 = vector.broadcast %cst_239 : f32 to vector<2x1xf32>
    %798 = arith.addf %794, %797 : vector<2x1xf32>
    %799 = math.rsqrt %798 : vector<2x1xf32>
    %800 = vector.broadcast %799 : vector<2x1xf32> to vector<2x32xf32>
    %801 = arith.mulf %796, %800 : vector<2x32xf32>
    %802 = vector.broadcast %780 : vector<1x32xf32> to vector<2x32xf32>
    %803 = arith.mulf %801, %802 : vector<2x32xf32>
    %804 = vector.broadcast %781 : vector<1x32xf32> to vector<2x32xf32>
    %805 = arith.addf %803, %804 : vector<2x32xf32>
    %c0_240 = arith.constant 0 : index
    %c0_241 = arith.constant 0 : index
    %806 = vector.load %arg17[%c0_240, %c0_241] : memref<32x32xf32, #tpu.memory_space<vmem>>, vector<32x32xf32>
    %807 = vector.extract_strided_slice %806 {offsets = [0, 0], sizes = [32, 16], strides = [1, 1]} : vector<32x32xf32> to vector<32x16xf32>
    %cst_242 = arith.constant dense<0.000000e+00> : vector<2x16xf32>
    %808 = tpu.matmul %417, %807, %cst_242 {dimension_numbers = #tpu.dot_dimension_numbers<[1], [0], [0], [1], [0, 0, 1, 1], [], []>} : vector<2x32xf32>, vector<32x16xf32>, vector<2x16xf32> -> vector<2x16xf32>
    %809 = vector.extract_strided_slice %806 {offsets = [0, 16], sizes = [32, 16], strides = [1, 1]} : vector<32x32xf32> to vector<32x16xf32>
    %cst_243 = arith.constant dense<0.000000e+00> : vector<2x16xf32>
    %810 = tpu.matmul %805, %809, %cst_243 {dimension_numbers = #tpu.dot_dimension_numbers<[1], [0], [0], [1], [0, 0, 1, 1], [], []>} : vector<2x32xf32>, vector<32x16xf32>, vector<2x16xf32> -> vector<2x16xf32>
    %811 = arith.mulf %808, %808 : vector<2x16xf32>
    %cst_244 = arith.constant dense<0.000000e+00> : vector<2xf32>
    %812 = vector.multi_reduction <add>, %811, %cst_244 [1] : vector<2x16xf32> to vector<2xf32>
    %813 = vector.shape_cast %812 : vector<2xf32> to vector<2x1xf32>
    %cst_245 = arith.constant 9.99999996E-13 : f32
    %814 = vector.broadcast %cst_245 : f32 to vector<2x1xf32>
    %815 = arith.addf %813, %814 : vector<2x1xf32>
    %816 = math.rsqrt %815 : vector<2x1xf32>
    %817 = vector.broadcast %816 : vector<2x1xf32> to vector<2x16xf32>
    %818 = arith.mulf %808, %817 : vector<2x16xf32>
    %819 = arith.mulf %810, %810 : vector<2x16xf32>
    %cst_246 = arith.constant dense<0.000000e+00> : vector<2xf32>
    %820 = vector.multi_reduction <add>, %819, %cst_246 [1] : vector<2x16xf32> to vector<2xf32>
    %821 = vector.shape_cast %820 : vector<2xf32> to vector<2x1xf32>
    %cst_247 = arith.constant 9.99999996E-13 : f32
    %822 = vector.broadcast %cst_247 : f32 to vector<2x1xf32>
    %823 = arith.addf %821, %822 : vector<2x1xf32>
    %824 = math.rsqrt %823 : vector<2x1xf32>
    %825 = vector.broadcast %824 : vector<2x1xf32> to vector<2x16xf32>
    %826 = arith.mulf %810, %825 : vector<2x16xf32>
    %827 = vector.extract_strided_slice %0 {offsets = [6, 0], sizes = [1, 1], strides = [1, 1]} : vector<8x128xf32> to vector<1x1xf32>
    %828 = math.exp %827 : vector<1x1xf32>
    "tpu.trace_start"() <{level = 10 : i32, message = "td,id->ti"}> : () -> ()
    %cst_248 = arith.constant dense<0.000000e+00> : vector<2x2xf32>
    %829 = tpu.matmul %826, %818, %cst_248 {dimension_numbers = #tpu.dot_dimension_numbers<[1], [1], [0], [0], [0, 0, 1, 0], [], []>} : vector<2x16xf32>, vector<2x16xf32>, vector<2x2xf32> -> vector<2x2xf32>
    "tpu.trace_stop"() : () -> ()
    %830 = vector.broadcast %828 : vector<1x1xf32> to vector<2x2xf32>
    %831 = arith.mulf %829, %830 : vector<2x2xf32>
    %c0_249 = arith.constant 0 : index
    %c0_250 = arith.constant 0 : index
    %832 = vector.load %arg19[%c0_249, %c0_250] : memref<2x16xf32, #tpu.memory_space<vmem>>, vector<2x16xf32>
    tpu.vector_store %arg19[%c0_249, %c0_250], %818 {strides = array<i32>} : memref<2x16xf32, #tpu.memory_space<vmem>>, vector<2x16xf32>,
    %c0_251 = arith.constant 0 : index
    %c0_252 = arith.constant 0 : index
    %833 = vector.load %arg20[%c0_251, %c0_252] : memref<2x16xf32, #tpu.memory_space<vmem>>, vector<2x16xf32>
    tpu.vector_store %arg20[%c0_251, %c0_252], %826 {strides = array<i32>} : memref<2x16xf32, #tpu.memory_space<vmem>>, vector<2x16xf32>,
    %c0_253 = arith.constant 0 : index
    %c0_254 = arith.constant 0 : index
    %834 = vector.load %arg21[%c0_253, %c0_254] : memref<2x2xf32, #tpu.memory_space<vmem>>, vector<2x2xf32>
    tpu.vector_store %arg21[%c0_253, %c0_254], %831 {strides = array<i32>} : memref<2x2xf32, #tpu.memory_space<vmem>>, vector<2x2xf32>,
    return
  }
  func.func @transform_0(%arg0: i32) -> (i32, i32, i32) {
    %c0_i32 = arith.constant 0 : i32
    %c0_i32_0 = arith.constant 0 : i32
    %c0_i32_1 = arith.constant 0 : i32
    %c0_i32_2 = arith.constant 0 : i32
    return %c0_i32, %c0_i32_0, %c0_i32_1 : i32, i32, i32
  }
  func.func @transform_1(%arg0: i32) -> (i32, i32) {
    %c0_i32 = arith.constant 0 : i32
    %c0_i32_0 = arith.constant 0 : i32
    %c0_i32_1 = arith.constant 0 : i32
    return %c0_i32, %c0_i32_0 : i32, i32
  }
  func.func @transform_2(%arg0: i32) -> (i32, i32) {
    %c0_i32 = arith.constant 0 : i32
    %c0_i32_0 = arith.constant 0 : i32
    %c0_i32_1 = arith.constant 0 : i32
    return %c0_i32, %c0_i32_0 : i32, i32
  }
  func.func @transform_3(%arg0: i32) -> (i32, i32, i32) {
    %c0_i32 = arith.constant 0 : i32
    %c0_i32_0 = arith.constant 0 : i32
    %c0_i32_1 = arith.constant 0 : i32
    %c0_i32_2 = arith.constant 0 : i32
    return %c0_i32, %c0_i32_0, %c0_i32_1 : i32, i32, i32
  }
  func.func @transform_4(%arg0: i32) -> (i32, i32, i32) {
    %c0_i32 = arith.constant 0 : i32
    %c0_i32_0 = arith.constant 0 : i32
    %c0_i32_1 = arith.constant 0 : i32
    %c0_i32_2 = arith.constant 0 : i32
    return %c0_i32, %c0_i32_0, %c0_i32_1 : i32, i32, i32
  }
  func.func @transform_5(%arg0: i32) -> (i32, i32, i32) {
    %c0_i32 = arith.constant 0 : i32
    %c0_i32_0 = arith.constant 0 : i32
    %c0_i32_1 = arith.constant 0 : i32
    %c0_i32_2 = arith.constant 0 : i32
    return %c0_i32, %c0_i32_0, %c0_i32_1 : i32, i32, i32
  }
  func.func @transform_6(%arg0: i32) -> (i32, i32, i32) {
    %c0_i32 = arith.constant 0 : i32
    %c0_i32_0 = arith.constant 0 : i32
    %c0_i32_1 = arith.constant 0 : i32
    %c0_i32_2 = arith.constant 0 : i32
    return %c0_i32, %c0_i32_0, %c0_i32_1 : i32, i32, i32
  }
  func.func @transform_7(%arg0: i32) -> (i32, i32, i32) {
    %c0_i32 = arith.constant 0 : i32
    %c0_i32_0 = arith.constant 0 : i32
    %c0_i32_1 = arith.constant 0 : i32
    %c0_i32_2 = arith.constant 0 : i32
    return %c0_i32, %c0_i32_0, %c0_i32_1 : i32, i32, i32
  }
  func.func @transform_8(%arg0: i32) -> (i32, i32, i32) {
    %c0_i32 = arith.constant 0 : i32
    %c0_i32_0 = arith.constant 0 : i32
    %c0_i32_1 = arith.constant 0 : i32
    %c0_i32_2 = arith.constant 0 : i32
    return %c0_i32, %c0_i32_0, %c0_i32_1 : i32, i32, i32
  }
  func.func @transform_9(%arg0: i32) -> (i32, i32) {
    %c0_i32 = arith.constant 0 : i32
    %c0_i32_0 = arith.constant 0 : i32
    %c0_i32_1 = arith.constant 0 : i32
    return %c0_i32, %c0_i32_0 : i32, i32
  }
  func.func @transform_10(%arg0: i32) -> (i32, i32) {
    %c0_i32 = arith.constant 0 : i32
    %c0_i32_0 = arith.constant 0 : i32
    %c0_i32_1 = arith.constant 0 : i32
    return %c0_i32, %c0_i32_0 : i32, i32
  }
  func.func @transform_11(%arg0: i32) -> (i32, i32, i32) {
    %c0_i32 = arith.constant 0 : i32
    %c0_i32_0 = arith.constant 0 : i32
    %c0_i32_1 = arith.constant 0 : i32
    %c0_i32_2 = arith.constant 0 : i32
    return %c0_i32, %c0_i32_0, %c0_i32_1 : i32, i32, i32
  }
  func.func @transform_12(%arg0: i32) -> (i32, i32, i32) {
    %c0_i32 = arith.constant 0 : i32
    %c0_i32_0 = arith.constant 0 : i32
    %c0_i32_1 = arith.constant 0 : i32
    %c0_i32_2 = arith.constant 0 : i32
    return %c0_i32, %c0_i32_0, %c0_i32_1 : i32, i32, i32
  }
  func.func @transform_13(%arg0: i32) -> (i32, i32, i32) {
    %c0_i32 = arith.constant 0 : i32
    %c0_i32_0 = arith.constant 0 : i32
    %c0_i32_1 = arith.constant 0 : i32
    %c0_i32_2 = arith.constant 0 : i32
    return %c0_i32, %c0_i32_0, %c0_i32_1 : i32, i32, i32
  }
  func.func @transform_14(%arg0: i32) -> (i32, i32, i32) {
    %c0_i32 = arith.constant 0 : i32
    %c0_i32_0 = arith.constant 0 : i32
    %c0_i32_1 = arith.constant 0 : i32
    %c0_i32_2 = arith.constant 0 : i32
    return %c0_i32, %c0_i32_0, %c0_i32_1 : i32, i32, i32
  }
  func.func @transform_15(%arg0: i32) -> (i32, i32, i32) {
    %c0_i32 = arith.constant 0 : i32
    %c0_i32_0 = arith.constant 0 : i32
    %c0_i32_1 = arith.constant 0 : i32
    %c0_i32_2 = arith.constant 0 : i32
    return %c0_i32, %c0_i32_0, %c0_i32_1 : i32, i32, i32
  }
  func.func @transform_16(%arg0: i32) -> (i32, i32) {
    %c0_i32 = arith.constant 0 : i32
    %c0_i32_0 = arith.constant 0 : i32
    %c0_i32_1 = arith.constant 0 : i32
    return %c0_i32, %c0_i32_0 : i32, i32
  }
  func.func @transform_17(%arg0: i32) -> (i32, i32) {
    %c0_i32 = arith.constant 0 : i32
    %c0_i32_0 = arith.constant 0 : i32
    %c0_i32_1 = arith.constant 0 : i32
    return %c0_i32, %c0_i32_0 : i32, i32
  }
  func.func @transform_18(%arg0: i32) -> (i32, i32) {
    %c0_i32 = arith.constant 0 : i32
    %c0_i32_0 = arith.constant 0 : i32
    %c0_i32_1 = arith.constant 0 : i32
    return %c0_i32, %c0_i32_0 : i32, i32
  }
  func.func @transform_19(%arg0: i32) -> (i32, i32) {
    %c0_i32 = arith.constant 0 : i32
    %c0_i32_0 = arith.constant 0 : i32
    %c0_i32_1 = arith.constant 0 : i32
    return %c0_i32, %c0_i32_0 : i32, i32
  }
  func.func @transform_20(%arg0: i32) -> (i32, i32) {
    %c0_i32 = arith.constant 0 : i32
    %c0_i32_0 = arith.constant 0 : i32
    %c0_i32_1 = arith.constant 0 : i32
    return %c0_i32, %c0_i32_0 : i32, i32
  }
}

</mosaic_0001>

<llo_original>
// kernel: clip_forward.1
$region0: #{clip_forward.1}
  #allocation0 [shape = 'u32[]', space=smem, size = 0x4, offset = 0x4, fixed_abs, tag = 'smem constant byte address 0x4 - core index']
  #allocation1 [shape = 'u32[144,128]{1,0:T(1,128)}', space=vmem, size = 0x12000, scoped, tag = 'internal scratch']
  %s0 = inlined_call_operand.vmem [shape: f32[2,8,192], index: 0, kind: input, shape index: {}]
  %s1 = inlined_call_operand.vmem [shape: f32[192,32], index: 1, kind: input, shape index: {}]
  %s2 = inlined_call_operand.vmem [shape: f32[8,32], index: 2, kind: input, shape index: {}]
  %s3 = inlined_call_operand.vmem [shape: f32[2,32,96], index: 3, kind: input, shape index: {}]
  %s4 = inlined_call_operand.vmem [shape: f32[2,32,32], index: 4, kind: input, shape index: {}]
  %s5 = inlined_call_operand.vmem [shape: f32[2,32,64], index: 5, kind: input, shape index: {}]
  %s6 = inlined_call_operand.vmem [shape: f32[2,64,32], index: 6, kind: input, shape index: {}]
  %s7 = inlined_call_operand.vmem [shape: f32[2,8,128], index: 7, kind: input, shape index: {}]
  %s8 = inlined_call_operand.vmem [shape: f32[2,8,32], index: 8, kind: input, shape index: {}]
  %s9 = inlined_call_operand.vmem [shape: f32[2,8], index: 9, kind: input, shape index: {}]
  %s10 = inlined_call_operand.vmem [shape: f32[2,8], index: 10, kind: input, shape index: {}]
  %s11 = inlined_call_operand.vmem [shape: f32[2,32,96], index: 11, kind: input, shape index: {}]
  %s12 = inlined_call_operand.vmem [shape: f32[2,32,32], index: 12, kind: input, shape index: {}]
  %s13 = inlined_call_operand.vmem [shape: f32[2,32,64], index: 13, kind: input, shape index: {}]
  %s14 = inlined_call_operand.vmem [shape: f32[2,64,32], index: 14, kind: input, shape index: {}]
  %s15 = inlined_call_operand.vmem [shape: f32[2,8,128], index: 15, kind: input, shape index: {}]
  %s16 = inlined_call_operand.vmem [shape: f32[32,32], index: 16, kind: input, shape index: {}]
  %s17 = inlined_call_operand.vmem [shape: f32[8,128], index: 17, kind: input, shape index: {}]
  %s18 = inlined_call_operand.hbm [shape: f32[2,16], index: 18, kind: output, shape index: {0}]
  %s19 = inlined_call_operand.hbm [shape: f32[2,16], index: 19, kind: output, shape index: {1}]
  %s20 = inlined_call_operand.vmem [shape: f32[2,2], index: 20, kind: output, shape index: {2}]
  %21 = xla_tuple %s18, %s19, %s20
  %s22 = sld [smem:[#allocation0]]
  $region98: #{clip_forward.1} parent=0
    _
  %s24 = ssub.s32 1, %s22
  %s25 = scalar_select 0, %s24, %s22
  $region1: #{clip_forward.1} parent=0
    #allocation2 [shape = 'u8[1024]{0}', space=vmem, size = 0x400, scoped, tag = 'output window, operand 0, single buffered']
    #allocation3 [shape = 's32[1]{0}', space=sflag, size = 0x4, scoped, tag = 'scoped memory for clip_forward.1']
    #allocation4 [shape = 'u8[1024]{0}', space=vmem, size = 0x400, scoped, tag = 'output window, operand 1, single buffered']
    #allocation5 [shape = 's32[1]{0}', space=sflag, size = 0x4, scoped, tag = 'scoped memory for clip_forward.1']
    %26 = vsyncpa [#allocation3], 0
    %27 = vsyncpa [#allocation5], 0
    // Predicated region
    $region2: #{clip_forward.1} parent=1 // pred_check
      _
    $region3: #{clip_forward.1} parent=1 // pred_check_branch
      %29 = sbr.rel (0) target = $region5
    $region4: #{clip_forward.1} parent=1 // pred_region
      _
    $region5: #{clip_forward.1} parent=1 // pred_fallthru
      _
    // Predicated region
    $region6: #{clip_forward.1} parent=1 // pred_check
      _
    $region7: #{clip_forward.1} parent=1 // pred_check_branch
      %31 = sbr.rel (0) target = $region9
    $region8: #{clip_forward.1} parent=1 // pred_region
      _
    $region9: #{clip_forward.1} parent=1 // pred_fallthru
      _
    // Predicated region
    $region10: #{clip_forward.1} parent=1 // pred_check
      _
    $region11: #{clip_forward.1} parent=1 // pred_check_branch
      %33 = sbr.rel (0) target = $region13
    $region12: #{clip_forward.1} parent=1 // pred_region
      _
    $region13: #{clip_forward.1} parent=1 // pred_fallthru
      _
    // Predicated region
    $region14: #{clip_forward.1} parent=1 // pred_check
      _
    $region15: #{clip_forward.1} parent=1 // pred_check_branch
      %35 = sbr.rel (0) target = $region17
    $region16: #{clip_forward.1} parent=1 // pred_region
      _
    $region17: #{clip_forward.1} parent=1 // pred_fallthru
      _
    // Predicated region
    $region18: #{clip_forward.1} parent=1 // pred_check
      _
    $region19: #{clip_forward.1} parent=1 // pred_check_branch
      %37 = sbr.rel (0) target = $region21
    $region20: #{clip_forward.1} parent=1 // pred_region
      _
    $region21: #{clip_forward.1} parent=1 // pred_fallthru
      _
    // Predicated region
    $region22: #{clip_forward.1} parent=1 // pred_check
      _
    $region23: #{clip_forward.1} parent=1 // pred_check_branch
      %39 = sbr.rel (0) target = $region25
    $region24: #{clip_forward.1} parent=1 // pred_region
      _
    $region25: #{clip_forward.1} parent=1 // pred_fallthru
      _
    // Predicated region
    $region26: #{clip_forward.1} parent=1 // pred_check
      _
    $region27: #{clip_forward.1} parent=1 // pred_check_branch
      %41 = sbr.rel (0) target = $region29
    $region28: #{clip_forward.1} parent=1 // pred_region
      _
    $region29: #{clip_forward.1} parent=1 // pred_fallthru
      _
    // Predicated region
    $region30: #{clip_forward.1} parent=1 // pred_check
      _
    $region31: #{clip_forward.1} parent=1 // pred_check_branch
      %43 = sbr.rel (0) target = $region33
    $region32: #{clip_forward.1} parent=1 // pred_region
      _
    $region33: #{clip_forward.1} parent=1 // pred_fallthru
      _
    // Predicated region
    $region34: #{clip_forward.1} parent=1 // pred_check
      _
    $region35: #{clip_forward.1} parent=1 // pred_check_branch
      %45 = sbr.rel (0) target = $region37
    $region36: #{clip_forward.1} parent=1 // pred_region
      _
    $region37: #{clip_forward.1} parent=1 // pred_fallthru
      _
    // Predicated region
    $region38: #{clip_forward.1} parent=1 // pred_check
      _
    $region39: #{clip_forward.1} parent=1 // pred_check_branch
      %47 = sbr.rel (0) target = $region41
    $region40: #{clip_forward.1} parent=1 // pred_region
      _
    $region41: #{clip_forward.1} parent=1 // pred_fallthru
      _
    // Predicated region
    $region42: #{clip_forward.1} parent=1 // pred_check
      _
    $region43: #{clip_forward.1} parent=1 // pred_check_branch
      %49 = sbr.rel (0) target = $region45
    $region44: #{clip_forward.1} parent=1 // pred_region
      _
    $region45: #{clip_forward.1} parent=1 // pred_fallthru
      _
    // Predicated region
    $region46: #{clip_forward.1} parent=1 // pred_check
      _
    $region47: #{clip_forward.1} parent=1 // pred_check_branch
      %51 = sbr.rel (0) target = $region49
    $region48: #{clip_forward.1} parent=1 // pred_region
      _
    $region49: #{clip_forward.1} parent=1 // pred_fallthru
      _
    // Predicated region
    $region50: #{clip_forward.1} parent=1 // pred_check
      _
    $region51: #{clip_forward.1} parent=1 // pred_check_branch
      %53 = sbr.rel (0) target = $region53
    $region52: #{clip_forward.1} parent=1 // pred_region
      _
    $region53: #{clip_forward.1} parent=1 // pred_fallthru
      _
    // Predicated region
    $region54: #{clip_forward.1} parent=1 // pred_check
      _
    $region55: #{clip_forward.1} parent=1 // pred_check_branch
      %55 = sbr.rel (0) target = $region57
    $region56: #{clip_forward.1} parent=1 // pred_region
      _
    $region57: #{clip_forward.1} parent=1 // pred_fallthru
      _
    // Predicated region
    $region58: #{clip_forward.1} parent=1 // pred_check
      _
    $region59: #{clip_forward.1} parent=1 // pred_check_branch
      %57 = sbr.rel (0) target = $region61
    $region60: #{clip_forward.1} parent=1 // pred_region
      _
    $region61: #{clip_forward.1} parent=1 // pred_fallthru
      _
    // Predicated region
    $region62: #{clip_forward.1} parent=1 // pred_check
      _
    $region63: #{clip_forward.1} parent=1 // pred_check_branch
      %59 = sbr.rel (0) target = $region65
    $region64: #{clip_forward.1} parent=1 // pred_region
      _
    $region65: #{clip_forward.1} parent=1 // pred_fallthru
      _
    // Predicated region
    $region66: #{clip_forward.1} parent=1 // pred_check
      _
    $region67: #{clip_forward.1} parent=1 // pred_check_branch
      %61 = sbr.rel (0) target = $region69
    $region68: #{clip_forward.1} parent=1 // pred_region
      _
    $region69: #{clip_forward.1} parent=1 // pred_fallthru
      _
    // Predicated region
    $region70: #{clip_forward.1} parent=1 // pred_check
      _
    $region71: #{clip_forward.1} parent=1 // pred_check_branch
      %63 = sbr.rel (0) target = $region73
    $region72: #{clip_forward.1} parent=1 // pred_region
      _
    $region73: #{clip_forward.1} parent=1 // pred_fallthru
      _
    %v64 = vld [vmem:[%s17] sm:$0xff]
    %v65 = vld [vmem:[%s0] sm:$0xff]
    %v66 = vld [vmem:[%s0 + $0x8] sm:$0xff]
    %v67 = vld [vmem:[%s0 + $0x10] sm:$0xff]
    %v68 = vld [vmem:[%s0 + $0x18] sm:$0xff]
    %v69 = vld [vmem:[%s1] sm:$0xff]
    %v70 = vld [vmem:[%s1 + $0x8] sm:$0xff]
    %v71 = vld [vmem:[%s1 + $0x10] sm:$0xff]
    %v72 = vld [vmem:[%s1 + $0x18] sm:$0xff]
    %v73 = vld [vmem:[%s1 + $0x20] sm:$0xff]
    %v74 = vld [vmem:[%s1 + $0x28] sm:$0xff]
    %v75 = vld [vmem:[%s1 + $0x30] sm:$0xff]
    %v76 = vld [vmem:[%s1 + $0x38] sm:$0xff]
    %v77 = vld [vmem:[%s1 + $0x40] sm:$0xff]
    %v78 = vld [vmem:[%s1 + $0x48] sm:$0xff]
    %v79 = vld [vmem:[%s1 + $0x50] sm:$0xff]
    %v80 = vld [vmem:[%s1 + $0x58] sm:$0xff]
    %v81 = vld [vmem:[%s1 + $0x60] sm:$0xff]
    %v82 = vld [vmem:[%s1 + $0x68] sm:$0xff]
    %v83 = vld [vmem:[%s1 + $0x70] sm:$0xff]
    %v84 = vld [vmem:[%s1 + $0x78] sm:$0xff]
    %v85 = vld [vmem:[%s1 + $0x80] sm:$0xff]
    %v86 = vld [vmem:[%s1 + $0x88] sm:$0xff]
    %v87 = vld [vmem:[%s1 + $0x90] sm:$0xff]
    %v88 = vld [vmem:[%s1 + $0x98] sm:$0xff]
    %v89 = vld [vmem:[%s1 + $0xa0] sm:$0xff]
    %v90 = vld [vmem:[%s1 + $0xa8] sm:$0xff]
    %v91 = vld [vmem:[%s1 + $0xb0] sm:$0xff]
    %v92 = vld [vmem:[%s1 + $0xb8] sm:$0xff]
    %vm93 = vcmask 523264
    %v95 = vsel %vm93, %v66, 0
    %v98 = vsel %vm93, %v68, 0
    %100 = vmatprep.subr.mxu0 0.0
    %101 = vmatpush1.msra.mxu0 %v69
    %102 = vmatprep.subr.mxu0 0.0
    %103 = vmatpush1.msra.mxu0 %v70
    %104 = vmatprep.subr.mxu0 0.0
    %105 = vmatpush1.msra.mxu0 %v71
    %106 = vmatprep.subr.mxu0 0.0
    %107 = vmatpush1.msra.mxu0 %v72
    %108 = vmatprep.subr.mxu0 0.0
    %109 = vmatpush1.msra.mxu0 %v73
    %110 = vmatprep.subr.mxu0 0.0
    %111 = vmatpush1.msra.mxu0 %v74
    %112 = vmatprep.subr.mxu0 0.0
    %113 = vmatpush1.msra.mxu0 %v75
    %114 = vmatprep.subr.mxu0 0.0
    %115 = vmatpush1.msra.mxu0 %v76
    %116 = vmatprep.subr.mxu0 0.0
    %117 = vmatpush1.msra.mxu0 %v77
    %118 = vmatprep.subr.mxu0 0.0
    %119 = vmatpush1.msra.mxu0 %v78
    %120 = vmatprep.subr.mxu0 0.0
    %121 = vmatpush1.msra.mxu0 %v79
    %122 = vmatprep.subr.mxu0 0.0
    %123 = vmatpush1.msra.mxu0 %v80
    %124 = vmatprep.subr.mxu0 0.0
    %125 = vmatpush1.msra.mxu0 %v81
    %126 = vmatprep.subr.mxu0 0.0
    %127 = vmatpush1.msra.mxu0 %v82
    %128 = vmatprep.subr.mxu0 0.0
    %129 = vmatpush1.msra.mxu0 %v83
    %130 = vmatprep.subr.mxu0 0.0
    %131 = vmatpush1.msra.mxu0 %v84
    %132 = vmatprep.subr.mxu0 0.0
    %133 = vmatpush1.msra.mxu0 %v85
    %134 = vmatprep.subr.mxu0 0.0
    %135 = vmatpush1.msra.mxu0 %v86
    %136 = vmatprep.subr.mxu0 0.0
    %137 = vmatpush1.msra.mxu0 %v87
    %138 = vmatprep.subr.mxu0 0.0
    %139 = vmatpush1.msra.mxu0 %v88
    %140 = vmatprep.subr.mxu0 0.0
    %141 = vmatpush1.msra.mxu0 %v89
    %142 = vmatprep.subr.mxu0 0.0
    %143 = vmatpush1.msra.mxu0 %v90
    %144 = vmatprep.subr.mxu0 0.0
    %145 = vmatpush1.msra.mxu0 %v91
    %146 = vmatprep.subr.mxu0 0.0
    %147 = vmatpush1.msra.mxu0 %v92
    %148 = vmatprep.subr.mxu0 0.0
    %149 = vmatpush1.msra.mxu0 0.0
    %150 = vmatprep.subr.mxu0 0.0
    %151 = vmatpush1.msra.mxu0 0.0
    %152 = vmatprep.subr.mxu0 0.0
    %153 = vmatpush1.msra.mxu0 0.0
    %154 = vmatprep.subr.mxu0 0.0
    %155 = vmatpush1.msra.mxu0 0.0
    %156 = vmatprep.subr.mxu0 0.0
    %157 = vmatpush1.msra.mxu0 0.0
    %158 = vmatprep.subr.mxu0 0.0
    %159 = vmatpush1.msra.mxu0 0.0
    %160 = vmatprep.subr.mxu0 0.0
    %161 = vmatpush1.msra.mxu0 0.0
    %162 = vmatprep.subr.mxu0 0.0
    %163 = vmatpush1.msra.mxu0 0.0
    %164 = vmatprep.mubr.f32.mxu0 %v95
    %165 = vmatmul.mubr.f32.gmra.mrb[0].mxu0 %v65
    %v166 = vpop.f32.mrb[0].mxu0
    %v167 = vadd.f32 0.0, %v166
    %v168 = vpop.f32.mrb[0].mxu0
    %169 = vmatprep.mubr.f32.mxu0 %v98
    %170 = vmatmul.mubr.f32.gmra.mrb[0].mxu0 %v67
    %v171 = vpop.f32.mrb[0].mxu0
    %v172 = vadd.f32 0.0, %v171
    %v173 = vpop.f32.mrb[0].mxu0
    %174 = vdwg.mxu0
    %v175 = vld [vmem:[%s2] sm:$0xff]
    %v176 = vadd.f32 %v167, %v175
    %v177 = vadd.f32 %v172, %v175
    %vm178 = vcmask 261120
    %v179 = vsel %vm178, %v176, 0.0
    %180 = vadd.xlane.f32.xlu0 %v179
    %v181 = vpop.xlane.xlu0 %180
    %v182 = vsel %vm178, %v177, 0.0
    %183 = vadd.xlane.f32.xlu0 %v182
    %v184 = vpop.xlane.xlu0 %183
    %v185 = vrcp.pop 32.0
    %v186 = vmul.f32 %v181, %v185
    %v187 = vmul.f32 %v184, %v185
    %v188 = vsub.f32 %v176, %v186
    %v189 = vsub.f32 %v177, %v187
    %v190 = vmul.f32 %v188, %v188
    %v191 = vmul.f32 %v189, %v189
    %v192 = vsel %vm178, %v190, 0.0
    %193 = vadd.xlane.f32.xlu0 %v192
    %v194 = vpop.xlane.xlu0 %193
    %v195 = vsel %vm178, %v191, 0.0
    %196 = vadd.xlane.f32.xlu0 %v195
    %v197 = vpop.xlane.xlu0 %196
    %v198 = vmul.f32 %v194, %v185
    %v199 = vmul.f32 %v197, %v185
    %v200 = vadd.f32 %v198, 1e-05
    %v201 = vadd.f32 %v199, 1e-05
    %v202 = vrsqrt.pop %v200
    %v203 = vrsqrt.pop %v201
    %v204 = vmul.f32 %v188, %v202
    %v205 = vmul.f32 %v189, %v203
    %v206 = vlaneseq
    %v207 = vshrl.u32 %v206, 7
    %v208 = vsub.s32 0, %v207
    %v209 = vrot.slane %v64, %v208
    %v210 = vmul.f32 %v204, %v209
    %v211 = vmul.f32 %v205, %v209
    %v212 = vlaneseq
    %v213 = vshrl.u32 %v212, 7
    %v214 = vsub.s32 1, %v213
    %v215 = vrot.slane %v64, %v214
    %v216 = vadd.f32 %v210, %v215
    %v217 = vadd.f32 %v211, %v215
    %v218 = vlaneseq
    %v219 = vand.u32 %v218, 127
    %vm220 = vcmp.lt.s32.totalorder %v219, 5
    %v221 = vsel %vm220, 0.0, -1e+09
    %v222 = vld [vmem:[%s3] sm:$0xff]
    %v223 = vld [vmem:[%s3 + $0x8] sm:$0xff]
    %v224 = vld [vmem:[%s3 + $0x10] sm:$0xff]
    %v225 = vld [vmem:[%s3 + $0x18] sm:$0xff]
    %v226 = vld [vmem:[%s4] sm:$0xff]
    %v227 = vld [vmem:[%s4 + $0x8] sm:$0xff]
    %v228 = vld [vmem:[%s4 + $0x10] sm:$0xff]
    %v229 = vld [vmem:[%s4 + $0x18] sm:$0xff]
    %v230 = vld [vmem:[%s5] sm:$0xff]
    %v231 = vld [vmem:[%s5 + $0x8] sm:$0xff]
    %v232 = vld [vmem:[%s5 + $0x10] sm:$0xff]
    %v233 = vld [vmem:[%s5 + $0x18] sm:$0xff]
    %v234 = vld [vmem:[%s6] sm:$0xff]
    %v235 = vld [vmem:[%s6 + $0x8] sm:$0xff]
    %v236 = vld [vmem:[%s6 + $0x10] sm:$0xff]
    %v237 = vld [vmem:[%s6 + $0x18] sm:$0xff]
    %v238 = vld [vmem:[%s6 + $0x20] sm:$0xff]
    %v239 = vld [vmem:[%s6 + $0x28] sm:$0xff]
    %v240 = vld [vmem:[%s6 + $0x30] sm:$0xff]
    %v241 = vld [vmem:[%s6 + $0x38] sm:$0xff]
    %v242 = vld [vmem:[%s7] sm:$0xff]
    %v243 = vsel %vm178, %v216, 0.0
    %244 = vadd.xlane.f32.xlu0 %v243
    %v245 = vpop.xlane.xlu0 %244
    %v246 = vsel %vm178, %v217, 0.0
    %247 = vadd.xlane.f32.xlu0 %v246
    %v248 = vpop.xlane.xlu0 %247
    %v249 = vmul.f32 %v245, %v185
    %v250 = vmul.f32 %v248, %v185
    %v251 = vsub.f32 %v216, %v249
    %v252 = vsub.f32 %v217, %v250
    %v253 = vmul.f32 %v251, %v251
    %v254 = vmul.f32 %v252, %v252
    %v255 = vsel %vm178, %v253, 0.0
    %256 = vadd.xlane.f32.xlu0 %v255
    %v257 = vpop.xlane.xlu0 %256
    %v258 = vsel %vm178, %v254, 0.0
    %259 = vadd.xlane.f32.xlu0 %v258
    %v260 = vpop.xlane.xlu0 %259
    %v261 = vmul.f32 %v257, %v185
    %v262 = vmul.f32 %v260, %v185
    %v263 = vadd.f32 %v261, 1e-05
    %v264 = vadd.f32 %v262, 1e-05
    %v265 = vrsqrt.pop %v263
    %v266 = vrsqrt.pop %v264
    %v267 = vmul.f32 %v251, %v265
    %v268 = vmul.f32 %v252, %v266
    %v269 = vlaneseq
    %v270 = vshrl.u32 %v269, 7
    %v271 = vsub.s32 0, %v270
    %v272 = vrot.slane %v242, %v271
    %v273 = vmul.f32 %v267, %v272
    %v274 = vmul.f32 %v268, %v272
    %v275 = vlaneseq
    %v276 = vshrl.u32 %v275, 7
    %v277 = vsub.s32 1, %v276
    %v278 = vrot.slane %v242, %v277
    %v279 = vadd.f32 %v273, %v278
    %v280 = vadd.f32 %v274, %v278
    %v281 = vlaneseq
    %v282 = vshrl.u32 %v281, 7
    %v283 = vsub.s32 4, %v282
    %v284 = vrot.slane %v242, %v283
    %v286 = vsel %vm178, %v279, 0
    %v289 = vsel %vm178, %v280, 0
    %291 = vmatprep.subr.mxu0 0.0
    %292 = vmatpush1.msra.mxu0 %v222
    %293 = vmatprep.subr.mxu0 0.0
    %294 = vmatpush1.msra.mxu0 %v223
    %295 = vmatprep.subr.mxu0 0.0
    %296 = vmatpush1.msra.mxu0 %v224
    %297 = vmatprep.subr.mxu0 0.0
    %298 = vmatpush1.msra.mxu0 %v225
    %299 = vmatprep.subr.mxu0 0.0
    %300 = vmatpush1.msra.mxu0 0.0
    %301 = vmatprep.subr.mxu0 0.0
    %302 = vmatpush1.msra.mxu0 0.0
    %303 = vmatprep.subr.mxu0 0.0
    %304 = vmatpush1.msra.mxu0 0.0
    %305 = vmatprep.subr.mxu0 0.0
    %306 = vmatpush1.msra.mxu0 0.0
    %307 = vmatprep.subr.mxu0 0.0
    %308 = vmatpush1.msra.mxu0 0.0
    %309 = vmatprep.subr.mxu0 0.0
    %310 = vmatpush1.msra.mxu0 0.0
    %311 = vmatprep.subr.mxu0 0.0
    %312 = vmatpush1.msra.mxu0 0.0
    %313 = vmatprep.subr.mxu0 0.0
    %314 = vmatpush1.msra.mxu0 0.0
    %315 = vmatprep.subr.mxu0 0.0
    %316 = vmatpush1.msra.mxu0 0.0
    %317 = vmatprep.subr.mxu0 0.0
    %318 = vmatpush1.msra.mxu0 0.0
    %319 = vmatprep.subr.mxu0 0.0
    %320 = vmatpush1.msra.mxu0 0.0
    %321 = vmatprep.subr.mxu0 0.0
    %322 = vmatpush1.msra.mxu0 0.0
    %323 = vmatprep.subr.mxu0 0.0
    %324 = vmatpush1.msra.mxu0 0.0
    %325 = vmatprep.subr.mxu0 0.0
    %326 = vmatpush1.msra.mxu0 0.0
    %327 = vmatprep.subr.mxu0 0.0
    %328 = vmatpush1.msra.mxu0 0.0
    %329 = vmatprep.subr.mxu0 0.0
    %330 = vmatpush1.msra.mxu0 0.0
    %331 = vmatprep.subr.mxu0 0.0
    %332 = vmatpush1.msra.mxu0 0.0
    %333 = vmatprep.subr.mxu0 0.0
    %334 = vmatpush1.msra.mxu0 0.0
    %335 = vmatprep.subr.mxu0 0.0
    %336 = vmatpush1.msra.mxu0 0.0
    %337 = vmatprep.subr.mxu0 0.0
    %338 = vmatpush1.msra.mxu0 0.0
    %339 = vmatprep.subr.mxu0 0.0
    %340 = vmatpush1.msra.mxu0 0.0
    %341 = vmatprep.subr.mxu0 0.0
    %342 = vmatpush1.msra.mxu0 0.0
    %343 = vmatprep.subr.mxu0 0.0
    %344 = vmatpush1.msra.mxu0 0.0
    %345 = vmatprep.subr.mxu0 0.0
    %346 = vmatpush1.msra.mxu0 0.0
    %347 = vmatprep.subr.mxu0 0.0
    %348 = vmatpush1.msra.mxu0 0.0
    %349 = vmatprep.subr.mxu0 0.0
    %350 = vmatpush1.msra.mxu0 0.0
    %351 = vmatprep.subr.mxu0 0.0
    %352 = vmatpush1.msra.mxu0 0.0
    %353 = vmatprep.subr.mxu0 0.0
    %354 = vmatpush1.msra.mxu0 0.0
    %355 = vmatprep.mubr.f32.mxu0 0.0
    %356 = vmatmul.mubr.f32.gmra.mrb[0].mxu0 %v286
    %v357 = vpop.f32.mrb[0].mxu0
    %v358 = vadd.f32 %v284, %v357
    %v359 = vpop.f32.mrb[0].mxu0
    %360 = vmatprep.mubr.f32.mxu0 0.0
    %361 = vmatmul.mubr.f32.gmra.mrb[0].mxu0 %v289
    %v362 = vpop.f32.mrb[0].mxu0
    %v363 = vadd.f32 %v284, %v362
    %v364 = vpop.f32.mrb[0].mxu0
    %365 = vdwg.mxu0
    %367 = vrot.lane.b32.xlu0 %v358, 96
    %v368 = vpop.permute.xlu0 %367
    %vm369 = vcmask 64512
    %v370 = vsel %vm369, %v358, 0
    %v372 = vsel %vm369, %v368, 0
    %374 = vmatprep.subr.mxu0 0.0
    %375 = vmatpush1.xpose.msra.mxu0 %v372
    %376 = vmatprep.subr.mxu0 0.0
    %377 = vmatpush1.xpose.msra.mxu0 0.0
    %378 = vmatprep.subr.mxu0 0.0
    %379 = vmatpush1.xpose.msra.mxu0 0.0
    %380 = vmatprep.subr.mxu0 0.0
    %381 = vmatpush1.xpose.msra.mxu0 0.0
    %382 = vmatprep.subr.mxu0 0.0
    %383 = vmatpush1.xpose.msra.mxu0 0.0
    %384 = vmatprep.subr.mxu0 0.0
    %385 = vmatpush1.xpose.msra.mxu0 0.0
    %386 = vmatprep.subr.mxu0 0.0
    %387 = vmatpush1.xpose.msra.mxu0 0.0
    %388 = vmatprep.subr.mxu0 0.0
    %389 = vmatpush1.xpose.msra.mxu0 0.0
    %390 = vmatprep.subr.mxu0 0.0
    %391 = vmatpush1.xpose.msra.mxu0 0.0
    %392 = vmatprep.subr.mxu0 0.0
    %393 = vmatpush1.xpose.msra.mxu0 0.0
    %394 = vmatprep.subr.mxu0 0.0
    %395 = vmatpush1.xpose.msra.mxu0 0.0
    %396 = vmatprep.subr.mxu0 0.0
    %397 = vmatpush1.xpose.msra.mxu0 0.0
    %398 = vmatprep.subr.mxu0 0.0
    %399 = vmatpush1.xpose.msra.mxu0 0.0
    %400 = vmatprep.subr.mxu0 0.0
    %401 = vmatpush1.xpose.msra.mxu0 0.0
    %402 = vmatprep.subr.mxu0 0.0
    %403 = vmatpush1.xpose.msra.mxu0 0.0
    %404 = vmatprep.subr.mxu0 0.0
    %405 = vmatpush1.xpose.msra.mxu0 0.0
    %406 = vmatprep.subr.mxu0 0.0
    %407 = vmatpush1.xpose.msra.mxu0 0.0
    %408 = vmatprep.subr.mxu0 0.0
    %409 = vmatpush1.xpose.msra.mxu0 0.0
    %410 = vmatprep.subr.mxu0 0.0
    %411 = vmatpush1.xpose.msra.mxu0 0.0
    %412 = vmatprep.subr.mxu0 0.0
    %413 = vmatpush1.xpose.msra.mxu0 0.0
    %414 = vmatprep.subr.mxu0 0.0
    %415 = vmatpush1.xpose.msra.mxu0 0.0
    %416 = vmatprep.subr.mxu0 0.0
    %417 = vmatpush1.xpose.msra.mxu0 0.0
    %418 = vmatprep.subr.mxu0 0.0
    %419 = vmatpush1.xpose.msra.mxu0 0.0
    %420 = vmatprep.subr.mxu0 0.0
    %421 = vmatpush1.xpose.msra.mxu0 0.0
    %422 = vmatprep.subr.mxu0 0.0
    %423 = vmatpush1.xpose.msra.mxu0 0.0
    %424 = vmatprep.subr.mxu0 0.0
    %425 = vmatpush1.xpose.msra.mxu0 0.0
    %426 = vmatprep.subr.mxu0 0.0
    %427 = vmatpush1.xpose.msra.mxu0 0.0
    %428 = vmatprep.subr.mxu0 0.0
    %429 = vmatpush1.xpose.msra.mxu0 0.0
    %430 = vmatprep.subr.mxu0 0.0
    %431 = vmatpush1.xpose.msra.mxu0 0.0
    %432 = vmatprep.subr.mxu0 0.0
    %433 = vmatpush1.xpose.msra.mxu0 0.0
    %434 = vmatprep.subr.mxu0 0.0
    %435 = vmatpush1.xpose.msra.mxu0 0.0
    %436 = vmatprep.subr.mxu0 0.0
    %437 = vmatpush1.xpose.msra.mxu0 0.0
    %438 = vmatprep.mubr.f32.mxu0 0.0
    %439 = vmatmul.mubr.f32.gmra.mrb[0].mxu0 %v370
    %v440 = vpop.f32.mrb[0].mxu0
    %v441 = vadd.f32 %v221, %v440
    %v442 = vpop.f32.mrb[0].mxu0
    %443 = vdwg.mxu0
    %445 = vrot.lane.b32.xlu0 %v363, 96
    %v446 = vpop.permute.xlu0 %445
    %v447 = vsel %vm369, %v363, 0
    %v449 = vsel %vm369, %v446, 0
    %451 = vmatprep.subr.mxu0 0.0
    %452 = vmatpush1.xpose.msra.mxu0 %v449
    %453 = vmatprep.subr.mxu0 0.0
    %454 = vmatpush1.xpose.msra.mxu0 0.0
    %455 = vmatprep.subr.mxu0 0.0
    %456 = vmatpush1.xpose.msra.mxu0 0.0
    %457 = vmatprep.subr.mxu0 0.0
    %458 = vmatpush1.xpose.msra.mxu0 0.0
    %459 = vmatprep.subr.mxu0 0.0
    %460 = vmatpush1.xpose.msra.mxu0 0.0
    %461 = vmatprep.subr.mxu0 0.0
    %462 = vmatpush1.xpose.msra.mxu0 0.0
    %463 = vmatprep.subr.mxu0 0.0
    %464 = vmatpush1.xpose.msra.mxu0 0.0
    %465 = vmatprep.subr.mxu0 0.0
    %466 = vmatpush1.xpose.msra.mxu0 0.0
    %467 = vmatprep.subr.mxu0 0.0
    %468 = vmatpush1.xpose.msra.mxu0 0.0
    %469 = vmatprep.subr.mxu0 0.0
    %470 = vmatpush1.xpose.msra.mxu0 0.0
    %471 = vmatprep.subr.mxu0 0.0
    %472 = vmatpush1.xpose.msra.mxu0 0.0
    %473 = vmatprep.subr.mxu0 0.0
    %474 = vmatpush1.xpose.msra.mxu0 0.0
    %475 = vmatprep.subr.mxu0 0.0
    %476 = vmatpush1.xpose.msra.mxu0 0.0
    %477 = vmatprep.subr.mxu0 0.0
    %478 = vmatpush1.xpose.msra.mxu0 0.0
    %479 = vmatprep.subr.mxu0 0.0
    %480 = vmatpush1.xpose.msra.mxu0 0.0
    %481 = vmatprep.subr.mxu0 0.0
    %482 = vmatpush1.xpose.msra.mxu0 0.0
    %483 = vmatprep.subr.mxu0 0.0
    %484 = vmatpush1.xpose.msra.mxu0 0.0
    %485 = vmatprep.subr.mxu0 0.0
    %486 = vmatpush1.xpose.msra.mxu0 0.0
    %487 = vmatprep.subr.mxu0 0.0
    %488 = vmatpush1.xpose.msra.mxu0 0.0
    %489 = vmatprep.subr.mxu0 0.0
    %490 = vmatpush1.xpose.msra.mxu0 0.0
    %491 = vmatprep.subr.mxu0 0.0
    %492 = vmatpush1.xpose.msra.mxu0 0.0
    %493 = vmatprep.subr.mxu0 0.0
    %494 = vmatpush1.xpose.msra.mxu0 0.0
    %495 = vmatprep.subr.mxu0 0.0
    %496 = vmatpush1.xpose.msra.mxu0 0.0
    %497 = vmatprep.subr.mxu0 0.0
    %498 = vmatpush1.xpose.msra.mxu0 0.0
    %499 = vmatprep.subr.mxu0 0.0
    %500 = vmatpush1.xpose.msra.mxu0 0.0
    %501 = vmatprep.subr.mxu0 0.0
    %502 = vmatpush1.xpose.msra.mxu0 0.0
    %503 = vmatprep.subr.mxu0 0.0
    %504 = vmatpush1.xpose.msra.mxu0 0.0
    %505 = vmatprep.subr.mxu0 0.0
    %506 = vmatpush1.xpose.msra.mxu0 0.0
    %507 = vmatprep.subr.mxu0 0.0
    %508 = vmatpush1.xpose.msra.mxu0 0.0
    %509 = vmatprep.subr.mxu0 0.0
    %510 = vmatpush1.xpose.msra.mxu0 0.0
    %511 = vmatprep.subr.mxu0 0.0
    %512 = vmatpush1.xpose.msra.mxu0 0.0
    %513 = vmatprep.subr.mxu0 0.0
    %514 = vmatpush1.xpose.msra.mxu0 0.0
    %515 = vmatprep.mubr.f32.mxu0 0.0
    %516 = vmatmul.mubr.f32.gmra.mrb[0].mxu0 %v447
    %v517 = vpop.f32.mrb[0].mxu0
    %v518 = vadd.f32 %v221, %v517
    %v519 = vpop.f32.mrb[0].mxu0
    %520 = vdwg.mxu0
    %v521 = vsel %vm369, %v441, -inf
    %522 = vmax.xlane.f32.xlu0 %v521
    %v523 = vpop.xlane.xlu0 %522
    %v524 = vsel %vm369, %v518, -inf
    %525 = vmax.xlane.f32.xlu0 %v524
    %v526 = vpop.xlane.xlu0 %525
    %v527 = vsub.f32 %v441, %v523
    %v528 = vsub.f32 %v518, %v526
    %v529 = vmul.f32 %v527, 1.442695
    %v530 = vpow.pop %v529
    %v531 = vmul.f32 %v528, 1.442695
    %v532 = vpow.pop %v531
    %v533 = vsel %vm369, %v530, 0.0
    %534 = vadd.xlane.f32.xlu0 %v533
    %v535 = vpop.xlane.xlu0 %534
    %v536 = vsel %vm369, %v532, 0.0
    %537 = vadd.xlane.f32.xlu0 %v536
    %v538 = vpop.xlane.xlu0 %537
    %v539 = vrcp.pop %v535
    %v540 = vrcp.pop %v538
    %v541 = vmul.f32 %v530, %v539
    %v542 = vmul.f32 %v532, %v540
    %543 = vrot.lane.b32.xlu0 %v358, 64
    %v544 = vpop.permute.xlu0 %543
    %v547 = vsel %vm369, %v541, 0
    %549 = vmatprep.subr.mxu0 0.0
    %550 = vmatpush1.msra.mxu0 %v544
    %551 = vmatprep.subr.mxu0 0.0
    %552 = vmatpush1.msra.mxu0 0.0
    %553 = vmatprep.subr.mxu0 0.0
    %554 = vmatpush1.msra.mxu0 0.0
    %555 = vmatprep.subr.mxu0 0.0
    %556 = vmatpush1.msra.mxu0 0.0
    %557 = vmatprep.subr.mxu0 0.0
    %558 = vmatpush1.msra.mxu0 0.0
    %559 = vmatprep.subr.mxu0 0.0
    %560 = vmatpush1.msra.mxu0 0.0
    %561 = vmatprep.subr.mxu0 0.0
    %562 = vmatpush1.msra.mxu0 0.0
    %563 = vmatprep.subr.mxu0 0.0
    %564 = vmatpush1.msra.mxu0 0.0
    %565 = vmatprep.subr.mxu0 0.0
    %566 = vmatpush1.msra.mxu0 0.0
    %567 = vmatprep.subr.mxu0 0.0
    %568 = vmatpush1.msra.mxu0 0.0
    %569 = vmatprep.subr.mxu0 0.0
    %570 = vmatpush1.msra.mxu0 0.0
    %571 = vmatprep.subr.mxu0 0.0
    %572 = vmatpush1.msra.mxu0 0.0
    %573 = vmatprep.subr.mxu0 0.0
    %574 = vmatpush1.msra.mxu0 0.0
    %575 = vmatprep.subr.mxu0 0.0
    %576 = vmatpush1.msra.mxu0 0.0
    %577 = vmatprep.subr.mxu0 0.0
    %578 = vmatpush1.msra.mxu0 0.0
    %579 = vmatprep.subr.mxu0 0.0
    %580 = vmatpush1.msra.mxu0 0.0
    %581 = vmatprep.subr.mxu0 0.0
    %582 = vmatpush1.msra.mxu0 0.0
    %583 = vmatprep.subr.mxu0 0.0
    %584 = vmatpush1.msra.mxu0 0.0
    %585 = vmatprep.subr.mxu0 0.0
    %586 = vmatpush1.msra.mxu0 0.0
    %587 = vmatprep.subr.mxu0 0.0
    %588 = vmatpush1.msra.mxu0 0.0
    %589 = vmatprep.subr.mxu0 0.0
    %590 = vmatpush1.msra.mxu0 0.0
    %591 = vmatprep.subr.mxu0 0.0
    %592 = vmatpush1.msra.mxu0 0.0
    %593 = vmatprep.subr.mxu0 0.0
    %594 = vmatpush1.msra.mxu0 0.0
    %595 = vmatprep.subr.mxu0 0.0
    %596 = vmatpush1.msra.mxu0 0.0
    %597 = vmatprep.subr.mxu0 0.0
    %598 = vmatpush1.msra.mxu0 0.0
    %599 = vmatprep.subr.mxu0 0.0
    %600 = vmatpush1.msra.mxu0 0.0
    %601 = vmatprep.subr.mxu0 0.0
    %602 = vmatpush1.msra.mxu0 0.0
    %603 = vmatprep.subr.mxu0 0.0
    %604 = vmatpush1.msra.mxu0 0.0
    %605 = vmatprep.subr.mxu0 0.0
    %606 = vmatpush1.msra.mxu0 0.0
    %607 = vmatprep.subr.mxu0 0.0
    %608 = vmatpush1.msra.mxu0 0.0
    %609 = vmatprep.subr.mxu0 0.0
    %610 = vmatpush1.msra.mxu0 0.0
    %611 = vmatprep.subr.mxu0 0.0
    %612 = vmatpush1.msra.mxu0 0.0
    %613 = vmatprep.mubr.f32.mxu0 0.0
    %614 = vmatmul.mubr.f32.gmra.mrb[0].mxu0 %v547
    %v615 = vpop.f32.mrb[0].mxu0
    %v616 = vadd.f32 0.0, %v615
    %v617 = vpop.f32.mrb[0].mxu0
    %618 = vdwg.mxu0
    %619 = vrot.lane.b32.xlu0 %v363, 64
    %v620 = vpop.permute.xlu0 %619
    %v623 = vsel %vm369, %v542, 0
    %625 = vmatprep.subr.mxu0 0.0
    %626 = vmatpush1.msra.mxu0 %v620
    %627 = vmatprep.subr.mxu0 0.0
    %628 = vmatpush1.msra.mxu0 0.0
    %629 = vmatprep.subr.mxu0 0.0
    %630 = vmatpush1.msra.mxu0 0.0
    %631 = vmatprep.subr.mxu0 0.0
    %632 = vmatpush1.msra.mxu0 0.0
    %633 = vmatprep.subr.mxu0 0.0
    %634 = vmatpush1.msra.mxu0 0.0
    %635 = vmatprep.subr.mxu0 0.0
    %636 = vmatpush1.msra.mxu0 0.0
    %637 = vmatprep.subr.mxu0 0.0
    %638 = vmatpush1.msra.mxu0 0.0
    %639 = vmatprep.subr.mxu0 0.0
    %640 = vmatpush1.msra.mxu0 0.0
    %641 = vmatprep.subr.mxu0 0.0
    %642 = vmatpush1.msra.mxu0 0.0
    %643 = vmatprep.subr.mxu0 0.0
    %644 = vmatpush1.msra.mxu0 0.0
    %645 = vmatprep.subr.mxu0 0.0
    %646 = vmatpush1.msra.mxu0 0.0
    %647 = vmatprep.subr.mxu0 0.0
    %648 = vmatpush1.msra.mxu0 0.0
    %649 = vmatprep.subr.mxu0 0.0
    %650 = vmatpush1.msra.mxu0 0.0
    %651 = vmatprep.subr.mxu0 0.0
    %652 = vmatpush1.msra.mxu0 0.0
    %653 = vmatprep.subr.mxu0 0.0
    %654 = vmatpush1.msra.mxu0 0.0
    %655 = vmatprep.subr.mxu0 0.0
    %656 = vmatpush1.msra.mxu0 0.0
    %657 = vmatprep.subr.mxu0 0.0
    %658 = vmatpush1.msra.mxu0 0.0
    %659 = vmatprep.subr.mxu0 0.0
    %660 = vmatpush1.msra.mxu0 0.0
    %661 = vmatprep.subr.mxu0 0.0
    %662 = vmatpush1.msra.mxu0 0.0
    %663 = vmatprep.subr.mxu0 0.0
    %664 = vmatpush1.msra.mxu0 0.0
    %665 = vmatprep.subr.mxu0 0.0
    %666 = vmatpush1.msra.mxu0 0.0
    %667 = vmatprep.subr.mxu0 0.0
    %668 = vmatpush1.msra.mxu0 0.0
    %669 = vmatprep.subr.mxu0 0.0
    %670 = vmatpush1.msra.mxu0 0.0
    %671 = vmatprep.subr.mxu0 0.0
    %672 = vmatpush1.msra.mxu0 0.0
    %673 = vmatprep.subr.mxu0 0.0
    %674 = vmatpush1.msra.mxu0 0.0
    %675 = vmatprep.subr.mxu0 0.0
    %676 = vmatpush1.msra.mxu0 0.0
    %677 = vmatprep.subr.mxu0 0.0
    %678 = vmatpush1.msra.mxu0 0.0
    %679 = vmatprep.subr.mxu0 0.0
    %680 = vmatpush1.msra.mxu0 0.0
    %681 = vmatprep.subr.mxu0 0.0
    %682 = vmatpush1.msra.mxu0 0.0
    %683 = vmatprep.subr.mxu0 0.0
    %684 = vmatpush1.msra.mxu0 0.0
    %685 = vmatprep.subr.mxu0 0.0
    %686 = vmatpush1.msra.mxu0 0.0
    %687 = vmatprep.subr.mxu0 0.0
    %688 = vmatpush1.msra.mxu0 0.0
    %689 = vmatprep.mubr.f32.mxu0 0.0
    %690 = vmatmul.mubr.f32.gmra.mrb[0].mxu0 %v623
    %v691 = vpop.f32.mrb[0].mxu0
    %v692 = vadd.f32 0.0, %v691
    %v693 = vpop.f32.mrb[0].mxu0
    %694 = vdwg.mxu0
    %695 = vrot.lane.b32.xlu0 %v358, 120
    %v696 = vpop.permute.xlu0 %695
    %697 = vrot.lane.b32.xlu0 %v358, 88
    %v698 = vpop.permute.xlu0 %697
    %v699 = vsel %vm369, %v696, 0
    %v701 = vsel %vm369, %v698, 0
    %703 = vmatprep.subr.mxu0 0.0
    %704 = vmatpush1.xpose.msra.mxu0 %v701
    %705 = vmatprep.subr.mxu0 0.0
    %706 = vmatpush1.xpose.msra.mxu0 0.0
    %707 = vmatprep.subr.mxu0 0.0
    %708 = vmatpush1.xpose.msra.mxu0 0.0
    %709 = vmatprep.subr.mxu0 0.0
    %710 = vmatpush1.xpose.msra.mxu0 0.0
    %711 = vmatprep.subr.mxu0 0.0
    %712 = vmatpush1.xpose.msra.mxu0 0.0
    %713 = vmatprep.subr.mxu0 0.0
    %714 = vmatpush1.xpose.msra.mxu0 0.0
    %715 = vmatprep.subr.mxu0 0.0
    %716 = vmatpush1.xpose.msra.mxu0 0.0
    %717 = vmatprep.subr.mxu0 0.0
    %718 = vmatpush1.xpose.msra.mxu0 0.0
    %719 = vmatprep.subr.mxu0 0.0
    %720 = vmatpush1.xpose.msra.mxu0 0.0
    %721 = vmatprep.subr.mxu0 0.0
    %722 = vmatpush1.xpose.msra.mxu0 0.0
    %723 = vmatprep.subr.mxu0 0.0
    %724 = vmatpush1.xpose.msra.mxu0 0.0
    %725 = vmatprep.subr.mxu0 0.0
    %726 = vmatpush1.xpose.msra.mxu0 0.0
    %727 = vmatprep.subr.mxu0 0.0
    %728 = vmatpush1.xpose.msra.mxu0 0.0
    %729 = vmatprep.subr.mxu0 0.0
    %730 = vmatpush1.xpose.msra.mxu0 0.0
    %731 = vmatprep.subr.mxu0 0.0
    %732 = vmatpush1.xpose.msra.mxu0 0.0
    %733 = vmatprep.subr.mxu0 0.0
    %734 = vmatpush1.xpose.msra.mxu0 0.0
    %735 = vmatprep.subr.mxu0 0.0
    %736 = vmatpush1.xpose.msra.mxu0 0.0
    %737 = vmatprep.subr.mxu0 0.0
    %738 = vmatpush1.xpose.msra.mxu0 0.0
    %739 = vmatprep.subr.mxu0 0.0
    %740 = vmatpush1.xpose.msra.mxu0 0.0
    %741 = vmatprep.subr.mxu0 0.0
    %742 = vmatpush1.xpose.msra.mxu0 0.0
    %743 = vmatprep.subr.mxu0 0.0
    %744 = vmatpush1.xpose.msra.mxu0 0.0
    %745 = vmatprep.subr.mxu0 0.0
    %746 = vmatpush1.xpose.msra.mxu0 0.0
    %747 = vmatprep.subr.mxu0 0.0
    %748 = vmatpush1.xpose.msra.mxu0 0.0
    %749 = vmatprep.subr.mxu0 0.0
    %750 = vmatpush1.xpose.msra.mxu0 0.0
    %751 = vmatprep.subr.mxu0 0.0
    %752 = vmatpush1.xpose.msra.mxu0 0.0
    %753 = vmatprep.subr.mxu0 0.0
    %754 = vmatpush1.xpose.msra.mxu0 0.0
    %755 = vmatprep.subr.mxu0 0.0
    %756 = vmatpush1.xpose.msra.mxu0 0.0
    %757 = vmatprep.subr.mxu0 0.0
    %758 = vmatpush1.xpose.msra.mxu0 0.0
    %759 = vmatprep.subr.mxu0 0.0
    %760 = vmatpush1.xpose.msra.mxu0 0.0
    %761 = vmatprep.subr.mxu0 0.0
    %762 = vmatpush1.xpose.msra.mxu0 0.0
    %763 = vmatprep.subr.mxu0 0.0
    %764 = vmatpush1.xpose.msra.mxu0 0.0
    %765 = vmatprep.subr.mxu0 0.0
    %766 = vmatpush1.xpose.msra.mxu0 0.0
    %767 = vmatprep.mubr.f32.mxu0 0.0
    %768 = vmatmul.mubr.f32.gmra.mrb[0].mxu0 %v699
    %v769 = vpop.f32.mrb[0].mxu0
    %v770 = vadd.f32 %v221, %v769
    %v771 = vpop.f32.mrb[0].mxu0
    %772 = vdwg.mxu0
    %773 = vrot.lane.b32.xlu0 %v363, 120
    %v774 = vpop.permute.xlu0 %773
    %775 = vrot.lane.b32.xlu0 %v363, 88
    %v776 = vpop.permute.xlu0 %775
    %v777 = vsel %vm369, %v774, 0
    %v779 = vsel %vm369, %v776, 0
    %781 = vmatprep.subr.mxu0 0.0
    %782 = vmatpush1.xpose.msra.mxu0 %v779
    %783 = vmatprep.subr.mxu0 0.0
    %784 = vmatpush1.xpose.msra.mxu0 0.0
    %785 = vmatprep.subr.mxu0 0.0
    %786 = vmatpush1.xpose.msra.mxu0 0.0
    %787 = vmatprep.subr.mxu0 0.0
    %788 = vmatpush1.xpose.msra.mxu0 0.0
    %789 = vmatprep.subr.mxu0 0.0
    %790 = vmatpush1.xpose.msra.mxu0 0.0
    %791 = vmatprep.subr.mxu0 0.0
    %792 = vmatpush1.xpose.msra.mxu0 0.0
    %793 = vmatprep.subr.mxu0 0.0
    %794 = vmatpush1.xpose.msra.mxu0 0.0
    %795 = vmatprep.subr.mxu0 0.0
    %796 = vmatpush1.xpose.msra.mxu0 0.0
    %797 = vmatprep.subr.mxu0 0.0
    %798 = vmatpush1.xpose.msra.mxu0 0.0
    %799 = vmatprep.subr.mxu0 0.0
    %800 = vmatpush1.xpose.msra.mxu0 0.0
    %801 = vmatprep.subr.mxu0 0.0
    %802 = vmatpush1.xpose.msra.mxu0 0.0
    %803 = vmatprep.subr.mxu0 0.0
    %804 = vmatpush1.xpose.msra.mxu0 0.0
    %805 = vmatprep.subr.mxu0 0.0
    %806 = vmatpush1.xpose.msra.mxu0 0.0
    %807 = vmatprep.subr.mxu0 0.0
    %808 = vmatpush1.xpose.msra.mxu0 0.0
    %809 = vmatprep.subr.mxu0 0.0
    %810 = vmatpush1.xpose.msra.mxu0 0.0
    %811 = vmatprep.subr.mxu0 0.0
    %812 = vmatpush1.xpose.msra.mxu0 0.0
    %813 = vmatprep.subr.mxu0 0.0
    %814 = vmatpush1.xpose.msra.mxu0 0.0
    %815 = vmatprep.subr.mxu0 0.0
    %816 = vmatpush1.xpose.msra.mxu0 0.0
    %817 = vmatprep.subr.mxu0 0.0
    %818 = vmatpush1.xpose.msra.mxu0 0.0
    %819 = vmatprep.subr.mxu0 0.0
    %820 = vmatpush1.xpose.msra.mxu0 0.0
    %821 = vmatprep.subr.mxu0 0.0
    %822 = vmatpush1.xpose.msra.mxu0 0.0
    %823 = vmatprep.subr.mxu0 0.0
    %824 = vmatpush1.xpose.msra.mxu0 0.0
    %825 = vmatprep.subr.mxu0 0.0
    %826 = vmatpush1.xpose.msra.mxu0 0.0
    %827 = vmatprep.subr.mxu0 0.0
    %828 = vmatpush1.xpose.msra.mxu0 0.0
    %829 = vmatprep.subr.mxu0 0.0
    %830 = vmatpush1.xpose.msra.mxu0 0.0
    %831 = vmatprep.subr.mxu0 0.0
    %832 = vmatpush1.xpose.msra.mxu0 0.0
    %833 = vmatprep.subr.mxu0 0.0
    %834 = vmatpush1.xpose.msra.mxu0 0.0
    %835 = vmatprep.subr.mxu0 0.0
    %836 = vmatpush1.xpose.msra.mxu0 0.0
    %837 = vmatprep.subr.mxu0 0.0
    %838 = vmatpush1.xpose.msra.mxu0 0.0
    %839 = vmatprep.subr.mxu0 0.0
    %840 = vmatpush1.xpose.msra.mxu0 0.0
    %841 = vmatprep.subr.mxu0 0.0
    %842 = vmatpush1.xpose.msra.mxu0 0.0
    %843 = vmatprep.subr.mxu0 0.0
    %844 = vmatpush1.xpose.msra.mxu0 0.0
    %845 = vmatprep.mubr.f32.mxu0 0.0
    %846 = vmatmul.mubr.f32.gmra.mrb[0].mxu0 %v777
    %v847 = vpop.f32.mrb[0].mxu0
    %v848 = vadd.f32 %v221, %v847
    %v849 = vpop.f32.mrb[0].mxu0
    %850 = vdwg.mxu0
    %v851 = vsel %vm369, %v770, -inf
    %852 = vmax.xlane.f32.xlu0 %v851
    %v853 = vpop.xlane.xlu0 %852
    %v854 = vsel %vm369, %v848, -inf
    %855 = vmax.xlane.f32.xlu0 %v854
    %v856 = vpop.xlane.xlu0 %855
    %v857 = vsub.f32 %v770, %v853
    %v858 = vsub.f32 %v848, %v856
    %v859 = vmul.f32 %v857, 1.442695
    %v860 = vpow.pop %v859
    %v861 = vmul.f32 %v858, 1.442695
    %v862 = vpow.pop %v861
    %v863 = vsel %vm369, %v860, 0.0
    %864 = vadd.xlane.f32.xlu0 %v863
    %v865 = vpop.xlane.xlu0 %864
    %v866 = vsel %vm369, %v862, 0.0
    %867 = vadd.xlane.f32.xlu0 %v866
    %v868 = vpop.xlane.xlu0 %867
    %v869 = vrcp.pop %v865
    %v870 = vrcp.pop %v868
    %v871 = vmul.f32 %v860, %v869
    %v872 = vmul.f32 %v862, %v870
    %873 = vrot.lane.b32.xlu0 %v358, 56
    %v874 = vpop.permute.xlu0 %873
    %v877 = vsel %vm369, %v871, 0
    %879 = vmatprep.subr.mxu0 0.0
    %880 = vmatpush1.msra.mxu0 %v874
    %881 = vmatprep.subr.mxu0 0.0
    %882 = vmatpush1.msra.mxu0 0.0
    %883 = vmatprep.subr.mxu0 0.0
    %884 = vmatpush1.msra.mxu0 0.0
    %885 = vmatprep.subr.mxu0 0.0
    %886 = vmatpush1.msra.mxu0 0.0
    %887 = vmatprep.subr.mxu0 0.0
    %888 = vmatpush1.msra.mxu0 0.0
    %889 = vmatprep.subr.mxu0 0.0
    %890 = vmatpush1.msra.mxu0 0.0
    %891 = vmatprep.subr.mxu0 0.0
    %892 = vmatpush1.msra.mxu0 0.0
    %893 = vmatprep.subr.mxu0 0.0
    %894 = vmatpush1.msra.mxu0 0.0
    %895 = vmatprep.subr.mxu0 0.0
    %896 = vmatpush1.msra.mxu0 0.0
    %897 = vmatprep.subr.mxu0 0.0
    %898 = vmatpush1.msra.mxu0 0.0
    %899 = vmatprep.subr.mxu0 0.0
    %900 = vmatpush1.msra.mxu0 0.0
    %901 = vmatprep.subr.mxu0 0.0
    %902 = vmatpush1.msra.mxu0 0.0
    %903 = vmatprep.subr.mxu0 0.0
    %904 = vmatpush1.msra.mxu0 0.0
    %905 = vmatprep.subr.mxu0 0.0
    %906 = vmatpush1.msra.mxu0 0.0
    %907 = vmatprep.subr.mxu0 0.0
    %908 = vmatpush1.msra.mxu0 0.0
    %909 = vmatprep.subr.mxu0 0.0
    %910 = vmatpush1.msra.mxu0 0.0
    %911 = vmatprep.subr.mxu0 0.0
    %912 = vmatpush1.msra.mxu0 0.0
    %913 = vmatprep.subr.mxu0 0.0
    %914 = vmatpush1.msra.mxu0 0.0
    %915 = vmatprep.subr.mxu0 0.0
    %916 = vmatpush1.msra.mxu0 0.0
    %917 = vmatprep.subr.mxu0 0.0
    %918 = vmatpush1.msra.mxu0 0.0
    %919 = vmatprep.subr.mxu0 0.0
    %920 = vmatpush1.msra.mxu0 0.0
    %921 = vmatprep.subr.mxu0 0.0
    %922 = vmatpush1.msra.mxu0 0.0
    %923 = vmatprep.subr.mxu0 0.0
    %924 = vmatpush1.msra.mxu0 0.0
    %925 = vmatprep.subr.mxu0 0.0
    %926 = vmatpush1.msra.mxu0 0.0
    %927 = vmatprep.subr.mxu0 0.0
    %928 = vmatpush1.msra.mxu0 0.0
    %929 = vmatprep.subr.mxu0 0.0
    %930 = vmatpush1.msra.mxu0 0.0
    %931 = vmatprep.subr.mxu0 0.0
    %932 = vmatpush1.msra.mxu0 0.0
    %933 = vmatprep.subr.mxu0 0.0
    %934 = vmatpush1.msra.mxu0 0.0
    %935 = vmatprep.subr.mxu0 0.0
    %936 = vmatpush1.msra.mxu0 0.0
    %937 = vmatprep.subr.mxu0 0.0
    %938 = vmatpush1.msra.mxu0 0.0
    %939 = vmatprep.subr.mxu0 0.0
    %940 = vmatpush1.msra.mxu0 0.0
    %941 = vmatprep.subr.mxu0 0.0
    %942 = vmatpush1.msra.mxu0 0.0
    %943 = vmatprep.mubr.f32.mxu0 0.0
    %944 = vmatmul.mubr.f32.gmra.mrb[0].mxu0 %v877
    %v945 = vpop.f32.mrb[0].mxu0
    %v946 = vadd.f32 0.0, %v945
    %v947 = vpop.f32.mrb[0].mxu0
    %948 = vdwg.mxu0
    %949 = vrot.lane.b32.xlu0 %v363, 56
    %v950 = vpop.permute.xlu0 %949
    %v953 = vsel %vm369, %v872, 0
    %955 = vmatprep.subr.mxu0 0.0
    %956 = vmatpush1.msra.mxu0 %v950
    %957 = vmatprep.subr.mxu0 0.0
    %958 = vmatpush1.msra.mxu0 0.0
    %959 = vmatprep.subr.mxu0 0.0
    %960 = vmatpush1.msra.mxu0 0.0
    %961 = vmatprep.subr.mxu0 0.0
    %962 = vmatpush1.msra.mxu0 0.0
    %963 = vmatprep.subr.mxu0 0.0
    %964 = vmatpush1.msra.mxu0 0.0
    %965 = vmatprep.subr.mxu0 0.0
    %966 = vmatpush1.msra.mxu0 0.0
    %967 = vmatprep.subr.mxu0 0.0
    %968 = vmatpush1.msra.mxu0 0.0
    %969 = vmatprep.subr.mxu0 0.0
    %970 = vmatpush1.msra.mxu0 0.0
    %971 = vmatprep.subr.mxu0 0.0
    %972 = vmatpush1.msra.mxu0 0.0
    %973 = vmatprep.subr.mxu0 0.0
    %974 = vmatpush1.msra.mxu0 0.0
    %975 = vmatprep.subr.mxu0 0.0
    %976 = vmatpush1.msra.mxu0 0.0
    %977 = vmatprep.subr.mxu0 0.0
    %978 = vmatpush1.msra.mxu0 0.0
    %979 = vmatprep.subr.mxu0 0.0
    %980 = vmatpush1.msra.mxu0 0.0
    %981 = vmatprep.subr.mxu0 0.0
    %982 = vmatpush1.msra.mxu0 0.0
    %983 = vmatprep.subr.mxu0 0.0
    %984 = vmatpush1.msra.mxu0 0.0
    %985 = vmatprep.subr.mxu0 0.0
    %986 = vmatpush1.msra.mxu0 0.0
    %987 = vmatprep.subr.mxu0 0.0
    %988 = vmatpush1.msra.mxu0 0.0
    %989 = vmatprep.subr.mxu0 0.0
    %990 = vmatpush1.msra.mxu0 0.0
    %991 = vmatprep.subr.mxu0 0.0
    %992 = vmatpush1.msra.mxu0 0.0
    %993 = vmatprep.subr.mxu0 0.0
    %994 = vmatpush1.msra.mxu0 0.0
    %995 = vmatprep.subr.mxu0 0.0
    %996 = vmatpush1.msra.mxu0 0.0
    %997 = vmatprep.subr.mxu0 0.0
    %998 = vmatpush1.msra.mxu0 0.0
    %999 = vmatprep.subr.mxu0 0.0
    %1000 = vmatpush1.msra.mxu0 0.0
    %1001 = vmatprep.subr.mxu0 0.0
    %1002 = vmatpush1.msra.mxu0 0.0
    %1003 = vmatprep.subr.mxu0 0.0
    %1004 = vmatpush1.msra.mxu0 0.0
    %1005 = vmatprep.subr.mxu0 0.0
    %1006 = vmatpush1.msra.mxu0 0.0
    %1007 = vmatprep.subr.mxu0 0.0
    %1008 = vmatpush1.msra.mxu0 0.0
    %1009 = vmatprep.subr.mxu0 0.0
    %1010 = vmatpush1.msra.mxu0 0.0
    %1011 = vmatprep.subr.mxu0 0.0
    %1012 = vmatpush1.msra.mxu0 0.0
    %1013 = vmatprep.subr.mxu0 0.0
    %1014 = vmatpush1.msra.mxu0 0.0
    %1015 = vmatprep.subr.mxu0 0.0
    %1016 = vmatpush1.msra.mxu0 0.0
    %1017 = vmatprep.subr.mxu0 0.0
    %1018 = vmatpush1.msra.mxu0 0.0
    %1019 = vmatprep.mubr.f32.mxu0 0.0
    %1020 = vmatmul.mubr.f32.gmra.mrb[0].mxu0 %v953
    %v1021 = vpop.f32.mrb[0].mxu0
    %v1022 = vadd.f32 0.0, %v1021
    %v1023 = vpop.f32.mrb[0].mxu0
    %1024 = vdwg.mxu0
    %v1026 = vsel %vm369, %v946, 0
    %v1029 = vsel %vm369, %v1022, 0
    %1031 = vmatprep.subr.mxu0 0.0
    %1032 = vmatpush1.msra.mxu0 %v227
    %1033 = vmatprep.subr.mxu0 0.0
    %1034 = vmatpush1.msra.mxu0 0.0
    %1035 = vmatprep.subr.mxu0 0.0
    %1036 = vmatpush1.msra.mxu0 0.0
    %1037 = vmatprep.subr.mxu0 0.0
    %1038 = vmatpush1.msra.mxu0 0.0
    %1039 = vmatprep.subr.mxu0 0.0
    %1040 = vmatpush1.msra.mxu0 0.0
    %1041 = vmatprep.subr.mxu0 0.0
    %1042 = vmatpush1.msra.mxu0 0.0
    %1043 = vmatprep.subr.mxu0 0.0
    %1044 = vmatpush1.msra.mxu0 0.0
    %1045 = vmatprep.subr.mxu0 0.0
    %1046 = vmatpush1.msra.mxu0 0.0
    %1047 = vmatprep.subr.mxu0 0.0
    %1048 = vmatpush1.msra.mxu0 0.0
    %1049 = vmatprep.subr.mxu0 0.0
    %1050 = vmatpush1.msra.mxu0 0.0
    %1051 = vmatprep.subr.mxu0 0.0
    %1052 = vmatpush1.msra.mxu0 0.0
    %1053 = vmatprep.subr.mxu0 0.0
    %1054 = vmatpush1.msra.mxu0 0.0
    %1055 = vmatprep.subr.mxu0 0.0
    %1056 = vmatpush1.msra.mxu0 0.0
    %1057 = vmatprep.subr.mxu0 0.0
    %1058 = vmatpush1.msra.mxu0 0.0
    %1059 = vmatprep.subr.mxu0 0.0
    %1060 = vmatpush1.msra.mxu0 0.0
    %1061 = vmatprep.subr.mxu0 0.0
    %1062 = vmatpush1.msra.mxu0 0.0
    %1063 = vmatprep.subr.mxu0 0.0
    %1064 = vmatpush1.msra.mxu0 0.0
    %1065 = vmatprep.subr.mxu0 0.0
    %1066 = vmatpush1.msra.mxu0 0.0
    %1067 = vmatprep.subr.mxu0 0.0
    %1068 = vmatpush1.msra.mxu0 0.0
    %1069 = vmatprep.subr.mxu0 0.0
    %1070 = vmatpush1.msra.mxu0 0.0
    %1071 = vmatprep.subr.mxu0 0.0
    %1072 = vmatpush1.msra.mxu0 0.0
    %1073 = vmatprep.subr.mxu0 0.0
    %1074 = vmatpush1.msra.mxu0 0.0
    %1075 = vmatprep.subr.mxu0 0.0
    %1076 = vmatpush1.msra.mxu0 0.0
    %1077 = vmatprep.subr.mxu0 0.0
    %1078 = vmatpush1.msra.mxu0 0.0
    %1079 = vmatprep.subr.mxu0 0.0
    %1080 = vmatpush1.msra.mxu0 0.0
    %1081 = vmatprep.subr.mxu0 0.0
    %1082 = vmatpush1.msra.mxu0 0.0
    %1083 = vmatprep.subr.mxu0 0.0
    %1084 = vmatpush1.msra.mxu0 0.0
    %1085 = vmatprep.subr.mxu0 0.0
    %1086 = vmatpush1.msra.mxu0 0.0
    %1087 = vmatprep.subr.mxu0 0.0
    %1088 = vmatpush1.msra.mxu0 0.0
    %1089 = vmatprep.subr.mxu0 0.0
    %1090 = vmatpush1.msra.mxu0 0.0
    %1091 = vmatprep.subr.mxu0 0.0
    %1092 = vmatpush1.msra.mxu0 0.0
    %1093 = vmatprep.subr.mxu0 0.0
    %1094 = vmatpush1.msra.mxu0 0.0
    %1095 = vmatprep.mubr.f32.mxu0 0.0
    %1096 = vmatmul.mubr.f32.gmra.mrb[0].mxu0 %v1026
    %v1097 = vpop.f32.mrb[0].mxu0
    %v1098 = vadd.f32 0.0, %v1097
    %v1099 = vpop.f32.mrb[0].mxu0
    %1100 = vmatprep.mubr.f32.mxu0 0.0
    %1101 = vmatmul.mubr.f32.gmra.mrb[0].mxu0 %v1029
    %v1102 = vpop.f32.mrb[0].mxu0
    %v1103 = vadd.f32 0.0, %v1102
    %v1104 = vpop.f32.mrb[0].mxu0
    %1105 = vdwg.mxu0
    %v1107 = vsel %vm369, %v616, 0
    %v1110 = vsel %vm369, %v692, 0
    %1112 = vmatprep.subr.mxu0 0.0
    %1113 = vmatpush1.msra.mxu0 %v226
    %1114 = vmatprep.subr.mxu0 0.0
    %1115 = vmatpush1.msra.mxu0 0.0
    %1116 = vmatprep.subr.mxu0 0.0
    %1117 = vmatpush1.msra.mxu0 0.0
    %1118 = vmatprep.subr.mxu0 0.0
    %1119 = vmatpush1.msra.mxu0 0.0
    %1120 = vmatprep.subr.mxu0 0.0
    %1121 = vmatpush1.msra.mxu0 0.0
    %1122 = vmatprep.subr.mxu0 0.0
    %1123 = vmatpush1.msra.mxu0 0.0
    %1124 = vmatprep.subr.mxu0 0.0
    %1125 = vmatpush1.msra.mxu0 0.0
    %1126 = vmatprep.subr.mxu0 0.0
    %1127 = vmatpush1.msra.mxu0 0.0
    %1128 = vmatprep.subr.mxu0 0.0
    %1129 = vmatpush1.msra.mxu0 0.0
    %1130 = vmatprep.subr.mxu0 0.0
    %1131 = vmatpush1.msra.mxu0 0.0
    %1132 = vmatprep.subr.mxu0 0.0
    %1133 = vmatpush1.msra.mxu0 0.0
    %1134 = vmatprep.subr.mxu0 0.0
    %1135 = vmatpush1.msra.mxu0 0.0
    %1136 = vmatprep.subr.mxu0 0.0
    %1137 = vmatpush1.msra.mxu0 0.0
    %1138 = vmatprep.subr.mxu0 0.0
    %1139 = vmatpush1.msra.mxu0 0.0
    %1140 = vmatprep.subr.mxu0 0.0
    %1141 = vmatpush1.msra.mxu0 0.0
    %1142 = vmatprep.subr.mxu0 0.0
    %1143 = vmatpush1.msra.mxu0 0.0
    %1144 = vmatprep.subr.mxu0 0.0
    %1145 = vmatpush1.msra.mxu0 0.0
    %1146 = vmatprep.subr.mxu0 0.0
    %1147 = vmatpush1.msra.mxu0 0.0
    %1148 = vmatprep.subr.mxu0 0.0
    %1149 = vmatpush1.msra.mxu0 0.0
    %1150 = vmatprep.subr.mxu0 0.0
    %1151 = vmatpush1.msra.mxu0 0.0
    %1152 = vmatprep.subr.mxu0 0.0
    %1153 = vmatpush1.msra.mxu0 0.0
    %1154 = vmatprep.subr.mxu0 0.0
    %1155 = vmatpush1.msra.mxu0 0.0
    %1156 = vmatprep.subr.mxu0 0.0
    %1157 = vmatpush1.msra.mxu0 0.0
    %1158 = vmatprep.subr.mxu0 0.0
    %1159 = vmatpush1.msra.mxu0 0.0
    %1160 = vmatprep.subr.mxu0 0.0
    %1161 = vmatpush1.msra.mxu0 0.0
    %1162 = vmatprep.subr.mxu0 0.0
    %1163 = vmatpush1.msra.mxu0 0.0
    %1164 = vmatprep.subr.mxu0 0.0
    %1165 = vmatpush1.msra.mxu0 0.0
    %1166 = vmatprep.subr.mxu0 0.0
    %1167 = vmatpush1.msra.mxu0 0.0
    %1168 = vmatprep.subr.mxu0 0.0
    %1169 = vmatpush1.msra.mxu0 0.0
    %1170 = vmatprep.subr.mxu0 0.0
    %1171 = vmatpush1.msra.mxu0 0.0
    %1172 = vmatprep.subr.mxu0 0.0
    %1173 = vmatpush1.msra.mxu0 0.0
    %1174 = vmatprep.subr.mxu0 0.0
    %1175 = vmatpush1.msra.mxu0 0.0
    %1176 = vmatprep.mubr.f32.mxu0 0.0
    %1177 = vmatmul.mubr.f32.gmra.mrb[0].mxu0 %v1107
    %v1178 = vpop.f32.mrb[0].mxu0
    %v1179 = vadd.f32 %v1098, %v1178
    %v1180 = vpop.f32.mrb[0].mxu0
    %1181 = vmatprep.mubr.f32.mxu0 0.0
    %1182 = vmatmul.mubr.f32.gmra.mrb[0].mxu0 %v1110
    %v1183 = vpop.f32.mrb[0].mxu0
    %v1184 = vadd.f32 %v1103, %v1183
    %v1185 = vpop.f32.mrb[0].mxu0
    %1186 = vdwg.mxu0
    %1187 = vrot.lane.b32.xlu0 %v358, 112
    %v1188 = vpop.permute.xlu0 %1187
    %1189 = vrot.lane.b32.xlu0 %v358, 80
    %v1190 = vpop.permute.xlu0 %1189
    %v1191 = vsel %vm369, %v1188, 0
    %v1193 = vsel %vm369, %v1190, 0
    %1195 = vmatprep.subr.mxu0 0.0
    %1196 = vmatpush1.xpose.msra.mxu0 %v1193
    %1197 = vmatprep.subr.mxu0 0.0
    %1198 = vmatpush1.xpose.msra.mxu0 0.0
    %1199 = vmatprep.subr.mxu0 0.0
    %1200 = vmatpush1.xpose.msra.mxu0 0.0
    %1201 = vmatprep.subr.mxu0 0.0
    %1202 = vmatpush1.xpose.msra.mxu0 0.0
    %1203 = vmatprep.subr.mxu0 0.0
    %1204 = vmatpush1.xpose.msra.mxu0 0.0
    %1205 = vmatprep.subr.mxu0 0.0
    %1206 = vmatpush1.xpose.msra.mxu0 0.0
    %1207 = vmatprep.subr.mxu0 0.0
    %1208 = vmatpush1.xpose.msra.mxu0 0.0
    %1209 = vmatprep.subr.mxu0 0.0
    %1210 = vmatpush1.xpose.msra.mxu0 0.0
    %1211 = vmatprep.subr.mxu0 0.0
    %1212 = vmatpush1.xpose.msra.mxu0 0.0
    %1213 = vmatprep.subr.mxu0 0.0
    %1214 = vmatpush1.xpose.msra.mxu0 0.0
    %1215 = vmatprep.subr.mxu0 0.0
    %1216 = vmatpush1.xpose.msra.mxu0 0.0
    %1217 = vmatprep.subr.mxu0 0.0
    %1218 = vmatpush1.xpose.msra.mxu0 0.0
    %1219 = vmatprep.subr.mxu0 0.0
    %1220 = vmatpush1.xpose.msra.mxu0 0.0
    %1221 = vmatprep.subr.mxu0 0.0
    %1222 = vmatpush1.xpose.msra.mxu0 0.0
    %1223 = vmatprep.subr.mxu0 0.0
    %1224 = vmatpush1.xpose.msra.mxu0 0.0
    %1225 = vmatprep.subr.mxu0 0.0
    %1226 = vmatpush1.xpose.msra.mxu0 0.0
    %1227 = vmatprep.subr.mxu0 0.0
    %1228 = vmatpush1.xpose.msra.mxu0 0.0
    %1229 = vmatprep.subr.mxu0 0.0
    %1230 = vmatpush1.xpose.msra.mxu0 0.0
    %1231 = vmatprep.subr.mxu0 0.0
    %1232 = vmatpush1.xpose.msra.mxu0 0.0
    %1233 = vmatprep.subr.mxu0 0.0
    %1234 = vmatpush1.xpose.msra.mxu0 0.0
    %1235 = vmatprep.subr.mxu0 0.0
    %1236 = vmatpush1.xpose.msra.mxu0 0.0
    %1237 = vmatprep.subr.mxu0 0.0
    %1238 = vmatpush1.xpose.msra.mxu0 0.0
    %1239 = vmatprep.subr.mxu0 0.0
    %1240 = vmatpush1.xpose.msra.mxu0 0.0
    %1241 = vmatprep.subr.mxu0 0.0
    %1242 = vmatpush1.xpose.msra.mxu0 0.0
    %1243 = vmatprep.subr.mxu0 0.0
    %1244 = vmatpush1.xpose.msra.mxu0 0.0
    %1245 = vmatprep.subr.mxu0 0.0
    %1246 = vmatpush1.xpose.msra.mxu0 0.0
    %1247 = vmatprep.subr.mxu0 0.0
    %1248 = vmatpush1.xpose.msra.mxu0 0.0
    %1249 = vmatprep.subr.mxu0 0.0
    %1250 = vmatpush1.xpose.msra.mxu0 0.0
    %1251 = vmatprep.subr.mxu0 0.0
    %1252 = vmatpush1.xpose.msra.mxu0 0.0
    %1253 = vmatprep.subr.mxu0 0.0
    %1254 = vmatpush1.xpose.msra.mxu0 0.0
    %1255 = vmatprep.subr.mxu0 0.0
    %1256 = vmatpush1.xpose.msra.mxu0 0.0
    %1257 = vmatprep.subr.mxu0 0.0
    %1258 = vmatpush1.xpose.msra.mxu0 0.0
    %1259 = vmatprep.mubr.f32.mxu0 0.0
    %1260 = vmatmul.mubr.f32.gmra.mrb[0].mxu0 %v1191
    %v1261 = vpop.f32.mrb[0].mxu0
    %v1262 = vadd.f32 %v221, %v1261
    %v1263 = vpop.f32.mrb[0].mxu0
    %1264 = vdwg.mxu0
    %1265 = vrot.lane.b32.xlu0 %v363, 112
    %v1266 = vpop.permute.xlu0 %1265
    %1267 = vrot.lane.b32.xlu0 %v363, 80
    %v1268 = vpop.permute.xlu0 %1267
    %v1269 = vsel %vm369, %v1266, 0
    %v1271 = vsel %vm369, %v1268, 0
    %1273 = vmatprep.subr.mxu0 0.0
    %1274 = vmatpush1.xpose.msra.mxu0 %v1271
    %1275 = vmatprep.subr.mxu0 0.0
    %1276 = vmatpush1.xpose.msra.mxu0 0.0
    %1277 = vmatprep.subr.mxu0 0.0
    %1278 = vmatpush1.xpose.msra.mxu0 0.0
    %1279 = vmatprep.subr.mxu0 0.0
    %1280 = vmatpush1.xpose.msra.mxu0 0.0
    %1281 = vmatprep.subr.mxu0 0.0
    %1282 = vmatpush1.xpose.msra.mxu0 0.0
    %1283 = vmatprep.subr.mxu0 0.0
    %1284 = vmatpush1.xpose.msra.mxu0 0.0
    %1285 = vmatprep.subr.mxu0 0.0
    %1286 = vmatpush1.xpose.msra.mxu0 0.0
    %1287 = vmatprep.subr.mxu0 0.0
    %1288 = vmatpush1.xpose.msra.mxu0 0.0
    %1289 = vmatprep.subr.mxu0 0.0
    %1290 = vmatpush1.xpose.msra.mxu0 0.0
    %1291 = vmatprep.subr.mxu0 0.0
    %1292 = vmatpush1.xpose.msra.mxu0 0.0
    %1293 = vmatprep.subr.mxu0 0.0
    %1294 = vmatpush1.xpose.msra.mxu0 0.0
    %1295 = vmatprep.subr.mxu0 0.0
    %1296 = vmatpush1.xpose.msra.mxu0 0.0
    %1297 = vmatprep.subr.mxu0 0.0
    %1298 = vmatpush1.xpose.msra.mxu0 0.0
    %1299 = vmatprep.subr.mxu0 0.0
    %1300 = vmatpush1.xpose.msra.mxu0 0.0
    %1301 = vmatprep.subr.mxu0 0.0
    %1302 = vmatpush1.xpose.msra.mxu0 0.0
    %1303 = vmatprep.subr.mxu0 0.0
    %1304 = vmatpush1.xpose.msra.mxu0 0.0
    %1305 = vmatprep.subr.mxu0 0.0
    %1306 = vmatpush1.xpose.msra.mxu0 0.0
    %1307 = vmatprep.subr.mxu0 0.0
    %1308 = vmatpush1.xpose.msra.mxu0 0.0
    %1309 = vmatprep.subr.mxu0 0.0
    %1310 = vmatpush1.xpose.msra.mxu0 0.0
    %1311 = vmatprep.subr.mxu0 0.0
    %1312 = vmatpush1.xpose.msra.mxu0 0.0
    %1313 = vmatprep.subr.mxu0 0.0
    %1314 = vmatpush1.xpose.msra.mxu0 0.0
    %1315 = vmatprep.subr.mxu0 0.0
    %1316 = vmatpush1.xpose.msra.mxu0 0.0
    %1317 = vmatprep.subr.mxu0 0.0
    %1318 = vmatpush1.xpose.msra.mxu0 0.0
    %1319 = vmatprep.subr.mxu0 0.0
    %1320 = vmatpush1.xpose.msra.mxu0 0.0
    %1321 = vmatprep.subr.mxu0 0.0
    %1322 = vmatpush1.xpose.msra.mxu0 0.0
    %1323 = vmatprep.subr.mxu0 0.0
    %1324 = vmatpush1.xpose.msra.mxu0 0.0
    %1325 = vmatprep.subr.mxu0 0.0
    %1326 = vmatpush1.xpose.msra.mxu0 0.0
    %1327 = vmatprep.subr.mxu0 0.0
    %1328 = vmatpush1.xpose.msra.mxu0 0.0
    %1329 = vmatprep.subr.mxu0 0.0
    %1330 = vmatpush1.xpose.msra.mxu0 0.0
    %1331 = vmatprep.subr.mxu0 0.0
    %1332 = vmatpush1.xpose.msra.mxu0 0.0
    %1333 = vmatprep.subr.mxu0 0.0
    %1334 = vmatpush1.xpose.msra.mxu0 0.0
    %1335 = vmatprep.subr.mxu0 0.0
    %1336 = vmatpush1.xpose.msra.mxu0 0.0
    %1337 = vmatprep.mubr.f32.mxu0 0.0
    %1338 = vmatmul.mubr.f32.gmra.mrb[0].mxu0 %v1269
    %v1339 = vpop.f32.mrb[0].mxu0
    %v1340 = vadd.f32 %v221, %v1339
    %v1341 = vpop.f32.mrb[0].mxu0
    %1342 = vdwg.mxu0
    %v1343 = vsel %vm369, %v1262, -inf
    %1344 = vmax.xlane.f32.xlu0 %v1343
    %v1345 = vpop.xlane.xlu0 %1344
    %v1346 = vsel %vm369, %v1340, -inf
    %1347 = vmax.xlane.f32.xlu0 %v1346
    %v1348 = vpop.xlane.xlu0 %1347
    %v1349 = vsub.f32 %v1262, %v1345
    %v1350 = vsub.f32 %v1340, %v1348
    %v1351 = vmul.f32 %v1349, 1.442695
    %v1352 = vpow.pop %v1351
    %v1353 = vmul.f32 %v1350, 1.442695
    %v1354 = vpow.pop %v1353
    %v1355 = vsel %vm369, %v1352, 0.0
    %1356 = vadd.xlane.f32.xlu0 %v1355
    %v1357 = vpop.xlane.xlu0 %1356
    %v1358 = vsel %vm369, %v1354, 0.0
    %1359 = vadd.xlane.f32.xlu0 %v1358
    %v1360 = vpop.xlane.xlu0 %1359
    %v1361 = vrcp.pop %v1357
    %v1362 = vrcp.pop %v1360
    %v1363 = vmul.f32 %v1352, %v1361
    %v1364 = vmul.f32 %v1354, %v1362
    %1365 = vrot.lane.b32.xlu0 %v358, 48
    %v1366 = vpop.permute.xlu0 %1365
    %v1369 = vsel %vm369, %v1363, 0
    %1371 = vmatprep.subr.mxu0 0.0
    %1372 = vmatpush1.msra.mxu0 %v1366
    %1373 = vmatprep.subr.mxu0 0.0
    %1374 = vmatpush1.msra.mxu0 0.0
    %1375 = vmatprep.subr.mxu0 0.0
    %1376 = vmatpush1.msra.mxu0 0.0
    %1377 = vmatprep.subr.mxu0 0.0
    %1378 = vmatpush1.msra.mxu0 0.0
    %1379 = vmatprep.subr.mxu0 0.0
    %1380 = vmatpush1.msra.mxu0 0.0
    %1381 = vmatprep.subr.mxu0 0.0
    %1382 = vmatpush1.msra.mxu0 0.0
    %1383 = vmatprep.subr.mxu0 0.0
    %1384 = vmatpush1.msra.mxu0 0.0
    %1385 = vmatprep.subr.mxu0 0.0
    %1386 = vmatpush1.msra.mxu0 0.0
    %1387 = vmatprep.subr.mxu0 0.0
    %1388 = vmatpush1.msra.mxu0 0.0
    %1389 = vmatprep.subr.mxu0 0.0
    %1390 = vmatpush1.msra.mxu0 0.0
    %1391 = vmatprep.subr.mxu0 0.0
    %1392 = vmatpush1.msra.mxu0 0.0
    %1393 = vmatprep.subr.mxu0 0.0
    %1394 = vmatpush1.msra.mxu0 0.0
    %1395 = vmatprep.subr.mxu0 0.0
    %1396 = vmatpush1.msra.mxu0 0.0
    %1397 = vmatprep.subr.mxu0 0.0
    %1398 = vmatpush1.msra.mxu0 0.0
    %1399 = vmatprep.subr.mxu0 0.0
    %1400 = vmatpush1.msra.mxu0 0.0
    %1401 = vmatprep.subr.mxu0 0.0
    %1402 = vmatpush1.msra.mxu0 0.0
    %1403 = vmatprep.subr.mxu0 0.0
    %1404 = vmatpush1.msra.mxu0 0.0
    %1405 = vmatprep.subr.mxu0 0.0
    %1406 = vmatpush1.msra.mxu0 0.0
    %1407 = vmatprep.subr.mxu0 0.0
    %1408 = vmatpush1.msra.mxu0 0.0
    %1409 = vmatprep.subr.mxu0 0.0
    %1410 = vmatpush1.msra.mxu0 0.0
    %1411 = vmatprep.subr.mxu0 0.0
    %1412 = vmatpush1.msra.mxu0 0.0
    %1413 = vmatprep.subr.mxu0 0.0
    %1414 = vmatpush1.msra.mxu0 0.0
    %1415 = vmatprep.subr.mxu0 0.0
    %1416 = vmatpush1.msra.mxu0 0.0
    %1417 = vmatprep.subr.mxu0 0.0
    %1418 = vmatpush1.msra.mxu0 0.0
    %1419 = vmatprep.subr.mxu0 0.0
    %1420 = vmatpush1.msra.mxu0 0.0
    %1421 = vmatprep.subr.mxu0 0.0
    %1422 = vmatpush1.msra.mxu0 0.0
    %1423 = vmatprep.subr.mxu0 0.0
    %1424 = vmatpush1.msra.mxu0 0.0
    %1425 = vmatprep.subr.mxu0 0.0
    %1426 = vmatpush1.msra.mxu0 0.0
    %1427 = vmatprep.subr.mxu0 0.0
    %1428 = vmatpush1.msra.mxu0 0.0
    %1429 = vmatprep.subr.mxu0 0.0
    %1430 = vmatpush1.msra.mxu0 0.0
    %1431 = vmatprep.subr.mxu0 0.0
    %1432 = vmatpush1.msra.mxu0 0.0
    %1433 = vmatprep.subr.mxu0 0.0
    %1434 = vmatpush1.msra.mxu0 0.0
    %1435 = vmatprep.mubr.f32.mxu0 0.0
    %1436 = vmatmul.mubr.f32.gmra.mrb[0].mxu0 %v1369
    %v1437 = vpop.f32.mrb[0].mxu0
    %v1438 = vadd.f32 0.0, %v1437
    %v1439 = vpop.f32.mrb[0].mxu0
    %1440 = vdwg.mxu0
    %1441 = vrot.lane.b32.xlu0 %v363, 48
    %v1442 = vpop.permute.xlu0 %1441
    %v1445 = vsel %vm369, %v1364, 0
    %1447 = vmatprep.subr.mxu0 0.0
    %1448 = vmatpush1.msra.mxu0 %v1442
    %1449 = vmatprep.subr.mxu0 0.0
    %1450 = vmatpush1.msra.mxu0 0.0
    %1451 = vmatprep.subr.mxu0 0.0
    %1452 = vmatpush1.msra.mxu0 0.0
    %1453 = vmatprep.subr.mxu0 0.0
    %1454 = vmatpush1.msra.mxu0 0.0
    %1455 = vmatprep.subr.mxu0 0.0
    %1456 = vmatpush1.msra.mxu0 0.0
    %1457 = vmatprep.subr.mxu0 0.0
    %1458 = vmatpush1.msra.mxu0 0.0
    %1459 = vmatprep.subr.mxu0 0.0
    %1460 = vmatpush1.msra.mxu0 0.0
    %1461 = vmatprep.subr.mxu0 0.0
    %1462 = vmatpush1.msra.mxu0 0.0
    %1463 = vmatprep.subr.mxu0 0.0
    %1464 = vmatpush1.msra.mxu0 0.0
    %1465 = vmatprep.subr.mxu0 0.0
    %1466 = vmatpush1.msra.mxu0 0.0
    %1467 = vmatprep.subr.mxu0 0.0
    %1468 = vmatpush1.msra.mxu0 0.0
    %1469 = vmatprep.subr.mxu0 0.0
    %1470 = vmatpush1.msra.mxu0 0.0
    %1471 = vmatprep.subr.mxu0 0.0
    %1472 = vmatpush1.msra.mxu0 0.0
    %1473 = vmatprep.subr.mxu0 0.0
    %1474 = vmatpush1.msra.mxu0 0.0
    %1475 = vmatprep.subr.mxu0 0.0
    %1476 = vmatpush1.msra.mxu0 0.0
    %1477 = vmatprep.subr.mxu0 0.0
    %1478 = vmatpush1.msra.mxu0 0.0
    %1479 = vmatprep.subr.mxu0 0.0
    %1480 = vmatpush1.msra.mxu0 0.0
    %1481 = vmatprep.subr.mxu0 0.0
    %1482 = vmatpush1.msra.mxu0 0.0
    %1483 = vmatprep.subr.mxu0 0.0
    %1484 = vmatpush1.msra.mxu0 0.0
    %1485 = vmatprep.subr.mxu0 0.0
    %1486 = vmatpush1.msra.mxu0 0.0
    %1487 = vmatprep.subr.mxu0 0.0
    %1488 = vmatpush1.msra.mxu0 0.0
    %1489 = vmatprep.subr.mxu0 0.0
    %1490 = vmatpush1.msra.mxu0 0.0
    %1491 = vmatprep.subr.mxu0 0.0
    %1492 = vmatpush1.msra.mxu0 0.0
    %1493 = vmatprep.subr.mxu0 0.0
    %1494 = vmatpush1.msra.mxu0 0.0
    %1495 = vmatprep.subr.mxu0 0.0
    %1496 = vmatpush1.msra.mxu0 0.0
    %1497 = vmatprep.subr.mxu0 0.0
    %1498 = vmatpush1.msra.mxu0 0.0
    %1499 = vmatprep.subr.mxu0 0.0
    %1500 = vmatpush1.msra.mxu0 0.0
    %1501 = vmatprep.subr.mxu0 0.0
    %1502 = vmatpush1.msra.mxu0 0.0
    %1503 = vmatprep.subr.mxu0 0.0
    %1504 = vmatpush1.msra.mxu0 0.0
    %1505 = vmatprep.subr.mxu0 0.0
    %1506 = vmatpush1.msra.mxu0 0.0
    %1507 = vmatprep.subr.mxu0 0.0
    %1508 = vmatpush1.msra.mxu0 0.0
    %1509 = vmatprep.subr.mxu0 0.0
    %1510 = vmatpush1.msra.mxu0 0.0
    %1511 = vmatprep.mubr.f32.mxu0 0.0
    %1512 = vmatmul.mubr.f32.gmra.mrb[0].mxu0 %v1445
    %v1513 = vpop.f32.mrb[0].mxu0
    %v1514 = vadd.f32 0.0, %v1513
    %v1515 = vpop.f32.mrb[0].mxu0
    %1516 = vdwg.mxu0
    %v1518 = vsel %vm369, %v1438, 0
    %v1521 = vsel %vm369, %v1514, 0
    %1523 = vmatprep.subr.mxu0 0.0
    %1524 = vmatpush1.msra.mxu0 %v228
    %1525 = vmatprep.subr.mxu0 0.0
    %1526 = vmatpush1.msra.mxu0 0.0
    %1527 = vmatprep.subr.mxu0 0.0
    %1528 = vmatpush1.msra.mxu0 0.0
    %1529 = vmatprep.subr.mxu0 0.0
    %1530 = vmatpush1.msra.mxu0 0.0
    %1531 = vmatprep.subr.mxu0 0.0
    %1532 = vmatpush1.msra.mxu0 0.0
    %1533 = vmatprep.subr.mxu0 0.0
    %1534 = vmatpush1.msra.mxu0 0.0
    %1535 = vmatprep.subr.mxu0 0.0
    %1536 = vmatpush1.msra.mxu0 0.0
    %1537 = vmatprep.subr.mxu0 0.0
    %1538 = vmatpush1.msra.mxu0 0.0
    %1539 = vmatprep.subr.mxu0 0.0
    %1540 = vmatpush1.msra.mxu0 0.0
    %1541 = vmatprep.subr.mxu0 0.0
    %1542 = vmatpush1.msra.mxu0 0.0
    %1543 = vmatprep.subr.mxu0 0.0
    %1544 = vmatpush1.msra.mxu0 0.0
    %1545 = vmatprep.subr.mxu0 0.0
    %1546 = vmatpush1.msra.mxu0 0.0
    %1547 = vmatprep.subr.mxu0 0.0
    %1548 = vmatpush1.msra.mxu0 0.0
    %1549 = vmatprep.subr.mxu0 0.0
    %1550 = vmatpush1.msra.mxu0 0.0
    %1551 = vmatprep.subr.mxu0 0.0
    %1552 = vmatpush1.msra.mxu0 0.0
    %1553 = vmatprep.subr.mxu0 0.0
    %1554 = vmatpush1.msra.mxu0 0.0
    %1555 = vmatprep.subr.mxu0 0.0
    %1556 = vmatpush1.msra.mxu0 0.0
    %1557 = vmatprep.subr.mxu0 0.0
    %1558 = vmatpush1.msra.mxu0 0.0
    %1559 = vmatprep.subr.mxu0 0.0
    %1560 = vmatpush1.msra.mxu0 0.0
    %1561 = vmatprep.subr.mxu0 0.0
    %1562 = vmatpush1.msra.mxu0 0.0
    %1563 = vmatprep.subr.mxu0 0.0
    %1564 = vmatpush1.msra.mxu0 0.0
    %1565 = vmatprep.subr.mxu0 0.0
    %1566 = vmatpush1.msra.mxu0 0.0
    %1567 = vmatprep.subr.mxu0 0.0
    %1568 = vmatpush1.msra.mxu0 0.0
    %1569 = vmatprep.subr.mxu0 0.0
    %1570 = vmatpush1.msra.mxu0 0.0
    %1571 = vmatprep.subr.mxu0 0.0
    %1572 = vmatpush1.msra.mxu0 0.0
    %1573 = vmatprep.subr.mxu0 0.0
    %1574 = vmatpush1.msra.mxu0 0.0
    %1575 = vmatprep.subr.mxu0 0.0
    %1576 = vmatpush1.msra.mxu0 0.0
    %1577 = vmatprep.subr.mxu0 0.0
    %1578 = vmatpush1.msra.mxu0 0.0
    %1579 = vmatprep.subr.mxu0 0.0
    %1580 = vmatpush1.msra.mxu0 0.0
    %1581 = vmatprep.subr.mxu0 0.0
    %1582 = vmatpush1.msra.mxu0 0.0
    %1583 = vmatprep.subr.mxu0 0.0
    %1584 = vmatpush1.msra.mxu0 0.0
    %1585 = vmatprep.subr.mxu0 0.0
    %1586 = vmatpush1.msra.mxu0 0.0
    %1587 = vmatprep.mubr.f32.mxu0 0.0
    %1588 = vmatmul.mubr.f32.gmra.mrb[0].mxu0 %v1518
    %v1589 = vpop.f32.mrb[0].mxu0
    %v1590 = vadd.f32 0.0, %v1589
    %v1591 = vpop.f32.mrb[0].mxu0
    %1592 = vmatprep.mubr.f32.mxu0 0.0
    %1593 = vmatmul.mubr.f32.gmra.mrb[0].mxu0 %v1521
    %v1594 = vpop.f32.mrb[0].mxu0
    %v1595 = vadd.f32 0.0, %v1594
    %v1596 = vpop.f32.mrb[0].mxu0
    %1597 = vdwg.mxu0
    %v1598 = vadd.f32 %v1179, %v1590
    %v1599 = vadd.f32 %v1184, %v1595
    %1600 = vrot.lane.b32.xlu0 %v358, 104
    %v1601 = vpop.permute.xlu0 %1600
    %1602 = vrot.lane.b32.xlu0 %v358, 72
    %v1603 = vpop.permute.xlu0 %1602
    %v1604 = vsel %vm369, %v1601, 0
    %v1606 = vsel %vm369, %v1603, 0
    %1608 = vmatprep.subr.mxu0 0.0
    %1609 = vmatpush1.xpose.msra.mxu0 %v1606
    %1610 = vmatprep.subr.mxu0 0.0
    %1611 = vmatpush1.xpose.msra.mxu0 0.0
    %1612 = vmatprep.subr.mxu0 0.0
    %1613 = vmatpush1.xpose.msra.mxu0 0.0
    %1614 = vmatprep.subr.mxu0 0.0
    %1615 = vmatpush1.xpose.msra.mxu0 0.0
    %1616 = vmatprep.subr.mxu0 0.0
    %1617 = vmatpush1.xpose.msra.mxu0 0.0
    %1618 = vmatprep.subr.mxu0 0.0
    %1619 = vmatpush1.xpose.msra.mxu0 0.0
    %1620 = vmatprep.subr.mxu0 0.0
    %1621 = vmatpush1.xpose.msra.mxu0 0.0
    %1622 = vmatprep.subr.mxu0 0.0
    %1623 = vmatpush1.xpose.msra.mxu0 0.0
    %1624 = vmatprep.subr.mxu0 0.0
    %1625 = vmatpush1.xpose.msra.mxu0 0.0
    %1626 = vmatprep.subr.mxu0 0.0
    %1627 = vmatpush1.xpose.msra.mxu0 0.0
    %1628 = vmatprep.subr.mxu0 0.0
    %1629 = vmatpush1.xpose.msra.mxu0 0.0
    %1630 = vmatprep.subr.mxu0 0.0
    %1631 = vmatpush1.xpose.msra.mxu0 0.0
    %1632 = vmatprep.subr.mxu0 0.0
    %1633 = vmatpush1.xpose.msra.mxu0 0.0
    %1634 = vmatprep.subr.mxu0 0.0
    %1635 = vmatpush1.xpose.msra.mxu0 0.0
    %1636 = vmatprep.subr.mxu0 0.0
    %1637 = vmatpush1.xpose.msra.mxu0 0.0
    %1638 = vmatprep.subr.mxu0 0.0
    %1639 = vmatpush1.xpose.msra.mxu0 0.0
    %1640 = vmatprep.subr.mxu0 0.0
    %1641 = vmatpush1.xpose.msra.mxu0 0.0
    %1642 = vmatprep.subr.mxu0 0.0
    %1643 = vmatpush1.xpose.msra.mxu0 0.0
    %1644 = vmatprep.subr.mxu0 0.0
    %1645 = vmatpush1.xpose.msra.mxu0 0.0
    %1646 = vmatprep.subr.mxu0 0.0
    %1647 = vmatpush1.xpose.msra.mxu0 0.0
    %1648 = vmatprep.subr.mxu0 0.0
    %1649 = vmatpush1.xpose.msra.mxu0 0.0
    %1650 = vmatprep.subr.mxu0 0.0
    %1651 = vmatpush1.xpose.msra.mxu0 0.0
    %1652 = vmatprep.subr.mxu0 0.0
    %1653 = vmatpush1.xpose.msra.mxu0 0.0
    %1654 = vmatprep.subr.mxu0 0.0
    %1655 = vmatpush1.xpose.msra.mxu0 0.0
    %1656 = vmatprep.subr.mxu0 0.0
    %1657 = vmatpush1.xpose.msra.mxu0 0.0
    %1658 = vmatprep.subr.mxu0 0.0
    %1659 = vmatpush1.xpose.msra.mxu0 0.0
    %1660 = vmatprep.subr.mxu0 0.0
    %1661 = vmatpush1.xpose.msra.mxu0 0.0
    %1662 = vmatprep.subr.mxu0 0.0
    %1663 = vmatpush1.xpose.msra.mxu0 0.0
    %1664 = vmatprep.subr.mxu0 0.0
    %1665 = vmatpush1.xpose.msra.mxu0 0.0
    %1666 = vmatprep.subr.mxu0 0.0
    %1667 = vmatpush1.xpose.msra.mxu0 0.0
    %1668 = vmatprep.subr.mxu0 0.0
    %1669 = vmatpush1.xpose.msra.mxu0 0.0
    %1670 = vmatprep.subr.mxu0 0.0
    %1671 = vmatpush1.xpose.msra.mxu0 0.0
    %1672 = vmatprep.mubr.f32.mxu0 0.0
    %1673 = vmatmul.mubr.f32.gmra.mrb[0].mxu0 %v1604
    %v1674 = vpop.f32.mrb[0].mxu0
    %v1675 = vadd.f32 %v221, %v1674
    %v1676 = vpop.f32.mrb[0].mxu0
    %1677 = vdwg.mxu0
    %1678 = vrot.lane.b32.xlu0 %v363, 104
    %v1679 = vpop.permute.xlu0 %1678
    %1680 = vrot.lane.b32.xlu0 %v363, 72
    %v1681 = vpop.permute.xlu0 %1680
    %v1682 = vsel %vm369, %v1679, 0
    %v1684 = vsel %vm369, %v1681, 0
    %1686 = vmatprep.subr.mxu0 0.0
    %1687 = vmatpush1.xpose.msra.mxu0 %v1684
    %1688 = vmatprep.subr.mxu0 0.0
    %1689 = vmatpush1.xpose.msra.mxu0 0.0
    %1690 = vmatprep.subr.mxu0 0.0
    %1691 = vmatpush1.xpose.msra.mxu0 0.0
    %1692 = vmatprep.subr.mxu0 0.0
    %1693 = vmatpush1.xpose.msra.mxu0 0.0
    %1694 = vmatprep.subr.mxu0 0.0
    %1695 = vmatpush1.xpose.msra.mxu0 0.0
    %1696 = vmatprep.subr.mxu0 0.0
    %1697 = vmatpush1.xpose.msra.mxu0 0.0
    %1698 = vmatprep.subr.mxu0 0.0
    %1699 = vmatpush1.xpose.msra.mxu0 0.0
    %1700 = vmatprep.subr.mxu0 0.0
    %1701 = vmatpush1.xpose.msra.mxu0 0.0
    %1702 = vmatprep.subr.mxu0 0.0
    %1703 = vmatpush1.xpose.msra.mxu0 0.0
    %1704 = vmatprep.subr.mxu0 0.0
    %1705 = vmatpush1.xpose.msra.mxu0 0.0
    %1706 = vmatprep.subr.mxu0 0.0
    %1707 = vmatpush1.xpose.msra.mxu0 0.0
    %1708 = vmatprep.subr.mxu0 0.0
    %1709 = vmatpush1.xpose.msra.mxu0 0.0
    %1710 = vmatprep.subr.mxu0 0.0
    %1711 = vmatpush1.xpose.msra.mxu0 0.0
    %1712 = vmatprep.subr.mxu0 0.0
    %1713 = vmatpush1.xpose.msra.mxu0 0.0
    %1714 = vmatprep.subr.mxu0 0.0
    %1715 = vmatpush1.xpose.msra.mxu0 0.0
    %1716 = vmatprep.subr.mxu0 0.0
    %1717 = vmatpush1.xpose.msra.mxu0 0.0
    %1718 = vmatprep.subr.mxu0 0.0
    %1719 = vmatpush1.xpose.msra.mxu0 0.0
    %1720 = vmatprep.subr.mxu0 0.0
    %1721 = vmatpush1.xpose.msra.mxu0 0.0
    %1722 = vmatprep.subr.mxu0 0.0
    %1723 = vmatpush1.xpose.msra.mxu0 0.0
    %1724 = vmatprep.subr.mxu0 0.0
    %1725 = vmatpush1.xpose.msra.mxu0 0.0
    %1726 = vmatprep.subr.mxu0 0.0
    %1727 = vmatpush1.xpose.msra.mxu0 0.0
    %1728 = vmatprep.subr.mxu0 0.0
    %1729 = vmatpush1.xpose.msra.mxu0 0.0
    %1730 = vmatprep.subr.mxu0 0.0
    %1731 = vmatpush1.xpose.msra.mxu0 0.0
    %1732 = vmatprep.subr.mxu0 0.0
    %1733 = vmatpush1.xpose.msra.mxu0 0.0
    %1734 = vmatprep.subr.mxu0 0.0
    %1735 = vmatpush1.xpose.msra.mxu0 0.0
    %1736 = vmatprep.subr.mxu0 0.0
    %1737 = vmatpush1.xpose.msra.mxu0 0.0
    %1738 = vmatprep.subr.mxu0 0.0
    %1739 = vmatpush1.xpose.msra.mxu0 0.0
    %1740 = vmatprep.subr.mxu0 0.0
    %1741 = vmatpush1.xpose.msra.mxu0 0.0
    %1742 = vmatprep.subr.mxu0 0.0
    %1743 = vmatpush1.xpose.msra.mxu0 0.0
    %1744 = vmatprep.subr.mxu0 0.0
    %1745 = vmatpush1.xpose.msra.mxu0 0.0
    %1746 = vmatprep.subr.mxu0 0.0
    %1747 = vmatpush1.xpose.msra.mxu0 0.0
    %1748 = vmatprep.subr.mxu0 0.0
    %1749 = vmatpush1.xpose.msra.mxu0 0.0
    %1750 = vmatprep.mubr.f32.mxu0 0.0
    %1751 = vmatmul.mubr.f32.gmra.mrb[0].mxu0 %v1682
    %v1752 = vpop.f32.mrb[0].mxu0
    %v1753 = vadd.f32 %v221, %v1752
    %v1754 = vpop.f32.mrb[0].mxu0
    %1755 = vdwg.mxu0
    %v1756 = vsel %vm369, %v1675, -inf
    %1757 = vmax.xlane.f32.xlu0 %v1756
    %v1758 = vpop.xlane.xlu0 %1757
    %v1759 = vsel %vm369, %v1753, -inf
    %1760 = vmax.xlane.f32.xlu0 %v1759
    %v1761 = vpop.xlane.xlu0 %1760
    %v1762 = vsub.f32 %v1675, %v1758
    %v1763 = vsub.f32 %v1753, %v1761
    %v1764 = vmul.f32 %v1762, 1.442695
    %v1765 = vpow.pop %v1764
    %v1766 = vmul.f32 %v1763, 1.442695
    %v1767 = vpow.pop %v1766
    %v1768 = vsel %vm369, %v1765, 0.0
    %1769 = vadd.xlane.f32.xlu0 %v1768
    %v1770 = vpop.xlane.xlu0 %1769
    %v1771 = vsel %vm369, %v1767, 0.0
    %1772 = vadd.xlane.f32.xlu0 %v1771
    %v1773 = vpop.xlane.xlu0 %1772
    %v1774 = vrcp.pop %v1770
    %v1775 = vrcp.pop %v1773
    %v1776 = vmul.f32 %v1765, %v1774
    %v1777 = vmul.f32 %v1767, %v1775
    %1778 = vrot.lane.b32.xlu0 %v358, 40
    %v1779 = vpop.permute.xlu0 %1778
    %v1782 = vsel %vm369, %v1776, 0
    %1784 = vmatprep.subr.mxu0 0.0
    %1785 = vmatpush1.msra.mxu0 %v1779
    %1786 = vmatprep.subr.mxu0 0.0
    %1787 = vmatpush1.msra.mxu0 0.0
    %1788 = vmatprep.subr.mxu0 0.0
    %1789 = vmatpush1.msra.mxu0 0.0
    %1790 = vmatprep.subr.mxu0 0.0
    %1791 = vmatpush1.msra.mxu0 0.0
    %1792 = vmatprep.subr.mxu0 0.0
    %1793 = vmatpush1.msra.mxu0 0.0
    %1794 = vmatprep.subr.mxu0 0.0
    %1795 = vmatpush1.msra.mxu0 0.0
    %1796 = vmatprep.subr.mxu0 0.0
    %1797 = vmatpush1.msra.mxu0 0.0
    %1798 = vmatprep.subr.mxu0 0.0
    %1799 = vmatpush1.msra.mxu0 0.0
    %1800 = vmatprep.subr.mxu0 0.0
    %1801 = vmatpush1.msra.mxu0 0.0
    %1802 = vmatprep.subr.mxu0 0.0
    %1803 = vmatpush1.msra.mxu0 0.0
    %1804 = vmatprep.subr.mxu0 0.0
    %1805 = vmatpush1.msra.mxu0 0.0
    %1806 = vmatprep.subr.mxu0 0.0
    %1807 = vmatpush1.msra.mxu0 0.0
    %1808 = vmatprep.subr.mxu0 0.0
    %1809 = vmatpush1.msra.mxu0 0.0
    %1810 = vmatprep.subr.mxu0 0.0
    %1811 = vmatpush1.msra.mxu0 0.0
    %1812 = vmatprep.subr.mxu0 0.0
    %1813 = vmatpush1.msra.mxu0 0.0
    %1814 = vmatprep.subr.mxu0 0.0
    %1815 = vmatpush1.msra.mxu0 0.0
    %1816 = vmatprep.subr.mxu0 0.0
    %1817 = vmatpush1.msra.mxu0 0.0
    %1818 = vmatprep.subr.mxu0 0.0
    %1819 = vmatpush1.msra.mxu0 0.0
    %1820 = vmatprep.subr.mxu0 0.0
    %1821 = vmatpush1.msra.mxu0 0.0
    %1822 = vmatprep.subr.mxu0 0.0
    %1823 = vmatpush1.msra.mxu0 0.0
    %1824 = vmatprep.subr.mxu0 0.0
    %1825 = vmatpush1.msra.mxu0 0.0
    %1826 = vmatprep.subr.mxu0 0.0
    %1827 = vmatpush1.msra.mxu0 0.0
    %1828 = vmatprep.subr.mxu0 0.0
    %1829 = vmatpush1.msra.mxu0 0.0
    %1830 = vmatprep.subr.mxu0 0.0
    %1831 = vmatpush1.msra.mxu0 0.0
    %1832 = vmatprep.subr.mxu0 0.0
    %1833 = vmatpush1.msra.mxu0 0.0
    %1834 = vmatprep.subr.mxu0 0.0
    %1835 = vmatpush1.msra.mxu0 0.0
    %1836 = vmatprep.subr.mxu0 0.0
    %1837 = vmatpush1.msra.mxu0 0.0
    %1838 = vmatprep.subr.mxu0 0.0
    %1839 = vmatpush1.msra.mxu0 0.0
    %1840 = vmatprep.subr.mxu0 0.0
    %1841 = vmatpush1.msra.mxu0 0.0
    %1842 = vmatprep.subr.mxu0 0.0
    %1843 = vmatpush1.msra.mxu0 0.0
    %1844 = vmatprep.subr.mxu0 0.0
    %1845 = vmatpush1.msra.mxu0 0.0
    %1846 = vmatprep.subr.mxu0 0.0
    %1847 = vmatpush1.msra.mxu0 0.0
    %1848 = vmatprep.mubr.f32.mxu0 0.0
    %1849 = vmatmul.mubr.f32.gmra.mrb[0].mxu0 %v1782
    %v1850 = vpop.f32.mrb[0].mxu0
    %v1851 = vadd.f32 0.0, %v1850
    %v1852 = vpop.f32.mrb[0].mxu0
    %1853 = vdwg.mxu0
    %1854 = vrot.lane.b32.xlu0 %v363, 40
    %v1855 = vpop.permute.xlu0 %1854
    %v1858 = vsel %vm369, %v1777, 0
    %1860 = vmatprep.subr.mxu0 0.0
    %1861 = vmatpush1.msra.mxu0 %v1855
    %1862 = vmatprep.subr.mxu0 0.0
    %1863 = vmatpush1.msra.mxu0 0.0
    %1864 = vmatprep.subr.mxu0 0.0
    %1865 = vmatpush1.msra.mxu0 0.0
    %1866 = vmatprep.subr.mxu0 0.0
    %1867 = vmatpush1.msra.mxu0 0.0
    %1868 = vmatprep.subr.mxu0 0.0
    %1869 = vmatpush1.msra.mxu0 0.0
    %1870 = vmatprep.subr.mxu0 0.0
    %1871 = vmatpush1.msra.mxu0 0.0
    %1872 = vmatprep.subr.mxu0 0.0
    %1873 = vmatpush1.msra.mxu0 0.0
    %1874 = vmatprep.subr.mxu0 0.0
    %1875 = vmatpush1.msra.mxu0 0.0
    %1876 = vmatprep.subr.mxu0 0.0
    %1877 = vmatpush1.msra.mxu0 0.0
    %1878 = vmatprep.subr.mxu0 0.0
    %1879 = vmatpush1.msra.mxu0 0.0
    %1880 = vmatprep.subr.mxu0 0.0
    %1881 = vmatpush1.msra.mxu0 0.0
    %1882 = vmatprep.subr.mxu0 0.0
    %1883 = vmatpush1.msra.mxu0 0.0
    %1884 = vmatprep.subr.mxu0 0.0
    %1885 = vmatpush1.msra.mxu0 0.0
    %1886 = vmatprep.subr.mxu0 0.0
    %1887 = vmatpush1.msra.mxu0 0.0
    %1888 = vmatprep.subr.mxu0 0.0
    %1889 = vmatpush1.msra.mxu0 0.0
    %1890 = vmatprep.subr.mxu0 0.0
    %1891 = vmatpush1.msra.mxu0 0.0
    %1892 = vmatprep.subr.mxu0 0.0
    %1893 = vmatpush1.msra.mxu0 0.0
    %1894 = vmatprep.subr.mxu0 0.0
    %1895 = vmatpush1.msra.mxu0 0.0
    %1896 = vmatprep.subr.mxu0 0.0
    %1897 = vmatpush1.msra.mxu0 0.0
    %1898 = vmatprep.subr.mxu0 0.0
    %1899 = vmatpush1.msra.mxu0 0.0
    %1900 = vmatprep.subr.mxu0 0.0
    %1901 = vmatpush1.msra.mxu0 0.0
    %1902 = vmatprep.subr.mxu0 0.0
    %1903 = vmatpush1.msra.mxu0 0.0
    %1904 = vmatprep.subr.mxu0 0.0
    %1905 = vmatpush1.msra.mxu0 0.0
    %1906 = vmatprep.subr.mxu0 0.0
    %1907 = vmatpush1.msra.mxu0 0.0
    %1908 = vmatprep.subr.mxu0 0.0
    %1909 = vmatpush1.msra.mxu0 0.0
    %1910 = vmatprep.subr.mxu0 0.0
    %1911 = vmatpush1.msra.mxu0 0.0
    %1912 = vmatprep.subr.mxu0 0.0
    %1913 = vmatpush1.msra.mxu0 0.0
    %1914 = vmatprep.subr.mxu0 0.0
    %1915 = vmatpush1.msra.mxu0 0.0
    %1916 = vmatprep.subr.mxu0 0.0
    %1917 = vmatpush1.msra.mxu0 0.0
    %1918 = vmatprep.subr.mxu0 0.0
    %1919 = vmatpush1.msra.mxu0 0.0
    %1920 = vmatprep.subr.mxu0 0.0
    %1921 = vmatpush1.msra.mxu0 0.0
    %1922 = vmatprep.subr.mxu0 0.0
    %1923 = vmatpush1.msra.mxu0 0.0
    %1924 = vmatprep.mubr.f32.mxu0 0.0
    %1925 = vmatmul.mubr.f32.gmra.mrb[0].mxu0 %v1858
    %v1926 = vpop.f32.mrb[0].mxu0
    %v1927 = vadd.f32 0.0, %v1926
    %v1928 = vpop.f32.mrb[0].mxu0
    %1929 = vdwg.mxu0
    %v1931 = vsel %vm369, %v1851, 0
    %v1934 = vsel %vm369, %v1927, 0
    %1936 = vmatprep.subr.mxu0 0.0
    %1937 = vmatpush1.msra.mxu0 %v229
    %1938 = vmatprep.subr.mxu0 0.0
    %1939 = vmatpush1.msra.mxu0 0.0
    %1940 = vmatprep.subr.mxu0 0.0
    %1941 = vmatpush1.msra.mxu0 0.0
    %1942 = vmatprep.subr.mxu0 0.0
    %1943 = vmatpush1.msra.mxu0 0.0
    %1944 = vmatprep.subr.mxu0 0.0
    %1945 = vmatpush1.msra.mxu0 0.0
    %1946 = vmatprep.subr.mxu0 0.0
    %1947 = vmatpush1.msra.mxu0 0.0
    %1948 = vmatprep.subr.mxu0 0.0
    %1949 = vmatpush1.msra.mxu0 0.0
    %1950 = vmatprep.subr.mxu0 0.0
    %1951 = vmatpush1.msra.mxu0 0.0
    %1952 = vmatprep.subr.mxu0 0.0
    %1953 = vmatpush1.msra.mxu0 0.0
    %1954 = vmatprep.subr.mxu0 0.0
    %1955 = vmatpush1.msra.mxu0 0.0
    %1956 = vmatprep.subr.mxu0 0.0
    %1957 = vmatpush1.msra.mxu0 0.0
    %1958 = vmatprep.subr.mxu0 0.0
    %1959 = vmatpush1.msra.mxu0 0.0
    %1960 = vmatprep.subr.mxu0 0.0
    %1961 = vmatpush1.msra.mxu0 0.0
    %1962 = vmatprep.subr.mxu0 0.0
    %1963 = vmatpush1.msra.mxu0 0.0
    %1964 = vmatprep.subr.mxu0 0.0
    %1965 = vmatpush1.msra.mxu0 0.0
    %1966 = vmatprep.subr.mxu0 0.0
    %1967 = vmatpush1.msra.mxu0 0.0
    %1968 = vmatprep.subr.mxu0 0.0
    %1969 = vmatpush1.msra.mxu0 0.0
    %1970 = vmatprep.subr.mxu0 0.0
    %1971 = vmatpush1.msra.mxu0 0.0
    %1972 = vmatprep.subr.mxu0 0.0
    %1973 = vmatpush1.msra.mxu0 0.0
    %1974 = vmatprep.subr.mxu0 0.0
    %1975 = vmatpush1.msra.mxu0 0.0
    %1976 = vmatprep.subr.mxu0 0.0
    %1977 = vmatpush1.msra.mxu0 0.0
    %1978 = vmatprep.subr.mxu0 0.0
    %1979 = vmatpush1.msra.mxu0 0.0
    %1980 = vmatprep.subr.mxu0 0.0
    %1981 = vmatpush1.msra.mxu0 0.0
    %1982 = vmatprep.subr.mxu0 0.0
    %1983 = vmatpush1.msra.mxu0 0.0
    %1984 = vmatprep.subr.mxu0 0.0
    %1985 = vmatpush1.msra.mxu0 0.0
    %1986 = vmatprep.subr.mxu0 0.0
    %1987 = vmatpush1.msra.mxu0 0.0
    %1988 = vmatprep.subr.mxu0 0.0
    %1989 = vmatpush1.msra.mxu0 0.0
    %1990 = vmatprep.subr.mxu0 0.0
    %1991 = vmatpush1.msra.mxu0 0.0
    %1992 = vmatprep.subr.mxu0 0.0
    %1993 = vmatpush1.msra.mxu0 0.0
    %1994 = vmatprep.subr.mxu0 0.0
    %1995 = vmatpush1.msra.mxu0 0.0
    %1996 = vmatprep.subr.mxu0 0.0
    %1997 = vmatpush1.msra.mxu0 0.0
    %1998 = vmatprep.subr.mxu0 0.0
    %1999 = vmatpush1.msra.mxu0 0.0
    %2000 = vmatprep.mubr.f32.mxu0 0.0
    %2001 = vmatmul.mubr.f32.gmra.mrb[0].mxu0 %v1931
    %v2002 = vpop.f32.mrb[0].mxu0
    %v2003 = vadd.f32 0.0, %v2002
    %v2004 = vpop.f32.mrb[0].mxu0
    %2005 = vmatprep.mubr.f32.mxu0 0.0
    %2006 = vmatmul.mubr.f32.gmra.mrb[0].mxu0 %v1934
    %v2007 = vpop.f32.mrb[0].mxu0
    %v2008 = vadd.f32 0.0, %v2007
    %v2009 = vpop.f32.mrb[0].mxu0
    %2010 = vdwg.mxu0
    %v2011 = vadd.f32 %v1598, %v2003
    %v2012 = vadd.f32 %v1599, %v2008
    %v2013 = vadd.f32 %v216, %v2011
    %v2014 = vadd.f32 %v217, %v2012
    %v2015 = vlaneseq
    %v2016 = vshrl.u32 %v2015, 7
    %v2017 = vsub.s32 5, %v2016
    %v2018 = vrot.slane %v242, %v2017
    %v2019 = vadd.f32 %v2013, %v2018
    %v2020 = vadd.f32 %v2014, %v2018
    %v2021 = vsel %vm178, %v2019, 0.0
    %2022 = vadd.xlane.f32.xlu0 %v2021
    %v2023 = vpop.xlane.xlu0 %2022
    %v2024 = vsel %vm178, %v2020, 0.0
    %2025 = vadd.xlane.f32.xlu0 %v2024
    %v2026 = vpop.xlane.xlu0 %2025
    %v2027 = vmul.f32 %v2023, %v185
    %v2028 = vmul.f32 %v2026, %v185
    %v2029 = vsub.f32 %v2019, %v2027
    %v2030 = vsub.f32 %v2020, %v2028
    %v2031 = vmul.f32 %v2029, %v2029
    %v2032 = vmul.f32 %v2030, %v2030
    %v2033 = vsel %vm178, %v2031, 0.0
    %2034 = vadd.xlane.f32.xlu0 %v2033
    %v2035 = vpop.xlane.xlu0 %2034
    %v2036 = vsel %vm178, %v2032, 0.0
    %2037 = vadd.xlane.f32.xlu0 %v2036
    %v2038 = vpop.xlane.xlu0 %2037
    %v2039 = vmul.f32 %v2035, %v185
    %v2040 = vmul.f32 %v2038, %v185
    %v2041 = vadd.f32 %v2039, 1e-05
    %v2042 = vadd.f32 %v2040, 1e-05
    %v2043 = vrsqrt.pop %v2041
    %v2044 = vrsqrt.pop %v2042
    %v2045 = vmul.f32 %v2029, %v2043
    %v2046 = vmul.f32 %v2030, %v2044
    %v2047 = vlaneseq
    %v2048 = vshrl.u32 %v2047, 7
    %v2049 = vsub.s32 2, %v2048
    %v2050 = vrot.slane %v242, %v2049
    %v2051 = vmul.f32 %v2045, %v2050
    %v2052 = vmul.f32 %v2046, %v2050
    %v2053 = vlaneseq
    %v2054 = vshrl.u32 %v2053, 7
    %v2055 = vsub.s32 3, %v2054
    %v2056 = vrot.slane %v242, %v2055
    %v2057 = vadd.f32 %v2051, %v2056
    %v2058 = vadd.f32 %v2052, %v2056
    %v2059 = vlaneseq
    %v2060 = vshrl.u32 %v2059, 7
    %v2061 = vsub.s32 6, %v2060
    %v2062 = vrot.slane %v242, %v2061
    %v2064 = vsel %vm178, %v2057, 0
    %v2067 = vsel %vm178, %v2058, 0
    %2069 = vmatprep.subr.mxu0 0.0
    %2070 = vmatpush1.msra.mxu0 %v230
    %2071 = vmatprep.subr.mxu0 0.0
    %2072 = vmatpush1.msra.mxu0 %v231
    %2073 = vmatprep.subr.mxu0 0.0
    %2074 = vmatpush1.msra.mxu0 %v232
    %2075 = vmatprep.subr.mxu0 0.0
    %2076 = vmatpush1.msra.mxu0 %v233
    %2077 = vmatprep.subr.mxu0 0.0
    %2078 = vmatpush1.msra.mxu0 0.0
    %2079 = vmatprep.subr.mxu0 0.0
    %2080 = vmatpush1.msra.mxu0 0.0
    %2081 = vmatprep.subr.mxu0 0.0
    %2082 = vmatpush1.msra.mxu0 0.0
    %2083 = vmatprep.subr.mxu0 0.0
    %2084 = vmatpush1.msra.mxu0 0.0
    %2085 = vmatprep.subr.mxu0 0.0
    %2086 = vmatpush1.msra.mxu0 0.0
    %2087 = vmatprep.subr.mxu0 0.0
    %2088 = vmatpush1.msra.mxu0 0.0
    %2089 = vmatprep.subr.mxu0 0.0
    %2090 = vmatpush1.msra.mxu0 0.0
    %2091 = vmatprep.subr.mxu0 0.0
    %2092 = vmatpush1.msra.mxu0 0.0
    %2093 = vmatprep.subr.mxu0 0.0
    %2094 = vmatpush1.msra.mxu0 0.0
    %2095 = vmatprep.subr.mxu0 0.0
    %2096 = vmatpush1.msra.mxu0 0.0
    %2097 = vmatprep.subr.mxu0 0.0
    %2098 = vmatpush1.msra.mxu0 0.0
    %2099 = vmatprep.subr.mxu0 0.0
    %2100 = vmatpush1.msra.mxu0 0.0
    %2101 = vmatprep.subr.mxu0 0.0
    %2102 = vmatpush1.msra.mxu0 0.0
    %2103 = vmatprep.subr.mxu0 0.0
    %2104 = vmatpush1.msra.mxu0 0.0
    %2105 = vmatprep.subr.mxu0 0.0
    %2106 = vmatpush1.msra.mxu0 0.0
    %2107 = vmatprep.subr.mxu0 0.0
    %2108 = vmatpush1.msra.mxu0 0.0
    %2109 = vmatprep.subr.mxu0 0.0
    %2110 = vmatpush1.msra.mxu0 0.0
    %2111 = vmatprep.subr.mxu0 0.0
    %2112 = vmatpush1.msra.mxu0 0.0
    %2113 = vmatprep.subr.mxu0 0.0
    %2114 = vmatpush1.msra.mxu0 0.0
    %2115 = vmatprep.subr.mxu0 0.0
    %2116 = vmatpush1.msra.mxu0 0.0
    %2117 = vmatprep.subr.mxu0 0.0
    %2118 = vmatpush1.msra.mxu0 0.0
    %2119 = vmatprep.subr.mxu0 0.0
    %2120 = vmatpush1.msra.mxu0 0.0
    %2121 = vmatprep.subr.mxu0 0.0
    %2122 = vmatpush1.msra.mxu0 0.0
    %2123 = vmatprep.subr.mxu0 0.0
    %2124 = vmatpush1.msra.mxu0 0.0
    %2125 = vmatprep.subr.mxu0 0.0
    %2126 = vmatpush1.msra.mxu0 0.0
    %2127 = vmatprep.subr.mxu0 0.0
    %2128 = vmatpush1.msra.mxu0 0.0
    %2129 = vmatprep.subr.mxu0 0.0
    %2130 = vmatpush1.msra.mxu0 0.0
    %2131 = vmatprep.subr.mxu0 0.0
    %2132 = vmatpush1.msra.mxu0 0.0
    %2133 = vmatprep.mubr.f32.mxu0 0.0
    %2134 = vmatmul.mubr.f32.gmra.mrb[0].mxu0 %v2064
    %v2135 = vpop.f32.mrb[0].mxu0
    %v2136 = vadd.f32 %v2062, %v2135
    %v2137 = vpop.f32.mrb[0].mxu0
    %2138 = vmatprep.mubr.f32.mxu0 0.0
    %2139 = vmatmul.mubr.f32.gmra.mrb[0].mxu0 %v2067
    %v2140 = vpop.f32.mrb[0].mxu0
    %v2141 = vadd.f32 %v2062, %v2140
    %v2142 = vpop.f32.mrb[0].mxu0
    %2143 = vdwg.mxu0
    %v2144 = vmul.f32 %v2136, 1.702
    %v2145 = vmul.f32 %v2141, 1.702
    %v2146 = vxor.u32 %v2144, 2147483648
    %v2147 = vxor.u32 %v2145, 2147483648
    %v2148 = vmul.f32 %v2146, 1.442695
    %v2149 = vpow.pop %v2148
    %v2150 = vmul.f32 %v2147, 1.442695
    %v2151 = vpow.pop %v2150
    %v2152 = vadd.f32 %v2149, 1.0
    %v2153 = vadd.f32 %v2151, 1.0
    %v2154 = vrcp.pop %v2152
    %v2155 = vmul.f32 1.0, %v2154
    %v2156 = vrcp.pop %v2153
    %v2157 = vmul.f32 1.0, %v2156
    %v2158 = vmul.f32 %v2136, %v2155
    %v2159 = vmul.f32 %v2141, %v2157
    %v2160 = vlaneseq
    %v2161 = vshrl.u32 %v2160, 7
    %v2162 = vsub.s32 7, %v2161
    %v2163 = vrot.slane %v242, %v2162
    %v2165 = vsel %vm93, %v2158, 0
    %v2168 = vsel %vm93, %v2159, 0
    %2170 = vmatprep.subr.mxu0 0.0
    %2171 = vmatpush1.msra.mxu0 %v234
    %2172 = vmatprep.subr.mxu0 0.0
    %2173 = vmatpush1.msra.mxu0 %v235
    %2174 = vmatprep.subr.mxu0 0.0
    %2175 = vmatpush1.msra.mxu0 %v236
    %2176 = vmatprep.subr.mxu0 0.0
    %2177 = vmatpush1.msra.mxu0 %v237
    %2178 = vmatprep.subr.mxu0 0.0
    %2179 = vmatpush1.msra.mxu0 %v238
    %2180 = vmatprep.subr.mxu0 0.0
    %2181 = vmatpush1.msra.mxu0 %v239
    %2182 = vmatprep.subr.mxu0 0.0
    %2183 = vmatpush1.msra.mxu0 %v240
    %2184 = vmatprep.subr.mxu0 0.0
    %2185 = vmatpush1.msra.mxu0 %v241
    %2186 = vmatprep.subr.mxu0 0.0
    %2187 = vmatpush1.msra.mxu0 0.0
    %2188 = vmatprep.subr.mxu0 0.0
    %2189 = vmatpush1.msra.mxu0 0.0
    %2190 = vmatprep.subr.mxu0 0.0
    %2191 = vmatpush1.msra.mxu0 0.0
    %2192 = vmatprep.subr.mxu0 0.0
    %2193 = vmatpush1.msra.mxu0 0.0
    %2194 = vmatprep.subr.mxu0 0.0
    %2195 = vmatpush1.msra.mxu0 0.0
    %2196 = vmatprep.subr.mxu0 0.0
    %2197 = vmatpush1.msra.mxu0 0.0
    %2198 = vmatprep.subr.mxu0 0.0
    %2199 = vmatpush1.msra.mxu0 0.0
    %2200 = vmatprep.subr.mxu0 0.0
    %2201 = vmatpush1.msra.mxu0 0.0
    %2202 = vmatprep.subr.mxu0 0.0
    %2203 = vmatpush1.msra.mxu0 0.0
    %2204 = vmatprep.subr.mxu0 0.0
    %2205 = vmatpush1.msra.mxu0 0.0
    %2206 = vmatprep.subr.mxu0 0.0
    %2207 = vmatpush1.msra.mxu0 0.0
    %2208 = vmatprep.subr.mxu0 0.0
    %2209 = vmatpush1.msra.mxu0 0.0
    %2210 = vmatprep.subr.mxu0 0.0
    %2211 = vmatpush1.msra.mxu0 0.0
    %2212 = vmatprep.subr.mxu0 0.0
    %2213 = vmatpush1.msra.mxu0 0.0
    %2214 = vmatprep.subr.mxu0 0.0
    %2215 = vmatpush1.msra.mxu0 0.0
    %2216 = vmatprep.subr.mxu0 0.0
    %2217 = vmatpush1.msra.mxu0 0.0
    %2218 = vmatprep.subr.mxu0 0.0
    %2219 = vmatpush1.msra.mxu0 0.0
    %2220 = vmatprep.subr.mxu0 0.0
    %2221 = vmatpush1.msra.mxu0 0.0
    %2222 = vmatprep.subr.mxu0 0.0
    %2223 = vmatpush1.msra.mxu0 0.0
    %2224 = vmatprep.subr.mxu0 0.0
    %2225 = vmatpush1.msra.mxu0 0.0
    %2226 = vmatprep.subr.mxu0 0.0
    %2227 = vmatpush1.msra.mxu0 0.0
    %2228 = vmatprep.subr.mxu0 0.0
    %2229 = vmatpush1.msra.mxu0 0.0
    %2230 = vmatprep.subr.mxu0 0.0
    %2231 = vmatpush1.msra.mxu0 0.0
    %2232 = vmatprep.subr.mxu0 0.0
    %2233 = vmatpush1.msra.mxu0 0.0
    %2234 = vmatprep.mubr.f32.mxu0 0.0
    %2235 = vmatmul.mubr.f32.gmra.mrb[0].mxu0 %v2165
    %v2236 = vpop.f32.mrb[0].mxu0
    %v2237 = vadd.f32 %v2163, %v2236
    %v2238 = vpop.f32.mrb[0].mxu0
    %2239 = vmatprep.mubr.f32.mxu0 0.0
    %2240 = vmatmul.mubr.f32.gmra.mrb[0].mxu0 %v2168
    %v2241 = vpop.f32.mrb[0].mxu0
    %v2242 = vadd.f32 %v2163, %v2241
    %v2243 = vpop.f32.mrb[0].mxu0
    %2244 = vdwg.mxu0
    %v2245 = vadd.f32 %v2019, %v2237
    %v2246 = vadd.f32 %v2020, %v2242
    %s2247 = scalar_lea.vmem %s3, 32
    %v2248 = vld [vmem:[%s2247] sm:$0xff]
    %v2249 = vld [vmem:[%s2247 + $0x8] sm:$0xff]
    %v2250 = vld [vmem:[%s2247 + $0x10] sm:$0xff]
    %v2251 = vld [vmem:[%s2247 + $0x18] sm:$0xff]
    %s2252 = scalar_lea.vmem %s4, 32
    %v2253 = vld [vmem:[%s2252] sm:$0xff]
    %v2254 = vld [vmem:[%s2252 + $0x8] sm:$0xff]
    %v2255 = vld [vmem:[%s2252 + $0x10] sm:$0xff]
    %v2256 = vld [vmem:[%s2252 + $0x18] sm:$0xff]
    %s2257 = scalar_lea.vmem %s5, 32
    %v2258 = vld [vmem:[%s2257] sm:$0xff]
    %v2259 = vld [vmem:[%s2257 + $0x8] sm:$0xff]
    %v2260 = vld [vmem:[%s2257 + $0x10] sm:$0xff]
    %v2261 = vld [vmem:[%s2257 + $0x18] sm:$0xff]
    %s2262 = scalar_lea.vmem %s6, 64
    %v2263 = vld [vmem:[%s2262] sm:$0xff]
    %v2264 = vld [vmem:[%s2262 + $0x8] sm:$0xff]
    %v2265 = vld [vmem:[%s2262 + $0x10] sm:$0xff]
    %v2266 = vld [vmem:[%s2262 + $0x18] sm:$0xff]
    %v2267 = vld [vmem:[%s2262 + $0x20] sm:$0xff]
    %v2268 = vld [vmem:[%s2262 + $0x28] sm:$0xff]
    %v2269 = vld [vmem:[%s2262 + $0x30] sm:$0xff]
    %v2270 = vld [vmem:[%s2262 + $0x38] sm:$0xff]
    %s2271 = scalar_lea.vmem %s7, 8
    %v2272 = vld [vmem:[%s2271] sm:$0xff]
    %v2273 = vsel %vm178, %v2245, 0.0
    %2274 = vadd.xlane.f32.xlu0 %v2273
    %v2275 = vpop.xlane.xlu0 %2274
    %v2276 = vsel %vm178, %v2246, 0.0
    %2277 = vadd.xlane.f32.xlu0 %v2276
    %v2278 = vpop.xlane.xlu0 %2277
    %v2279 = vmul.f32 %v2275, %v185
    %v2280 = vmul.f32 %v2278, %v185
    %v2281 = vsub.f32 %v2245, %v2279
    %v2282 = vsub.f32 %v2246, %v2280
    %v2283 = vmul.f32 %v2281, %v2281
    %v2284 = vmul.f32 %v2282, %v2282
    %v2285 = vsel %vm178, %v2283, 0.0
    %2286 = vadd.xlane.f32.xlu0 %v2285
    %v2287 = vpop.xlane.xlu0 %2286
    %v2288 = vsel %vm178, %v2284, 0.0
    %2289 = vadd.xlane.f32.xlu0 %v2288
    %v2290 = vpop.xlane.xlu0 %2289
    %v2291 = vmul.f32 %v2287, %v185
    %v2292 = vmul.f32 %v2290, %v185
    %v2293 = vadd.f32 %v2291, 1e-05
    %v2294 = vadd.f32 %v2292, 1e-05
    %v2295 = vrsqrt.pop %v2293
    %v2296 = vrsqrt.pop %v2294
    %v2297 = vmul.f32 %v2281, %v2295
    %v2298 = vmul.f32 %v2282, %v2296
    %v2299 = vlaneseq
    %v2300 = vshrl.u32 %v2299, 7
    %v2301 = vsub.s32 0, %v2300
    %v2302 = vrot.slane %v2272, %v2301
    %v2303 = vmul.f32 %v2297, %v2302
    %v2304 = vmul.f32 %v2298, %v2302
    %v2305 = vlaneseq
    %v2306 = vshrl.u32 %v2305, 7
    %v2307 = vsub.s32 1, %v2306
    %v2308 = vrot.slane %v2272, %v2307
    %v2309 = vadd.f32 %v2303, %v2308
    %v2310 = vadd.f32 %v2304, %v2308
    %v2311 = vlaneseq
    %v2312 = vshrl.u32 %v2311, 7
    %v2313 = vsub.s32 4, %v2312
    %v2314 = vrot.slane %v2272, %v2313
    %v2316 = vsel %vm178, %v2309, 0
    %v2319 = vsel %vm178, %v2310, 0
    %2321 = vmatprep.subr.mxu0 0.0
    %2322 = vmatpush1.msra.mxu0 %v2248
    %2323 = vmatprep.subr.mxu0 0.0
    %2324 = vmatpush1.msra.mxu0 %v2249
    %2325 = vmatprep.subr.mxu0 0.0
    %2326 = vmatpush1.msra.mxu0 %v2250
    %2327 = vmatprep.subr.mxu0 0.0
    %2328 = vmatpush1.msra.mxu0 %v2251
    %2329 = vmatprep.subr.mxu0 0.0
    %2330 = vmatpush1.msra.mxu0 0.0
    %2331 = vmatprep.subr.mxu0 0.0
    %2332 = vmatpush1.msra.mxu0 0.0
    %2333 = vmatprep.subr.mxu0 0.0
    %2334 = vmatpush1.msra.mxu0 0.0
    %2335 = vmatprep.subr.mxu0 0.0
    %2336 = vmatpush1.msra.mxu0 0.0
    %2337 = vmatprep.subr.mxu0 0.0
    %2338 = vmatpush1.msra.mxu0 0.0
    %2339 = vmatprep.subr.mxu0 0.0
    %2340 = vmatpush1.msra.mxu0 0.0
    %2341 = vmatprep.subr.mxu0 0.0
    %2342 = vmatpush1.msra.mxu0 0.0
    %2343 = vmatprep.subr.mxu0 0.0
    %2344 = vmatpush1.msra.mxu0 0.0
    %2345 = vmatprep.subr.mxu0 0.0
    %2346 = vmatpush1.msra.mxu0 0.0
    %2347 = vmatprep.subr.mxu0 0.0
    %2348 = vmatpush1.msra.mxu0 0.0
    %2349 = vmatprep.subr.mxu0 0.0
    %2350 = vmatpush1.msra.mxu0 0.0
    %2351 = vmatprep.subr.mxu0 0.0
    %2352 = vmatpush1.msra.mxu0 0.0
    %2353 = vmatprep.subr.mxu0 0.0
    %2354 = vmatpush1.msra.mxu0 0.0
    %2355 = vmatprep.subr.mxu0 0.0
    %2356 = vmatpush1.msra.mxu0 0.0
    %2357 = vmatprep.subr.mxu0 0.0
    %2358 = vmatpush1.msra.mxu0 0.0
    %2359 = vmatprep.subr.mxu0 0.0
    %2360 = vmatpush1.msra.mxu0 0.0
    %2361 = vmatprep.subr.mxu0 0.0
    %2362 = vmatpush1.msra.mxu0 0.0
    %2363 = vmatprep.subr.mxu0 0.0
    %2364 = vmatpush1.msra.mxu0 0.0
    %2365 = vmatprep.subr.mxu0 0.0
    %2366 = vmatpush1.msra.mxu0 0.0
    %2367 = vmatprep.subr.mxu0 0.0
    %2368 = vmatpush1.msra.mxu0 0.0
    %2369 = vmatprep.subr.mxu0 0.0
    %2370 = vmatpush1.msra.mxu0 0.0
    %2371 = vmatprep.subr.mxu0 0.0
    %2372 = vmatpush1.msra.mxu0 0.0
    %2373 = vmatprep.subr.mxu0 0.0
    %2374 = vmatpush1.msra.mxu0 0.0
    %2375 = vmatprep.subr.mxu0 0.0
    %2376 = vmatpush1.msra.mxu0 0.0
    %2377 = vmatprep.subr.mxu0 0.0
    %2378 = vmatpush1.msra.mxu0 0.0
    %2379 = vmatprep.subr.mxu0 0.0
    %2380 = vmatpush1.msra.mxu0 0.0
    %2381 = vmatprep.subr.mxu0 0.0
    %2382 = vmatpush1.msra.mxu0 0.0
    %2383 = vmatprep.subr.mxu0 0.0
    %2384 = vmatpush1.msra.mxu0 0.0
    %2385 = vmatprep.mubr.f32.mxu0 0.0
    %2386 = vmatmul.mubr.f32.gmra.mrb[0].mxu0 %v2316
    %v2387 = vpop.f32.mrb[0].mxu0
    %v2388 = vadd.f32 %v2314, %v2387
    %v2389 = vpop.f32.mrb[0].mxu0
    %2390 = vmatprep.mubr.f32.mxu0 0.0
    %2391 = vmatmul.mubr.f32.gmra.mrb[0].mxu0 %v2319
    %v2392 = vpop.f32.mrb[0].mxu0
    %v2393 = vadd.f32 %v2314, %v2392
    %v2394 = vpop.f32.mrb[0].mxu0
    %2395 = vdwg.mxu0
    %2397 = vrot.lane.b32.xlu0 %v2388, 96
    %v2398 = vpop.permute.xlu0 %2397
    %v2399 = vsel %vm369, %v2388, 0
    %v2401 = vsel %vm369, %v2398, 0
    %2403 = vmatprep.subr.mxu0 0.0
    %2404 = vmatpush1.xpose.msra.mxu0 %v2401
    %2405 = vmatprep.subr.mxu0 0.0
    %2406 = vmatpush1.xpose.msra.mxu0 0.0
    %2407 = vmatprep.subr.mxu0 0.0
    %2408 = vmatpush1.xpose.msra.mxu0 0.0
    %2409 = vmatprep.subr.mxu0 0.0
    %2410 = vmatpush1.xpose.msra.mxu0 0.0
    %2411 = vmatprep.subr.mxu0 0.0
    %2412 = vmatpush1.xpose.msra.mxu0 0.0
    %2413 = vmatprep.subr.mxu0 0.0
    %2414 = vmatpush1.xpose.msra.mxu0 0.0
    %2415 = vmatprep.subr.mxu0 0.0
    %2416 = vmatpush1.xpose.msra.mxu0 0.0
    %2417 = vmatprep.subr.mxu0 0.0
    %2418 = vmatpush1.xpose.msra.mxu0 0.0
    %2419 = vmatprep.subr.mxu0 0.0
    %2420 = vmatpush1.xpose.msra.mxu0 0.0
    %2421 = vmatprep.subr.mxu0 0.0
    %2422 = vmatpush1.xpose.msra.mxu0 0.0
    %2423 = vmatprep.subr.mxu0 0.0
    %2424 = vmatpush1.xpose.msra.mxu0 0.0
    %2425 = vmatprep.subr.mxu0 0.0
    %2426 = vmatpush1.xpose.msra.mxu0 0.0
    %2427 = vmatprep.subr.mxu0 0.0
    %2428 = vmatpush1.xpose.msra.mxu0 0.0
    %2429 = vmatprep.subr.mxu0 0.0
    %2430 = vmatpush1.xpose.msra.mxu0 0.0
    %2431 = vmatprep.subr.mxu0 0.0
    %2432 = vmatpush1.xpose.msra.mxu0 0.0
    %2433 = vmatprep.subr.mxu0 0.0
    %2434 = vmatpush1.xpose.msra.mxu0 0.0
    %2435 = vmatprep.subr.mxu0 0.0
    %2436 = vmatpush1.xpose.msra.mxu0 0.0
    %2437 = vmatprep.subr.mxu0 0.0
    %2438 = vmatpush1.xpose.msra.mxu0 0.0
    %2439 = vmatprep.subr.mxu0 0.0
    %2440 = vmatpush1.xpose.msra.mxu0 0.0
    %2441 = vmatprep.subr.mxu0 0.0
    %2442 = vmatpush1.xpose.msra.mxu0 0.0
    %2443 = vmatprep.subr.mxu0 0.0
    %2444 = vmatpush1.xpose.msra.mxu0 0.0
    %2445 = vmatprep.subr.mxu0 0.0
    %2446 = vmatpush1.xpose.msra.mxu0 0.0
    %2447 = vmatprep.subr.mxu0 0.0
    %2448 = vmatpush1.xpose.msra.mxu0 0.0
    %2449 = vmatprep.subr.mxu0 0.0
    %2450 = vmatpush1.xpose.msra.mxu0 0.0
    %2451 = vmatprep.subr.mxu0 0.0
    %2452 = vmatpush1.xpose.msra.mxu0 0.0
    %2453 = vmatprep.subr.mxu0 0.0
    %2454 = vmatpush1.xpose.msra.mxu0 0.0
    %2455 = vmatprep.subr.mxu0 0.0
    %2456 = vmatpush1.xpose.msra.mxu0 0.0
    %2457 = vmatprep.subr.mxu0 0.0
    %2458 = vmatpush1.xpose.msra.mxu0 0.0
    %2459 = vmatprep.subr.mxu0 0.0
    %2460 = vmatpush1.xpose.msra.mxu0 0.0
    %2461 = vmatprep.subr.mxu0 0.0
    %2462 = vmatpush1.xpose.msra.mxu0 0.0
    %2463 = vmatprep.subr.mxu0 0.0
    %2464 = vmatpush1.xpose.msra.mxu0 0.0
    %2465 = vmatprep.subr.mxu0 0.0
    %2466 = vmatpush1.xpose.msra.mxu0 0.0
    %2467 = vmatprep.mubr.f32.mxu0 0.0
    %2468 = vmatmul.mubr.f32.gmra.mrb[0].mxu0 %v2399
    %v2469 = vpop.f32.mrb[0].mxu0
    %v2470 = vadd.f32 %v221, %v2469
    %v2471 = vpop.f32.mrb[0].mxu0
    %2472 = vdwg.mxu0
    %2474 = vrot.lane.b32.xlu0 %v2393, 96
    %v2475 = vpop.permute.xlu0 %2474
    %v2476 = vsel %vm369, %v2393, 0
    %v2478 = vsel %vm369, %v2475, 0
    %2480 = vmatprep.subr.mxu0 0.0
    %2481 = vmatpush1.xpose.msra.mxu0 %v2478
    %2482 = vmatprep.subr.mxu0 0.0
    %2483 = vmatpush1.xpose.msra.mxu0 0.0
    %2484 = vmatprep.subr.mxu0 0.0
    %2485 = vmatpush1.xpose.msra.mxu0 0.0
    %2486 = vmatprep.subr.mxu0 0.0
    %2487 = vmatpush1.xpose.msra.mxu0 0.0
    %2488 = vmatprep.subr.mxu0 0.0
    %2489 = vmatpush1.xpose.msra.mxu0 0.0
    %2490 = vmatprep.subr.mxu0 0.0
    %2491 = vmatpush1.xpose.msra.mxu0 0.0
    %2492 = vmatprep.subr.mxu0 0.0
    %2493 = vmatpush1.xpose.msra.mxu0 0.0
    %2494 = vmatprep.subr.mxu0 0.0
    %2495 = vmatpush1.xpose.msra.mxu0 0.0
    %2496 = vmatprep.subr.mxu0 0.0
    %2497 = vmatpush1.xpose.msra.mxu0 0.0
    %2498 = vmatprep.subr.mxu0 0.0
    %2499 = vmatpush1.xpose.msra.mxu0 0.0
    %2500 = vmatprep.subr.mxu0 0.0
    %2501 = vmatpush1.xpose.msra.mxu0 0.0
    %2502 = vmatprep.subr.mxu0 0.0
    %2503 = vmatpush1.xpose.msra.mxu0 0.0
    %2504 = vmatprep.subr.mxu0 0.0
    %2505 = vmatpush1.xpose.msra.mxu0 0.0
    %2506 = vmatprep.subr.mxu0 0.0
    %2507 = vmatpush1.xpose.msra.mxu0 0.0
    %2508 = vmatprep.subr.mxu0 0.0
    %2509 = vmatpush1.xpose.msra.mxu0 0.0
    %2510 = vmatprep.subr.mxu0 0.0
    %2511 = vmatpush1.xpose.msra.mxu0 0.0
    %2512 = vmatprep.subr.mxu0 0.0
    %2513 = vmatpush1.xpose.msra.mxu0 0.0
    %2514 = vmatprep.subr.mxu0 0.0
    %2515 = vmatpush1.xpose.msra.mxu0 0.0
    %2516 = vmatprep.subr.mxu0 0.0
    %2517 = vmatpush1.xpose.msra.mxu0 0.0
    %2518 = vmatprep.subr.mxu0 0.0
    %2519 = vmatpush1.xpose.msra.mxu0 0.0
    %2520 = vmatprep.subr.mxu0 0.0
    %2521 = vmatpush1.xpose.msra.mxu0 0.0
    %2522 = vmatprep.subr.mxu0 0.0
    %2523 = vmatpush1.xpose.msra.mxu0 0.0
    %2524 = vmatprep.subr.mxu0 0.0
    %2525 = vmatpush1.xpose.msra.mxu0 0.0
    %2526 = vmatprep.subr.mxu0 0.0
    %2527 = vmatpush1.xpose.msra.mxu0 0.0
    %2528 = vmatprep.subr.mxu0 0.0
    %2529 = vmatpush1.xpose.msra.mxu0 0.0
    %2530 = vmatprep.subr.mxu0 0.0
    %2531 = vmatpush1.xpose.msra.mxu0 0.0
    %2532 = vmatprep.subr.mxu0 0.0
    %2533 = vmatpush1.xpose.msra.mxu0 0.0
    %2534 = vmatprep.subr.mxu0 0.0
    %2535 = vmatpush1.xpose.msra.mxu0 0.0
    %2536 = vmatprep.subr.mxu0 0.0
    %2537 = vmatpush1.xpose.msra.mxu0 0.0
    %2538 = vmatprep.subr.mxu0 0.0
    %2539 = vmatpush1.xpose.msra.mxu0 0.0
    %2540 = vmatprep.subr.mxu0 0.0
    %2541 = vmatpush1.xpose.msra.mxu0 0.0
    %2542 = vmatprep.subr.mxu0 0.0
    %2543 = vmatpush1.xpose.msra.mxu0 0.0
    %2544 = vmatprep.mubr.f32.mxu0 0.0
    %2545 = vmatmul.mubr.f32.gmra.mrb[0].mxu0 %v2476
    %v2546 = vpop.f32.mrb[0].mxu0
    %v2547 = vadd.f32 %v221, %v2546
    %v2548 = vpop.f32.mrb[0].mxu0
    %2549 = vdwg.mxu0
    %v2550 = vsel %vm369, %v2470, -inf
    %2551 = vmax.xlane.f32.xlu0 %v2550
    %v2552 = vpop.xlane.xlu0 %2551
    %v2553 = vsel %vm369, %v2547, -inf
    %2554 = vmax.xlane.f32.xlu0 %v2553
    %v2555 = vpop.xlane.xlu0 %2554
    %v2556 = vsub.f32 %v2470, %v2552
    %v2557 = vsub.f32 %v2547, %v2555
    %v2558 = vmul.f32 %v2556, 1.442695
    %v2559 = vpow.pop %v2558
    %v2560 = vmul.f32 %v2557, 1.442695
    %v2561 = vpow.pop %v2560
    %v2562 = vsel %vm369, %v2559, 0.0
    %2563 = vadd.xlane.f32.xlu0 %v2562
    %v2564 = vpop.xlane.xlu0 %2563
    %v2565 = vsel %vm369, %v2561, 0.0
    %2566 = vadd.xlane.f32.xlu0 %v2565
    %v2567 = vpop.xlane.xlu0 %2566
    %v2568 = vrcp.pop %v2564
    %v2569 = vrcp.pop %v2567
    %v2570 = vmul.f32 %v2559, %v2568
    %v2571 = vmul.f32 %v2561, %v2569
    %2572 = vrot.lane.b32.xlu0 %v2388, 64
    %v2573 = vpop.permute.xlu0 %2572
    %v2576 = vsel %vm369, %v2570, 0
    %2578 = vmatprep.subr.mxu0 0.0
    %2579 = vmatpush1.msra.mxu0 %v2573
    %2580 = vmatprep.subr.mxu0 0.0
    %2581 = vmatpush1.msra.mxu0 0.0
    %2582 = vmatprep.subr.mxu0 0.0
    %2583 = vmatpush1.msra.mxu0 0.0
    %2584 = vmatprep.subr.mxu0 0.0
    %2585 = vmatpush1.msra.mxu0 0.0
    %2586 = vmatprep.subr.mxu0 0.0
    %2587 = vmatpush1.msra.mxu0 0.0
    %2588 = vmatprep.subr.mxu0 0.0
    %2589 = vmatpush1.msra.mxu0 0.0
    %2590 = vmatprep.subr.mxu0 0.0
    %2591 = vmatpush1.msra.mxu0 0.0
    %2592 = vmatprep.subr.mxu0 0.0
    %2593 = vmatpush1.msra.mxu0 0.0
    %2594 = vmatprep.subr.mxu0 0.0
    %2595 = vmatpush1.msra.mxu0 0.0
    %2596 = vmatprep.subr.mxu0 0.0
    %2597 = vmatpush1.msra.mxu0 0.0
    %2598 = vmatprep.subr.mxu0 0.0
    %2599 = vmatpush1.msra.mxu0 0.0
    %2600 = vmatprep.subr.mxu0 0.0
    %2601 = vmatpush1.msra.mxu0 0.0
    %2602 = vmatprep.subr.mxu0 0.0
    %2603 = vmatpush1.msra.mxu0 0.0
    %2604 = vmatprep.subr.mxu0 0.0
    %2605 = vmatpush1.msra.mxu0 0.0
    %2606 = vmatprep.subr.mxu0 0.0
    %2607 = vmatpush1.msra.mxu0 0.0
    %2608 = vmatprep.subr.mxu0 0.0
    %2609 = vmatpush1.msra.mxu0 0.0
    %2610 = vmatprep.subr.mxu0 0.0
    %2611 = vmatpush1.msra.mxu0 0.0
    %2612 = vmatprep.subr.mxu0 0.0
    %2613 = vmatpush1.msra.mxu0 0.0
    %2614 = vmatprep.subr.mxu0 0.0
    %2615 = vmatpush1.msra.mxu0 0.0
    %2616 = vmatprep.subr.mxu0 0.0
    %2617 = vmatpush1.msra.mxu0 0.0
    %2618 = vmatprep.subr.mxu0 0.0
    %2619 = vmatpush1.msra.mxu0 0.0
    %2620 = vmatprep.subr.mxu0 0.0
    %2621 = vmatpush1.msra.mxu0 0.0
    %2622 = vmatprep.subr.mxu0 0.0
    %2623 = vmatpush1.msra.mxu0 0.0
    %2624 = vmatprep.subr.mxu0 0.0
    %2625 = vmatpush1.msra.mxu0 0.0
    %2626 = vmatprep.subr.mxu0 0.0
    %2627 = vmatpush1.msra.mxu0 0.0
    %2628 = vmatprep.subr.mxu0 0.0
    %2629 = vmatpush1.msra.mxu0 0.0
    %2630 = vmatprep.subr.mxu0 0.0
    %2631 = vmatpush1.msra.mxu0 0.0
    %2632 = vmatprep.subr.mxu0 0.0
    %2633 = vmatpush1.msra.mxu0 0.0
    %2634 = vmatprep.subr.mxu0 0.0
    %2635 = vmatpush1.msra.mxu0 0.0
    %2636 = vmatprep.subr.mxu0 0.0
    %2637 = vmatpush1.msra.mxu0 0.0
    %2638 = vmatprep.subr.mxu0 0.0
    %2639 = vmatpush1.msra.mxu0 0.0
    %2640 = vmatprep.subr.mxu0 0.0
    %2641 = vmatpush1.msra.mxu0 0.0
    %2642 = vmatprep.mubr.f32.mxu0 0.0
    %2643 = vmatmul.mubr.f32.gmra.mrb[0].mxu0 %v2576
    %v2644 = vpop.f32.mrb[0].mxu0
    %v2645 = vadd.f32 0.0, %v2644
    %v2646 = vpop.f32.mrb[0].mxu0
    %2647 = vdwg.mxu0
    %2648 = vrot.lane.b32.xlu0 %v2393, 64
    %v2649 = vpop.permute.xlu0 %2648
    %v2652 = vsel %vm369, %v2571, 0
    %2654 = vmatprep.subr.mxu0 0.0
    %2655 = vmatpush1.msra.mxu0 %v2649
    %2656 = vmatprep.subr.mxu0 0.0
    %2657 = vmatpush1.msra.mxu0 0.0
    %2658 = vmatprep.subr.mxu0 0.0
    %2659 = vmatpush1.msra.mxu0 0.0
    %2660 = vmatprep.subr.mxu0 0.0
    %2661 = vmatpush1.msra.mxu0 0.0
    %2662 = vmatprep.subr.mxu0 0.0
    %2663 = vmatpush1.msra.mxu0 0.0
    %2664 = vmatprep.subr.mxu0 0.0
    %2665 = vmatpush1.msra.mxu0 0.0
    %2666 = vmatprep.subr.mxu0 0.0
    %2667 = vmatpush1.msra.mxu0 0.0
    %2668 = vmatprep.subr.mxu0 0.0
    %2669 = vmatpush1.msra.mxu0 0.0
    %2670 = vmatprep.subr.mxu0 0.0
    %2671 = vmatpush1.msra.mxu0 0.0
    %2672 = vmatprep.subr.mxu0 0.0
    %2673 = vmatpush1.msra.mxu0 0.0
    %2674 = vmatprep.subr.mxu0 0.0
    %2675 = vmatpush1.msra.mxu0 0.0
    %2676 = vmatprep.subr.mxu0 0.0
    %2677 = vmatpush1.msra.mxu0 0.0
    %2678 = vmatprep.subr.mxu0 0.0
    %2679 = vmatpush1.msra.mxu0 0.0
    %2680 = vmatprep.subr.mxu0 0.0
    %2681 = vmatpush1.msra.mxu0 0.0
    %2682 = vmatprep.subr.mxu0 0.0
    %2683 = vmatpush1.msra.mxu0 0.0
    %2684 = vmatprep.subr.mxu0 0.0
    %2685 = vmatpush1.msra.mxu0 0.0
    %2686 = vmatprep.subr.mxu0 0.0
    %2687 = vmatpush1.msra.mxu0 0.0
    %2688 = vmatprep.subr.mxu0 0.0
    %2689 = vmatpush1.msra.mxu0 0.0
    %2690 = vmatprep.subr.mxu0 0.0
    %2691 = vmatpush1.msra.mxu0 0.0
    %2692 = vmatprep.subr.mxu0 0.0
    %2693 = vmatpush1.msra.mxu0 0.0
    %2694 = vmatprep.subr.mxu0 0.0
    %2695 = vmatpush1.msra.mxu0 0.0
    %2696 = vmatprep.subr.mxu0 0.0
    %2697 = vmatpush1.msra.mxu0 0.0
    %2698 = vmatprep.subr.mxu0 0.0
    %2699 = vmatpush1.msra.mxu0 0.0
    %2700 = vmatprep.subr.mxu0 0.0
    %2701 = vmatpush1.msra.mxu0 0.0
    %2702 = vmatprep.subr.mxu0 0.0
    %2703 = vmatpush1.msra.mxu0 0.0
    %2704 = vmatprep.subr.mxu0 0.0
    %2705 = vmatpush1.msra.mxu0 0.0
    %2706 = vmatprep.subr.mxu0 0.0
    %2707 = vmatpush1.msra.mxu0 0.0
    %2708 = vmatprep.subr.mxu0 0.0
    %2709 = vmatpush1.msra.mxu0 0.0
    %2710 = vmatprep.subr.mxu0 0.0
    %2711 = vmatpush1.msra.mxu0 0.0
    %2712 = vmatprep.subr.mxu0 0.0
    %2713 = vmatpush1.msra.mxu0 0.0
    %2714 = vmatprep.subr.mxu0 0.0
    %2715 = vmatpush1.msra.mxu0 0.0
    %2716 = vmatprep.subr.mxu0 0.0
    %2717 = vmatpush1.msra.mxu0 0.0
    %2718 = vmatprep.mubr.f32.mxu0 0.0
    %2719 = vmatmul.mubr.f32.gmra.mrb[0].mxu0 %v2652
    %v2720 = vpop.f32.mrb[0].mxu0
    %v2721 = vadd.f32 0.0, %v2720
    %v2722 = vpop.f32.mrb[0].mxu0
    %2723 = vdwg.mxu0
    %2724 = vrot.lane.b32.xlu0 %v2388, 120
    %v2725 = vpop.permute.xlu0 %2724
    %2726 = vrot.lane.b32.xlu0 %v2388, 88
    %v2727 = vpop.permute.xlu0 %2726
    %v2728 = vsel %vm369, %v2725, 0
    %v2730 = vsel %vm369, %v2727, 0
    %2732 = vmatprep.subr.mxu0 0.0
    %2733 = vmatpush1.xpose.msra.mxu0 %v2730
    %2734 = vmatprep.subr.mxu0 0.0
    %2735 = vmatpush1.xpose.msra.mxu0 0.0
    %2736 = vmatprep.subr.mxu0 0.0
    %2737 = vmatpush1.xpose.msra.mxu0 0.0
    %2738 = vmatprep.subr.mxu0 0.0
    %2739 = vmatpush1.xpose.msra.mxu0 0.0
    %2740 = vmatprep.subr.mxu0 0.0
    %2741 = vmatpush1.xpose.msra.mxu0 0.0
    %2742 = vmatprep.subr.mxu0 0.0
    %2743 = vmatpush1.xpose.msra.mxu0 0.0
    %2744 = vmatprep.subr.mxu0 0.0
    %2745 = vmatpush1.xpose.msra.mxu0 0.0
    %2746 = vmatprep.subr.mxu0 0.0
    %2747 = vmatpush1.xpose.msra.mxu0 0.0
    %2748 = vmatprep.subr.mxu0 0.0
    %2749 = vmatpush1.xpose.msra.mxu0 0.0
    %2750 = vmatprep.subr.mxu0 0.0
    %2751 = vmatpush1.xpose.msra.mxu0 0.0
    %2752 = vmatprep.subr.mxu0 0.0
    %2753 = vmatpush1.xpose.msra.mxu0 0.0
    %2754 = vmatprep.subr.mxu0 0.0
    %2755 = vmatpush1.xpose.msra.mxu0 0.0
    %2756 = vmatprep.subr.mxu0 0.0
    %2757 = vmatpush1.xpose.msra.mxu0 0.0
    %2758 = vmatprep.subr.mxu0 0.0
    %2759 = vmatpush1.xpose.msra.mxu0 0.0
    %2760 = vmatprep.subr.mxu0 0.0
    %2761 = vmatpush1.xpose.msra.mxu0 0.0
    %2762 = vmatprep.subr.mxu0 0.0
    %2763 = vmatpush1.xpose.msra.mxu0 0.0
    %2764 = vmatprep.subr.mxu0 0.0
    %2765 = vmatpush1.xpose.msra.mxu0 0.0
    %2766 = vmatprep.subr.mxu0 0.0
    %2767 = vmatpush1.xpose.msra.mxu0 0.0
    %2768 = vmatprep.subr.mxu0 0.0
    %2769 = vmatpush1.xpose.msra.mxu0 0.0
    %2770 = vmatprep.subr.mxu0 0.0
    %2771 = vmatpush1.xpose.msra.mxu0 0.0
    %2772 = vmatprep.subr.mxu0 0.0
    %2773 = vmatpush1.xpose.msra.mxu0 0.0
    %2774 = vmatprep.subr.mxu0 0.0
    %2775 = vmatpush1.xpose.msra.mxu0 0.0
    %2776 = vmatprep.subr.mxu0 0.0
    %2777 = vmatpush1.xpose.msra.mxu0 0.0
    %2778 = vmatprep.subr.mxu0 0.0
    %2779 = vmatpush1.xpose.msra.mxu0 0.0
    %2780 = vmatprep.subr.mxu0 0.0
    %2781 = vmatpush1.xpose.msra.mxu0 0.0
    %2782 = vmatprep.subr.mxu0 0.0
    %2783 = vmatpush1.xpose.msra.mxu0 0.0
    %2784 = vmatprep.subr.mxu0 0.0
    %2785 = vmatpush1.xpose.msra.mxu0 0.0
    %2786 = vmatprep.subr.mxu0 0.0
    %2787 = vmatpush1.xpose.msra.mxu0 0.0
    %2788 = vmatprep.subr.mxu0 0.0
    %2789 = vmatpush1.xpose.msra.mxu0 0.0
    %2790 = vmatprep.subr.mxu0 0.0
    %2791 = vmatpush1.xpose.msra.mxu0 0.0
    %2792 = vmatprep.subr.mxu0 0.0
    %2793 = vmatpush1.xpose.msra.mxu0 0.0
    %2794 = vmatprep.subr.mxu0 0.0
    %2795 = vmatpush1.xpose.msra.mxu0 0.0
    %2796 = vmatprep.mubr.f32.mxu0 0.0
    %2797 = vmatmul.mubr.f32.gmra.mrb[0].mxu0 %v2728
    %v2798 = vpop.f32.mrb[0].mxu0
    %v2799 = vadd.f32 %v221, %v2798
    %v2800 = vpop.f32.mrb[0].mxu0
    %2801 = vdwg.mxu0
    %2802 = vrot.lane.b32.xlu0 %v2393, 120
    %v2803 = vpop.permute.xlu0 %2802
    %2804 = vrot.lane.b32.xlu0 %v2393, 88
    %v2805 = vpop.permute.xlu0 %2804
    %v2806 = vsel %vm369, %v2803, 0
    %v2808 = vsel %vm369, %v2805, 0
    %2810 = vmatprep.subr.mxu0 0.0
    %2811 = vmatpush1.xpose.msra.mxu0 %v2808
    %2812 = vmatprep.subr.mxu0 0.0
    %2813 = vmatpush1.xpose.msra.mxu0 0.0
    %2814 = vmatprep.subr.mxu0 0.0
    %2815 = vmatpush1.xpose.msra.mxu0 0.0
    %2816 = vmatprep.subr.mxu0 0.0
    %2817 = vmatpush1.xpose.msra.mxu0 0.0
    %2818 = vmatprep.subr.mxu0 0.0
    %2819 = vmatpush1.xpose.msra.mxu0 0.0
    %2820 = vmatprep.subr.mxu0 0.0
    %2821 = vmatpush1.xpose.msra.mxu0 0.0
    %2822 = vmatprep.subr.mxu0 0.0
    %2823 = vmatpush1.xpose.msra.mxu0 0.0
    %2824 = vmatprep.subr.mxu0 0.0
    %2825 = vmatpush1.xpose.msra.mxu0 0.0
    %2826 = vmatprep.subr.mxu0 0.0
    %2827 = vmatpush1.xpose.msra.mxu0 0.0
    %2828 = vmatprep.subr.mxu0 0.0
    %2829 = vmatpush1.xpose.msra.mxu0 0.0
    %2830 = vmatprep.subr.mxu0 0.0
    %2831 = vmatpush1.xpose.msra.mxu0 0.0
    %2832 = vmatprep.subr.mxu0 0.0
    %2833 = vmatpush1.xpose.msra.mxu0 0.0
    %2834 = vmatprep.subr.mxu0 0.0
    %2835 = vmatpush1.xpose.msra.mxu0 0.0
    %2836 = vmatprep.subr.mxu0 0.0
    %2837 = vmatpush1.xpose.msra.mxu0 0.0
    %2838 = vmatprep.subr.mxu0 0.0
    %2839 = vmatpush1.xpose.msra.mxu0 0.0
    %2840 = vmatprep.subr.mxu0 0.0
    %2841 = vmatpush1.xpose.msra.mxu0 0.0
    %2842 = vmatprep.subr.mxu0 0.0
    %2843 = vmatpush1.xpose.msra.mxu0 0.0
    %2844 = vmatprep.subr.mxu0 0.0
    %2845 = vmatpush1.xpose.msra.mxu0 0.0
    %2846 = vmatprep.subr.mxu0 0.0
    %2847 = vmatpush1.xpose.msra.mxu0 0.0
    %2848 = vmatprep.subr.mxu0 0.0
    %2849 = vmatpush1.xpose.msra.mxu0 0.0
    %2850 = vmatprep.subr.mxu0 0.0
    %2851 = vmatpush1.xpose.msra.mxu0 0.0
    %2852 = vmatprep.subr.mxu0 0.0
    %2853 = vmatpush1.xpose.msra.mxu0 0.0
    %2854 = vmatprep.subr.mxu0 0.0
    %2855 = vmatpush1.xpose.msra.mxu0 0.0
    %2856 = vmatprep.subr.mxu0 0.0
    %2857 = vmatpush1.xpose.msra.mxu0 0.0
    %2858 = vmatprep.subr.mxu0 0.0
    %2859 = vmatpush1.xpose.msra.mxu0 0.0
    %2860 = vmatprep.subr.mxu0 0.0
    %2861 = vmatpush1.xpose.msra.mxu0 0.0
    %2862 = vmatprep.subr.mxu0 0.0
    %2863 = vmatpush1.xpose.msra.mxu0 0.0
    %2864 = vmatprep.subr.mxu0 0.0
    %2865 = vmatpush1.xpose.msra.mxu0 0.0
    %2866 = vmatprep.subr.mxu0 0.0
    %2867 = vmatpush1.xpose.msra.mxu0 0.0
    %2868 = vmatprep.subr.mxu0 0.0
    %2869 = vmatpush1.xpose.msra.mxu0 0.0
    %2870 = vmatprep.subr.mxu0 0.0
    %2871 = vmatpush1.xpose.msra.mxu0 0.0
    %2872 = vmatprep.subr.mxu0 0.0
    %2873 = vmatpush1.xpose.msra.mxu0 0.0
    %2874 = vmatprep.mubr.f32.mxu0 0.0
    %2875 = vmatmul.mubr.f32.gmra.mrb[0].mxu0 %v2806
    %v2876 = vpop.f32.mrb[0].mxu0
    %v2877 = vadd.f32 %v221, %v2876
    %v2878 = vpop.f32.mrb[0].mxu0
    %2879 = vdwg.mxu0
    %v2880 = vsel %vm369, %v2799, -inf
    %2881 = vmax.xlane.f32.xlu0 %v2880
    %v2882 = vpop.xlane.xlu0 %2881
    %v2883 = vsel %vm369, %v2877, -inf
    %2884 = vmax.xlane.f32.xlu0 %v2883
    %v2885 = vpop.xlane.xlu0 %2884
    %v2886 = vsub.f32 %v2799, %v2882
    %v2887 = vsub.f32 %v2877, %v2885
    %v2888 = vmul.f32 %v2886, 1.442695
    %v2889 = vpow.pop %v2888
    %v2890 = vmul.f32 %v2887, 1.442695
    %v2891 = vpow.pop %v2890
    %v2892 = vsel %vm369, %v2889, 0.0
    %2893 = vadd.xlane.f32.xlu0 %v2892
    %v2894 = vpop.xlane.xlu0 %2893
    %v2895 = vsel %vm369, %v2891, 0.0
    %2896 = vadd.xlane.f32.xlu0 %v2895
    %v2897 = vpop.xlane.xlu0 %2896
    %v2898 = vrcp.pop %v2894
    %v2899 = vrcp.pop %v2897
    %v2900 = vmul.f32 %v2889, %v2898
    %v2901 = vmul.f32 %v2891, %v2899
    %2902 = vrot.lane.b32.xlu0 %v2388, 56
    %v2903 = vpop.permute.xlu0 %2902
    %v2906 = vsel %vm369, %v2900, 0
    %2908 = vmatprep.subr.mxu0 0.0
    %2909 = vmatpush1.msra.mxu0 %v2903
    %2910 = vmatprep.subr.mxu0 0.0
    %2911 = vmatpush1.msra.mxu0 0.0
    %2912 = vmatprep.subr.mxu0 0.0
    %2913 = vmatpush1.msra.mxu0 0.0
    %2914 = vmatprep.subr.mxu0 0.0
    %2915 = vmatpush1.msra.mxu0 0.0
    %2916 = vmatprep.subr.mxu0 0.0
    %2917 = vmatpush1.msra.mxu0 0.0
    %2918 = vmatprep.subr.mxu0 0.0
    %2919 = vmatpush1.msra.mxu0 0.0
    %2920 = vmatprep.subr.mxu0 0.0
    %2921 = vmatpush1.msra.mxu0 0.0
    %2922 = vmatprep.subr.mxu0 0.0
    %2923 = vmatpush1.msra.mxu0 0.0
    %2924 = vmatprep.subr.mxu0 0.0
    %2925 = vmatpush1.msra.mxu0 0.0
    %2926 = vmatprep.subr.mxu0 0.0
    %2927 = vmatpush1.msra.mxu0 0.0
    %2928 = vmatprep.subr.mxu0 0.0
    %2929 = vmatpush1.msra.mxu0 0.0
    %2930 = vmatprep.subr.mxu0 0.0
    %2931 = vmatpush1.msra.mxu0 0.0
    %2932 = vmatprep.subr.mxu0 0.0
    %2933 = vmatpush1.msra.mxu0 0.0
    %2934 = vmatprep.subr.mxu0 0.0
    %2935 = vmatpush1.msra.mxu0 0.0
    %2936 = vmatprep.subr.mxu0 0.0
    %2937 = vmatpush1.msra.mxu0 0.0
    %2938 = vmatprep.subr.mxu0 0.0
    %2939 = vmatpush1.msra.mxu0 0.0
    %2940 = vmatprep.subr.mxu0 0.0
    %2941 = vmatpush1.msra.mxu0 0.0
    %2942 = vmatprep.subr.mxu0 0.0
    %2943 = vmatpush1.msra.mxu0 0.0
    %2944 = vmatprep.subr.mxu0 0.0
    %2945 = vmatpush1.msra.mxu0 0.0
    %2946 = vmatprep.subr.mxu0 0.0
    %2947 = vmatpush1.msra.mxu0 0.0
    %2948 = vmatprep.subr.mxu0 0.0
    %2949 = vmatpush1.msra.mxu0 0.0
    %2950 = vmatprep.subr.mxu0 0.0
    %2951 = vmatpush1.msra.mxu0 0.0
    %2952 = vmatprep.subr.mxu0 0.0
    %2953 = vmatpush1.msra.mxu0 0.0
    %2954 = vmatprep.subr.mxu0 0.0
    %2955 = vmatpush1.msra.mxu0 0.0
    %2956 = vmatprep.subr.mxu0 0.0
    %2957 = vmatpush1.msra.mxu0 0.0
    %2958 = vmatprep.subr.mxu0 0.0
    %2959 = vmatpush1.msra.mxu0 0.0
    %2960 = vmatprep.subr.mxu0 0.0
    %2961 = vmatpush1.msra.mxu0 0.0
    %2962 = vmatprep.subr.mxu0 0.0
    %2963 = vmatpush1.msra.mxu0 0.0
    %2964 = vmatprep.subr.mxu0 0.0
    %2965 = vmatpush1.msra.mxu0 0.0
    %2966 = vmatprep.subr.mxu0 0.0
    %2967 = vmatpush1.msra.mxu0 0.0
    %2968 = vmatprep.subr.mxu0 0.0
    %2969 = vmatpush1.msra.mxu0 0.0
    %2970 = vmatprep.subr.mxu0 0.0
    %2971 = vmatpush1.msra.mxu0 0.0
    %2972 = vmatprep.mubr.f32.mxu0 0.0
    %2973 = vmatmul.mubr.f32.gmra.mrb[0].mxu0 %v2906
    %v2974 = vpop.f32.mrb[0].mxu0
    %v2975 = vadd.f32 0.0, %v2974
    %v2976 = vpop.f32.mrb[0].mxu0
    %2977 = vdwg.mxu0
    %2978 = vrot.lane.b32.xlu0 %v2393, 56
    %v2979 = vpop.permute.xlu0 %2978
    %v2982 = vsel %vm369, %v2901, 0
    %2984 = vmatprep.subr.mxu0 0.0
    %2985 = vmatpush1.msra.mxu0 %v2979
    %2986 = vmatprep.subr.mxu0 0.0
    %2987 = vmatpush1.msra.mxu0 0.0
    %2988 = vmatprep.subr.mxu0 0.0
    %2989 = vmatpush1.msra.mxu0 0.0
    %2990 = vmatprep.subr.mxu0 0.0
    %2991 = vmatpush1.msra.mxu0 0.0
    %2992 = vmatprep.subr.mxu0 0.0
    %2993 = vmatpush1.msra.mxu0 0.0
    %2994 = vmatprep.subr.mxu0 0.0
    %2995 = vmatpush1.msra.mxu0 0.0
    %2996 = vmatprep.subr.mxu0 0.0
    %2997 = vmatpush1.msra.mxu0 0.0
    %2998 = vmatprep.subr.mxu0 0.0
    %2999 = vmatpush1.msra.mxu0 0.0
    %3000 = vmatprep.subr.mxu0 0.0
    %3001 = vmatpush1.msra.mxu0 0.0
    %3002 = vmatprep.subr.mxu0 0.0
    %3003 = vmatpush1.msra.mxu0 0.0
    %3004 = vmatprep.subr.mxu0 0.0
    %3005 = vmatpush1.msra.mxu0 0.0
    %3006 = vmatprep.subr.mxu0 0.0
    %3007 = vmatpush1.msra.mxu0 0.0
    %3008 = vmatprep.subr.mxu0 0.0
    %3009 = vmatpush1.msra.mxu0 0.0
    %3010 = vmatprep.subr.mxu0 0.0
    %3011 = vmatpush1.msra.mxu0 0.0
    %3012 = vmatprep.subr.mxu0 0.0
    %3013 = vmatpush1.msra.mxu0 0.0
    %3014 = vmatprep.subr.mxu0 0.0
    %3015 = vmatpush1.msra.mxu0 0.0
    %3016 = vmatprep.subr.mxu0 0.0
    %3017 = vmatpush1.msra.mxu0 0.0
    %3018 = vmatprep.subr.mxu0 0.0
    %3019 = vmatpush1.msra.mxu0 0.0
    %3020 = vmatprep.subr.mxu0 0.0
    %3021 = vmatpush1.msra.mxu0 0.0
    %3022 = vmatprep.subr.mxu0 0.0
    %3023 = vmatpush1.msra.mxu0 0.0
    %3024 = vmatprep.subr.mxu0 0.0
    %3025 = vmatpush1.msra.mxu0 0.0
    %3026 = vmatprep.subr.mxu0 0.0
    %3027 = vmatpush1.msra.mxu0 0.0
    %3028 = vmatprep.subr.mxu0 0.0
    %3029 = vmatpush1.msra.mxu0 0.0
    %3030 = vmatprep.subr.mxu0 0.0
    %3031 = vmatpush1.msra.mxu0 0.0
    %3032 = vmatprep.subr.mxu0 0.0
    %3033 = vmatpush1.msra.mxu0 0.0
    %3034 = vmatprep.subr.mxu0 0.0
    %3035 = vmatpush1.msra.mxu0 0.0
    %3036 = vmatprep.subr.mxu0 0.0
    %3037 = vmatpush1.msra.mxu0 0.0
    %3038 = vmatprep.subr.mxu0 0.0
    %3039 = vmatpush1.msra.mxu0 0.0
    %3040 = vmatprep.subr.mxu0 0.0
    %3041 = vmatpush1.msra.mxu0 0.0
    %3042 = vmatprep.subr.mxu0 0.0
    %3043 = vmatpush1.msra.mxu0 0.0
    %3044 = vmatprep.subr.mxu0 0.0
    %3045 = vmatpush1.msra.mxu0 0.0
    %3046 = vmatprep.subr.mxu0 0.0
    %3047 = vmatpush1.msra.mxu0 0.0
    %3048 = vmatprep.mubr.f32.mxu0 0.0
    %3049 = vmatmul.mubr.f32.gmra.mrb[0].mxu0 %v2982
    %v3050 = vpop.f32.mrb[0].mxu0
    %v3051 = vadd.f32 0.0, %v3050
    %v3052 = vpop.f32.mrb[0].mxu0
    %3053 = vdwg.mxu0
    %v3055 = vsel %vm369, %v2975, 0
    %v3058 = vsel %vm369, %v3051, 0
    %3060 = vmatprep.subr.mxu0 0.0
    %3061 = vmatpush1.msra.mxu0 %v2254
    %3062 = vmatprep.subr.mxu0 0.0
    %3063 = vmatpush1.msra.mxu0 0.0
    %3064 = vmatprep.subr.mxu0 0.0
    %3065 = vmatpush1.msra.mxu0 0.0
    %3066 = vmatprep.subr.mxu0 0.0
    %3067 = vmatpush1.msra.mxu0 0.0
    %3068 = vmatprep.subr.mxu0 0.0
    %3069 = vmatpush1.msra.mxu0 0.0
    %3070 = vmatprep.subr.mxu0 0.0
    %3071 = vmatpush1.msra.mxu0 0.0
    %3072 = vmatprep.subr.mxu0 0.0
    %3073 = vmatpush1.msra.mxu0 0.0
    %3074 = vmatprep.subr.mxu0 0.0
    %3075 = vmatpush1.msra.mxu0 0.0
    %3076 = vmatprep.subr.mxu0 0.0
    %3077 = vmatpush1.msra.mxu0 0.0
    %3078 = vmatprep.subr.mxu0 0.0
    %3079 = vmatpush1.msra.mxu0 0.0
    %3080 = vmatprep.subr.mxu0 0.0
    %3081 = vmatpush1.msra.mxu0 0.0
    %3082 = vmatprep.subr.mxu0 0.0
    %3083 = vmatpush1.msra.mxu0 0.0
    %3084 = vmatprep.subr.mxu0 0.0
    %3085 = vmatpush1.msra.mxu0 0.0
    %3086 = vmatprep.subr.mxu0 0.0
    %3087 = vmatpush1.msra.mxu0 0.0
    %3088 = vmatprep.subr.mxu0 0.0
    %3089 = vmatpush1.msra.mxu0 0.0
    %3090 = vmatprep.subr.mxu0 0.0
    %3091 = vmatpush1.msra.mxu0 0.0
    %3092 = vmatprep.subr.mxu0 0.0
    %3093 = vmatpush1.msra.mxu0 0.0
    %3094 = vmatprep.subr.mxu0 0.0
    %3095 = vmatpush1.msra.mxu0 0.0
    %3096 = vmatprep.subr.mxu0 0.0
    %3097 = vmatpush1.msra.mxu0 0.0
    %3098 = vmatprep.subr.mxu0 0.0
    %3099 = vmatpush1.msra.mxu0 0.0
    %3100 = vmatprep.subr.mxu0 0.0
    %3101 = vmatpush1.msra.mxu0 0.0
    %3102 = vmatprep.subr.mxu0 0.0
    %3103 = vmatpush1.msra.mxu0 0.0
    %3104 = vmatprep.subr.mxu0 0.0
    %3105 = vmatpush1.msra.mxu0 0.0
    %3106 = vmatprep.subr.mxu0 0.0
    %3107 = vmatpush1.msra.mxu0 0.0
    %3108 = vmatprep.subr.mxu0 0.0
    %3109 = vmatpush1.msra.mxu0 0.0
    %3110 = vmatprep.subr.mxu0 0.0
    %3111 = vmatpush1.msra.mxu0 0.0
    %3112 = vmatprep.subr.mxu0 0.0
    %3113 = vmatpush1.msra.mxu0 0.0
    %3114 = vmatprep.subr.mxu0 0.0
    %3115 = vmatpush1.msra.mxu0 0.0
    %3116 = vmatprep.subr.mxu0 0.0
    %3117 = vmatpush1.msra.mxu0 0.0
    %3118 = vmatprep.subr.mxu0 0.0
    %3119 = vmatpush1.msra.mxu0 0.0
    %3120 = vmatprep.subr.mxu0 0.0
    %3121 = vmatpush1.msra.mxu0 0.0
    %3122 = vmatprep.subr.mxu0 0.0
    %3123 = vmatpush1.msra.mxu0 0.0
    %3124 = vmatprep.mubr.f32.mxu0 0.0
    %3125 = vmatmul.mubr.f32.gmra.mrb[0].mxu0 %v3055
    %v3126 = vpop.f32.mrb[0].mxu0
    %v3127 = vadd.f32 0.0, %v3126
    %v3128 = vpop.f32.mrb[0].mxu0
    %3129 = vmatprep.mubr.f32.mxu0 0.0
    %3130 = vmatmul.mubr.f32.gmra.mrb[0].mxu0 %v3058
    %v3131 = vpop.f32.mrb[0].mxu0
    %v3132 = vadd.f32 0.0, %v3131
    %v3133 = vpop.f32.mrb[0].mxu0
    %3134 = vdwg.mxu0
    %v3136 = vsel %vm369, %v2645, 0
    %v3139 = vsel %vm369, %v2721, 0
    %3141 = vmatprep.subr.mxu0 0.0
    %3142 = vmatpush1.msra.mxu0 %v2253
    %3143 = vmatprep.subr.mxu0 0.0
    %3144 = vmatpush1.msra.mxu0 0.0
    %3145 = vmatprep.subr.mxu0 0.0
    %3146 = vmatpush1.msra.mxu0 0.0
    %3147 = vmatprep.subr.mxu0 0.0
    %3148 = vmatpush1.msra.mxu0 0.0
    %3149 = vmatprep.subr.mxu0 0.0
    %3150 = vmatpush1.msra.mxu0 0.0
    %3151 = vmatprep.subr.mxu0 0.0
    %3152 = vmatpush1.msra.mxu0 0.0
    %3153 = vmatprep.subr.mxu0 0.0
    %3154 = vmatpush1.msra.mxu0 0.0
    %3155 = vmatprep.subr.mxu0 0.0
    %3156 = vmatpush1.msra.mxu0 0.0
    %3157 = vmatprep.subr.mxu0 0.0
    %3158 = vmatpush1.msra.mxu0 0.0
    %3159 = vmatprep.subr.mxu0 0.0
    %3160 = vmatpush1.msra.mxu0 0.0
    %3161 = vmatprep.subr.mxu0 0.0
    %3162 = vmatpush1.msra.mxu0 0.0
    %3163 = vmatprep.subr.mxu0 0.0
    %3164 = vmatpush1.msra.mxu0 0.0
    %3165 = vmatprep.subr.mxu0 0.0
    %3166 = vmatpush1.msra.mxu0 0.0
    %3167 = vmatprep.subr.mxu0 0.0
    %3168 = vmatpush1.msra.mxu0 0.0
    %3169 = vmatprep.subr.mxu0 0.0
    %3170 = vmatpush1.msra.mxu0 0.0
    %3171 = vmatprep.subr.mxu0 0.0
    %3172 = vmatpush1.msra.mxu0 0.0
    %3173 = vmatprep.subr.mxu0 0.0
    %3174 = vmatpush1.msra.mxu0 0.0
    %3175 = vmatprep.subr.mxu0 0.0
    %3176 = vmatpush1.msra.mxu0 0.0
    %3177 = vmatprep.subr.mxu0 0.0
    %3178 = vmatpush1.msra.mxu0 0.0
    %3179 = vmatprep.subr.mxu0 0.0
    %3180 = vmatpush1.msra.mxu0 0.0
    %3181 = vmatprep.subr.mxu0 0.0
    %3182 = vmatpush1.msra.mxu0 0.0
    %3183 = vmatprep.subr.mxu0 0.0
    %3184 = vmatpush1.msra.mxu0 0.0
    %3185 = vmatprep.subr.mxu0 0.0
    %3186 = vmatpush1.msra.mxu0 0.0
    %3187 = vmatprep.subr.mxu0 0.0
    %3188 = vmatpush1.msra.mxu0 0.0
    %3189 = vmatprep.subr.mxu0 0.0
    %3190 = vmatpush1.msra.mxu0 0.0
    %3191 = vmatprep.subr.mxu0 0.0
    %3192 = vmatpush1.msra.mxu0 0.0
    %3193 = vmatprep.subr.mxu0 0.0
    %3194 = vmatpush1.msra.mxu0 0.0
    %3195 = vmatprep.subr.mxu0 0.0
    %3196 = vmatpush1.msra.mxu0 0.0
    %3197 = vmatprep.subr.mxu0 0.0
    %3198 = vmatpush1.msra.mxu0 0.0
    %3199 = vmatprep.subr.mxu0 0.0
    %3200 = vmatpush1.msra.mxu0 0.0
    %3201 = vmatprep.subr.mxu0 0.0
    %3202 = vmatpush1.msra.mxu0 0.0
    %3203 = vmatprep.subr.mxu0 0.0
    %3204 = vmatpush1.msra.mxu0 0.0
    %3205 = vmatprep.mubr.f32.mxu0 0.0
    %3206 = vmatmul.mubr.f32.gmra.mrb[0].mxu0 %v3136
    %v3207 = vpop.f32.mrb[0].mxu0
    %v3208 = vadd.f32 %v3127, %v3207
    %v3209 = vpop.f32.mrb[0].mxu0
    %3210 = vmatprep.mubr.f32.mxu0 0.0
    %3211 = vmatmul.mubr.f32.gmra.mrb[0].mxu0 %v3139
    %v3212 = vpop.f32.mrb[0].mxu0
    %v3213 = vadd.f32 %v3132, %v3212
    %v3214 = vpop.f32.mrb[0].mxu0
    %3215 = vdwg.mxu0
    %3216 = vrot.lane.b32.xlu0 %v2388, 112
    %v3217 = vpop.permute.xlu0 %3216
    %3218 = vrot.lane.b32.xlu0 %v2388, 80
    %v3219 = vpop.permute.xlu0 %3218
    %v3220 = vsel %vm369, %v3217, 0
    %v3222 = vsel %vm369, %v3219, 0
    %3224 = vmatprep.subr.mxu0 0.0
    %3225 = vmatpush1.xpose.msra.mxu0 %v3222
    %3226 = vmatprep.subr.mxu0 0.0
    %3227 = vmatpush1.xpose.msra.mxu0 0.0
    %3228 = vmatprep.subr.mxu0 0.0
    %3229 = vmatpush1.xpose.msra.mxu0 0.0
    %3230 = vmatprep.subr.mxu0 0.0
    %3231 = vmatpush1.xpose.msra.mxu0 0.0
    %3232 = vmatprep.subr.mxu0 0.0
    %3233 = vmatpush1.xpose.msra.mxu0 0.0
    %3234 = vmatprep.subr.mxu0 0.0
    %3235 = vmatpush1.xpose.msra.mxu0 0.0
    %3236 = vmatprep.subr.mxu0 0.0
    %3237 = vmatpush1.xpose.msra.mxu0 0.0
    %3238 = vmatprep.subr.mxu0 0.0
    %3239 = vmatpush1.xpose.msra.mxu0 0.0
    %3240 = vmatprep.subr.mxu0 0.0
    %3241 = vmatpush1.xpose.msra.mxu0 0.0
    %3242 = vmatprep.subr.mxu0 0.0
    %3243 = vmatpush1.xpose.msra.mxu0 0.0
    %3244 = vmatprep.subr.mxu0 0.0
    %3245 = vmatpush1.xpose.msra.mxu0 0.0
    %3246 = vmatprep.subr.mxu0 0.0
    %3247 = vmatpush1.xpose.msra.mxu0 0.0
    %3248 = vmatprep.subr.mxu0 0.0
    %3249 = vmatpush1.xpose.msra.mxu0 0.0
    %3250 = vmatprep.subr.mxu0 0.0
    %3251 = vmatpush1.xpose.msra.mxu0 0.0
    %3252 = vmatprep.subr.mxu0 0.0
    %3253 = vmatpush1.xpose.msra.mxu0 0.0
    %3254 = vmatprep.subr.mxu0 0.0
    %3255 = vmatpush1.xpose.msra.mxu0 0.0
    %3256 = vmatprep.subr.mxu0 0.0
    %3257 = vmatpush1.xpose.msra.mxu0 0.0
    %3258 = vmatprep.subr.mxu0 0.0
    %3259 = vmatpush1.xpose.msra.mxu0 0.0
    %3260 = vmatprep.subr.mxu0 0.0
    %3261 = vmatpush1.xpose.msra.mxu0 0.0
    %3262 = vmatprep.subr.mxu0 0.0
    %3263 = vmatpush1.xpose.msra.mxu0 0.0
    %3264 = vmatprep.subr.mxu0 0.0
    %3265 = vmatpush1.xpose.msra.mxu0 0.0
    %3266 = vmatprep.subr.mxu0 0.0
    %3267 = vmatpush1.xpose.msra.mxu0 0.0
    %3268 = vmatprep.subr.mxu0 0.0
    %3269 = vmatpush1.xpose.msra.mxu0 0.0
    %3270 = vmatprep.subr.mxu0 0.0
    %3271 = vmatpush1.xpose.msra.mxu0 0.0
    %3272 = vmatprep.subr.mxu0 0.0
    %3273 = vmatpush1.xpose.msra.mxu0 0.0
    %3274 = vmatprep.subr.mxu0 0.0
    %3275 = vmatpush1.xpose.msra.mxu0 0.0
    %3276 = vmatprep.subr.mxu0 0.0
    %3277 = vmatpush1.xpose.msra.mxu0 0.0
    %3278 = vmatprep.subr.mxu0 0.0
    %3279 = vmatpush1.xpose.msra.mxu0 0.0
    %3280 = vmatprep.subr.mxu0 0.0
    %3281 = vmatpush1.xpose.msra.mxu0 0.0
    %3282 = vmatprep.subr.mxu0 0.0
    %3283 = vmatpush1.xpose.msra.mxu0 0.0
    %3284 = vmatprep.subr.mxu0 0.0
    %3285 = vmatpush1.xpose.msra.mxu0 0.0
    %3286 = vmatprep.subr.mxu0 0.0
    %3287 = vmatpush1.xpose.msra.mxu0 0.0
    %3288 = vmatprep.mubr.f32.mxu0 0.0
    %3289 = vmatmul.mubr.f32.gmra.mrb[0].mxu0 %v3220
    %v3290 = vpop.f32.mrb[0].mxu0
    %v3291 = vadd.f32 %v221, %v3290
    %v3292 = vpop.f32.mrb[0].mxu0
    %3293 = vdwg.mxu0
    %3294 = vrot.lane.b32.xlu0 %v2393, 112
    %v3295 = vpop.permute.xlu0 %3294
    %3296 = vrot.lane.b32.xlu0 %v2393, 80
    %v3297 = vpop.permute.xlu0 %3296
    %v3298 = vsel %vm369, %v3295, 0
    %v3300 = vsel %vm369, %v3297, 0
    %3302 = vmatprep.subr.mxu0 0.0
    %3303 = vmatpush1.xpose.msra.mxu0 %v3300
    %3304 = vmatprep.subr.mxu0 0.0
    %3305 = vmatpush1.xpose.msra.mxu0 0.0
    %3306 = vmatprep.subr.mxu0 0.0
    %3307 = vmatpush1.xpose.msra.mxu0 0.0
    %3308 = vmatprep.subr.mxu0 0.0
    %3309 = vmatpush1.xpose.msra.mxu0 0.0
    %3310 = vmatprep.subr.mxu0 0.0
    %3311 = vmatpush1.xpose.msra.mxu0 0.0
    %3312 = vmatprep.subr.mxu0 0.0
    %3313 = vmatpush1.xpose.msra.mxu0 0.0
    %3314 = vmatprep.subr.mxu0 0.0
    %3315 = vmatpush1.xpose.msra.mxu0 0.0
    %3316 = vmatprep.subr.mxu0 0.0
    %3317 = vmatpush1.xpose.msra.mxu0 0.0
    %3318 = vmatprep.subr.mxu0 0.0
    %3319 = vmatpush1.xpose.msra.mxu0 0.0
    %3320 = vmatprep.subr.mxu0 0.0
    %3321 = vmatpush1.xpose.msra.mxu0 0.0
    %3322 = vmatprep.subr.mxu0 0.0
    %3323 = vmatpush1.xpose.msra.mxu0 0.0
    %3324 = vmatprep.subr.mxu0 0.0
    %3325 = vmatpush1.xpose.msra.mxu0 0.0
    %3326 = vmatprep.subr.mxu0 0.0
    %3327 = vmatpush1.xpose.msra.mxu0 0.0
    %3328 = vmatprep.subr.mxu0 0.0
    %3329 = vmatpush1.xpose.msra.mxu0 0.0
    %3330 = vmatprep.subr.mxu0 0.0
    %3331 = vmatpush1.xpose.msra.mxu0 0.0
    %3332 = vmatprep.subr.mxu0 0.0
    %3333 = vmatpush1.xpose.msra.mxu0 0.0
    %3334 = vmatprep.subr.mxu0 0.0
    %3335 = vmatpush1.xpose.msra.mxu0 0.0
    %3336 = vmatprep.subr.mxu0 0.0
    %3337 = vmatpush1.xpose.msra.mxu0 0.0
    %3338 = vmatprep.subr.mxu0 0.0
    %3339 = vmatpush1.xpose.msra.mxu0 0.0
    %3340 = vmatprep.subr.mxu0 0.0
    %3341 = vmatpush1.xpose.msra.mxu0 0.0
    %3342 = vmatprep.subr.mxu0 0.0
    %3343 = vmatpush1.xpose.msra.mxu0 0.0
    %3344 = vmatprep.subr.mxu0 0.0
    %3345 = vmatpush1.xpose.msra.mxu0 0.0
    %3346 = vmatprep.subr.mxu0 0.0
    %3347 = vmatpush1.xpose.msra.mxu0 0.0
    %3348 = vmatprep.subr.mxu0 0.0
    %3349 = vmatpush1.xpose.msra.mxu0 0.0
    %3350 = vmatprep.subr.mxu0 0.0
    %3351 = vmatpush1.xpose.msra.mxu0 0.0
    %3352 = vmatprep.subr.mxu0 0.0
    %3353 = vmatpush1.xpose.msra.mxu0 0.0
    %3354 = vmatprep.subr.mxu0 0.0
    %3355 = vmatpush1.xpose.msra.mxu0 0.0
    %3356 = vmatprep.subr.mxu0 0.0
    %3357 = vmatpush1.xpose.msra.mxu0 0.0
    %3358 = vmatprep.subr.mxu0 0.0
    %3359 = vmatpush1.xpose.msra.mxu0 0.0
    %3360 = vmatprep.subr.mxu0 0.0
    %3361 = vmatpush1.xpose.msra.mxu0 0.0
    %3362 = vmatprep.subr.mxu0 0.0
    %3363 = vmatpush1.xpose.msra.mxu0 0.0
    %3364 = vmatprep.subr.mxu0 0.0
    %3365 = vmatpush1.xpose.msra.mxu0 0.0
    %3366 = vmatprep.mubr.f32.mxu0 0.0
    %3367 = vmatmul.mubr.f32.gmra.mrb[0].mxu0 %v3298
    %v3368 = vpop.f32.mrb[0].mxu0
    %v3369 = vadd.f32 %v221, %v3368
    %v3370 = vpop.f32.mrb[0].mxu0
    %3371 = vdwg.mxu0
    %v3372 = vsel %vm369, %v3291, -inf
    %3373 = vmax.xlane.f32.xlu0 %v3372
    %v3374 = vpop.xlane.xlu0 %3373
    %v3375 = vsel %vm369, %v3369, -inf
    %3376 = vmax.xlane.f32.xlu0 %v3375
    %v3377 = vpop.xlane.xlu0 %3376
    %v3378 = vsub.f32 %v3291, %v3374
    %v3379 = vsub.f32 %v3369, %v3377
    %v3380 = vmul.f32 %v3378, 1.442695
    %v3381 = vpow.pop %v3380
    %v3382 = vmul.f32 %v3379, 1.442695
    %v3383 = vpow.pop %v3382
    %v3384 = vsel %vm369, %v3381, 0.0
    %3385 = vadd.xlane.f32.xlu0 %v3384
    %v3386 = vpop.xlane.xlu0 %3385
    %v3387 = vsel %vm369, %v3383, 0.0
    %3388 = vadd.xlane.f32.xlu0 %v3387
    %v3389 = vpop.xlane.xlu0 %3388
    %v3390 = vrcp.pop %v3386
    %v3391 = vrcp.pop %v3389
    %v3392 = vmul.f32 %v3381, %v3390
    %v3393 = vmul.f32 %v3383, %v3391
    %3394 = vrot.lane.b32.xlu0 %v2388, 48
    %v3395 = vpop.permute.xlu0 %3394
    %v3398 = vsel %vm369, %v3392, 0
    %3400 = vmatprep.subr.mxu0 0.0
    %3401 = vmatpush1.msra.mxu0 %v3395
    %3402 = vmatprep.subr.mxu0 0.0
    %3403 = vmatpush1.msra.mxu0 0.0
    %3404 = vmatprep.subr.mxu0 0.0
    %3405 = vmatpush1.msra.mxu0 0.0
    %3406 = vmatprep.subr.mxu0 0.0
    %3407 = vmatpush1.msra.mxu0 0.0
    %3408 = vmatprep.subr.mxu0 0.0
    %3409 = vmatpush1.msra.mxu0 0.0
    %3410 = vmatprep.subr.mxu0 0.0
    %3411 = vmatpush1.msra.mxu0 0.0
    %3412 = vmatprep.subr.mxu0 0.0
    %3413 = vmatpush1.msra.mxu0 0.0
    %3414 = vmatprep.subr.mxu0 0.0
    %3415 = vmatpush1.msra.mxu0 0.0
    %3416 = vmatprep.subr.mxu0 0.0
    %3417 = vmatpush1.msra.mxu0 0.0
    %3418 = vmatprep.subr.mxu0 0.0
    %3419 = vmatpush1.msra.mxu0 0.0
    %3420 = vmatprep.subr.mxu0 0.0
    %3421 = vmatpush1.msra.mxu0 0.0
    %3422 = vmatprep.subr.mxu0 0.0
    %3423 = vmatpush1.msra.mxu0 0.0
    %3424 = vmatprep.subr.mxu0 0.0
    %3425 = vmatpush1.msra.mxu0 0.0
    %3426 = vmatprep.subr.mxu0 0.0
    %3427 = vmatpush1.msra.mxu0 0.0
    %3428 = vmatprep.subr.mxu0 0.0
    %3429 = vmatpush1.msra.mxu0 0.0
    %3430 = vmatprep.subr.mxu0 0.0
    %3431 = vmatpush1.msra.mxu0 0.0
    %3432 = vmatprep.subr.mxu0 0.0
    %3433 = vmatpush1.msra.mxu0 0.0
    %3434 = vmatprep.subr.mxu0 0.0
    %3435 = vmatpush1.msra.mxu0 0.0
    %3436 = vmatprep.subr.mxu0 0.0
    %3437 = vmatpush1.msra.mxu0 0.0
    %3438 = vmatprep.subr.mxu0 0.0
    %3439 = vmatpush1.msra.mxu0 0.0
    %3440 = vmatprep.subr.mxu0 0.0
    %3441 = vmatpush1.msra.mxu0 0.0
    %3442 = vmatprep.subr.mxu0 0.0
    %3443 = vmatpush1.msra.mxu0 0.0
    %3444 = vmatprep.subr.mxu0 0.0
    %3445 = vmatpush1.msra.mxu0 0.0
    %3446 = vmatprep.subr.mxu0 0.0
    %3447 = vmatpush1.msra.mxu0 0.0
    %3448 = vmatprep.subr.mxu0 0.0
    %3449 = vmatpush1.msra.mxu0 0.0
    %3450 = vmatprep.subr.mxu0 0.0
    %3451 = vmatpush1.msra.mxu0 0.0
    %3452 = vmatprep.subr.mxu0 0.0
    %3453 = vmatpush1.msra.mxu0 0.0
    %3454 = vmatprep.subr.mxu0 0.0
    %3455 = vmatpush1.msra.mxu0 0.0
    %3456 = vmatprep.subr.mxu0 0.0
    %3457 = vmatpush1.msra.mxu0 0.0
    %3458 = vmatprep.subr.mxu0 0.0
    %3459 = vmatpush1.msra.mxu0 0.0
    %3460 = vmatprep.subr.mxu0 0.0
    %3461 = vmatpush1.msra.mxu0 0.0
    %3462 = vmatprep.subr.mxu0 0.0
    %3463 = vmatpush1.msra.mxu0 0.0
    %3464 = vmatprep.mubr.f32.mxu0 0.0
    %3465 = vmatmul.mubr.f32.gmra.mrb[0].mxu0 %v3398
    %v3466 = vpop.f32.mrb[0].mxu0
    %v3467 = vadd.f32 0.0, %v3466
    %v3468 = vpop.f32.mrb[0].mxu0
    %3469 = vdwg.mxu0
    %3470 = vrot.lane.b32.xlu0 %v2393, 48
    %v3471 = vpop.permute.xlu0 %3470
    %v3474 = vsel %vm369, %v3393, 0
    %3476 = vmatprep.subr.mxu0 0.0
    %3477 = vmatpush1.msra.mxu0 %v3471
    %3478 = vmatprep.subr.mxu0 0.0
    %3479 = vmatpush1.msra.mxu0 0.0
    %3480 = vmatprep.subr.mxu0 0.0
    %3481 = vmatpush1.msra.mxu0 0.0
    %3482 = vmatprep.subr.mxu0 0.0
    %3483 = vmatpush1.msra.mxu0 0.0
    %3484 = vmatprep.subr.mxu0 0.0
    %3485 = vmatpush1.msra.mxu0 0.0
    %3486 = vmatprep.subr.mxu0 0.0
    %3487 = vmatpush1.msra.mxu0 0.0
    %3488 = vmatprep.subr.mxu0 0.0
    %3489 = vmatpush1.msra.mxu0 0.0
    %3490 = vmatprep.subr.mxu0 0.0
    %3491 = vmatpush1.msra.mxu0 0.0
    %3492 = vmatprep.subr.mxu0 0.0
    %3493 = vmatpush1.msra.mxu0 0.0
    %3494 = vmatprep.subr.mxu0 0.0
    %3495 = vmatpush1.msra.mxu0 0.0
    %3496 = vmatprep.subr.mxu0 0.0
    %3497 = vmatpush1.msra.mxu0 0.0
    %3498 = vmatprep.subr.mxu0 0.0
    %3499 = vmatpush1.msra.mxu0 0.0
    %3500 = vmatprep.subr.mxu0 0.0
    %3501 = vmatpush1.msra.mxu0 0.0
    %3502 = vmatprep.subr.mxu0 0.0
    %3503 = vmatpush1.msra.mxu0 0.0
    %3504 = vmatprep.subr.mxu0 0.0
    %3505 = vmatpush1.msra.mxu0 0.0
    %3506 = vmatprep.subr.mxu0 0.0
    %3507 = vmatpush1.msra.mxu0 0.0
    %3508 = vmatprep.subr.mxu0 0.0
    %3509 = vmatpush1.msra.mxu0 0.0
    %3510 = vmatprep.subr.mxu0 0.0
    %3511 = vmatpush1.msra.mxu0 0.0
    %3512 = vmatprep.subr.mxu0 0.0
    %3513 = vmatpush1.msra.mxu0 0.0
    %3514 = vmatprep.subr.mxu0 0.0
    %3515 = vmatpush1.msra.mxu0 0.0
    %3516 = vmatprep.subr.mxu0 0.0
    %3517 = vmatpush1.msra.mxu0 0.0
    %3518 = vmatprep.subr.mxu0 0.0
    %3519 = vmatpush1.msra.mxu0 0.0
    %3520 = vmatprep.subr.mxu0 0.0
    %3521 = vmatpush1.msra.mxu0 0.0
    %3522 = vmatprep.subr.mxu0 0.0
    %3523 = vmatpush1.msra.mxu0 0.0
    %3524 = vmatprep.subr.mxu0 0.0
    %3525 = vmatpush1.msra.mxu0 0.0
    %3526 = vmatprep.subr.mxu0 0.0
    %3527 = vmatpush1.msra.mxu0 0.0
    %3528 = vmatprep.subr.mxu0 0.0
    %3529 = vmatpush1.msra.mxu0 0.0
    %3530 = vmatprep.subr.mxu0 0.0
    %3531 = vmatpush1.msra.mxu0 0.0
    %3532 = vmatprep.subr.mxu0 0.0
    %3533 = vmatpush1.msra.mxu0 0.0
    %3534 = vmatprep.subr.mxu0 0.0
    %3535 = vmatpush1.msra.mxu0 0.0
    %3536 = vmatprep.subr.mxu0 0.0
    %3537 = vmatpush1.msra.mxu0 0.0
    %3538 = vmatprep.subr.mxu0 0.0
    %3539 = vmatpush1.msra.mxu0 0.0
    %3540 = vmatprep.mubr.f32.mxu0 0.0
    %3541 = vmatmul.mubr.f32.gmra.mrb[0].mxu0 %v3474
    %v3542 = vpop.f32.mrb[0].mxu0
    %v3543 = vadd.f32 0.0, %v3542
    %v3544 = vpop.f32.mrb[0].mxu0
    %3545 = vdwg.mxu0
    %v3547 = vsel %vm369, %v3467, 0
    %v3550 = vsel %vm369, %v3543, 0
    %3552 = vmatprep.subr.mxu0 0.0
    %3553 = vmatpush1.msra.mxu0 %v2255
    %3554 = vmatprep.subr.mxu0 0.0
    %3555 = vmatpush1.msra.mxu0 0.0
    %3556 = vmatprep.subr.mxu0 0.0
    %3557 = vmatpush1.msra.mxu0 0.0
    %3558 = vmatprep.subr.mxu0 0.0
    %3559 = vmatpush1.msra.mxu0 0.0
    %3560 = vmatprep.subr.mxu0 0.0
    %3561 = vmatpush1.msra.mxu0 0.0
    %3562 = vmatprep.subr.mxu0 0.0
    %3563 = vmatpush1.msra.mxu0 0.0
    %3564 = vmatprep.subr.mxu0 0.0
    %3565 = vmatpush1.msra.mxu0 0.0
    %3566 = vmatprep.subr.mxu0 0.0
    %3567 = vmatpush1.msra.mxu0 0.0
    %3568 = vmatprep.subr.mxu0 0.0
    %3569 = vmatpush1.msra.mxu0 0.0
    %3570 = vmatprep.subr.mxu0 0.0
    %3571 = vmatpush1.msra.mxu0 0.0
    %3572 = vmatprep.subr.mxu0 0.0
    %3573 = vmatpush1.msra.mxu0 0.0
    %3574 = vmatprep.subr.mxu0 0.0
    %3575 = vmatpush1.msra.mxu0 0.0
    %3576 = vmatprep.subr.mxu0 0.0
    %3577 = vmatpush1.msra.mxu0 0.0
    %3578 = vmatprep.subr.mxu0 0.0
    %3579 = vmatpush1.msra.mxu0 0.0
    %3580 = vmatprep.subr.mxu0 0.0
    %3581 = vmatpush1.msra.mxu0 0.0
    %3582 = vmatprep.subr.mxu0 0.0
    %3583 = vmatpush1.msra.mxu0 0.0
    %3584 = vmatprep.subr.mxu0 0.0
    %3585 = vmatpush1.msra.mxu0 0.0
    %3586 = vmatprep.subr.mxu0 0.0
    %3587 = vmatpush1.msra.mxu0 0.0
    %3588 = vmatprep.subr.mxu0 0.0
    %3589 = vmatpush1.msra.mxu0 0.0
    %3590 = vmatprep.subr.mxu0 0.0
    %3591 = vmatpush1.msra.mxu0 0.0
    %3592 = vmatprep.subr.mxu0 0.0
    %3593 = vmatpush1.msra.mxu0 0.0
    %3594 = vmatprep.subr.mxu0 0.0
    %3595 = vmatpush1.msra.mxu0 0.0
    %3596 = vmatprep.subr.mxu0 0.0
    %3597 = vmatpush1.msra.mxu0 0.0
    %3598 = vmatprep.subr.mxu0 0.0
    %3599 = vmatpush1.msra.mxu0 0.0
    %3600 = vmatprep.subr.mxu0 0.0
    %3601 = vmatpush1.msra.mxu0 0.0
    %3602 = vmatprep.subr.mxu0 0.0
    %3603 = vmatpush1.msra.mxu0 0.0
    %3604 = vmatprep.subr.mxu0 0.0
    %3605 = vmatpush1.msra.mxu0 0.0
    %3606 = vmatprep.subr.mxu0 0.0
    %3607 = vmatpush1.msra.mxu0 0.0
    %3608 = vmatprep.subr.mxu0 0.0
    %3609 = vmatpush1.msra.mxu0 0.0
    %3610 = vmatprep.subr.mxu0 0.0
    %3611 = vmatpush1.msra.mxu0 0.0
    %3612 = vmatprep.subr.mxu0 0.0
    %3613 = vmatpush1.msra.mxu0 0.0
    %3614 = vmatprep.subr.mxu0 0.0
    %3615 = vmatpush1.msra.mxu0 0.0
    %3616 = vmatprep.mubr.f32.mxu0 0.0
    %3617 = vmatmul.mubr.f32.gmra.mrb[0].mxu0 %v3547
    %v3618 = vpop.f32.mrb[0].mxu0
    %v3619 = vadd.f32 0.0, %v3618
    %v3620 = vpop.f32.mrb[0].mxu0
    %3621 = vmatprep.mubr.f32.mxu0 0.0
    %3622 = vmatmul.mubr.f32.gmra.mrb[0].mxu0 %v3550
    %v3623 = vpop.f32.mrb[0].mxu0
    %v3624 = vadd.f32 0.0, %v3623
    %v3625 = vpop.f32.mrb[0].mxu0
    %3626 = vdwg.mxu0
    %v3627 = vadd.f32 %v3208, %v3619
    %v3628 = vadd.f32 %v3213, %v3624
    %3629 = vrot.lane.b32.xlu0 %v2388, 104
    %v3630 = vpop.permute.xlu0 %3629
    %3631 = vrot.lane.b32.xlu0 %v2388, 72
    %v3632 = vpop.permute.xlu0 %3631
    %v3633 = vsel %vm369, %v3630, 0
    %v3635 = vsel %vm369, %v3632, 0
    %3637 = vmatprep.subr.mxu0 0.0
    %3638 = vmatpush1.xpose.msra.mxu0 %v3635
    %3639 = vmatprep.subr.mxu0 0.0
    %3640 = vmatpush1.xpose.msra.mxu0 0.0
    %3641 = vmatprep.subr.mxu0 0.0
    %3642 = vmatpush1.xpose.msra.mxu0 0.0
    %3643 = vmatprep.subr.mxu0 0.0
    %3644 = vmatpush1.xpose.msra.mxu0 0.0
    %3645 = vmatprep.subr.mxu0 0.0
    %3646 = vmatpush1.xpose.msra.mxu0 0.0
    %3647 = vmatprep.subr.mxu0 0.0
    %3648 = vmatpush1.xpose.msra.mxu0 0.0
    %3649 = vmatprep.subr.mxu0 0.0
    %3650 = vmatpush1.xpose.msra.mxu0 0.0
    %3651 = vmatprep.subr.mxu0 0.0
    %3652 = vmatpush1.xpose.msra.mxu0 0.0
    %3653 = vmatprep.subr.mxu0 0.0
    %3654 = vmatpush1.xpose.msra.mxu0 0.0
    %3655 = vmatprep.subr.mxu0 0.0
    %3656 = vmatpush1.xpose.msra.mxu0 0.0
    %3657 = vmatprep.subr.mxu0 0.0
    %3658 = vmatpush1.xpose.msra.mxu0 0.0
    %3659 = vmatprep.subr.mxu0 0.0
    %3660 = vmatpush1.xpose.msra.mxu0 0.0
    %3661 = vmatprep.subr.mxu0 0.0
    %3662 = vmatpush1.xpose.msra.mxu0 0.0
    %3663 = vmatprep.subr.mxu0 0.0
    %3664 = vmatpush1.xpose.msra.mxu0 0.0
    %3665 = vmatprep.subr.mxu0 0.0
    %3666 = vmatpush1.xpose.msra.mxu0 0.0
    %3667 = vmatprep.subr.mxu0 0.0
    %3668 = vmatpush1.xpose.msra.mxu0 0.0
    %3669 = vmatprep.subr.mxu0 0.0
    %3670 = vmatpush1.xpose.msra.mxu0 0.0
    %3671 = vmatprep.subr.mxu0 0.0
    %3672 = vmatpush1.xpose.msra.mxu0 0.0
    %3673 = vmatprep.subr.mxu0 0.0
    %3674 = vmatpush1.xpose.msra.mxu0 0.0
    %3675 = vmatprep.subr.mxu0 0.0
    %3676 = vmatpush1.xpose.msra.mxu0 0.0
    %3677 = vmatprep.subr.mxu0 0.0
    %3678 = vmatpush1.xpose.msra.mxu0 0.0
    %3679 = vmatprep.subr.mxu0 0.0
    %3680 = vmatpush1.xpose.msra.mxu0 0.0
    %3681 = vmatprep.subr.mxu0 0.0
    %3682 = vmatpush1.xpose.msra.mxu0 0.0
    %3683 = vmatprep.subr.mxu0 0.0
    %3684 = vmatpush1.xpose.msra.mxu0 0.0
    %3685 = vmatprep.subr.mxu0 0.0
    %3686 = vmatpush1.xpose.msra.mxu0 0.0
    %3687 = vmatprep.subr.mxu0 0.0
    %3688 = vmatpush1.xpose.msra.mxu0 0.0
    %3689 = vmatprep.subr.mxu0 0.0
    %3690 = vmatpush1.xpose.msra.mxu0 0.0
    %3691 = vmatprep.subr.mxu0 0.0
    %3692 = vmatpush1.xpose.msra.mxu0 0.0
    %3693 = vmatprep.subr.mxu0 0.0
    %3694 = vmatpush1.xpose.msra.mxu0 0.0
    %3695 = vmatprep.subr.mxu0 0.0
    %3696 = vmatpush1.xpose.msra.mxu0 0.0
    %3697 = vmatprep.subr.mxu0 0.0
    %3698 = vmatpush1.xpose.msra.mxu0 0.0
    %3699 = vmatprep.subr.mxu0 0.0
    %3700 = vmatpush1.xpose.msra.mxu0 0.0
    %3701 = vmatprep.mubr.f32.mxu0 0.0
    %3702 = vmatmul.mubr.f32.gmra.mrb[0].mxu0 %v3633
    %v3703 = vpop.f32.mrb[0].mxu0
    %v3704 = vadd.f32 %v221, %v3703
    %v3705 = vpop.f32.mrb[0].mxu0
    %3706 = vdwg.mxu0
    %3707 = vrot.lane.b32.xlu0 %v2393, 104
    %v3708 = vpop.permute.xlu0 %3707
    %3709 = vrot.lane.b32.xlu0 %v2393, 72
    %v3710 = vpop.permute.xlu0 %3709
    %v3711 = vsel %vm369, %v3708, 0
    %v3713 = vsel %vm369, %v3710, 0
    %3715 = vmatprep.subr.mxu0 0.0
    %3716 = vmatpush1.xpose.msra.mxu0 %v3713
    %3717 = vmatprep.subr.mxu0 0.0
    %3718 = vmatpush1.xpose.msra.mxu0 0.0
    %3719 = vmatprep.subr.mxu0 0.0
    %3720 = vmatpush1.xpose.msra.mxu0 0.0
    %3721 = vmatprep.subr.mxu0 0.0
    %3722 = vmatpush1.xpose.msra.mxu0 0.0
    %3723 = vmatprep.subr.mxu0 0.0
    %3724 = vmatpush1.xpose.msra.mxu0 0.0
    %3725 = vmatprep.subr.mxu0 0.0
    %3726 = vmatpush1.xpose.msra.mxu0 0.0
    %3727 = vmatprep.subr.mxu0 0.0
    %3728 = vmatpush1.xpose.msra.mxu0 0.0
    %3729 = vmatprep.subr.mxu0 0.0
    %3730 = vmatpush1.xpose.msra.mxu0 0.0
    %3731 = vmatprep.subr.mxu0 0.0
    %3732 = vmatpush1.xpose.msra.mxu0 0.0
    %3733 = vmatprep.subr.mxu0 0.0
    %3734 = vmatpush1.xpose.msra.mxu0 0.0
    %3735 = vmatprep.subr.mxu0 0.0
    %3736 = vmatpush1.xpose.msra.mxu0 0.0
    %3737 = vmatprep.subr.mxu0 0.0
    %3738 = vmatpush1.xpose.msra.mxu0 0.0
    %3739 = vmatprep.subr.mxu0 0.0
    %3740 = vmatpush1.xpose.msra.mxu0 0.0
    %3741 = vmatprep.subr.mxu0 0.0
    %3742 = vmatpush1.xpose.msra.mxu0 0.0
    %3743 = vmatprep.subr.mxu0 0.0
    %3744 = vmatpush1.xpose.msra.mxu0 0.0
    %3745 = vmatprep.subr.mxu0 0.0
    %3746 = vmatpush1.xpose.msra.mxu0 0.0
    %3747 = vmatprep.subr.mxu0 0.0
    %3748 = vmatpush1.xpose.msra.mxu0 0.0
    %3749 = vmatprep.subr.mxu0 0.0
    %3750 = vmatpush1.xpose.msra.mxu0 0.0
    %3751 = vmatprep.subr.mxu0 0.0
    %3752 = vmatpush1.xpose.msra.mxu0 0.0
    %3753 = vmatprep.subr.mxu0 0.0
    %3754 = vmatpush1.xpose.msra.mxu0 0.0
    %3755 = vmatprep.subr.mxu0 0.0
    %3756 = vmatpush1.xpose.msra.mxu0 0.0
    %3757 = vmatprep.subr.mxu0 0.0
    %3758 = vmatpush1.xpose.msra.mxu0 0.0
    %3759 = vmatprep.subr.mxu0 0.0
    %3760 = vmatpush1.xpose.msra.mxu0 0.0
    %3761 = vmatprep.subr.mxu0 0.0
    %3762 = vmatpush1.xpose.msra.mxu0 0.0
    %3763 = vmatprep.subr.mxu0 0.0
    %3764 = vmatpush1.xpose.msra.mxu0 0.0
    %3765 = vmatprep.subr.mxu0 0.0
    %3766 = vmatpush1.xpose.msra.mxu0 0.0
    %3767 = vmatprep.subr.mxu0 0.0
    %3768 = vmatpush1.xpose.msra.mxu0 0.0
    %3769 = vmatprep.subr.mxu0 0.0
    %3770 = vmatpush1.xpose.msra.mxu0 0.0
    %3771 = vmatprep.subr.mxu0 0.0
    %3772 = vmatpush1.xpose.msra.mxu0 0.0
    %3773 = vmatprep.subr.mxu0 0.0
    %3774 = vmatpush1.xpose.msra.mxu0 0.0
    %3775 = vmatprep.subr.mxu0 0.0
    %3776 = vmatpush1.xpose.msra.mxu0 0.0
    %3777 = vmatprep.subr.mxu0 0.0
    %3778 = vmatpush1.xpose.msra.mxu0 0.0
    %3779 = vmatprep.mubr.f32.mxu0 0.0
    %3780 = vmatmul.mubr.f32.gmra.mrb[0].mxu0 %v3711
    %v3781 = vpop.f32.mrb[0].mxu0
    %v3782 = vadd.f32 %v221, %v3781
    %v3783 = vpop.f32.mrb[0].mxu0
    %3784 = vdwg.mxu0
    %v3785 = vsel %vm369, %v3704, -inf
    %3786 = vmax.xlane.f32.xlu0 %v3785
    %v3787 = vpop.xlane.xlu0 %3786
    %v3788 = vsel %vm369, %v3782, -inf
    %3789 = vmax.xlane.f32.xlu0 %v3788
    %v3790 = vpop.xlane.xlu0 %3789
    %v3791 = vsub.f32 %v3704, %v3787
    %v3792 = vsub.f32 %v3782, %v3790
    %v3793 = vmul.f32 %v3791, 1.442695
    %v3794 = vpow.pop %v3793
    %v3795 = vmul.f32 %v3792, 1.442695
    %v3796 = vpow.pop %v3795
    %v3797 = vsel %vm369, %v3794, 0.0
    %3798 = vadd.xlane.f32.xlu0 %v3797
    %v3799 = vpop.xlane.xlu0 %3798
    %v3800 = vsel %vm369, %v3796, 0.0
    %3801 = vadd.xlane.f32.xlu0 %v3800
    %v3802 = vpop.xlane.xlu0 %3801
    %v3803 = vrcp.pop %v3799
    %v3804 = vrcp.pop %v3802
    %v3805 = vmul.f32 %v3794, %v3803
    %v3806 = vmul.f32 %v3796, %v3804
    %3807 = vrot.lane.b32.xlu0 %v2388, 40
    %v3808 = vpop.permute.xlu0 %3807
    %v3811 = vsel %vm369, %v3805, 0
    %3813 = vmatprep.subr.mxu0 0.0
    %3814 = vmatpush1.msra.mxu0 %v3808
    %3815 = vmatprep.subr.mxu0 0.0
    %3816 = vmatpush1.msra.mxu0 0.0
    %3817 = vmatprep.subr.mxu0 0.0
    %3818 = vmatpush1.msra.mxu0 0.0
    %3819 = vmatprep.subr.mxu0 0.0
    %3820 = vmatpush1.msra.mxu0 0.0
    %3821 = vmatprep.subr.mxu0 0.0
    %3822 = vmatpush1.msra.mxu0 0.0
    %3823 = vmatprep.subr.mxu0 0.0
    %3824 = vmatpush1.msra.mxu0 0.0
    %3825 = vmatprep.subr.mxu0 0.0
    %3826 = vmatpush1.msra.mxu0 0.0
    %3827 = vmatprep.subr.mxu0 0.0
    %3828 = vmatpush1.msra.mxu0 0.0
    %3829 = vmatprep.subr.mxu0 0.0
    %3830 = vmatpush1.msra.mxu0 0.0
    %3831 = vmatprep.subr.mxu0 0.0
    %3832 = vmatpush1.msra.mxu0 0.0
    %3833 = vmatprep.subr.mxu0 0.0
    %3834 = vmatpush1.msra.mxu0 0.0
    %3835 = vmatprep.subr.mxu0 0.0
    %3836 = vmatpush1.msra.mxu0 0.0
    %3837 = vmatprep.subr.mxu0 0.0
    %3838 = vmatpush1.msra.mxu0 0.0
    %3839 = vmatprep.subr.mxu0 0.0
    %3840 = vmatpush1.msra.mxu0 0.0
    %3841 = vmatprep.subr.mxu0 0.0
    %3842 = vmatpush1.msra.mxu0 0.0
    %3843 = vmatprep.subr.mxu0 0.0
    %3844 = vmatpush1.msra.mxu0 0.0
    %3845 = vmatprep.subr.mxu0 0.0
    %3846 = vmatpush1.msra.mxu0 0.0
    %3847 = vmatprep.subr.mxu0 0.0
    %3848 = vmatpush1.msra.mxu0 0.0
    %3849 = vmatprep.subr.mxu0 0.0
    %3850 = vmatpush1.msra.mxu0 0.0
    %3851 = vmatprep.subr.mxu0 0.0
    %3852 = vmatpush1.msra.mxu0 0.0
    %3853 = vmatprep.subr.mxu0 0.0
    %3854 = vmatpush1.msra.mxu0 0.0
    %3855 = vmatprep.subr.mxu0 0.0
    %3856 = vmatpush1.msra.mxu0 0.0
    %3857 = vmatprep.subr.mxu0 0.0
    %3858 = vmatpush1.msra.mxu0 0.0
    %3859 = vmatprep.subr.mxu0 0.0
    %3860 = vmatpush1.msra.mxu0 0.0
    %3861 = vmatprep.subr.mxu0 0.0
    %3862 = vmatpush1.msra.mxu0 0.0
    %3863 = vmatprep.subr.mxu0 0.0
    %3864 = vmatpush1.msra.mxu0 0.0
    %3865 = vmatprep.subr.mxu0 0.0
    %3866 = vmatpush1.msra.mxu0 0.0
    %3867 = vmatprep.subr.mxu0 0.0
    %3868 = vmatpush1.msra.mxu0 0.0
    %3869 = vmatprep.subr.mxu0 0.0
    %3870 = vmatpush1.msra.mxu0 0.0
    %3871 = vmatprep.subr.mxu0 0.0
    %3872 = vmatpush1.msra.mxu0 0.0
    %3873 = vmatprep.subr.mxu0 0.0
    %3874 = vmatpush1.msra.mxu0 0.0
    %3875 = vmatprep.subr.mxu0 0.0
    %3876 = vmatpush1.msra.mxu0 0.0
    %3877 = vmatprep.mubr.f32.mxu0 0.0
    %3878 = vmatmul.mubr.f32.gmra.mrb[0].mxu0 %v3811
    %v3879 = vpop.f32.mrb[0].mxu0
    %v3880 = vadd.f32 0.0, %v3879
    %v3881 = vpop.f32.mrb[0].mxu0
    %3882 = vdwg.mxu0
    %3883 = vrot.lane.b32.xlu0 %v2393, 40
    %v3884 = vpop.permute.xlu0 %3883
    %v3887 = vsel %vm369, %v3806, 0
    %3889 = vmatprep.subr.mxu0 0.0
    %3890 = vmatpush1.msra.mxu0 %v3884
    %3891 = vmatprep.subr.mxu0 0.0
    %3892 = vmatpush1.msra.mxu0 0.0
    %3893 = vmatprep.subr.mxu0 0.0
    %3894 = vmatpush1.msra.mxu0 0.0
    %3895 = vmatprep.subr.mxu0 0.0
    %3896 = vmatpush1.msra.mxu0 0.0
    %3897 = vmatprep.subr.mxu0 0.0
    %3898 = vmatpush1.msra.mxu0 0.0
    %3899 = vmatprep.subr.mxu0 0.0
    %3900 = vmatpush1.msra.mxu0 0.0
    %3901 = vmatprep.subr.mxu0 0.0
    %3902 = vmatpush1.msra.mxu0 0.0
    %3903 = vmatprep.subr.mxu0 0.0
    %3904 = vmatpush1.msra.mxu0 0.0
    %3905 = vmatprep.subr.mxu0 0.0
    %3906 = vmatpush1.msra.mxu0 0.0
    %3907 = vmatprep.subr.mxu0 0.0
    %3908 = vmatpush1.msra.mxu0 0.0
    %3909 = vmatprep.subr.mxu0 0.0
    %3910 = vmatpush1.msra.mxu0 0.0
    %3911 = vmatprep.subr.mxu0 0.0
    %3912 = vmatpush1.msra.mxu0 0.0
    %3913 = vmatprep.subr.mxu0 0.0
    %3914 = vmatpush1.msra.mxu0 0.0
    %3915 = vmatprep.subr.mxu0 0.0
    %3916 = vmatpush1.msra.mxu0 0.0
    %3917 = vmatprep.subr.mxu0 0.0
    %3918 = vmatpush1.msra.mxu0 0.0
    %3919 = vmatprep.subr.mxu0 0.0
    %3920 = vmatpush1.msra.mxu0 0.0
    %3921 = vmatprep.subr.mxu0 0.0
    %3922 = vmatpush1.msra.mxu0 0.0
    %3923 = vmatprep.subr.mxu0 0.0
    %3924 = vmatpush1.msra.mxu0 0.0
    %3925 = vmatprep.subr.mxu0 0.0
    %3926 = vmatpush1.msra.mxu0 0.0
    %3927 = vmatprep.subr.mxu0 0.0
    %3928 = vmatpush1.msra.mxu0 0.0
    %3929 = vmatprep.subr.mxu0 0.0
    %3930 = vmatpush1.msra.mxu0 0.0
    %3931 = vmatprep.subr.mxu0 0.0
    %3932 = vmatpush1.msra.mxu0 0.0
    %3933 = vmatprep.subr.mxu0 0.0
    %3934 = vmatpush1.msra.mxu0 0.0
    %3935 = vmatprep.subr.mxu0 0.0
    %3936 = vmatpush1.msra.mxu0 0.0
    %3937 = vmatprep.subr.mxu0 0.0
    %3938 = vmatpush1.msra.mxu0 0.0
    %3939 = vmatprep.subr.mxu0 0.0
    %3940 = vmatpush1.msra.mxu0 0.0
    %3941 = vmatprep.subr.mxu0 0.0
    %3942 = vmatpush1.msra.mxu0 0.0
    %3943 = vmatprep.subr.mxu0 0.0
    %3944 = vmatpush1.msra.mxu0 0.0
    %3945 = vmatprep.subr.mxu0 0.0
    %3946 = vmatpush1.msra.mxu0 0.0
    %3947 = vmatprep.subr.mxu0 0.0
    %3948 = vmatpush1.msra.mxu0 0.0
    %3949 = vmatprep.subr.mxu0 0.0
    %3950 = vmatpush1.msra.mxu0 0.0
    %3951 = vmatprep.subr.mxu0 0.0
    %3952 = vmatpush1.msra.mxu0 0.0
    %3953 = vmatprep.mubr.f32.mxu0 0.0
    %3954 = vmatmul.mubr.f32.gmra.mrb[0].mxu0 %v3887
    %v3955 = vpop.f32.mrb[0].mxu0
    %v3956 = vadd.f32 0.0, %v3955
    %v3957 = vpop.f32.mrb[0].mxu0
    %3958 = vdwg.mxu0
    %v3960 = vsel %vm369, %v3880, 0
    %v3963 = vsel %vm369, %v3956, 0
    %3965 = vmatprep.subr.mxu0 0.0
    %3966 = vmatpush1.msra.mxu0 %v2256
    %3967 = vmatprep.subr.mxu0 0.0
    %3968 = vmatpush1.msra.mxu0 0.0
    %3969 = vmatprep.subr.mxu0 0.0
    %3970 = vmatpush1.msra.mxu0 0.0
    %3971 = vmatprep.subr.mxu0 0.0
    %3972 = vmatpush1.msra.mxu0 0.0
    %3973 = vmatprep.subr.mxu0 0.0
    %3974 = vmatpush1.msra.mxu0 0.0
    %3975 = vmatprep.subr.mxu0 0.0
    %3976 = vmatpush1.msra.mxu0 0.0
    %3977 = vmatprep.subr.mxu0 0.0
    %3978 = vmatpush1.msra.mxu0 0.0
    %3979 = vmatprep.subr.mxu0 0.0
    %3980 = vmatpush1.msra.mxu0 0.0
    %3981 = vmatprep.subr.mxu0 0.0
    %3982 = vmatpush1.msra.mxu0 0.0
    %3983 = vmatprep.subr.mxu0 0.0
    %3984 = vmatpush1.msra.mxu0 0.0
    %3985 = vmatprep.subr.mxu0 0.0
    %3986 = vmatpush1.msra.mxu0 0.0
    %3987 = vmatprep.subr.mxu0 0.0
    %3988 = vmatpush1.msra.mxu0 0.0
    %3989 = vmatprep.subr.mxu0 0.0
    %3990 = vmatpush1.msra.mxu0 0.0
    %3991 = vmatprep.subr.mxu0 0.0
    %3992 = vmatpush1.msra.mxu0 0.0
    %3993 = vmatprep.subr.mxu0 0.0
    %3994 = vmatpush1.msra.mxu0 0.0
    %3995 = vmatprep.subr.mxu0 0.0
    %3996 = vmatpush1.msra.mxu0 0.0
    %3997 = vmatprep.subr.mxu0 0.0
    %3998 = vmatpush1.msra.mxu0 0.0
    %3999 = vmatprep.subr.mxu0 0.0
    %4000 = vmatpush1.msra.mxu0 0.0
    %4001 = vmatprep.subr.mxu0 0.0
    %4002 = vmatpush1.msra.mxu0 0.0
    %4003 = vmatprep.subr.mxu0 0.0
    %4004 = vmatpush1.msra.mxu0 0.0
    %4005 = vmatprep.subr.mxu0 0.0
    %4006 = vmatpush1.msra.mxu0 0.0
    %4007 = vmatprep.subr.mxu0 0.0
    %4008 = vmatpush1.msra.mxu0 0.0
    %4009 = vmatprep.subr.mxu0 0.0
    %4010 = vmatpush1.msra.mxu0 0.0
    %4011 = vmatprep.subr.mxu0 0.0
    %4012 = vmatpush1.msra.mxu0 0.0
    %4013 = vmatprep.subr.mxu0 0.0
    %4014 = vmatpush1.msra.mxu0 0.0
    %4015 = vmatprep.subr.mxu0 0.0
    %4016 = vmatpush1.msra.mxu0 0.0
    %4017 = vmatprep.subr.mxu0 0.0
    %4018 = vmatpush1.msra.mxu0 0.0
    %4019 = vmatprep.subr.mxu0 0.0
    %4020 = vmatpush1.msra.mxu0 0.0
    %4021 = vmatprep.subr.mxu0 0.0
    %4022 = vmatpush1.msra.mxu0 0.0
    %4023 = vmatprep.subr.mxu0 0.0
    %4024 = vmatpush1.msra.mxu0 0.0
    %4025 = vmatprep.subr.mxu0 0.0
    %4026 = vmatpush1.msra.mxu0 0.0
    %4027 = vmatprep.subr.mxu0 0.0
    %4028 = vmatpush1.msra.mxu0 0.0
    %4029 = vmatprep.mubr.f32.mxu0 0.0
    %4030 = vmatmul.mubr.f32.gmra.mrb[0].mxu0 %v3960
    %v4031 = vpop.f32.mrb[0].mxu0
    %v4032 = vadd.f32 0.0, %v4031
    %v4033 = vpop.f32.mrb[0].mxu0
    %4034 = vmatprep.mubr.f32.mxu0 0.0
    %4035 = vmatmul.mubr.f32.gmra.mrb[0].mxu0 %v3963
    %v4036 = vpop.f32.mrb[0].mxu0
    %v4037 = vadd.f32 0.0, %v4036
    %v4038 = vpop.f32.mrb[0].mxu0
    %4039 = vdwg.mxu0
    %v4040 = vadd.f32 %v3627, %v4032
    %v4041 = vadd.f32 %v3628, %v4037
    %v4042 = vadd.f32 %v2245, %v4040
    %v4043 = vadd.f32 %v2246, %v4041
    %v4044 = vlaneseq
    %v4045 = vshrl.u32 %v4044, 7
    %v4046 = vsub.s32 5, %v4045
    %v4047 = vrot.slane %v2272, %v4046
    %v4048 = vadd.f32 %v4042, %v4047
    %v4049 = vadd.f32 %v4043, %v4047
    %v4050 = vsel %vm178, %v4048, 0.0
    %4051 = vadd.xlane.f32.xlu0 %v4050
    %v4052 = vpop.xlane.xlu0 %4051
    %v4053 = vsel %vm178, %v4049, 0.0
    %4054 = vadd.xlane.f32.xlu0 %v4053
    %v4055 = vpop.xlane.xlu0 %4054
    %v4056 = vmul.f32 %v4052, %v185
    %v4057 = vmul.f32 %v4055, %v185
    %v4058 = vsub.f32 %v4048, %v4056
    %v4059 = vsub.f32 %v4049, %v4057
    %v4060 = vmul.f32 %v4058, %v4058
    %v4061 = vmul.f32 %v4059, %v4059
    %v4062 = vsel %vm178, %v4060, 0.0
    %4063 = vadd.xlane.f32.xlu0 %v4062
    %v4064 = vpop.xlane.xlu0 %4063
    %v4065 = vsel %vm178, %v4061, 0.0
    %4066 = vadd.xlane.f32.xlu0 %v4065
    %v4067 = vpop.xlane.xlu0 %4066
    %v4068 = vmul.f32 %v4064, %v185
    %v4069 = vmul.f32 %v4067, %v185
    %v4070 = vadd.f32 %v4068, 1e-05
    %v4071 = vadd.f32 %v4069, 1e-05
    %v4072 = vrsqrt.pop %v4070
    %v4073 = vrsqrt.pop %v4071
    %v4074 = vmul.f32 %v4058, %v4072
    %v4075 = vmul.f32 %v4059, %v4073
    %v4076 = vlaneseq
    %v4077 = vshrl.u32 %v4076, 7
    %v4078 = vsub.s32 2, %v4077
    %v4079 = vrot.slane %v2272, %v4078
    %v4080 = vmul.f32 %v4074, %v4079
    %v4081 = vmul.f32 %v4075, %v4079
    %v4082 = vlaneseq
    %v4083 = vshrl.u32 %v4082, 7
    %v4084 = vsub.s32 3, %v4083
    %v4085 = vrot.slane %v2272, %v4084
    %v4086 = vadd.f32 %v4080, %v4085
    %v4087 = vadd.f32 %v4081, %v4085
    %v4088 = vlaneseq
    %v4089 = vshrl.u32 %v4088, 7
    %v4090 = vsub.s32 6, %v4089
    %v4091 = vrot.slane %v2272, %v4090
    %v4093 = vsel %vm178, %v4086, 0
    %v4096 = vsel %vm178, %v4087, 0
    %4098 = vmatprep.subr.mxu0 0.0
    %4099 = vmatpush1.msra.mxu0 %v2258
    %4100 = vmatprep.subr.mxu0 0.0
    %4101 = vmatpush1.msra.mxu0 %v2259
    %4102 = vmatprep.subr.mxu0 0.0
    %4103 = vmatpush1.msra.mxu0 %v2260
    %4104 = vmatprep.subr.mxu0 0.0
    %4105 = vmatpush1.msra.mxu0 %v2261
    %4106 = vmatprep.subr.mxu0 0.0
    %4107 = vmatpush1.msra.mxu0 0.0
    %4108 = vmatprep.subr.mxu0 0.0
    %4109 = vmatpush1.msra.mxu0 0.0
    %4110 = vmatprep.subr.mxu0 0.0
    %4111 = vmatpush1.msra.mxu0 0.0
    %4112 = vmatprep.subr.mxu0 0.0
    %4113 = vmatpush1.msra.mxu0 0.0
    %4114 = vmatprep.subr.mxu0 0.0
    %4115 = vmatpush1.msra.mxu0 0.0
    %4116 = vmatprep.subr.mxu0 0.0
    %4117 = vmatpush1.msra.mxu0 0.0
    %4118 = vmatprep.subr.mxu0 0.0
    %4119 = vmatpush1.msra.mxu0 0.0
    %4120 = vmatprep.subr.mxu0 0.0
    %4121 = vmatpush1.msra.mxu0 0.0
    %4122 = vmatprep.subr.mxu0 0.0
    %4123 = vmatpush1.msra.mxu0 0.0
    %4124 = vmatprep.subr.mxu0 0.0
    %4125 = vmatpush1.msra.mxu0 0.0
    %4126 = vmatprep.subr.mxu0 0.0
    %4127 = vmatpush1.msra.mxu0 0.0
    %4128 = vmatprep.subr.mxu0 0.0
    %4129 = vmatpush1.msra.mxu0 0.0
    %4130 = vmatprep.subr.mxu0 0.0
    %4131 = vmatpush1.msra.mxu0 0.0
    %4132 = vmatprep.subr.mxu0 0.0
    %4133 = vmatpush1.msra.mxu0 0.0
    %4134 = vmatprep.subr.mxu0 0.0
    %4135 = vmatpush1.msra.mxu0 0.0
    %4136 = vmatprep.subr.mxu0 0.0
    %4137 = vmatpush1.msra.mxu0 0.0
    %4138 = vmatprep.subr.mxu0 0.0
    %4139 = vmatpush1.msra.mxu0 0.0
    %4140 = vmatprep.subr.mxu0 0.0
    %4141 = vmatpush1.msra.mxu0 0.0
    %4142 = vmatprep.subr.mxu0 0.0
    %4143 = vmatpush1.msra.mxu0 0.0
    %4144 = vmatprep.subr.mxu0 0.0
    %4145 = vmatpush1.msra.mxu0 0.0
    %4146 = vmatprep.subr.mxu0 0.0
    %4147 = vmatpush1.msra.mxu0 0.0
    %4148 = vmatprep.subr.mxu0 0.0
    %4149 = vmatpush1.msra.mxu0 0.0
    %4150 = vmatprep.subr.mxu0 0.0
    %4151 = vmatpush1.msra.mxu0 0.0
    %4152 = vmatprep.subr.mxu0 0.0
    %4153 = vmatpush1.msra.mxu0 0.0
    %4154 = vmatprep.subr.mxu0 0.0
    %4155 = vmatpush1.msra.mxu0 0.0
    %4156 = vmatprep.subr.mxu0 0.0
    %4157 = vmatpush1.msra.mxu0 0.0
    %4158 = vmatprep.subr.mxu0 0.0
    %4159 = vmatpush1.msra.mxu0 0.0
    %4160 = vmatprep.subr.mxu0 0.0
    %4161 = vmatpush1.msra.mxu0 0.0
    %4162 = vmatprep.mubr.f32.mxu0 0.0
    %4163 = vmatmul.mubr.f32.gmra.mrb[0].mxu0 %v4093
    %v4164 = vpop.f32.mrb[0].mxu0
    %v4165 = vadd.f32 %v4091, %v4164
    %v4166 = vpop.f32.mrb[0].mxu0
    %4167 = vmatprep.mubr.f32.mxu0 0.0
    %4168 = vmatmul.mubr.f32.gmra.mrb[0].mxu0 %v4096
    %v4169 = vpop.f32.mrb[0].mxu0
    %v4170 = vadd.f32 %v4091, %v4169
    %v4171 = vpop.f32.mrb[0].mxu0
    %4172 = vdwg.mxu0
    %v4173 = vmul.f32 %v4165, 1.702
    %v4174 = vmul.f32 %v4170, 1.702
    %v4175 = vxor.u32 %v4173, 2147483648
    %v4176 = vxor.u32 %v4174, 2147483648
    %v4177 = vmul.f32 %v4175, 1.442695
    %v4178 = vpow.pop %v4177
    %v4179 = vmul.f32 %v4176, 1.442695
    %v4180 = vpow.pop %v4179
    %v4181 = vadd.f32 %v4178, 1.0
    %v4182 = vadd.f32 %v4180, 1.0
    %v4183 = vrcp.pop %v4181
    %v4184 = vmul.f32 1.0, %v4183
    %v4185 = vrcp.pop %v4182
    %v4186 = vmul.f32 1.0, %v4185
    %v4187 = vmul.f32 %v4165, %v4184
    %v4188 = vmul.f32 %v4170, %v4186
    %v4189 = vlaneseq
    %v4190 = vshrl.u32 %v4189, 7
    %v4191 = vsub.s32 7, %v4190
    %v4192 = vrot.slane %v2272, %v4191
    %v4194 = vsel %vm93, %v4187, 0
    %v4197 = vsel %vm93, %v4188, 0
    %4199 = vmatprep.subr.mxu0 0.0
    %4200 = vmatpush1.msra.mxu0 %v2263
    %4201 = vmatprep.subr.mxu0 0.0
    %4202 = vmatpush1.msra.mxu0 %v2264
    %4203 = vmatprep.subr.mxu0 0.0
    %4204 = vmatpush1.msra.mxu0 %v2265
    %4205 = vmatprep.subr.mxu0 0.0
    %4206 = vmatpush1.msra.mxu0 %v2266
    %4207 = vmatprep.subr.mxu0 0.0
    %4208 = vmatpush1.msra.mxu0 %v2267
    %4209 = vmatprep.subr.mxu0 0.0
    %4210 = vmatpush1.msra.mxu0 %v2268
    %4211 = vmatprep.subr.mxu0 0.0
    %4212 = vmatpush1.msra.mxu0 %v2269
    %4213 = vmatprep.subr.mxu0 0.0
    %4214 = vmatpush1.msra.mxu0 %v2270
    %4215 = vmatprep.subr.mxu0 0.0
    %4216 = vmatpush1.msra.mxu0 0.0
    %4217 = vmatprep.subr.mxu0 0.0
    %4218 = vmatpush1.msra.mxu0 0.0
    %4219 = vmatprep.subr.mxu0 0.0
    %4220 = vmatpush1.msra.mxu0 0.0
    %4221 = vmatprep.subr.mxu0 0.0
    %4222 = vmatpush1.msra.mxu0 0.0
    %4223 = vmatprep.subr.mxu0 0.0
    %4224 = vmatpush1.msra.mxu0 0.0
    %4225 = vmatprep.subr.mxu0 0.0
    %4226 = vmatpush1.msra.mxu0 0.0
    %4227 = vmatprep.subr.mxu0 0.0
    %4228 = vmatpush1.msra.mxu0 0.0
    %4229 = vmatprep.subr.mxu0 0.0
    %4230 = vmatpush1.msra.mxu0 0.0
    %4231 = vmatprep.subr.mxu0 0.0
    %4232 = vmatpush1.msra.mxu0 0.0
    %4233 = vmatprep.subr.mxu0 0.0
    %4234 = vmatpush1.msra.mxu0 0.0
    %4235 = vmatprep.subr.mxu0 0.0
    %4236 = vmatpush1.msra.mxu0 0.0
    %4237 = vmatprep.subr.mxu0 0.0
    %4238 = vmatpush1.msra.mxu0 0.0
    %4239 = vmatprep.subr.mxu0 0.0
    %4240 = vmatpush1.msra.mxu0 0.0
    %4241 = vmatprep.subr.mxu0 0.0
    %4242 = vmatpush1.msra.mxu0 0.0
    %4243 = vmatprep.subr.mxu0 0.0
    %4244 = vmatpush1.msra.mxu0 0.0
    %4245 = vmatprep.subr.mxu0 0.0
    %4246 = vmatpush1.msra.mxu0 0.0
    %4247 = vmatprep.subr.mxu0 0.0
    %4248 = vmatpush1.msra.mxu0 0.0
    %4249 = vmatprep.subr.mxu0 0.0
    %4250 = vmatpush1.msra.mxu0 0.0
    %4251 = vmatprep.subr.mxu0 0.0
    %4252 = vmatpush1.msra.mxu0 0.0
    %4253 = vmatprep.subr.mxu0 0.0
    %4254 = vmatpush1.msra.mxu0 0.0
    %4255 = vmatprep.subr.mxu0 0.0
    %4256 = vmatpush1.msra.mxu0 0.0
    %4257 = vmatprep.subr.mxu0 0.0
    %4258 = vmatpush1.msra.mxu0 0.0
    %4259 = vmatprep.subr.mxu0 0.0
    %4260 = vmatpush1.msra.mxu0 0.0
    %4261 = vmatprep.subr.mxu0 0.0
    %4262 = vmatpush1.msra.mxu0 0.0
    %4263 = vmatprep.mubr.f32.mxu0 0.0
    %4264 = vmatmul.mubr.f32.gmra.mrb[0].mxu0 %v4194
    %v4265 = vpop.f32.mrb[0].mxu0
    %v4266 = vadd.f32 %v4192, %v4265
    %v4267 = vpop.f32.mrb[0].mxu0
    %4268 = vmatprep.mubr.f32.mxu0 0.0
    %4269 = vmatmul.mubr.f32.gmra.mrb[0].mxu0 %v4197
    %v4270 = vpop.f32.mrb[0].mxu0
    %v4271 = vadd.f32 %v4192, %v4270
    %v4272 = vpop.f32.mrb[0].mxu0
    %4273 = vdwg.mxu0
    %v4274 = vadd.f32 %v4048, %v4266
    %v4275 = vadd.f32 %v4049, %v4271
    %v4278 = vrot.slane %v4275, 7
    %vm4279 = vcmask 1041409
    %v4280 = vsel %vm4279, %v4278, %v4274
    %vm4282 = vcmask 254976
    %v4283 = vsel %vm4282, %v4280, 0.0
    %4284 = vadd.xlane.f32.xlu0 %v4283
    %v4285 = vpop.xlane.xlu0 %4284
    %v4286 = vmul.f32 %v4285, %v185
    %v4288 = vrot.slane %v4286, 1
    %v4291 = vsub.f32 %v4274, %v4286
    %v4292 = vsub.f32 %v4275, %v4288
    %v4293 = vmul.f32 %v4291, %v4291
    %v4294 = vmul.f32 %v4292, %v4292
    %v4297 = vrot.slane %v4294, 7
    %v4298 = vsel %vm4279, %v4297, %v4293
    %v4300 = vsel %vm4282, %v4298, 0.0
    %4301 = vadd.xlane.f32.xlu0 %v4300
    %v4302 = vpop.xlane.xlu0 %4301
    %v4303 = vmul.f32 %v4302, %v185
    %v4304 = vadd.f32 %v4303, 1e-05
    %v4305 = vrsqrt.pop %v4304
    %v4307 = vrot.slane %v4305, 1
    %v4310 = vmul.f32 %v4291, %v4305
    %v4311 = vmul.f32 %v4292, %v4307
    %v4312 = vlaneseq
    %v4313 = vshrl.u32 %v4312, 7
    %v4314 = vsub.s32 2, %v4313
    %v4315 = vrot.slane %v64, %v4314
    %v4316 = vmul.f32 %v4310, %v4315
    %v4317 = vmul.f32 %v4311, %v4315
    %v4318 = vlaneseq
    %v4319 = vshrl.u32 %v4318, 7
    %v4320 = vsub.s32 3, %v4319
    %v4321 = vrot.slane %v64, %v4320
    %v4322 = vadd.f32 %v4316, %v4321
    %v4323 = vadd.f32 %v4317, %v4321
    %v4324 = vld [vmem:[%s8] sm:$0xff]
    %v4325 = vld [vmem:[%s8 + $0x8] sm:$0xff]
    %v4326 = vlaneseq
    %v4327 = vshrl.u32 %v4326, 7
    %vm4328 = vcmp.gt.s32.totalorder %v219, %v4327
    %v4329 = vsel %vm4328, -1e+09, 0.0
    %v4330 = vld [vmem:[%s9] sm:$0x3]
    %v4331 = vsub.f32 1.0, %v4330
    %v4332 = vmul.f32 %v4331, -1e+09
    %v4335 = vunpack.c.l.s4 1966171168
    %v4336 = vunpack.c.0.s8 %v4335
    %v4337 = vlaneseq
    %v4338 = vshrl.u32 %v4337, 7
    %v4339 = vsub.s32 %v4336, %v4338
    %v4340 = vrot.slane %v4332, %v4339
    %v4341 = vcombine.high %v4340, %v4340
    %v4343 = vunpack.c.l.s4 1966171168
    %v4344 = vunpack.c.0.s8 %v4343
    %v4345 = vlaneseq
    %v4346 = vshrl.u32 %v4345, 7
    %v4347 = vsub.s32 %v4344, %v4346
    %v4348 = vrot.slane %v4340, %v4347
    %v4350 = vunpack.c.l.s4 1966171168
    %v4351 = vunpack.c.0.s8 %v4350
    %v4352 = vlaneseq
    %v4353 = vshrl.u32 %v4352, 7
    %v4354 = vsub.s32 %v4351, %v4353
    %v4355 = vrot.slane %v4341, %v4354
    %v4356 = vlaneseq
    %v4357 = vshrl.u32 %v4356, 7
    %v4358 = vsub.s32 0, %v4357
    %v4359 = vrot.slane %v4348, %v4358
    %v4360 = vlaneseq
    %v4361 = vshrl.u32 %v4360, 7
    %v4362 = vsub.s32 0, %v4361
    %v4363 = vrot.slane %v4355, %v4362
    %v4366 = vadd.f32 %v4329, %v4359
    %v4367 = vadd.f32 %v4329, %v4363
    %v4368 = vld [vmem:[%s11] sm:$0xff]
    %v4369 = vld [vmem:[%s11 + $0x8] sm:$0xff]
    %v4370 = vld [vmem:[%s11 + $0x10] sm:$0xff]
    %v4371 = vld [vmem:[%s11 + $0x18] sm:$0xff]
    %v4372 = vld [vmem:[%s12] sm:$0xff]
    %v4373 = vld [vmem:[%s12 + $0x8] sm:$0xff]
    %v4374 = vld [vmem:[%s12 + $0x10] sm:$0xff]
    %v4375 = vld [vmem:[%s12 + $0x18] sm:$0xff]
    %v4376 = vld [vmem:[%s13] sm:$0xff]
    %v4377 = vld [vmem:[%s13 + $0x8] sm:$0xff]
    %v4378 = vld [vmem:[%s13 + $0x10] sm:$0xff]
    %v4379 = vld [vmem:[%s13 + $0x18] sm:$0xff]
    %v4380 = vld [vmem:[%s14] sm:$0xff]
    %v4381 = vld [vmem:[%s14 + $0x8] sm:$0xff]
    %v4382 = vld [vmem:[%s14 + $0x10] sm:$0xff]
    %v4383 = vld [vmem:[%s14 + $0x18] sm:$0xff]
    %v4384 = vld [vmem:[%s14 + $0x20] sm:$0xff]
    %v4385 = vld [vmem:[%s14 + $0x28] sm:$0xff]
    %v4386 = vld [vmem:[%s14 + $0x30] sm:$0xff]
    %v4387 = vld [vmem:[%s14 + $0x38] sm:$0xff]
    %v4388 = vld [vmem:[%s15] sm:$0xff]
    %v4389 = vsel %vm178, %v4324, 0.0
    %4390 = vadd.xlane.f32.xlu0 %v4389
    %v4391 = vpop.xlane.xlu0 %4390
    %v4392 = vsel %vm178, %v4325, 0.0
    %4393 = vadd.xlane.f32.xlu0 %v4392
    %v4394 = vpop.xlane.xlu0 %4393
    %v4395 = vmul.f32 %v4391, %v185
    %v4396 = vmul.f32 %v4394, %v185
    %v4397 = vsub.f32 %v4324, %v4395
    %v4398 = vsub.f32 %v4325, %v4396
    %v4399 = vmul.f32 %v4397, %v4397
    %v4400 = vmul.f32 %v4398, %v4398
    %v4401 = vsel %vm178, %v4399, 0.0
    %4402 = vadd.xlane.f32.xlu0 %v4401
    %v4403 = vpop.xlane.xlu0 %4402
    %v4404 = vsel %vm178, %v4400, 0.0
    %4405 = vadd.xlane.f32.xlu0 %v4404
    %v4406 = vpop.xlane.xlu0 %4405
    %v4407 = vmul.f32 %v4403, %v185
    %v4408 = vmul.f32 %v4406, %v185
    %v4409 = vadd.f32 %v4407, 1e-05
    %v4410 = vadd.f32 %v4408, 1e-05
    %v4411 = vrsqrt.pop %v4409
    %v4412 = vrsqrt.pop %v4410
    %v4413 = vmul.f32 %v4397, %v4411
    %v4414 = vmul.f32 %v4398, %v4412
    %v4415 = vlaneseq
    %v4416 = vshrl.u32 %v4415, 7
    %v4417 = vsub.s32 0, %v4416
    %v4418 = vrot.slane %v4388, %v4417
    %v4419 = vmul.f32 %v4413, %v4418
    %v4420 = vmul.f32 %v4414, %v4418
    %v4421 = vlaneseq
    %v4422 = vshrl.u32 %v4421, 7
    %v4423 = vsub.s32 1, %v4422
    %v4424 = vrot.slane %v4388, %v4423
    %v4425 = vadd.f32 %v4419, %v4424
    %v4426 = vadd.f32 %v4420, %v4424
    %v4427 = vlaneseq
    %v4428 = vshrl.u32 %v4427, 7
    %v4429 = vsub.s32 4, %v4428
    %v4430 = vrot.slane %v4388, %v4429
    %v4432 = vsel %vm178, %v4425, 0
    %v4435 = vsel %vm178, %v4426, 0
    %4437 = vmatprep.subr.mxu0 0.0
    %4438 = vmatpush1.msra.mxu0 %v4368
    %4439 = vmatprep.subr.mxu0 0.0
    %4440 = vmatpush1.msra.mxu0 %v4369
    %4441 = vmatprep.subr.mxu0 0.0
    %4442 = vmatpush1.msra.mxu0 %v4370
    %4443 = vmatprep.subr.mxu0 0.0
    %4444 = vmatpush1.msra.mxu0 %v4371
    %4445 = vmatprep.subr.mxu0 0.0
    %4446 = vmatpush1.msra.mxu0 0.0
    %4447 = vmatprep.subr.mxu0 0.0
    %4448 = vmatpush1.msra.mxu0 0.0
    %4449 = vmatprep.subr.mxu0 0.0
    %4450 = vmatpush1.msra.mxu0 0.0
    %4451 = vmatprep.subr.mxu0 0.0
    %4452 = vmatpush1.msra.mxu0 0.0
    %4453 = vmatprep.subr.mxu0 0.0
    %4454 = vmatpush1.msra.mxu0 0.0
    %4455 = vmatprep.subr.mxu0 0.0
    %4456 = vmatpush1.msra.mxu0 0.0
    %4457 = vmatprep.subr.mxu0 0.0
    %4458 = vmatpush1.msra.mxu0 0.0
    %4459 = vmatprep.subr.mxu0 0.0
    %4460 = vmatpush1.msra.mxu0 0.0
    %4461 = vmatprep.subr.mxu0 0.0
    %4462 = vmatpush1.msra.mxu0 0.0
    %4463 = vmatprep.subr.mxu0 0.0
    %4464 = vmatpush1.msra.mxu0 0.0
    %4465 = vmatprep.subr.mxu0 0.0
    %4466 = vmatpush1.msra.mxu0 0.0
    %4467 = vmatprep.subr.mxu0 0.0
    %4468 = vmatpush1.msra.mxu0 0.0
    %4469 = vmatprep.subr.mxu0 0.0
    %4470 = vmatpush1.msra.mxu0 0.0
    %4471 = vmatprep.subr.mxu0 0.0
    %4472 = vmatpush1.msra.mxu0 0.0
    %4473 = vmatprep.subr.mxu0 0.0
    %4474 = vmatpush1.msra.mxu0 0.0
    %4475 = vmatprep.subr.mxu0 0.0
    %4476 = vmatpush1.msra.mxu0 0.0
    %4477 = vmatprep.subr.mxu0 0.0
    %4478 = vmatpush1.msra.mxu0 0.0
    %4479 = vmatprep.subr.mxu0 0.0
    %4480 = vmatpush1.msra.mxu0 0.0
    %4481 = vmatprep.subr.mxu0 0.0
    %4482 = vmatpush1.msra.mxu0 0.0
    %4483 = vmatprep.subr.mxu0 0.0
    %4484 = vmatpush1.msra.mxu0 0.0
    %4485 = vmatprep.subr.mxu0 0.0
    %4486 = vmatpush1.msra.mxu0 0.0
    %4487 = vmatprep.subr.mxu0 0.0
    %4488 = vmatpush1.msra.mxu0 0.0
    %4489 = vmatprep.subr.mxu0 0.0
    %4490 = vmatpush1.msra.mxu0 0.0
    %4491 = vmatprep.subr.mxu0 0.0
    %4492 = vmatpush1.msra.mxu0 0.0
    %4493 = vmatprep.subr.mxu0 0.0
    %4494 = vmatpush1.msra.mxu0 0.0
    %4495 = vmatprep.subr.mxu0 0.0
    %4496 = vmatpush1.msra.mxu0 0.0
    %4497 = vmatprep.subr.mxu0 0.0
    %4498 = vmatpush1.msra.mxu0 0.0
    %4499 = vmatprep.subr.mxu0 0.0
    %4500 = vmatpush1.msra.mxu0 0.0
    %4501 = vmatprep.mubr.f32.mxu0 0.0
    %4502 = vmatmul.mubr.f32.gmra.mrb[0].mxu0 %v4432
    %v4503 = vpop.f32.mrb[0].mxu0
    %v4504 = vadd.f32 %v4430, %v4503
    %v4505 = vpop.f32.mrb[0].mxu0
    %4506 = vmatprep.mubr.f32.mxu0 0.0
    %4507 = vmatmul.mubr.f32.gmra.mrb[0].mxu0 %v4435
    %v4508 = vpop.f32.mrb[0].mxu0
    %v4509 = vadd.f32 %v4430, %v4508
    %v4510 = vpop.f32.mrb[0].mxu0
    %4511 = vdwg.mxu0
    %4513 = vrot.lane.b32.xlu0 %v4504, 96
    %v4514 = vpop.permute.xlu0 %4513
    %v4515 = vsel %vm369, %v4504, 0
    %v4517 = vsel %vm369, %v4514, 0
    %4519 = vmatprep.subr.mxu0 0.0
    %4520 = vmatpush1.xpose.msra.mxu0 %v4517
    %4521 = vmatprep.subr.mxu0 0.0
    %4522 = vmatpush1.xpose.msra.mxu0 0.0
    %4523 = vmatprep.subr.mxu0 0.0
    %4524 = vmatpush1.xpose.msra.mxu0 0.0
    %4525 = vmatprep.subr.mxu0 0.0
    %4526 = vmatpush1.xpose.msra.mxu0 0.0
    %4527 = vmatprep.subr.mxu0 0.0
    %4528 = vmatpush1.xpose.msra.mxu0 0.0
    %4529 = vmatprep.subr.mxu0 0.0
    %4530 = vmatpush1.xpose.msra.mxu0 0.0
    %4531 = vmatprep.subr.mxu0 0.0
    %4532 = vmatpush1.xpose.msra.mxu0 0.0
    %4533 = vmatprep.subr.mxu0 0.0
    %4534 = vmatpush1.xpose.msra.mxu0 0.0
    %4535 = vmatprep.subr.mxu0 0.0
    %4536 = vmatpush1.xpose.msra.mxu0 0.0
    %4537 = vmatprep.subr.mxu0 0.0
    %4538 = vmatpush1.xpose.msra.mxu0 0.0
    %4539 = vmatprep.subr.mxu0 0.0
    %4540 = vmatpush1.xpose.msra.mxu0 0.0
    %4541 = vmatprep.subr.mxu0 0.0
    %4542 = vmatpush1.xpose.msra.mxu0 0.0
    %4543 = vmatprep.subr.mxu0 0.0
    %4544 = vmatpush1.xpose.msra.mxu0 0.0
    %4545 = vmatprep.subr.mxu0 0.0
    %4546 = vmatpush1.xpose.msra.mxu0 0.0
    %4547 = vmatprep.subr.mxu0 0.0
    %4548 = vmatpush1.xpose.msra.mxu0 0.0
    %4549 = vmatprep.subr.mxu0 0.0
    %4550 = vmatpush1.xpose.msra.mxu0 0.0
    %4551 = vmatprep.subr.mxu0 0.0
    %4552 = vmatpush1.xpose.msra.mxu0 0.0
    %4553 = vmatprep.subr.mxu0 0.0
    %4554 = vmatpush1.xpose.msra.mxu0 0.0
    %4555 = vmatprep.subr.mxu0 0.0
    %4556 = vmatpush1.xpose.msra.mxu0 0.0
    %4557 = vmatprep.subr.mxu0 0.0
    %4558 = vmatpush1.xpose.msra.mxu0 0.0
    %4559 = vmatprep.subr.mxu0 0.0
    %4560 = vmatpush1.xpose.msra.mxu0 0.0
    %4561 = vmatprep.subr.mxu0 0.0
    %4562 = vmatpush1.xpose.msra.mxu0 0.0
    %4563 = vmatprep.subr.mxu0 0.0
    %4564 = vmatpush1.xpose.msra.mxu0 0.0
    %4565 = vmatprep.subr.mxu0 0.0
    %4566 = vmatpush1.xpose.msra.mxu0 0.0
    %4567 = vmatprep.subr.mxu0 0.0
    %4568 = vmatpush1.xpose.msra.mxu0 0.0
    %4569 = vmatprep.subr.mxu0 0.0
    %4570 = vmatpush1.xpose.msra.mxu0 0.0
    %4571 = vmatprep.subr.mxu0 0.0
    %4572 = vmatpush1.xpose.msra.mxu0 0.0
    %4573 = vmatprep.subr.mxu0 0.0
    %4574 = vmatpush1.xpose.msra.mxu0 0.0
    %4575 = vmatprep.subr.mxu0 0.0
    %4576 = vmatpush1.xpose.msra.mxu0 0.0
    %4577 = vmatprep.subr.mxu0 0.0
    %4578 = vmatpush1.xpose.msra.mxu0 0.0
    %4579 = vmatprep.subr.mxu0 0.0
    %4580 = vmatpush1.xpose.msra.mxu0 0.0
    %4581 = vmatprep.subr.mxu0 0.0
    %4582 = vmatpush1.xpose.msra.mxu0 0.0
    %4583 = vmatprep.mubr.f32.mxu0 0.0
    %4584 = vmatmul.mubr.f32.gmra.mrb[0].mxu0 %v4515
    %v4585 = vpop.f32.mrb[0].mxu0
    %v4586 = vadd.f32 %v4366, %v4585
    %v4587 = vpop.f32.mrb[0].mxu0
    %4588 = vdwg.mxu0
    %4590 = vrot.lane.b32.xlu0 %v4509, 96
    %v4591 = vpop.permute.xlu0 %4590
    %v4592 = vsel %vm369, %v4509, 0
    %v4594 = vsel %vm369, %v4591, 0
    %4596 = vmatprep.subr.mxu0 0.0
    %4597 = vmatpush1.xpose.msra.mxu0 %v4594
    %4598 = vmatprep.subr.mxu0 0.0
    %4599 = vmatpush1.xpose.msra.mxu0 0.0
    %4600 = vmatprep.subr.mxu0 0.0
    %4601 = vmatpush1.xpose.msra.mxu0 0.0
    %4602 = vmatprep.subr.mxu0 0.0
    %4603 = vmatpush1.xpose.msra.mxu0 0.0
    %4604 = vmatprep.subr.mxu0 0.0
    %4605 = vmatpush1.xpose.msra.mxu0 0.0
    %4606 = vmatprep.subr.mxu0 0.0
    %4607 = vmatpush1.xpose.msra.mxu0 0.0
    %4608 = vmatprep.subr.mxu0 0.0
    %4609 = vmatpush1.xpose.msra.mxu0 0.0
    %4610 = vmatprep.subr.mxu0 0.0
    %4611 = vmatpush1.xpose.msra.mxu0 0.0
    %4612 = vmatprep.subr.mxu0 0.0
    %4613 = vmatpush1.xpose.msra.mxu0 0.0
    %4614 = vmatprep.subr.mxu0 0.0
    %4615 = vmatpush1.xpose.msra.mxu0 0.0
    %4616 = vmatprep.subr.mxu0 0.0
    %4617 = vmatpush1.xpose.msra.mxu0 0.0
    %4618 = vmatprep.subr.mxu0 0.0
    %4619 = vmatpush1.xpose.msra.mxu0 0.0
    %4620 = vmatprep.subr.mxu0 0.0
    %4621 = vmatpush1.xpose.msra.mxu0 0.0
    %4622 = vmatprep.subr.mxu0 0.0
    %4623 = vmatpush1.xpose.msra.mxu0 0.0
    %4624 = vmatprep.subr.mxu0 0.0
    %4625 = vmatpush1.xpose.msra.mxu0 0.0
    %4626 = vmatprep.subr.mxu0 0.0
    %4627 = vmatpush1.xpose.msra.mxu0 0.0
    %4628 = vmatprep.subr.mxu0 0.0
    %4629 = vmatpush1.xpose.msra.mxu0 0.0
    %4630 = vmatprep.subr.mxu0 0.0
    %4631 = vmatpush1.xpose.msra.mxu0 0.0
    %4632 = vmatprep.subr.mxu0 0.0
    %4633 = vmatpush1.xpose.msra.mxu0 0.0
    %4634 = vmatprep.subr.mxu0 0.0
    %4635 = vmatpush1.xpose.msra.mxu0 0.0
    %4636 = vmatprep.subr.mxu0 0.0
    %4637 = vmatpush1.xpose.msra.mxu0 0.0
    %4638 = vmatprep.subr.mxu0 0.0
    %4639 = vmatpush1.xpose.msra.mxu0 0.0
    %4640 = vmatprep.subr.mxu0 0.0
    %4641 = vmatpush1.xpose.msra.mxu0 0.0
    %4642 = vmatprep.subr.mxu0 0.0
    %4643 = vmatpush1.xpose.msra.mxu0 0.0
    %4644 = vmatprep.subr.mxu0 0.0
    %4645 = vmatpush1.xpose.msra.mxu0 0.0
    %4646 = vmatprep.subr.mxu0 0.0
    %4647 = vmatpush1.xpose.msra.mxu0 0.0
    %4648 = vmatprep.subr.mxu0 0.0
    %4649 = vmatpush1.xpose.msra.mxu0 0.0
    %4650 = vmatprep.subr.mxu0 0.0
    %4651 = vmatpush1.xpose.msra.mxu0 0.0
    %4652 = vmatprep.subr.mxu0 0.0
    %4653 = vmatpush1.xpose.msra.mxu0 0.0
    %4654 = vmatprep.subr.mxu0 0.0
    %4655 = vmatpush1.xpose.msra.mxu0 0.0
    %4656 = vmatprep.subr.mxu0 0.0
    %4657 = vmatpush1.xpose.msra.mxu0 0.0
    %4658 = vmatprep.subr.mxu0 0.0
    %4659 = vmatpush1.xpose.msra.mxu0 0.0
    %4660 = vmatprep.mubr.f32.mxu0 0.0
    %4661 = vmatmul.mubr.f32.gmra.mrb[0].mxu0 %v4592
    %v4662 = vpop.f32.mrb[0].mxu0
    %v4663 = vadd.f32 %v4367, %v4662
    %v4664 = vpop.f32.mrb[0].mxu0
    %4665 = vdwg.mxu0
    %v4666 = vsel %vm369, %v4586, -inf
    %4667 = vmax.xlane.f32.xlu0 %v4666
    %v4668 = vpop.xlane.xlu0 %4667
    %v4669 = vsel %vm369, %v4663, -inf
    %4670 = vmax.xlane.f32.xlu0 %v4669
    %v4671 = vpop.xlane.xlu0 %4670
    %v4672 = vsub.f32 %v4586, %v4668
    %v4673 = vsub.f32 %v4663, %v4671
    %v4674 = vmul.f32 %v4672, 1.442695
    %v4675 = vpow.pop %v4674
    %v4676 = vmul.f32 %v4673, 1.442695
    %v4677 = vpow.pop %v4676
    %v4678 = vsel %vm369, %v4675, 0.0
    %4679 = vadd.xlane.f32.xlu0 %v4678
    %v4680 = vpop.xlane.xlu0 %4679
    %v4681 = vsel %vm369, %v4677, 0.0
    %4682 = vadd.xlane.f32.xlu0 %v4681
    %v4683 = vpop.xlane.xlu0 %4682
    %v4684 = vrcp.pop %v4680
    %v4685 = vrcp.pop %v4683
    %v4686 = vmul.f32 %v4675, %v4684
    %v4687 = vmul.f32 %v4677, %v4685
    %4688 = vrot.lane.b32.xlu0 %v4504, 64
    %v4689 = vpop.permute.xlu0 %4688
    %v4692 = vsel %vm369, %v4686, 0
    %4694 = vmatprep.subr.mxu0 0.0
    %4695 = vmatpush1.msra.mxu0 %v4689
    %4696 = vmatprep.subr.mxu0 0.0
    %4697 = vmatpush1.msra.mxu0 0.0
    %4698 = vmatprep.subr.mxu0 0.0
    %4699 = vmatpush1.msra.mxu0 0.0
    %4700 = vmatprep.subr.mxu0 0.0
    %4701 = vmatpush1.msra.mxu0 0.0
    %4702 = vmatprep.subr.mxu0 0.0
    %4703 = vmatpush1.msra.mxu0 0.0
    %4704 = vmatprep.subr.mxu0 0.0
    %4705 = vmatpush1.msra.mxu0 0.0
    %4706 = vmatprep.subr.mxu0 0.0
    %4707 = vmatpush1.msra.mxu0 0.0
    %4708 = vmatprep.subr.mxu0 0.0
    %4709 = vmatpush1.msra.mxu0 0.0
    %4710 = vmatprep.subr.mxu0 0.0
    %4711 = vmatpush1.msra.mxu0 0.0
    %4712 = vmatprep.subr.mxu0 0.0
    %4713 = vmatpush1.msra.mxu0 0.0
    %4714 = vmatprep.subr.mxu0 0.0
    %4715 = vmatpush1.msra.mxu0 0.0
    %4716 = vmatprep.subr.mxu0 0.0
    %4717 = vmatpush1.msra.mxu0 0.0
    %4718 = vmatprep.subr.mxu0 0.0
    %4719 = vmatpush1.msra.mxu0 0.0
    %4720 = vmatprep.subr.mxu0 0.0
    %4721 = vmatpush1.msra.mxu0 0.0
    %4722 = vmatprep.subr.mxu0 0.0
    %4723 = vmatpush1.msra.mxu0 0.0
    %4724 = vmatprep.subr.mxu0 0.0
    %4725 = vmatpush1.msra.mxu0 0.0
    %4726 = vmatprep.subr.mxu0 0.0
    %4727 = vmatpush1.msra.mxu0 0.0
    %4728 = vmatprep.subr.mxu0 0.0
    %4729 = vmatpush1.msra.mxu0 0.0
    %4730 = vmatprep.subr.mxu0 0.0
    %4731 = vmatpush1.msra.mxu0 0.0
    %4732 = vmatprep.subr.mxu0 0.0
    %4733 = vmatpush1.msra.mxu0 0.0
    %4734 = vmatprep.subr.mxu0 0.0
    %4735 = vmatpush1.msra.mxu0 0.0
    %4736 = vmatprep.subr.mxu0 0.0
    %4737 = vmatpush1.msra.mxu0 0.0
    %4738 = vmatprep.subr.mxu0 0.0
    %4739 = vmatpush1.msra.mxu0 0.0
    %4740 = vmatprep.subr.mxu0 0.0
    %4741 = vmatpush1.msra.mxu0 0.0
    %4742 = vmatprep.subr.mxu0 0.0
    %4743 = vmatpush1.msra.mxu0 0.0
    %4744 = vmatprep.subr.mxu0 0.0
    %4745 = vmatpush1.msra.mxu0 0.0
    %4746 = vmatprep.subr.mxu0 0.0
    %4747 = vmatpush1.msra.mxu0 0.0
    %4748 = vmatprep.subr.mxu0 0.0
    %4749 = vmatpush1.msra.mxu0 0.0
    %4750 = vmatprep.subr.mxu0 0.0
    %4751 = vmatpush1.msra.mxu0 0.0
    %4752 = vmatprep.subr.mxu0 0.0
    %4753 = vmatpush1.msra.mxu0 0.0
    %4754 = vmatprep.subr.mxu0 0.0
    %4755 = vmatpush1.msra.mxu0 0.0
    %4756 = vmatprep.subr.mxu0 0.0
    %4757 = vmatpush1.msra.mxu0 0.0
    %4758 = vmatprep.mubr.f32.mxu0 0.0
    %4759 = vmatmul.mubr.f32.gmra.mrb[0].mxu0 %v4692
    %v4760 = vpop.f32.mrb[0].mxu0
    %v4761 = vadd.f32 0.0, %v4760
    %v4762 = vpop.f32.mrb[0].mxu0
    %4763 = vdwg.mxu0
    %4764 = vrot.lane.b32.xlu0 %v4509, 64
    %v4765 = vpop.permute.xlu0 %4764
    %v4768 = vsel %vm369, %v4687, 0
    %4770 = vmatprep.subr.mxu0 0.0
    %4771 = vmatpush1.msra.mxu0 %v4765
    %4772 = vmatprep.subr.mxu0 0.0
    %4773 = vmatpush1.msra.mxu0 0.0
    %4774 = vmatprep.subr.mxu0 0.0
    %4775 = vmatpush1.msra.mxu0 0.0
    %4776 = vmatprep.subr.mxu0 0.0
    %4777 = vmatpush1.msra.mxu0 0.0
    %4778 = vmatprep.subr.mxu0 0.0
    %4779 = vmatpush1.msra.mxu0 0.0
    %4780 = vmatprep.subr.mxu0 0.0
    %4781 = vmatpush1.msra.mxu0 0.0
    %4782 = vmatprep.subr.mxu0 0.0
    %4783 = vmatpush1.msra.mxu0 0.0
    %4784 = vmatprep.subr.mxu0 0.0
    %4785 = vmatpush1.msra.mxu0 0.0
    %4786 = vmatprep.subr.mxu0 0.0
    %4787 = vmatpush1.msra.mxu0 0.0
    %4788 = vmatprep.subr.mxu0 0.0
    %4789 = vmatpush1.msra.mxu0 0.0
    %4790 = vmatprep.subr.mxu0 0.0
    %4791 = vmatpush1.msra.mxu0 0.0
    %4792 = vmatprep.subr.mxu0 0.0
    %4793 = vmatpush1.msra.mxu0 0.0
    %4794 = vmatprep.subr.mxu0 0.0
    %4795 = vmatpush1.msra.mxu0 0.0
    %4796 = vmatprep.subr.mxu0 0.0
    %4797 = vmatpush1.msra.mxu0 0.0
    %4798 = vmatprep.subr.mxu0 0.0
    %4799 = vmatpush1.msra.mxu0 0.0
    %4800 = vmatprep.subr.mxu0 0.0
    %4801 = vmatpush1.msra.mxu0 0.0
    %4802 = vmatprep.subr.mxu0 0.0
    %4803 = vmatpush1.msra.mxu0 0.0
    %4804 = vmatprep.subr.mxu0 0.0
    %4805 = vmatpush1.msra.mxu0 0.0
    %4806 = vmatprep.subr.mxu0 0.0
    %4807 = vmatpush1.msra.mxu0 0.0
    %4808 = vmatprep.subr.mxu0 0.0
    %4809 = vmatpush1.msra.mxu0 0.0
    %4810 = vmatprep.subr.mxu0 0.0
    %4811 = vmatpush1.msra.mxu0 0.0
    %4812 = vmatprep.subr.mxu0 0.0
    %4813 = vmatpush1.msra.mxu0 0.0
    %4814 = vmatprep.subr.mxu0 0.0
    %4815 = vmatpush1.msra.mxu0 0.0
    %4816 = vmatprep.subr.mxu0 0.0
    %4817 = vmatpush1.msra.mxu0 0.0
    %4818 = vmatprep.subr.mxu0 0.0
    %4819 = vmatpush1.msra.mxu0 0.0
    %4820 = vmatprep.subr.mxu0 0.0
    %4821 = vmatpush1.msra.mxu0 0.0
    %4822 = vmatprep.subr.mxu0 0.0
    %4823 = vmatpush1.msra.mxu0 0.0
    %4824 = vmatprep.subr.mxu0 0.0
    %4825 = vmatpush1.msra.mxu0 0.0
    %4826 = vmatprep.subr.mxu0 0.0
    %4827 = vmatpush1.msra.mxu0 0.0
    %4828 = vmatprep.subr.mxu0 0.0
    %4829 = vmatpush1.msra.mxu0 0.0
    %4830 = vmatprep.subr.mxu0 0.0
    %4831 = vmatpush1.msra.mxu0 0.0
    %4832 = vmatprep.subr.mxu0 0.0
    %4833 = vmatpush1.msra.mxu0 0.0
    %4834 = vmatprep.mubr.f32.mxu0 0.0
    %4835 = vmatmul.mubr.f32.gmra.mrb[0].mxu0 %v4768
    %v4836 = vpop.f32.mrb[0].mxu0
    %v4837 = vadd.f32 0.0, %v4836
    %v4838 = vpop.f32.mrb[0].mxu0
    %4839 = vdwg.mxu0
    %4840 = vrot.lane.b32.xlu0 %v4504, 120
    %v4841 = vpop.permute.xlu0 %4840
    %4842 = vrot.lane.b32.xlu0 %v4504, 88
    %v4843 = vpop.permute.xlu0 %4842
    %v4844 = vsel %vm369, %v4841, 0
    %v4846 = vsel %vm369, %v4843, 0
    %4848 = vmatprep.subr.mxu0 0.0
    %4849 = vmatpush1.xpose.msra.mxu0 %v4846
    %4850 = vmatprep.subr.mxu0 0.0
    %4851 = vmatpush1.xpose.msra.mxu0 0.0
    %4852 = vmatprep.subr.mxu0 0.0
    %4853 = vmatpush1.xpose.msra.mxu0 0.0
    %4854 = vmatprep.subr.mxu0 0.0
    %4855 = vmatpush1.xpose.msra.mxu0 0.0
    %4856 = vmatprep.subr.mxu0 0.0
    %4857 = vmatpush1.xpose.msra.mxu0 0.0
    %4858 = vmatprep.subr.mxu0 0.0
    %4859 = vmatpush1.xpose.msra.mxu0 0.0
    %4860 = vmatprep.subr.mxu0 0.0
    %4861 = vmatpush1.xpose.msra.mxu0 0.0
    %4862 = vmatprep.subr.mxu0 0.0
    %4863 = vmatpush1.xpose.msra.mxu0 0.0
    %4864 = vmatprep.subr.mxu0 0.0
    %4865 = vmatpush1.xpose.msra.mxu0 0.0
    %4866 = vmatprep.subr.mxu0 0.0
    %4867 = vmatpush1.xpose.msra.mxu0 0.0
    %4868 = vmatprep.subr.mxu0 0.0
    %4869 = vmatpush1.xpose.msra.mxu0 0.0
    %4870 = vmatprep.subr.mxu0 0.0
    %4871 = vmatpush1.xpose.msra.mxu0 0.0
    %4872 = vmatprep.subr.mxu0 0.0
    %4873 = vmatpush1.xpose.msra.mxu0 0.0
    %4874 = vmatprep.subr.mxu0 0.0
    %4875 = vmatpush1.xpose.msra.mxu0 0.0
    %4876 = vmatprep.subr.mxu0 0.0
    %4877 = vmatpush1.xpose.msra.mxu0 0.0
    %4878 = vmatprep.subr.mxu0 0.0
    %4879 = vmatpush1.xpose.msra.mxu0 0.0
    %4880 = vmatprep.subr.mxu0 0.0
    %4881 = vmatpush1.xpose.msra.mxu0 0.0
    %4882 = vmatprep.subr.mxu0 0.0
    %4883 = vmatpush1.xpose.msra.mxu0 0.0
    %4884 = vmatprep.subr.mxu0 0.0
    %4885 = vmatpush1.xpose.msra.mxu0 0.0
    %4886 = vmatprep.subr.mxu0 0.0
    %4887 = vmatpush1.xpose.msra.mxu0 0.0
    %4888 = vmatprep.subr.mxu0 0.0
    %4889 = vmatpush1.xpose.msra.mxu0 0.0
    %4890 = vmatprep.subr.mxu0 0.0
    %4891 = vmatpush1.xpose.msra.mxu0 0.0
    %4892 = vmatprep.subr.mxu0 0.0
    %4893 = vmatpush1.xpose.msra.mxu0 0.0
    %4894 = vmatprep.subr.mxu0 0.0
    %4895 = vmatpush1.xpose.msra.mxu0 0.0
    %4896 = vmatprep.subr.mxu0 0.0
    %4897 = vmatpush1.xpose.msra.mxu0 0.0
    %4898 = vmatprep.subr.mxu0 0.0
    %4899 = vmatpush1.xpose.msra.mxu0 0.0
    %4900 = vmatprep.subr.mxu0 0.0
    %4901 = vmatpush1.xpose.msra.mxu0 0.0
    %4902 = vmatprep.subr.mxu0 0.0
    %4903 = vmatpush1.xpose.msra.mxu0 0.0
    %4904 = vmatprep.subr.mxu0 0.0
    %4905 = vmatpush1.xpose.msra.mxu0 0.0
    %4906 = vmatprep.subr.mxu0 0.0
    %4907 = vmatpush1.xpose.msra.mxu0 0.0
    %4908 = vmatprep.subr.mxu0 0.0
    %4909 = vmatpush1.xpose.msra.mxu0 0.0
    %4910 = vmatprep.subr.mxu0 0.0
    %4911 = vmatpush1.xpose.msra.mxu0 0.0
    %4912 = vmatprep.mubr.f32.mxu0 0.0
    %4913 = vmatmul.mubr.f32.gmra.mrb[0].mxu0 %v4844
    %v4914 = vpop.f32.mrb[0].mxu0
    %v4915 = vadd.f32 %v4366, %v4914
    %v4916 = vpop.f32.mrb[0].mxu0
    %4917 = vdwg.mxu0
    %4918 = vrot.lane.b32.xlu0 %v4509, 120
    %v4919 = vpop.permute.xlu0 %4918
    %4920 = vrot.lane.b32.xlu0 %v4509, 88
    %v4921 = vpop.permute.xlu0 %4920
    %v4922 = vsel %vm369, %v4919, 0
    %v4924 = vsel %vm369, %v4921, 0
    %4926 = vmatprep.subr.mxu0 0.0
    %4927 = vmatpush1.xpose.msra.mxu0 %v4924
    %4928 = vmatprep.subr.mxu0 0.0
    %4929 = vmatpush1.xpose.msra.mxu0 0.0
    %4930 = vmatprep.subr.mxu0 0.0
    %4931 = vmatpush1.xpose.msra.mxu0 0.0
    %4932 = vmatprep.subr.mxu0 0.0
    %4933 = vmatpush1.xpose.msra.mxu0 0.0
    %4934 = vmatprep.subr.mxu0 0.0
    %4935 = vmatpush1.xpose.msra.mxu0 0.0
    %4936 = vmatprep.subr.mxu0 0.0
    %4937 = vmatpush1.xpose.msra.mxu0 0.0
    %4938 = vmatprep.subr.mxu0 0.0
    %4939 = vmatpush1.xpose.msra.mxu0 0.0
    %4940 = vmatprep.subr.mxu0 0.0
    %4941 = vmatpush1.xpose.msra.mxu0 0.0
    %4942 = vmatprep.subr.mxu0 0.0
    %4943 = vmatpush1.xpose.msra.mxu0 0.0
    %4944 = vmatprep.subr.mxu0 0.0
    %4945 = vmatpush1.xpose.msra.mxu0 0.0
    %4946 = vmatprep.subr.mxu0 0.0
    %4947 = vmatpush1.xpose.msra.mxu0 0.0
    %4948 = vmatprep.subr.mxu0 0.0
    %4949 = vmatpush1.xpose.msra.mxu0 0.0
    %4950 = vmatprep.subr.mxu0 0.0
    %4951 = vmatpush1.xpose.msra.mxu0 0.0
    %4952 = vmatprep.subr.mxu0 0.0
    %4953 = vmatpush1.xpose.msra.mxu0 0.0
    %4954 = vmatprep.subr.mxu0 0.0
    %4955 = vmatpush1.xpose.msra.mxu0 0.0
    %4956 = vmatprep.subr.mxu0 0.0
    %4957 = vmatpush1.xpose.msra.mxu0 0.0
    %4958 = vmatprep.subr.mxu0 0.0
    %4959 = vmatpush1.xpose.msra.mxu0 0.0
    %4960 = vmatprep.subr.mxu0 0.0
    %4961 = vmatpush1.xpose.msra.mxu0 0.0
    %4962 = vmatprep.subr.mxu0 0.0
    %4963 = vmatpush1.xpose.msra.mxu0 0.0
    %4964 = vmatprep.subr.mxu0 0.0
    %4965 = vmatpush1.xpose.msra.mxu0 0.0
    %4966 = vmatprep.subr.mxu0 0.0
    %4967 = vmatpush1.xpose.msra.mxu0 0.0
    %4968 = vmatprep.subr.mxu0 0.0
    %4969 = vmatpush1.xpose.msra.mxu0 0.0
    %4970 = vmatprep.subr.mxu0 0.0
    %4971 = vmatpush1.xpose.msra.mxu0 0.0
    %4972 = vmatprep.subr.mxu0 0.0
    %4973 = vmatpush1.xpose.msra.mxu0 0.0
    %4974 = vmatprep.subr.mxu0 0.0
    %4975 = vmatpush1.xpose.msra.mxu0 0.0
    %4976 = vmatprep.subr.mxu0 0.0
    %4977 = vmatpush1.xpose.msra.mxu0 0.0
    %4978 = vmatprep.subr.mxu0 0.0
    %4979 = vmatpush1.xpose.msra.mxu0 0.0
    %4980 = vmatprep.subr.mxu0 0.0
    %4981 = vmatpush1.xpose.msra.mxu0 0.0
    %4982 = vmatprep.subr.mxu0 0.0
    %4983 = vmatpush1.xpose.msra.mxu0 0.0
    %4984 = vmatprep.subr.mxu0 0.0
    %4985 = vmatpush1.xpose.msra.mxu0 0.0
    %4986 = vmatprep.subr.mxu0 0.0
    %4987 = vmatpush1.xpose.msra.mxu0 0.0
    %4988 = vmatprep.subr.mxu0 0.0
    %4989 = vmatpush1.xpose.msra.mxu0 0.0
    %4990 = vmatprep.mubr.f32.mxu0 0.0
    %4991 = vmatmul.mubr.f32.gmra.mrb[0].mxu0 %v4922
    %v4992 = vpop.f32.mrb[0].mxu0
    %v4993 = vadd.f32 %v4367, %v4992
    %v4994 = vpop.f32.mrb[0].mxu0
    %4995 = vdwg.mxu0
    %v4996 = vsel %vm369, %v4915, -inf
    %4997 = vmax.xlane.f32.xlu0 %v4996
    %v4998 = vpop.xlane.xlu0 %4997
    %v4999 = vsel %vm369, %v4993, -inf
    %5000 = vmax.xlane.f32.xlu0 %v4999
    %v5001 = vpop.xlane.xlu0 %5000
    %v5002 = vsub.f32 %v4915, %v4998
    %v5003 = vsub.f32 %v4993, %v5001
    %v5004 = vmul.f32 %v5002, 1.442695
    %v5005 = vpow.pop %v5004
    %v5006 = vmul.f32 %v5003, 1.442695
    %v5007 = vpow.pop %v5006
    %v5008 = vsel %vm369, %v5005, 0.0
    %5009 = vadd.xlane.f32.xlu0 %v5008
    %v5010 = vpop.xlane.xlu0 %5009
    %v5011 = vsel %vm369, %v5007, 0.0
    %5012 = vadd.xlane.f32.xlu0 %v5011
    %v5013 = vpop.xlane.xlu0 %5012
    %v5014 = vrcp.pop %v5010
    %v5015 = vrcp.pop %v5013
    %v5016 = vmul.f32 %v5005, %v5014
    %v5017 = vmul.f32 %v5007, %v5015
    %5018 = vrot.lane.b32.xlu0 %v4504, 56
    %v5019 = vpop.permute.xlu0 %5018
    %v5022 = vsel %vm369, %v5016, 0
    %5024 = vmatprep.subr.mxu0 0.0
    %5025 = vmatpush1.msra.mxu0 %v5019
    %5026 = vmatprep.subr.mxu0 0.0
    %5027 = vmatpush1.msra.mxu0 0.0
    %5028 = vmatprep.subr.mxu0 0.0
    %5029 = vmatpush1.msra.mxu0 0.0
    %5030 = vmatprep.subr.mxu0 0.0
    %5031 = vmatpush1.msra.mxu0 0.0
    %5032 = vmatprep.subr.mxu0 0.0
    %5033 = vmatpush1.msra.mxu0 0.0
    %5034 = vmatprep.subr.mxu0 0.0
    %5035 = vmatpush1.msra.mxu0 0.0
    %5036 = vmatprep.subr.mxu0 0.0
    %5037 = vmatpush1.msra.mxu0 0.0
    %5038 = vmatprep.subr.mxu0 0.0
    %5039 = vmatpush1.msra.mxu0 0.0
    %5040 = vmatprep.subr.mxu0 0.0
    %5041 = vmatpush1.msra.mxu0 0.0
    %5042 = vmatprep.subr.mxu0 0.0
    %5043 = vmatpush1.msra.mxu0 0.0
    %5044 = vmatprep.subr.mxu0 0.0
    %5045 = vmatpush1.msra.mxu0 0.0
    %5046 = vmatprep.subr.mxu0 0.0
    %5047 = vmatpush1.msra.mxu0 0.0
    %5048 = vmatprep.subr.mxu0 0.0
    %5049 = vmatpush1.msra.mxu0 0.0
    %5050 = vmatprep.subr.mxu0 0.0
    %5051 = vmatpush1.msra.mxu0 0.0
    %5052 = vmatprep.subr.mxu0 0.0
    %5053 = vmatpush1.msra.mxu0 0.0
    %5054 = vmatprep.subr.mxu0 0.0
    %5055 = vmatpush1.msra.mxu0 0.0
    %5056 = vmatprep.subr.mxu0 0.0
    %5057 = vmatpush1.msra.mxu0 0.0
    %5058 = vmatprep.subr.mxu0 0.0
    %5059 = vmatpush1.msra.mxu0 0.0
    %5060 = vmatprep.subr.mxu0 0.0
    %5061 = vmatpush1.msra.mxu0 0.0
    %5062 = vmatprep.subr.mxu0 0.0
    %5063 = vmatpush1.msra.mxu0 0.0
    %5064 = vmatprep.subr.mxu0 0.0
    %5065 = vmatpush1.msra.mxu0 0.0
    %5066 = vmatprep.subr.mxu0 0.0
    %5067 = vmatpush1.msra.mxu0 0.0
    %5068 = vmatprep.subr.mxu0 0.0
    %5069 = vmatpush1.msra.mxu0 0.0
    %5070 = vmatprep.subr.mxu0 0.0
    %5071 = vmatpush1.msra.mxu0 0.0
    %5072 = vmatprep.subr.mxu0 0.0
    %5073 = vmatpush1.msra.mxu0 0.0
    %5074 = vmatprep.subr.mxu0 0.0
    %5075 = vmatpush1.msra.mxu0 0.0
    %5076 = vmatprep.subr.mxu0 0.0
    %5077 = vmatpush1.msra.mxu0 0.0
    %5078 = vmatprep.subr.mxu0 0.0
    %5079 = vmatpush1.msra.mxu0 0.0
    %5080 = vmatprep.subr.mxu0 0.0
    %5081 = vmatpush1.msra.mxu0 0.0
    %5082 = vmatprep.subr.mxu0 0.0
    %5083 = vmatpush1.msra.mxu0 0.0
    %5084 = vmatprep.subr.mxu0 0.0
    %5085 = vmatpush1.msra.mxu0 0.0
    %5086 = vmatprep.subr.mxu0 0.0
    %5087 = vmatpush1.msra.mxu0 0.0
    %5088 = vmatprep.mubr.f32.mxu0 0.0
    %5089 = vmatmul.mubr.f32.gmra.mrb[0].mxu0 %v5022
    %v5090 = vpop.f32.mrb[0].mxu0
    %v5091 = vadd.f32 0.0, %v5090
    %v5092 = vpop.f32.mrb[0].mxu0
    %5093 = vdwg.mxu0
    %5094 = vrot.lane.b32.xlu0 %v4509, 56
    %v5095 = vpop.permute.xlu0 %5094
    %v5098 = vsel %vm369, %v5017, 0
    %5100 = vmatprep.subr.mxu0 0.0
    %5101 = vmatpush1.msra.mxu0 %v5095
    %5102 = vmatprep.subr.mxu0 0.0
    %5103 = vmatpush1.msra.mxu0 0.0
    %5104 = vmatprep.subr.mxu0 0.0
    %5105 = vmatpush1.msra.mxu0 0.0
    %5106 = vmatprep.subr.mxu0 0.0
    %5107 = vmatpush1.msra.mxu0 0.0
    %5108 = vmatprep.subr.mxu0 0.0
    %5109 = vmatpush1.msra.mxu0 0.0
    %5110 = vmatprep.subr.mxu0 0.0
    %5111 = vmatpush1.msra.mxu0 0.0
    %5112 = vmatprep.subr.mxu0 0.0
    %5113 = vmatpush1.msra.mxu0 0.0
    %5114 = vmatprep.subr.mxu0 0.0
    %5115 = vmatpush1.msra.mxu0 0.0
    %5116 = vmatprep.subr.mxu0 0.0
    %5117 = vmatpush1.msra.mxu0 0.0
    %5118 = vmatprep.subr.mxu0 0.0
    %5119 = vmatpush1.msra.mxu0 0.0
    %5120 = vmatprep.subr.mxu0 0.0
    %5121 = vmatpush1.msra.mxu0 0.0
    %5122 = vmatprep.subr.mxu0 0.0
    %5123 = vmatpush1.msra.mxu0 0.0
    %5124 = vmatprep.subr.mxu0 0.0
    %5125 = vmatpush1.msra.mxu0 0.0
    %5126 = vmatprep.subr.mxu0 0.0
    %5127 = vmatpush1.msra.mxu0 0.0
    %5128 = vmatprep.subr.mxu0 0.0
    %5129 = vmatpush1.msra.mxu0 0.0
    %5130 = vmatprep.subr.mxu0 0.0
    %5131 = vmatpush1.msra.mxu0 0.0
    %5132 = vmatprep.subr.mxu0 0.0
    %5133 = vmatpush1.msra.mxu0 0.0
    %5134 = vmatprep.subr.mxu0 0.0
    %5135 = vmatpush1.msra.mxu0 0.0
    %5136 = vmatprep.subr.mxu0 0.0
    %5137 = vmatpush1.msra.mxu0 0.0
    %5138 = vmatprep.subr.mxu0 0.0
    %5139 = vmatpush1.msra.mxu0 0.0
    %5140 = vmatprep.subr.mxu0 0.0
    %5141 = vmatpush1.msra.mxu0 0.0
    %5142 = vmatprep.subr.mxu0 0.0
    %5143 = vmatpush1.msra.mxu0 0.0
    %5144 = vmatprep.subr.mxu0 0.0
    %5145 = vmatpush1.msra.mxu0 0.0
    %5146 = vmatprep.subr.mxu0 0.0
    %5147 = vmatpush1.msra.mxu0 0.0
    %5148 = vmatprep.subr.mxu0 0.0
    %5149 = vmatpush1.msra.mxu0 0.0
    %5150 = vmatprep.subr.mxu0 0.0
    %5151 = vmatpush1.msra.mxu0 0.0
    %5152 = vmatprep.subr.mxu0 0.0
    %5153 = vmatpush1.msra.mxu0 0.0
    %5154 = vmatprep.subr.mxu0 0.0
    %5155 = vmatpush1.msra.mxu0 0.0
    %5156 = vmatprep.subr.mxu0 0.0
    %5157 = vmatpush1.msra.mxu0 0.0
    %5158 = vmatprep.subr.mxu0 0.0
    %5159 = vmatpush1.msra.mxu0 0.0
    %5160 = vmatprep.subr.mxu0 0.0
    %5161 = vmatpush1.msra.mxu0 0.0
    %5162 = vmatprep.subr.mxu0 0.0
    %5163 = vmatpush1.msra.mxu0 0.0
    %5164 = vmatprep.mubr.f32.mxu0 0.0
    %5165 = vmatmul.mubr.f32.gmra.mrb[0].mxu0 %v5098
    %v5166 = vpop.f32.mrb[0].mxu0
    %v5167 = vadd.f32 0.0, %v5166
    %v5168 = vpop.f32.mrb[0].mxu0
    %5169 = vdwg.mxu0
    %v5171 = vsel %vm369, %v5091, 0
    %v5174 = vsel %vm369, %v5167, 0
    %5176 = vmatprep.subr.mxu0 0.0
    %5177 = vmatpush1.msra.mxu0 %v4373
    %5178 = vmatprep.subr.mxu0 0.0
    %5179 = vmatpush1.msra.mxu0 0.0
    %5180 = vmatprep.subr.mxu0 0.0
    %5181 = vmatpush1.msra.mxu0 0.0
    %5182 = vmatprep.subr.mxu0 0.0
    %5183 = vmatpush1.msra.mxu0 0.0
    %5184 = vmatprep.subr.mxu0 0.0
    %5185 = vmatpush1.msra.mxu0 0.0
    %5186 = vmatprep.subr.mxu0 0.0
    %5187 = vmatpush1.msra.mxu0 0.0
    %5188 = vmatprep.subr.mxu0 0.0
    %5189 = vmatpush1.msra.mxu0 0.0
    %5190 = vmatprep.subr.mxu0 0.0
    %5191 = vmatpush1.msra.mxu0 0.0
    %5192 = vmatprep.subr.mxu0 0.0
    %5193 = vmatpush1.msra.mxu0 0.0
    %5194 = vmatprep.subr.mxu0 0.0
    %5195 = vmatpush1.msra.mxu0 0.0
    %5196 = vmatprep.subr.mxu0 0.0
    %5197 = vmatpush1.msra.mxu0 0.0
    %5198 = vmatprep.subr.mxu0 0.0
    %5199 = vmatpush1.msra.mxu0 0.0
    %5200 = vmatprep.subr.mxu0 0.0
    %5201 = vmatpush1.msra.mxu0 0.0
    %5202 = vmatprep.subr.mxu0 0.0
    %5203 = vmatpush1.msra.mxu0 0.0
    %5204 = vmatprep.subr.mxu0 0.0
    %5205 = vmatpush1.msra.mxu0 0.0
    %5206 = vmatprep.subr.mxu0 0.0
    %5207 = vmatpush1.msra.mxu0 0.0
    %5208 = vmatprep.subr.mxu0 0.0
    %5209 = vmatpush1.msra.mxu0 0.0
    %5210 = vmatprep.subr.mxu0 0.0
    %5211 = vmatpush1.msra.mxu0 0.0
    %5212 = vmatprep.subr.mxu0 0.0
    %5213 = vmatpush1.msra.mxu0 0.0
    %5214 = vmatprep.subr.mxu0 0.0
    %5215 = vmatpush1.msra.mxu0 0.0
    %5216 = vmatprep.subr.mxu0 0.0
    %5217 = vmatpush1.msra.mxu0 0.0
    %5218 = vmatprep.subr.mxu0 0.0
    %5219 = vmatpush1.msra.mxu0 0.0
    %5220 = vmatprep.subr.mxu0 0.0
    %5221 = vmatpush1.msra.mxu0 0.0
    %5222 = vmatprep.subr.mxu0 0.0
    %5223 = vmatpush1.msra.mxu0 0.0
    %5224 = vmatprep.subr.mxu0 0.0
    %5225 = vmatpush1.msra.mxu0 0.0
    %5226 = vmatprep.subr.mxu0 0.0
    %5227 = vmatpush1.msra.mxu0 0.0
    %5228 = vmatprep.subr.mxu0 0.0
    %5229 = vmatpush1.msra.mxu0 0.0
    %5230 = vmatprep.subr.mxu0 0.0
    %5231 = vmatpush1.msra.mxu0 0.0
    %5232 = vmatprep.subr.mxu0 0.0
    %5233 = vmatpush1.msra.mxu0 0.0
    %5234 = vmatprep.subr.mxu0 0.0
    %5235 = vmatpush1.msra.mxu0 0.0
    %5236 = vmatprep.subr.mxu0 0.0
    %5237 = vmatpush1.msra.mxu0 0.0
    %5238 = vmatprep.subr.mxu0 0.0
    %5239 = vmatpush1.msra.mxu0 0.0
    %5240 = vmatprep.mubr.f32.mxu0 0.0
    %5241 = vmatmul.mubr.f32.gmra.mrb[0].mxu0 %v5171
    %v5242 = vpop.f32.mrb[0].mxu0
    %v5243 = vadd.f32 0.0, %v5242
    %v5244 = vpop.f32.mrb[0].mxu0
    %5245 = vmatprep.mubr.f32.mxu0 0.0
    %5246 = vmatmul.mubr.f32.gmra.mrb[0].mxu0 %v5174
    %v5247 = vpop.f32.mrb[0].mxu0
    %v5248 = vadd.f32 0.0, %v5247
    %v5249 = vpop.f32.mrb[0].mxu0
    %5250 = vdwg.mxu0
    %v5252 = vsel %vm369, %v4761, 0
    %v5255 = vsel %vm369, %v4837, 0
    %5257 = vmatprep.subr.mxu0 0.0
    %5258 = vmatpush1.msra.mxu0 %v4372
    %5259 = vmatprep.subr.mxu0 0.0
    %5260 = vmatpush1.msra.mxu0 0.0
    %5261 = vmatprep.subr.mxu0 0.0
    %5262 = vmatpush1.msra.mxu0 0.0
    %5263 = vmatprep.subr.mxu0 0.0
    %5264 = vmatpush1.msra.mxu0 0.0
    %5265 = vmatprep.subr.mxu0 0.0
    %5266 = vmatpush1.msra.mxu0 0.0
    %5267 = vmatprep.subr.mxu0 0.0
    %5268 = vmatpush1.msra.mxu0 0.0
    %5269 = vmatprep.subr.mxu0 0.0
    %5270 = vmatpush1.msra.mxu0 0.0
    %5271 = vmatprep.subr.mxu0 0.0
    %5272 = vmatpush1.msra.mxu0 0.0
    %5273 = vmatprep.subr.mxu0 0.0
    %5274 = vmatpush1.msra.mxu0 0.0
    %5275 = vmatprep.subr.mxu0 0.0
    %5276 = vmatpush1.msra.mxu0 0.0
    %5277 = vmatprep.subr.mxu0 0.0
    %5278 = vmatpush1.msra.mxu0 0.0
    %5279 = vmatprep.subr.mxu0 0.0
    %5280 = vmatpush1.msra.mxu0 0.0
    %5281 = vmatprep.subr.mxu0 0.0
    %5282 = vmatpush1.msra.mxu0 0.0
    %5283 = vmatprep.subr.mxu0 0.0
    %5284 = vmatpush1.msra.mxu0 0.0
    %5285 = vmatprep.subr.mxu0 0.0
    %5286 = vmatpush1.msra.mxu0 0.0
    %5287 = vmatprep.subr.mxu0 0.0
    %5288 = vmatpush1.msra.mxu0 0.0
    %5289 = vmatprep.subr.mxu0 0.0
    %5290 = vmatpush1.msra.mxu0 0.0
    %5291 = vmatprep.subr.mxu0 0.0
    %5292 = vmatpush1.msra.mxu0 0.0
    %5293 = vmatprep.subr.mxu0 0.0
    %5294 = vmatpush1.msra.mxu0 0.0
    %5295 = vmatprep.subr.mxu0 0.0
    %5296 = vmatpush1.msra.mxu0 0.0
    %5297 = vmatprep.subr.mxu0 0.0
    %5298 = vmatpush1.msra.mxu0 0.0
    %5299 = vmatprep.subr.mxu0 0.0
    %5300 = vmatpush1.msra.mxu0 0.0
    %5301 = vmatprep.subr.mxu0 0.0
    %5302 = vmatpush1.msra.mxu0 0.0
    %5303 = vmatprep.subr.mxu0 0.0
    %5304 = vmatpush1.msra.mxu0 0.0
    %5305 = vmatprep.subr.mxu0 0.0
    %5306 = vmatpush1.msra.mxu0 0.0
    %5307 = vmatprep.subr.mxu0 0.0
    %5308 = vmatpush1.msra.mxu0 0.0
    %5309 = vmatprep.subr.mxu0 0.0
    %5310 = vmatpush1.msra.mxu0 0.0
    %5311 = vmatprep.subr.mxu0 0.0
    %5312 = vmatpush1.msra.mxu0 0.0
    %5313 = vmatprep.subr.mxu0 0.0
    %5314 = vmatpush1.msra.mxu0 0.0
    %5315 = vmatprep.subr.mxu0 0.0
    %5316 = vmatpush1.msra.mxu0 0.0
    %5317 = vmatprep.subr.mxu0 0.0
    %5318 = vmatpush1.msra.mxu0 0.0
    %5319 = vmatprep.subr.mxu0 0.0
    %5320 = vmatpush1.msra.mxu0 0.0
    %5321 = vmatprep.mubr.f32.mxu0 0.0
    %5322 = vmatmul.mubr.f32.gmra.mrb[0].mxu0 %v5252
    %v5323 = vpop.f32.mrb[0].mxu0
    %v5324 = vadd.f32 %v5243, %v5323
    %v5325 = vpop.f32.mrb[0].mxu0
    %5326 = vmatprep.mubr.f32.mxu0 0.0
    %5327 = vmatmul.mubr.f32.gmra.mrb[0].mxu0 %v5255
    %v5328 = vpop.f32.mrb[0].mxu0
    %v5329 = vadd.f32 %v5248, %v5328
    %v5330 = vpop.f32.mrb[0].mxu0
    %5331 = vdwg.mxu0
    %5332 = vrot.lane.b32.xlu0 %v4504, 112
    %v5333 = vpop.permute.xlu0 %5332
    %5334 = vrot.lane.b32.xlu0 %v4504, 80
    %v5335 = vpop.permute.xlu0 %5334
    %v5336 = vsel %vm369, %v5333, 0
    %v5338 = vsel %vm369, %v5335, 0
    %5340 = vmatprep.subr.mxu0 0.0
    %5341 = vmatpush1.xpose.msra.mxu0 %v5338
    %5342 = vmatprep.subr.mxu0 0.0
    %5343 = vmatpush1.xpose.msra.mxu0 0.0
    %5344 = vmatprep.subr.mxu0 0.0
    %5345 = vmatpush1.xpose.msra.mxu0 0.0
    %5346 = vmatprep.subr.mxu0 0.0
    %5347 = vmatpush1.xpose.msra.mxu0 0.0
    %5348 = vmatprep.subr.mxu0 0.0
    %5349 = vmatpush1.xpose.msra.mxu0 0.0
    %5350 = vmatprep.subr.mxu0 0.0
    %5351 = vmatpush1.xpose.msra.mxu0 0.0
    %5352 = vmatprep.subr.mxu0 0.0
    %5353 = vmatpush1.xpose.msra.mxu0 0.0
    %5354 = vmatprep.subr.mxu0 0.0
    %5355 = vmatpush1.xpose.msra.mxu0 0.0
    %5356 = vmatprep.subr.mxu0 0.0
    %5357 = vmatpush1.xpose.msra.mxu0 0.0
    %5358 = vmatprep.subr.mxu0 0.0
    %5359 = vmatpush1.xpose.msra.mxu0 0.0
    %5360 = vmatprep.subr.mxu0 0.0
    %5361 = vmatpush1.xpose.msra.mxu0 0.0
    %5362 = vmatprep.subr.mxu0 0.0
    %5363 = vmatpush1.xpose.msra.mxu0 0.0
    %5364 = vmatprep.subr.mxu0 0.0
    %5365 = vmatpush1.xpose.msra.mxu0 0.0
    %5366 = vmatprep.subr.mxu0 0.0
    %5367 = vmatpush1.xpose.msra.mxu0 0.0
    %5368 = vmatprep.subr.mxu0 0.0
    %5369 = vmatpush1.xpose.msra.mxu0 0.0
    %5370 = vmatprep.subr.mxu0 0.0
    %5371 = vmatpush1.xpose.msra.mxu0 0.0
    %5372 = vmatprep.subr.mxu0 0.0
    %5373 = vmatpush1.xpose.msra.mxu0 0.0
    %5374 = vmatprep.subr.mxu0 0.0
    %5375 = vmatpush1.xpose.msra.mxu0 0.0
    %5376 = vmatprep.subr.mxu0 0.0
    %5377 = vmatpush1.xpose.msra.mxu0 0.0
    %5378 = vmatprep.subr.mxu0 0.0
    %5379 = vmatpush1.xpose.msra.mxu0 0.0
    %5380 = vmatprep.subr.mxu0 0.0
    %5381 = vmatpush1.xpose.msra.mxu0 0.0
    %5382 = vmatprep.subr.mxu0 0.0
    %5383 = vmatpush1.xpose.msra.mxu0 0.0
    %5384 = vmatprep.subr.mxu0 0.0
    %5385 = vmatpush1.xpose.msra.mxu0 0.0
    %5386 = vmatprep.subr.mxu0 0.0
    %5387 = vmatpush1.xpose.msra.mxu0 0.0
    %5388 = vmatprep.subr.mxu0 0.0
    %5389 = vmatpush1.xpose.msra.mxu0 0.0
    %5390 = vmatprep.subr.mxu0 0.0
    %5391 = vmatpush1.xpose.msra.mxu0 0.0
    %5392 = vmatprep.subr.mxu0 0.0
    %5393 = vmatpush1.xpose.msra.mxu0 0.0
    %5394 = vmatprep.subr.mxu0 0.0
    %5395 = vmatpush1.xpose.msra.mxu0 0.0
    %5396 = vmatprep.subr.mxu0 0.0
    %5397 = vmatpush1.xpose.msra.mxu0 0.0
    %5398 = vmatprep.subr.mxu0 0.0
    %5399 = vmatpush1.xpose.msra.mxu0 0.0
    %5400 = vmatprep.subr.mxu0 0.0
    %5401 = vmatpush1.xpose.msra.mxu0 0.0
    %5402 = vmatprep.subr.mxu0 0.0
    %5403 = vmatpush1.xpose.msra.mxu0 0.0
    %5404 = vmatprep.mubr.f32.mxu0 0.0
    %5405 = vmatmul.mubr.f32.gmra.mrb[0].mxu0 %v5336
    %v5406 = vpop.f32.mrb[0].mxu0
    %v5407 = vadd.f32 %v4366, %v5406
    %v5408 = vpop.f32.mrb[0].mxu0
    %5409 = vdwg.mxu0
    %5410 = vrot.lane.b32.xlu0 %v4509, 112
    %v5411 = vpop.permute.xlu0 %5410
    %5412 = vrot.lane.b32.xlu0 %v4509, 80
    %v5413 = vpop.permute.xlu0 %5412
    %v5414 = vsel %vm369, %v5411, 0
    %v5416 = vsel %vm369, %v5413, 0
    %5418 = vmatprep.subr.mxu0 0.0
    %5419 = vmatpush1.xpose.msra.mxu0 %v5416
    %5420 = vmatprep.subr.mxu0 0.0
    %5421 = vmatpush1.xpose.msra.mxu0 0.0
    %5422 = vmatprep.subr.mxu0 0.0
    %5423 = vmatpush1.xpose.msra.mxu0 0.0
    %5424 = vmatprep.subr.mxu0 0.0
    %5425 = vmatpush1.xpose.msra.mxu0 0.0
    %5426 = vmatprep.subr.mxu0 0.0
    %5427 = vmatpush1.xpose.msra.mxu0 0.0
    %5428 = vmatprep.subr.mxu0 0.0
    %5429 = vmatpush1.xpose.msra.mxu0 0.0
    %5430 = vmatprep.subr.mxu0 0.0
    %5431 = vmatpush1.xpose.msra.mxu0 0.0
    %5432 = vmatprep.subr.mxu0 0.0
    %5433 = vmatpush1.xpose.msra.mxu0 0.0
    %5434 = vmatprep.subr.mxu0 0.0
    %5435 = vmatpush1.xpose.msra.mxu0 0.0
    %5436 = vmatprep.subr.mxu0 0.0
    %5437 = vmatpush1.xpose.msra.mxu0 0.0
    %5438 = vmatprep.subr.mxu0 0.0
    %5439 = vmatpush1.xpose.msra.mxu0 0.0
    %5440 = vmatprep.subr.mxu0 0.0
    %5441 = vmatpush1.xpose.msra.mxu0 0.0
    %5442 = vmatprep.subr.mxu0 0.0
    %5443 = vmatpush1.xpose.msra.mxu0 0.0
    %5444 = vmatprep.subr.mxu0 0.0
    %5445 = vmatpush1.xpose.msra.mxu0 0.0
    %5446 = vmatprep.subr.mxu0 0.0
    %5447 = vmatpush1.xpose.msra.mxu0 0.0
    %5448 = vmatprep.subr.mxu0 0.0
    %5449 = vmatpush1.xpose.msra.mxu0 0.0
    %5450 = vmatprep.subr.mxu0 0.0
    %5451 = vmatpush1.xpose.msra.mxu0 0.0
    %5452 = vmatprep.subr.mxu0 0.0
    %5453 = vmatpush1.xpose.msra.mxu0 0.0
    %5454 = vmatprep.subr.mxu0 0.0
    %5455 = vmatpush1.xpose.msra.mxu0 0.0
    %5456 = vmatprep.subr.mxu0 0.0
    %5457 = vmatpush1.xpose.msra.mxu0 0.0
    %5458 = vmatprep.subr.mxu0 0.0
    %5459 = vmatpush1.xpose.msra.mxu0 0.0
    %5460 = vmatprep.subr.mxu0 0.0
    %5461 = vmatpush1.xpose.msra.mxu0 0.0
    %5462 = vmatprep.subr.mxu0 0.0
    %5463 = vmatpush1.xpose.msra.mxu0 0.0
    %5464 = vmatprep.subr.mxu0 0.0
    %5465 = vmatpush1.xpose.msra.mxu0 0.0
    %5466 = vmatprep.subr.mxu0 0.0
    %5467 = vmatpush1.xpose.msra.mxu0 0.0
    %5468 = vmatprep.subr.mxu0 0.0
    %5469 = vmatpush1.xpose.msra.mxu0 0.0
    %5470 = vmatprep.subr.mxu0 0.0
    %5471 = vmatpush1.xpose.msra.mxu0 0.0
    %5472 = vmatprep.subr.mxu0 0.0
    %5473 = vmatpush1.xpose.msra.mxu0 0.0
    %5474 = vmatprep.subr.mxu0 0.0
    %5475 = vmatpush1.xpose.msra.mxu0 0.0
    %5476 = vmatprep.subr.mxu0 0.0
    %5477 = vmatpush1.xpose.msra.mxu0 0.0
    %5478 = vmatprep.subr.mxu0 0.0
    %5479 = vmatpush1.xpose.msra.mxu0 0.0
    %5480 = vmatprep.subr.mxu0 0.0
    %5481 = vmatpush1.xpose.msra.mxu0 0.0
    %5482 = vmatprep.mubr.f32.mxu0 0.0
    %5483 = vmatmul.mubr.f32.gmra.mrb[0].mxu0 %v5414
    %v5484 = vpop.f32.mrb[0].mxu0
    %v5485 = vadd.f32 %v4367, %v5484
    %v5486 = vpop.f32.mrb[0].mxu0
    %5487 = vdwg.mxu0
    %v5488 = vsel %vm369, %v5407, -inf
    %5489 = vmax.xlane.f32.xlu0 %v5488
    %v5490 = vpop.xlane.xlu0 %5489
    %v5491 = vsel %vm369, %v5485, -inf
    %5492 = vmax.xlane.f32.xlu0 %v5491
    %v5493 = vpop.xlane.xlu0 %5492
    %v5494 = vsub.f32 %v5407, %v5490
    %v5495 = vsub.f32 %v5485, %v5493
    %v5496 = vmul.f32 %v5494, 1.442695
    %v5497 = vpow.pop %v5496
    %v5498 = vmul.f32 %v5495, 1.442695
    %v5499 = vpow.pop %v5498
    %v5500 = vsel %vm369, %v5497, 0.0
    %5501 = vadd.xlane.f32.xlu0 %v5500
    %v5502 = vpop.xlane.xlu0 %5501
    %v5503 = vsel %vm369, %v5499, 0.0
    %5504 = vadd.xlane.f32.xlu0 %v5503
    %v5505 = vpop.xlane.xlu0 %5504
    %v5506 = vrcp.pop %v5502
    %v5507 = vrcp.pop %v5505
    %v5508 = vmul.f32 %v5497, %v5506
    %v5509 = vmul.f32 %v5499, %v5507
    %5510 = vrot.lane.b32.xlu0 %v4504, 48
    %v5511 = vpop.permute.xlu0 %5510
    %v5514 = vsel %vm369, %v5508, 0
    %5516 = vmatprep.subr.mxu0 0.0
    %5517 = vmatpush1.msra.mxu0 %v5511
    %5518 = vmatprep.subr.mxu0 0.0
    %5519 = vmatpush1.msra.mxu0 0.0
    %5520 = vmatprep.subr.mxu0 0.0
    %5521 = vmatpush1.msra.mxu0 0.0
    %5522 = vmatprep.subr.mxu0 0.0
    %5523 = vmatpush1.msra.mxu0 0.0
    %5524 = vmatprep.subr.mxu0 0.0
    %5525 = vmatpush1.msra.mxu0 0.0
    %5526 = vmatprep.subr.mxu0 0.0
    %5527 = vmatpush1.msra.mxu0 0.0
    %5528 = vmatprep.subr.mxu0 0.0
    %5529 = vmatpush1.msra.mxu0 0.0
    %5530 = vmatprep.subr.mxu0 0.0
    %5531 = vmatpush1.msra.mxu0 0.0
    %5532 = vmatprep.subr.mxu0 0.0
    %5533 = vmatpush1.msra.mxu0 0.0
    %5534 = vmatprep.subr.mxu0 0.0
    %5535 = vmatpush1.msra.mxu0 0.0
    %5536 = vmatprep.subr.mxu0 0.0
    %5537 = vmatpush1.msra.mxu0 0.0
    %5538 = vmatprep.subr.mxu0 0.0
    %5539 = vmatpush1.msra.mxu0 0.0
    %5540 = vmatprep.subr.mxu0 0.0
    %5541 = vmatpush1.msra.mxu0 0.0
    %5542 = vmatprep.subr.mxu0 0.0
    %5543 = vmatpush1.msra.mxu0 0.0
    %5544 = vmatprep.subr.mxu0 0.0
    %5545 = vmatpush1.msra.mxu0 0.0
    %5546 = vmatprep.subr.mxu0 0.0
    %5547 = vmatpush1.msra.mxu0 0.0
    %5548 = vmatprep.subr.mxu0 0.0
    %5549 = vmatpush1.msra.mxu0 0.0
    %5550 = vmatprep.subr.mxu0 0.0
    %5551 = vmatpush1.msra.mxu0 0.0
    %5552 = vmatprep.subr.mxu0 0.0
    %5553 = vmatpush1.msra.mxu0 0.0
    %5554 = vmatprep.subr.mxu0 0.0
    %5555 = vmatpush1.msra.mxu0 0.0
    %5556 = vmatprep.subr.mxu0 0.0
    %5557 = vmatpush1.msra.mxu0 0.0
    %5558 = vmatprep.subr.mxu0 0.0
    %5559 = vmatpush1.msra.mxu0 0.0
    %5560 = vmatprep.subr.mxu0 0.0
    %5561 = vmatpush1.msra.mxu0 0.0
    %5562 = vmatprep.subr.mxu0 0.0
    %5563 = vmatpush1.msra.mxu0 0.0
    %5564 = vmatprep.subr.mxu0 0.0
    %5565 = vmatpush1.msra.mxu0 0.0
    %5566 = vmatprep.subr.mxu0 0.0
    %5567 = vmatpush1.msra.mxu0 0.0
    %5568 = vmatprep.subr.mxu0 0.0
    %5569 = vmatpush1.msra.mxu0 0.0
    %5570 = vmatprep.subr.mxu0 0.0
    %5571 = vmatpush1.msra.mxu0 0.0
    %5572 = vmatprep.subr.mxu0 0.0
    %5573 = vmatpush1.msra.mxu0 0.0
    %5574 = vmatprep.subr.mxu0 0.0
    %5575 = vmatpush1.msra.mxu0 0.0
    %5576 = vmatprep.subr.mxu0 0.0
    %5577 = vmatpush1.msra.mxu0 0.0
    %5578 = vmatprep.subr.mxu0 0.0
    %5579 = vmatpush1.msra.mxu0 0.0
    %5580 = vmatprep.mubr.f32.mxu0 0.0
    %5581 = vmatmul.mubr.f32.gmra.mrb[0].mxu0 %v5514
    %v5582 = vpop.f32.mrb[0].mxu0
    %v5583 = vadd.f32 0.0, %v5582
    %v5584 = vpop.f32.mrb[0].mxu0
    %5585 = vdwg.mxu0
    %5586 = vrot.lane.b32.xlu0 %v4509, 48
    %v5587 = vpop.permute.xlu0 %5586
    %v5590 = vsel %vm369, %v5509, 0
    %5592 = vmatprep.subr.mxu0 0.0
    %5593 = vmatpush1.msra.mxu0 %v5587
    %5594 = vmatprep.subr.mxu0 0.0
    %5595 = vmatpush1.msra.mxu0 0.0
    %5596 = vmatprep.subr.mxu0 0.0
    %5597 = vmatpush1.msra.mxu0 0.0
    %5598 = vmatprep.subr.mxu0 0.0
    %5599 = vmatpush1.msra.mxu0 0.0
    %5600 = vmatprep.subr.mxu0 0.0
    %5601 = vmatpush1.msra.mxu0 0.0
    %5602 = vmatprep.subr.mxu0 0.0
    %5603 = vmatpush1.msra.mxu0 0.0
    %5604 = vmatprep.subr.mxu0 0.0
    %5605 = vmatpush1.msra.mxu0 0.0
    %5606 = vmatprep.subr.mxu0 0.0
    %5607 = vmatpush1.msra.mxu0 0.0
    %5608 = vmatprep.subr.mxu0 0.0
    %5609 = vmatpush1.msra.mxu0 0.0
    %5610 = vmatprep.subr.mxu0 0.0
    %5611 = vmatpush1.msra.mxu0 0.0
    %5612 = vmatprep.subr.mxu0 0.0
    %5613 = vmatpush1.msra.mxu0 0.0
    %5614 = vmatprep.subr.mxu0 0.0
    %5615 = vmatpush1.msra.mxu0 0.0
    %5616 = vmatprep.subr.mxu0 0.0
    %5617 = vmatpush1.msra.mxu0 0.0
    %5618 = vmatprep.subr.mxu0 0.0
    %5619 = vmatpush1.msra.mxu0 0.0
    %5620 = vmatprep.subr.mxu0 0.0
    %5621 = vmatpush1.msra.mxu0 0.0
    %5622 = vmatprep.subr.mxu0 0.0
    %5623 = vmatpush1.msra.mxu0 0.0
    %5624 = vmatprep.subr.mxu0 0.0
    %5625 = vmatpush1.msra.mxu0 0.0
    %5626 = vmatprep.subr.mxu0 0.0
    %5627 = vmatpush1.msra.mxu0 0.0
    %5628 = vmatprep.subr.mxu0 0.0
    %5629 = vmatpush1.msra.mxu0 0.0
    %5630 = vmatprep.subr.mxu0 0.0
    %5631 = vmatpush1.msra.mxu0 0.0
    %5632 = vmatprep.subr.mxu0 0.0
    %5633 = vmatpush1.msra.mxu0 0.0
    %5634 = vmatprep.subr.mxu0 0.0
    %5635 = vmatpush1.msra.mxu0 0.0
    %5636 = vmatprep.subr.mxu0 0.0
    %5637 = vmatpush1.msra.mxu0 0.0
    %5638 = vmatprep.subr.mxu0 0.0
    %5639 = vmatpush1.msra.mxu0 0.0
    %5640 = vmatprep.subr.mxu0 0.0
    %5641 = vmatpush1.msra.mxu0 0.0
    %5642 = vmatprep.subr.mxu0 0.0
    %5643 = vmatpush1.msra.mxu0 0.0
    %5644 = vmatprep.subr.mxu0 0.0
    %5645 = vmatpush1.msra.mxu0 0.0
    %5646 = vmatprep.subr.mxu0 0.0
    %5647 = vmatpush1.msra.mxu0 0.0
    %5648 = vmatprep.subr.mxu0 0.0
    %5649 = vmatpush1.msra.mxu0 0.0
    %5650 = vmatprep.subr.mxu0 0.0
    %5651 = vmatpush1.msra.mxu0 0.0
    %5652 = vmatprep.subr.mxu0 0.0
    %5653 = vmatpush1.msra.mxu0 0.0
    %5654 = vmatprep.subr.mxu0 0.0
    %5655 = vmatpush1.msra.mxu0 0.0
    %5656 = vmatprep.mubr.f32.mxu0 0.0
    %5657 = vmatmul.mubr.f32.gmra.mrb[0].mxu0 %v5590
    %v5658 = vpop.f32.mrb[0].mxu0
    %v5659 = vadd.f32 0.0, %v5658
    %v5660 = vpop.f32.mrb[0].mxu0
    %5661 = vdwg.mxu0
    %v5663 = vsel %vm369, %v5583, 0
    %v5666 = vsel %vm369, %v5659, 0
    %5668 = vmatprep.subr.mxu0 0.0
    %5669 = vmatpush1.msra.mxu0 %v4374
    %5670 = vmatprep.subr.mxu0 0.0
    %5671 = vmatpush1.msra.mxu0 0.0
    %5672 = vmatprep.subr.mxu0 0.0
    %5673 = vmatpush1.msra.mxu0 0.0
    %5674 = vmatprep.subr.mxu0 0.0
    %5675 = vmatpush1.msra.mxu0 0.0
    %5676 = vmatprep.subr.mxu0 0.0
    %5677 = vmatpush1.msra.mxu0 0.0
    %5678 = vmatprep.subr.mxu0 0.0
    %5679 = vmatpush1.msra.mxu0 0.0
    %5680 = vmatprep.subr.mxu0 0.0
    %5681 = vmatpush1.msra.mxu0 0.0
    %5682 = vmatprep.subr.mxu0 0.0
    %5683 = vmatpush1.msra.mxu0 0.0
    %5684 = vmatprep.subr.mxu0 0.0
    %5685 = vmatpush1.msra.mxu0 0.0
    %5686 = vmatprep.subr.mxu0 0.0
    %5687 = vmatpush1.msra.mxu0 0.0
    %5688 = vmatprep.subr.mxu0 0.0
    %5689 = vmatpush1.msra.mxu0 0.0
    %5690 = vmatprep.subr.mxu0 0.0
    %5691 = vmatpush1.msra.mxu0 0.0
    %5692 = vmatprep.subr.mxu0 0.0
    %5693 = vmatpush1.msra.mxu0 0.0
    %5694 = vmatprep.subr.mxu0 0.0
    %5695 = vmatpush1.msra.mxu0 0.0
    %5696 = vmatprep.subr.mxu0 0.0
    %5697 = vmatpush1.msra.mxu0 0.0
    %5698 = vmatprep.subr.mxu0 0.0
    %5699 = vmatpush1.msra.mxu0 0.0
    %5700 = vmatprep.subr.mxu0 0.0
    %5701 = vmatpush1.msra.mxu0 0.0
    %5702 = vmatprep.subr.mxu0 0.0
    %5703 = vmatpush1.msra.mxu0 0.0
    %5704 = vmatprep.subr.mxu0 0.0
    %5705 = vmatpush1.msra.mxu0 0.0
    %5706 = vmatprep.subr.mxu0 0.0
    %5707 = vmatpush1.msra.mxu0 0.0
    %5708 = vmatprep.subr.mxu0 0.0
    %5709 = vmatpush1.msra.mxu0 0.0
    %5710 = vmatprep.subr.mxu0 0.0
    %5711 = vmatpush1.msra.mxu0 0.0
    %5712 = vmatprep.subr.mxu0 0.0
    %5713 = vmatpush1.msra.mxu0 0.0
    %5714 = vmatprep.subr.mxu0 0.0
    %5715 = vmatpush1.msra.mxu0 0.0
    %5716 = vmatprep.subr.mxu0 0.0
    %5717 = vmatpush1.msra.mxu0 0.0
    %5718 = vmatprep.subr.mxu0 0.0
    %5719 = vmatpush1.msra.mxu0 0.0
    %5720 = vmatprep.subr.mxu0 0.0
    %5721 = vmatpush1.msra.mxu0 0.0
    %5722 = vmatprep.subr.mxu0 0.0
    %5723 = vmatpush1.msra.mxu0 0.0
    %5724 = vmatprep.subr.mxu0 0.0
    %5725 = vmatpush1.msra.mxu0 0.0
    %5726 = vmatprep.subr.mxu0 0.0
    %5727 = vmatpush1.msra.mxu0 0.0
    %5728 = vmatprep.subr.mxu0 0.0
    %5729 = vmatpush1.msra.mxu0 0.0
    %5730 = vmatprep.subr.mxu0 0.0
    %5731 = vmatpush1.msra.mxu0 0.0
    %5732 = vmatprep.mubr.f32.mxu0 0.0
    %5733 = vmatmul.mubr.f32.gmra.mrb[0].mxu0 %v5663
    %v5734 = vpop.f32.mrb[0].mxu0
    %v5735 = vadd.f32 0.0, %v5734
    %v5736 = vpop.f32.mrb[0].mxu0
    %5737 = vmatprep.mubr.f32.mxu0 0.0
    %5738 = vmatmul.mubr.f32.gmra.mrb[0].mxu0 %v5666
    %v5739 = vpop.f32.mrb[0].mxu0
    %v5740 = vadd.f32 0.0, %v5739
    %v5741 = vpop.f32.mrb[0].mxu0
    %5742 = vdwg.mxu0
    %v5743 = vadd.f32 %v5324, %v5735
    %v5744 = vadd.f32 %v5329, %v5740
    %5745 = vrot.lane.b32.xlu0 %v4504, 104
    %v5746 = vpop.permute.xlu0 %5745
    %5747 = vrot.lane.b32.xlu0 %v4504, 72
    %v5748 = vpop.permute.xlu0 %5747
    %v5749 = vsel %vm369, %v5746, 0
    %v5751 = vsel %vm369, %v5748, 0
    %5753 = vmatprep.subr.mxu0 0.0
    %5754 = vmatpush1.xpose.msra.mxu0 %v5751
    %5755 = vmatprep.subr.mxu0 0.0
    %5756 = vmatpush1.xpose.msra.mxu0 0.0
    %5757 = vmatprep.subr.mxu0 0.0
    %5758 = vmatpush1.xpose.msra.mxu0 0.0
    %5759 = vmatprep.subr.mxu0 0.0
    %5760 = vmatpush1.xpose.msra.mxu0 0.0
    %5761 = vmatprep.subr.mxu0 0.0
    %5762 = vmatpush1.xpose.msra.mxu0 0.0
    %5763 = vmatprep.subr.mxu0 0.0
    %5764 = vmatpush1.xpose.msra.mxu0 0.0
    %5765 = vmatprep.subr.mxu0 0.0
    %5766 = vmatpush1.xpose.msra.mxu0 0.0
    %5767 = vmatprep.subr.mxu0 0.0
    %5768 = vmatpush1.xpose.msra.mxu0 0.0
    %5769 = vmatprep.subr.mxu0 0.0
    %5770 = vmatpush1.xpose.msra.mxu0 0.0
    %5771 = vmatprep.subr.mxu0 0.0
    %5772 = vmatpush1.xpose.msra.mxu0 0.0
    %5773 = vmatprep.subr.mxu0 0.0
    %5774 = vmatpush1.xpose.msra.mxu0 0.0
    %5775 = vmatprep.subr.mxu0 0.0
    %5776 = vmatpush1.xpose.msra.mxu0 0.0
    %5777 = vmatprep.subr.mxu0 0.0
    %5778 = vmatpush1.xpose.msra.mxu0 0.0
    %5779 = vmatprep.subr.mxu0 0.0
    %5780 = vmatpush1.xpose.msra.mxu0 0.0
    %5781 = vmatprep.subr.mxu0 0.0
    %5782 = vmatpush1.xpose.msra.mxu0 0.0
    %5783 = vmatprep.subr.mxu0 0.0
    %5784 = vmatpush1.xpose.msra.mxu0 0.0
    %5785 = vmatprep.subr.mxu0 0.0
    %5786 = vmatpush1.xpose.msra.mxu0 0.0
    %5787 = vmatprep.subr.mxu0 0.0
    %5788 = vmatpush1.xpose.msra.mxu0 0.0
    %5789 = vmatprep.subr.mxu0 0.0
    %5790 = vmatpush1.xpose.msra.mxu0 0.0
    %5791 = vmatprep.subr.mxu0 0.0
    %5792 = vmatpush1.xpose.msra.mxu0 0.0
    %5793 = vmatprep.subr.mxu0 0.0
    %5794 = vmatpush1.xpose.msra.mxu0 0.0
    %5795 = vmatprep.subr.mxu0 0.0
    %5796 = vmatpush1.xpose.msra.mxu0 0.0
    %5797 = vmatprep.subr.mxu0 0.0
    %5798 = vmatpush1.xpose.msra.mxu0 0.0
    %5799 = vmatprep.subr.mxu0 0.0
    %5800 = vmatpush1.xpose.msra.mxu0 0.0
    %5801 = vmatprep.subr.mxu0 0.0
    %5802 = vmatpush1.xpose.msra.mxu0 0.0
    %5803 = vmatprep.subr.mxu0 0.0
    %5804 = vmatpush1.xpose.msra.mxu0 0.0
    %5805 = vmatprep.subr.mxu0 0.0
    %5806 = vmatpush1.xpose.msra.mxu0 0.0
    %5807 = vmatprep.subr.mxu0 0.0
    %5808 = vmatpush1.xpose.msra.mxu0 0.0
    %5809 = vmatprep.subr.mxu0 0.0
    %5810 = vmatpush1.xpose.msra.mxu0 0.0
    %5811 = vmatprep.subr.mxu0 0.0
    %5812 = vmatpush1.xpose.msra.mxu0 0.0
    %5813 = vmatprep.subr.mxu0 0.0
    %5814 = vmatpush1.xpose.msra.mxu0 0.0
    %5815 = vmatprep.subr.mxu0 0.0
    %5816 = vmatpush1.xpose.msra.mxu0 0.0
    %5817 = vmatprep.mubr.f32.mxu0 0.0
    %5818 = vmatmul.mubr.f32.gmra.mrb[0].mxu0 %v5749
    %v5819 = vpop.f32.mrb[0].mxu0
    %v5820 = vadd.f32 %v4366, %v5819
    %v5821 = vpop.f32.mrb[0].mxu0
    %5822 = vdwg.mxu0
    %5823 = vrot.lane.b32.xlu0 %v4509, 104
    %v5824 = vpop.permute.xlu0 %5823
    %5825 = vrot.lane.b32.xlu0 %v4509, 72
    %v5826 = vpop.permute.xlu0 %5825
    %v5827 = vsel %vm369, %v5824, 0
    %v5829 = vsel %vm369, %v5826, 0
    %5831 = vmatprep.subr.mxu0 0.0
    %5832 = vmatpush1.xpose.msra.mxu0 %v5829
    %5833 = vmatprep.subr.mxu0 0.0
    %5834 = vmatpush1.xpose.msra.mxu0 0.0
    %5835 = vmatprep.subr.mxu0 0.0
    %5836 = vmatpush1.xpose.msra.mxu0 0.0
    %5837 = vmatprep.subr.mxu0 0.0
    %5838 = vmatpush1.xpose.msra.mxu0 0.0
    %5839 = vmatprep.subr.mxu0 0.0
    %5840 = vmatpush1.xpose.msra.mxu0 0.0
    %5841 = vmatprep.subr.mxu0 0.0
    %5842 = vmatpush1.xpose.msra.mxu0 0.0
    %5843 = vmatprep.subr.mxu0 0.0
    %5844 = vmatpush1.xpose.msra.mxu0 0.0
    %5845 = vmatprep.subr.mxu0 0.0
    %5846 = vmatpush1.xpose.msra.mxu0 0.0
    %5847 = vmatprep.subr.mxu0 0.0
    %5848 = vmatpush1.xpose.msra.mxu0 0.0
    %5849 = vmatprep.subr.mxu0 0.0
    %5850 = vmatpush1.xpose.msra.mxu0 0.0
    %5851 = vmatprep.subr.mxu0 0.0
    %5852 = vmatpush1.xpose.msra.mxu0 0.0
    %5853 = vmatprep.subr.mxu0 0.0
    %5854 = vmatpush1.xpose.msra.mxu0 0.0
    %5855 = vmatprep.subr.mxu0 0.0
    %5856 = vmatpush1.xpose.msra.mxu0 0.0
    %5857 = vmatprep.subr.mxu0 0.0
    %5858 = vmatpush1.xpose.msra.mxu0 0.0
    %5859 = vmatprep.subr.mxu0 0.0
    %5860 = vmatpush1.xpose.msra.mxu0 0.0
    %5861 = vmatprep.subr.mxu0 0.0
    %5862 = vmatpush1.xpose.msra.mxu0 0.0
    %5863 = vmatprep.subr.mxu0 0.0
    %5864 = vmatpush1.xpose.msra.mxu0 0.0
    %5865 = vmatprep.subr.mxu0 0.0
    %5866 = vmatpush1.xpose.msra.mxu0 0.0
    %5867 = vmatprep.subr.mxu0 0.0
    %5868 = vmatpush1.xpose.msra.mxu0 0.0
    %5869 = vmatprep.subr.mxu0 0.0
    %5870 = vmatpush1.xpose.msra.mxu0 0.0
    %5871 = vmatprep.subr.mxu0 0.0
    %5872 = vmatpush1.xpose.msra.mxu0 0.0
    %5873 = vmatprep.subr.mxu0 0.0
    %5874 = vmatpush1.xpose.msra.mxu0 0.0
    %5875 = vmatprep.subr.mxu0 0.0
    %5876 = vmatpush1.xpose.msra.mxu0 0.0
    %5877 = vmatprep.subr.mxu0 0.0
    %5878 = vmatpush1.xpose.msra.mxu0 0.0
    %5879 = vmatprep.subr.mxu0 0.0
    %5880 = vmatpush1.xpose.msra.mxu0 0.0
    %5881 = vmatprep.subr.mxu0 0.0
    %5882 = vmatpush1.xpose.msra.mxu0 0.0
    %5883 = vmatprep.subr.mxu0 0.0
    %5884 = vmatpush1.xpose.msra.mxu0 0.0
    %5885 = vmatprep.subr.mxu0 0.0
    %5886 = vmatpush1.xpose.msra.mxu0 0.0
    %5887 = vmatprep.subr.mxu0 0.0
    %5888 = vmatpush1.xpose.msra.mxu0 0.0
    %5889 = vmatprep.subr.mxu0 0.0
    %5890 = vmatpush1.xpose.msra.mxu0 0.0
    %5891 = vmatprep.subr.mxu0 0.0
    %5892 = vmatpush1.xpose.msra.mxu0 0.0
    %5893 = vmatprep.subr.mxu0 0.0
    %5894 = vmatpush1.xpose.msra.mxu0 0.0
    %5895 = vmatprep.mubr.f32.mxu0 0.0
    %5896 = vmatmul.mubr.f32.gmra.mrb[0].mxu0 %v5827
    %v5897 = vpop.f32.mrb[0].mxu0
    %v5898 = vadd.f32 %v4367, %v5897
    %v5899 = vpop.f32.mrb[0].mxu0
    %5900 = vdwg.mxu0
    %v5901 = vsel %vm369, %v5820, -inf
    %5902 = vmax.xlane.f32.xlu0 %v5901
    %v5903 = vpop.xlane.xlu0 %5902
    %v5904 = vsel %vm369, %v5898, -inf
    %5905 = vmax.xlane.f32.xlu0 %v5904
    %v5906 = vpop.xlane.xlu0 %5905
    %v5907 = vsub.f32 %v5820, %v5903
    %v5908 = vsub.f32 %v5898, %v5906
    %v5909 = vmul.f32 %v5907, 1.442695
    %v5910 = vpow.pop %v5909
    %v5911 = vmul.f32 %v5908, 1.442695
    %v5912 = vpow.pop %v5911
    %v5913 = vsel %vm369, %v5910, 0.0
    %5914 = vadd.xlane.f32.xlu0 %v5913
    %v5915 = vpop.xlane.xlu0 %5914
    %v5916 = vsel %vm369, %v5912, 0.0
    %5917 = vadd.xlane.f32.xlu0 %v5916
    %v5918 = vpop.xlane.xlu0 %5917
    %v5919 = vrcp.pop %v5915
    %v5920 = vrcp.pop %v5918
    %v5921 = vmul.f32 %v5910, %v5919
    %v5922 = vmul.f32 %v5912, %v5920
    %5923 = vrot.lane.b32.xlu0 %v4504, 40
    %v5924 = vpop.permute.xlu0 %5923
    %v5927 = vsel %vm369, %v5921, 0
    %5929 = vmatprep.subr.mxu0 0.0
    %5930 = vmatpush1.msra.mxu0 %v5924
    %5931 = vmatprep.subr.mxu0 0.0
    %5932 = vmatpush1.msra.mxu0 0.0
    %5933 = vmatprep.subr.mxu0 0.0
    %5934 = vmatpush1.msra.mxu0 0.0
    %5935 = vmatprep.subr.mxu0 0.0
    %5936 = vmatpush1.msra.mxu0 0.0
    %5937 = vmatprep.subr.mxu0 0.0
    %5938 = vmatpush1.msra.mxu0 0.0
    %5939 = vmatprep.subr.mxu0 0.0
    %5940 = vmatpush1.msra.mxu0 0.0
    %5941 = vmatprep.subr.mxu0 0.0
    %5942 = vmatpush1.msra.mxu0 0.0
    %5943 = vmatprep.subr.mxu0 0.0
    %5944 = vmatpush1.msra.mxu0 0.0
    %5945 = vmatprep.subr.mxu0 0.0
    %5946 = vmatpush1.msra.mxu0 0.0
    %5947 = vmatprep.subr.mxu0 0.0
    %5948 = vmatpush1.msra.mxu0 0.0
    %5949 = vmatprep.subr.mxu0 0.0
    %5950 = vmatpush1.msra.mxu0 0.0
    %5951 = vmatprep.subr.mxu0 0.0
    %5952 = vmatpush1.msra.mxu0 0.0
    %5953 = vmatprep.subr.mxu0 0.0
    %5954 = vmatpush1.msra.mxu0 0.0
    %5955 = vmatprep.subr.mxu0 0.0
    %5956 = vmatpush1.msra.mxu0 0.0
    %5957 = vmatprep.subr.mxu0 0.0
    %5958 = vmatpush1.msra.mxu0 0.0
    %5959 = vmatprep.subr.mxu0 0.0
    %5960 = vmatpush1.msra.mxu0 0.0
    %5961 = vmatprep.subr.mxu0 0.0
    %5962 = vmatpush1.msra.mxu0 0.0
    %5963 = vmatprep.subr.mxu0 0.0
    %5964 = vmatpush1.msra.mxu0 0.0
    %5965 = vmatprep.subr.mxu0 0.0
    %5966 = vmatpush1.msra.mxu0 0.0
    %5967 = vmatprep.subr.mxu0 0.0
    %5968 = vmatpush1.msra.mxu0 0.0
    %5969 = vmatprep.subr.mxu0 0.0
    %5970 = vmatpush1.msra.mxu0 0.0
    %5971 = vmatprep.subr.mxu0 0.0
    %5972 = vmatpush1.msra.mxu0 0.0
    %5973 = vmatprep.subr.mxu0 0.0
    %5974 = vmatpush1.msra.mxu0 0.0
    %5975 = vmatprep.subr.mxu0 0.0
    %5976 = vmatpush1.msra.mxu0 0.0
    %5977 = vmatprep.subr.mxu0 0.0
    %5978 = vmatpush1.msra.mxu0 0.0
    %5979 = vmatprep.subr.mxu0 0.0
    %5980 = vmatpush1.msra.mxu0 0.0
    %5981 = vmatprep.subr.mxu0 0.0
    %5982 = vmatpush1.msra.mxu0 0.0
    %5983 = vmatprep.subr.mxu0 0.0
    %5984 = vmatpush1.msra.mxu0 0.0
    %5985 = vmatprep.subr.mxu0 0.0
    %5986 = vmatpush1.msra.mxu0 0.0
    %5987 = vmatprep.subr.mxu0 0.0
    %5988 = vmatpush1.msra.mxu0 0.0
    %5989 = vmatprep.subr.mxu0 0.0
    %5990 = vmatpush1.msra.mxu0 0.0
    %5991 = vmatprep.subr.mxu0 0.0
    %5992 = vmatpush1.msra.mxu0 0.0
    %5993 = vmatprep.mubr.f32.mxu0 0.0
    %5994 = vmatmul.mubr.f32.gmra.mrb[0].mxu0 %v5927
    %v5995 = vpop.f32.mrb[0].mxu0
    %v5996 = vadd.f32 0.0, %v5995
    %v5997 = vpop.f32.mrb[0].mxu0
    %5998 = vdwg.mxu0
    %5999 = vrot.lane.b32.xlu0 %v4509, 40
    %v6000 = vpop.permute.xlu0 %5999
    %v6003 = vsel %vm369, %v5922, 0
    %6005 = vmatprep.subr.mxu0 0.0
    %6006 = vmatpush1.msra.mxu0 %v6000
    %6007 = vmatprep.subr.mxu0 0.0
    %6008 = vmatpush1.msra.mxu0 0.0
    %6009 = vmatprep.subr.mxu0 0.0
    %6010 = vmatpush1.msra.mxu0 0.0
    %6011 = vmatprep.subr.mxu0 0.0
    %6012 = vmatpush1.msra.mxu0 0.0
    %6013 = vmatprep.subr.mxu0 0.0
    %6014 = vmatpush1.msra.mxu0 0.0
    %6015 = vmatprep.subr.mxu0 0.0
    %6016 = vmatpush1.msra.mxu0 0.0
    %6017 = vmatprep.subr.mxu0 0.0
    %6018 = vmatpush1.msra.mxu0 0.0
    %6019 = vmatprep.subr.mxu0 0.0
    %6020 = vmatpush1.msra.mxu0 0.0
    %6021 = vmatprep.subr.mxu0 0.0
    %6022 = vmatpush1.msra.mxu0 0.0
    %6023 = vmatprep.subr.mxu0 0.0
    %6024 = vmatpush1.msra.mxu0 0.0
    %6025 = vmatprep.subr.mxu0 0.0
    %6026 = vmatpush1.msra.mxu0 0.0
    %6027 = vmatprep.subr.mxu0 0.0
    %6028 = vmatpush1.msra.mxu0 0.0
    %6029 = vmatprep.subr.mxu0 0.0
    %6030 = vmatpush1.msra.mxu0 0.0
    %6031 = vmatprep.subr.mxu0 0.0
    %6032 = vmatpush1.msra.mxu0 0.0
    %6033 = vmatprep.subr.mxu0 0.0
    %6034 = vmatpush1.msra.mxu0 0.0
    %6035 = vmatprep.subr.mxu0 0.0
    %6036 = vmatpush1.msra.mxu0 0.0
    %6037 = vmatprep.subr.mxu0 0.0
    %6038 = vmatpush1.msra.mxu0 0.0
    %6039 = vmatprep.subr.mxu0 0.0
    %6040 = vmatpush1.msra.mxu0 0.0
    %6041 = vmatprep.subr.mxu0 0.0
    %6042 = vmatpush1.msra.mxu0 0.0
    %6043 = vmatprep.subr.mxu0 0.0
    %6044 = vmatpush1.msra.mxu0 0.0
    %6045 = vmatprep.subr.mxu0 0.0
    %6046 = vmatpush1.msra.mxu0 0.0
    %6047 = vmatprep.subr.mxu0 0.0
    %6048 = vmatpush1.msra.mxu0 0.0
    %6049 = vmatprep.subr.mxu0 0.0
    %6050 = vmatpush1.msra.mxu0 0.0
    %6051 = vmatprep.subr.mxu0 0.0
    %6052 = vmatpush1.msra.mxu0 0.0
    %6053 = vmatprep.subr.mxu0 0.0
    %6054 = vmatpush1.msra.mxu0 0.0
    %6055 = vmatprep.subr.mxu0 0.0
    %6056 = vmatpush1.msra.mxu0 0.0
    %6057 = vmatprep.subr.mxu0 0.0
    %6058 = vmatpush1.msra.mxu0 0.0
    %6059 = vmatprep.subr.mxu0 0.0
    %6060 = vmatpush1.msra.mxu0 0.0
    %6061 = vmatprep.subr.mxu0 0.0
    %6062 = vmatpush1.msra.mxu0 0.0
    %6063 = vmatprep.subr.mxu0 0.0
    %6064 = vmatpush1.msra.mxu0 0.0
    %6065 = vmatprep.subr.mxu0 0.0
    %6066 = vmatpush1.msra.mxu0 0.0
    %6067 = vmatprep.subr.mxu0 0.0
    %6068 = vmatpush1.msra.mxu0 0.0
    %6069 = vmatprep.mubr.f32.mxu0 0.0
    %6070 = vmatmul.mubr.f32.gmra.mrb[0].mxu0 %v6003
    %v6071 = vpop.f32.mrb[0].mxu0
    %v6072 = vadd.f32 0.0, %v6071
    %v6073 = vpop.f32.mrb[0].mxu0
    %6074 = vdwg.mxu0
    %v6076 = vsel %vm369, %v5996, 0
    %v6079 = vsel %vm369, %v6072, 0
    %6081 = vmatprep.subr.mxu0 0.0
    %6082 = vmatpush1.msra.mxu0 %v4375
    %6083 = vmatprep.subr.mxu0 0.0
    %6084 = vmatpush1.msra.mxu0 0.0
    %6085 = vmatprep.subr.mxu0 0.0
    %6086 = vmatpush1.msra.mxu0 0.0
    %6087 = vmatprep.subr.mxu0 0.0
    %6088 = vmatpush1.msra.mxu0 0.0
    %6089 = vmatprep.subr.mxu0 0.0
    %6090 = vmatpush1.msra.mxu0 0.0
    %6091 = vmatprep.subr.mxu0 0.0
    %6092 = vmatpush1.msra.mxu0 0.0
    %6093 = vmatprep.subr.mxu0 0.0
    %6094 = vmatpush1.msra.mxu0 0.0
    %6095 = vmatprep.subr.mxu0 0.0
    %6096 = vmatpush1.msra.mxu0 0.0
    %6097 = vmatprep.subr.mxu0 0.0
    %6098 = vmatpush1.msra.mxu0 0.0
    %6099 = vmatprep.subr.mxu0 0.0
    %6100 = vmatpush1.msra.mxu0 0.0
    %6101 = vmatprep.subr.mxu0 0.0
    %6102 = vmatpush1.msra.mxu0 0.0
    %6103 = vmatprep.subr.mxu0 0.0
    %6104 = vmatpush1.msra.mxu0 0.0
    %6105 = vmatprep.subr.mxu0 0.0
    %6106 = vmatpush1.msra.mxu0 0.0
    %6107 = vmatprep.subr.mxu0 0.0
    %6108 = vmatpush1.msra.mxu0 0.0
    %6109 = vmatprep.subr.mxu0 0.0
    %6110 = vmatpush1.msra.mxu0 0.0
    %6111 = vmatprep.subr.mxu0 0.0
    %6112 = vmatpush1.msra.mxu0 0.0
    %6113 = vmatprep.subr.mxu0 0.0
    %6114 = vmatpush1.msra.mxu0 0.0
    %6115 = vmatprep.subr.mxu0 0.0
    %6116 = vmatpush1.msra.mxu0 0.0
    %6117 = vmatprep.subr.mxu0 0.0
    %6118 = vmatpush1.msra.mxu0 0.0
    %6119 = vmatprep.subr.mxu0 0.0
    %6120 = vmatpush1.msra.mxu0 0.0
    %6121 = vmatprep.subr.mxu0 0.0
    %6122 = vmatpush1.msra.mxu0 0.0
    %6123 = vmatprep.subr.mxu0 0.0
    %6124 = vmatpush1.msra.mxu0 0.0
    %6125 = vmatprep.subr.mxu0 0.0
    %6126 = vmatpush1.msra.mxu0 0.0
    %6127 = vmatprep.subr.mxu0 0.0
    %6128 = vmatpush1.msra.mxu0 0.0
    %6129 = vmatprep.subr.mxu0 0.0
    %6130 = vmatpush1.msra.mxu0 0.0
    %6131 = vmatprep.subr.mxu0 0.0
    %6132 = vmatpush1.msra.mxu0 0.0
    %6133 = vmatprep.subr.mxu0 0.0
    %6134 = vmatpush1.msra.mxu0 0.0
    %6135 = vmatprep.subr.mxu0 0.0
    %6136 = vmatpush1.msra.mxu0 0.0
    %6137 = vmatprep.subr.mxu0 0.0
    %6138 = vmatpush1.msra.mxu0 0.0
    %6139 = vmatprep.subr.mxu0 0.0
    %6140 = vmatpush1.msra.mxu0 0.0
    %6141 = vmatprep.subr.mxu0 0.0
    %6142 = vmatpush1.msra.mxu0 0.0
    %6143 = vmatprep.subr.mxu0 0.0
    %6144 = vmatpush1.msra.mxu0 0.0
    %6145 = vmatprep.mubr.f32.mxu0 0.0
    %6146 = vmatmul.mubr.f32.gmra.mrb[0].mxu0 %v6076
    %v6147 = vpop.f32.mrb[0].mxu0
    %v6148 = vadd.f32 0.0, %v6147
    %v6149 = vpop.f32.mrb[0].mxu0
    %6150 = vmatprep.mubr.f32.mxu0 0.0
    %6151 = vmatmul.mubr.f32.gmra.mrb[0].mxu0 %v6079
    %v6152 = vpop.f32.mrb[0].mxu0
    %v6153 = vadd.f32 0.0, %v6152
    %v6154 = vpop.f32.mrb[0].mxu0
    %6155 = vdwg.mxu0
    %v6156 = vadd.f32 %v5743, %v6148
    %v6157 = vadd.f32 %v5744, %v6153
    %v6158 = vadd.f32 %v4324, %v6156
    %v6159 = vadd.f32 %v4325, %v6157
    %v6160 = vlaneseq
    %v6161 = vshrl.u32 %v6160, 7
    %v6162 = vsub.s32 5, %v6161
    %v6163 = vrot.slane %v4388, %v6162
    %v6164 = vadd.f32 %v6158, %v6163
    %v6165 = vadd.f32 %v6159, %v6163
    %v6166 = vsel %vm178, %v6164, 0.0
    %6167 = vadd.xlane.f32.xlu0 %v6166
    %v6168 = vpop.xlane.xlu0 %6167
    %v6169 = vsel %vm178, %v6165, 0.0
    %6170 = vadd.xlane.f32.xlu0 %v6169
    %v6171 = vpop.xlane.xlu0 %6170
    %v6172 = vmul.f32 %v6168, %v185
    %v6173 = vmul.f32 %v6171, %v185
    %v6174 = vsub.f32 %v6164, %v6172
    %v6175 = vsub.f32 %v6165, %v6173
    %v6176 = vmul.f32 %v6174, %v6174
    %v6177 = vmul.f32 %v6175, %v6175
    %v6178 = vsel %vm178, %v6176, 0.0
    %6179 = vadd.xlane.f32.xlu0 %v6178
    %v6180 = vpop.xlane.xlu0 %6179
    %v6181 = vsel %vm178, %v6177, 0.0
    %6182 = vadd.xlane.f32.xlu0 %v6181
    %v6183 = vpop.xlane.xlu0 %6182
    %v6184 = vmul.f32 %v6180, %v185
    %v6185 = vmul.f32 %v6183, %v185
    %v6186 = vadd.f32 %v6184, 1e-05
    %v6187 = vadd.f32 %v6185, 1e-05
    %v6188 = vrsqrt.pop %v6186
    %v6189 = vrsqrt.pop %v6187
    %v6190 = vmul.f32 %v6174, %v6188
    %v6191 = vmul.f32 %v6175, %v6189
    %v6192 = vlaneseq
    %v6193 = vshrl.u32 %v6192, 7
    %v6194 = vsub.s32 2, %v6193
    %v6195 = vrot.slane %v4388, %v6194
    %v6196 = vmul.f32 %v6190, %v6195
    %v6197 = vmul.f32 %v6191, %v6195
    %v6198 = vlaneseq
    %v6199 = vshrl.u32 %v6198, 7
    %v6200 = vsub.s32 3, %v6199
    %v6201 = vrot.slane %v4388, %v6200
    %v6202 = vadd.f32 %v6196, %v6201
    %v6203 = vadd.f32 %v6197, %v6201
    %v6204 = vlaneseq
    %v6205 = vshrl.u32 %v6204, 7
    %v6206 = vsub.s32 6, %v6205
    %v6207 = vrot.slane %v4388, %v6206
    %v6209 = vsel %vm178, %v6202, 0
    %v6212 = vsel %vm178, %v6203, 0
    %6214 = vmatprep.subr.mxu0 0.0
    %6215 = vmatpush1.msra.mxu0 %v4376
    %6216 = vmatprep.subr.mxu0 0.0
    %6217 = vmatpush1.msra.mxu0 %v4377
    %6218 = vmatprep.subr.mxu0 0.0
    %6219 = vmatpush1.msra.mxu0 %v4378
    %6220 = vmatprep.subr.mxu0 0.0
    %6221 = vmatpush1.msra.mxu0 %v4379
    %6222 = vmatprep.subr.mxu0 0.0
    %6223 = vmatpush1.msra.mxu0 0.0
    %6224 = vmatprep.subr.mxu0 0.0
    %6225 = vmatpush1.msra.mxu0 0.0
    %6226 = vmatprep.subr.mxu0 0.0
    %6227 = vmatpush1.msra.mxu0 0.0
    %6228 = vmatprep.subr.mxu0 0.0
    %6229 = vmatpush1.msra.mxu0 0.0
    %6230 = vmatprep.subr.mxu0 0.0
    %6231 = vmatpush1.msra.mxu0 0.0
    %6232 = vmatprep.subr.mxu0 0.0
    %6233 = vmatpush1.msra.mxu0 0.0
    %6234 = vmatprep.subr.mxu0 0.0
    %6235 = vmatpush1.msra.mxu0 0.0
    %6236 = vmatprep.subr.mxu0 0.0
    %6237 = vmatpush1.msra.mxu0 0.0
    %6238 = vmatprep.subr.mxu0 0.0
    %6239 = vmatpush1.msra.mxu0 0.0
    %6240 = vmatprep.subr.mxu0 0.0
    %6241 = vmatpush1.msra.mxu0 0.0
    %6242 = vmatprep.subr.mxu0 0.0
    %6243 = vmatpush1.msra.mxu0 0.0
    %6244 = vmatprep.subr.mxu0 0.0
    %6245 = vmatpush1.msra.mxu0 0.0
    %6246 = vmatprep.subr.mxu0 0.0
    %6247 = vmatpush1.msra.mxu0 0.0
    %6248 = vmatprep.subr.mxu0 0.0
    %6249 = vmatpush1.msra.mxu0 0.0
    %6250 = vmatprep.subr.mxu0 0.0
    %6251 = vmatpush1.msra.mxu0 0.0
    %6252 = vmatprep.subr.mxu0 0.0
    %6253 = vmatpush1.msra.mxu0 0.0
    %6254 = vmatprep.subr.mxu0 0.0
    %6255 = vmatpush1.msra.mxu0 0.0
    %6256 = vmatprep.subr.mxu0 0.0
    %6257 = vmatpush1.msra.mxu0 0.0
    %6258 = vmatprep.subr.mxu0 0.0
    %6259 = vmatpush1.msra.mxu0 0.0
    %6260 = vmatprep.subr.mxu0 0.0
    %6261 = vmatpush1.msra.mxu0 0.0
    %6262 = vmatprep.subr.mxu0 0.0
    %6263 = vmatpush1.msra.mxu0 0.0
    %6264 = vmatprep.subr.mxu0 0.0
    %6265 = vmatpush1.msra.mxu0 0.0
    %6266 = vmatprep.subr.mxu0 0.0
    %6267 = vmatpush1.msra.mxu0 0.0
    %6268 = vmatprep.subr.mxu0 0.0
    %6269 = vmatpush1.msra.mxu0 0.0
    %6270 = vmatprep.subr.mxu0 0.0
    %6271 = vmatpush1.msra.mxu0 0.0
    %6272 = vmatprep.subr.mxu0 0.0
    %6273 = vmatpush1.msra.mxu0 0.0
    %6274 = vmatprep.subr.mxu0 0.0
    %6275 = vmatpush1.msra.mxu0 0.0
    %6276 = vmatprep.subr.mxu0 0.0
    %6277 = vmatpush1.msra.mxu0 0.0
    %6278 = vmatprep.mubr.f32.mxu0 0.0
    %6279 = vmatmul.mubr.f32.gmra.mrb[0].mxu0 %v6209
    %v6280 = vpop.f32.mrb[0].mxu0
    %v6281 = vadd.f32 %v6207, %v6280
    %v6282 = vpop.f32.mrb[0].mxu0
    %6283 = vmatprep.mubr.f32.mxu0 0.0
    %6284 = vmatmul.mubr.f32.gmra.mrb[0].mxu0 %v6212
    %v6285 = vpop.f32.mrb[0].mxu0
    %v6286 = vadd.f32 %v6207, %v6285
    %v6287 = vpop.f32.mrb[0].mxu0
    %6288 = vdwg.mxu0
    %v6289 = vmul.f32 %v6281, 1.702
    %v6290 = vmul.f32 %v6286, 1.702
    %v6291 = vxor.u32 %v6289, 2147483648
    %v6292 = vxor.u32 %v6290, 2147483648
    %v6293 = vmul.f32 %v6291, 1.442695
    %v6294 = vpow.pop %v6293
    %v6295 = vmul.f32 %v6292, 1.442695
    %v6296 = vpow.pop %v6295
    %v6297 = vadd.f32 %v6294, 1.0
    %v6298 = vadd.f32 %v6296, 1.0
    %v6299 = vrcp.pop %v6297
    %v6300 = vmul.f32 1.0, %v6299
    %v6301 = vrcp.pop %v6298
    %v6302 = vmul.f32 1.0, %v6301
    %v6303 = vmul.f32 %v6281, %v6300
    %v6304 = vmul.f32 %v6286, %v6302
    %v6305 = vlaneseq
    %v6306 = vshrl.u32 %v6305, 7
    %v6307 = vsub.s32 7, %v6306
    %v6308 = vrot.slane %v4388, %v6307
    %v6310 = vsel %vm93, %v6303, 0
    %v6313 = vsel %vm93, %v6304, 0
    %6315 = vmatprep.subr.mxu0 0.0
    %6316 = vmatpush1.msra.mxu0 %v4380
    %6317 = vmatprep.subr.mxu0 0.0
    %6318 = vmatpush1.msra.mxu0 %v4381
    %6319 = vmatprep.subr.mxu0 0.0
    %6320 = vmatpush1.msra.mxu0 %v4382
    %6321 = vmatprep.subr.mxu0 0.0
    %6322 = vmatpush1.msra.mxu0 %v4383
    %6323 = vmatprep.subr.mxu0 0.0
    %6324 = vmatpush1.msra.mxu0 %v4384
    %6325 = vmatprep.subr.mxu0 0.0
    %6326 = vmatpush1.msra.mxu0 %v4385
    %6327 = vmatprep.subr.mxu0 0.0
    %6328 = vmatpush1.msra.mxu0 %v4386
    %6329 = vmatprep.subr.mxu0 0.0
    %6330 = vmatpush1.msra.mxu0 %v4387
    %6331 = vmatprep.subr.mxu0 0.0
    %6332 = vmatpush1.msra.mxu0 0.0
    %6333 = vmatprep.subr.mxu0 0.0
    %6334 = vmatpush1.msra.mxu0 0.0
    %6335 = vmatprep.subr.mxu0 0.0
    %6336 = vmatpush1.msra.mxu0 0.0
    %6337 = vmatprep.subr.mxu0 0.0
    %6338 = vmatpush1.msra.mxu0 0.0
    %6339 = vmatprep.subr.mxu0 0.0
    %6340 = vmatpush1.msra.mxu0 0.0
    %6341 = vmatprep.subr.mxu0 0.0
    %6342 = vmatpush1.msra.mxu0 0.0
    %6343 = vmatprep.subr.mxu0 0.0
    %6344 = vmatpush1.msra.mxu0 0.0
    %6345 = vmatprep.subr.mxu0 0.0
    %6346 = vmatpush1.msra.mxu0 0.0
    %6347 = vmatprep.subr.mxu0 0.0
    %6348 = vmatpush1.msra.mxu0 0.0
    %6349 = vmatprep.subr.mxu0 0.0
    %6350 = vmatpush1.msra.mxu0 0.0
    %6351 = vmatprep.subr.mxu0 0.0
    %6352 = vmatpush1.msra.mxu0 0.0
    %6353 = vmatprep.subr.mxu0 0.0
    %6354 = vmatpush1.msra.mxu0 0.0
    %6355 = vmatprep.subr.mxu0 0.0
    %6356 = vmatpush1.msra.mxu0 0.0
    %6357 = vmatprep.subr.mxu0 0.0
    %6358 = vmatpush1.msra.mxu0 0.0
    %6359 = vmatprep.subr.mxu0 0.0
    %6360 = vmatpush1.msra.mxu0 0.0
    %6361 = vmatprep.subr.mxu0 0.0
    %6362 = vmatpush1.msra.mxu0 0.0
    %6363 = vmatprep.subr.mxu0 0.0
    %6364 = vmatpush1.msra.mxu0 0.0
    %6365 = vmatprep.subr.mxu0 0.0
    %6366 = vmatpush1.msra.mxu0 0.0
    %6367 = vmatprep.subr.mxu0 0.0
    %6368 = vmatpush1.msra.mxu0 0.0
    %6369 = vmatprep.subr.mxu0 0.0
    %6370 = vmatpush1.msra.mxu0 0.0
    %6371 = vmatprep.subr.mxu0 0.0
    %6372 = vmatpush1.msra.mxu0 0.0
    %6373 = vmatprep.subr.mxu0 0.0
    %6374 = vmatpush1.msra.mxu0 0.0
    %6375 = vmatprep.subr.mxu0 0.0
    %6376 = vmatpush1.msra.mxu0 0.0
    %6377 = vmatprep.subr.mxu0 0.0
    %6378 = vmatpush1.msra.mxu0 0.0
    %6379 = vmatprep.mubr.f32.mxu0 0.0
    %6380 = vmatmul.mubr.f32.gmra.mrb[0].mxu0 %v6310
    %v6381 = vpop.f32.mrb[0].mxu0
    %v6382 = vadd.f32 %v6308, %v6381
    %v6383 = vpop.f32.mrb[0].mxu0
    %6384 = vmatprep.mubr.f32.mxu0 0.0
    %6385 = vmatmul.mubr.f32.gmra.mrb[0].mxu0 %v6313
    %v6386 = vpop.f32.mrb[0].mxu0
    %v6387 = vadd.f32 %v6308, %v6386
    %v6388 = vpop.f32.mrb[0].mxu0
    %6389 = vdwg.mxu0
    %v6390 = vadd.f32 %v6164, %v6382
    %v6391 = vadd.f32 %v6165, %v6387
    %s6392 = scalar_lea.vmem %s11, 32
    %v6393 = vld [vmem:[%s6392] sm:$0xff]
    %v6394 = vld [vmem:[%s6392 + $0x8] sm:$0xff]
    %v6395 = vld [vmem:[%s6392 + $0x10] sm:$0xff]
    %v6396 = vld [vmem:[%s6392 + $0x18] sm:$0xff]
    %s6397 = scalar_lea.vmem %s12, 32
    %v6398 = vld [vmem:[%s6397] sm:$0xff]
    %v6399 = vld [vmem:[%s6397 + $0x8] sm:$0xff]
    %v6400 = vld [vmem:[%s6397 + $0x10] sm:$0xff]
    %v6401 = vld [vmem:[%s6397 + $0x18] sm:$0xff]
    %s6402 = scalar_lea.vmem %s13, 32
    %v6403 = vld [vmem:[%s6402] sm:$0xff]
    %v6404 = vld [vmem:[%s6402 + $0x8] sm:$0xff]
    %v6405 = vld [vmem:[%s6402 + $0x10] sm:$0xff]
    %v6406 = vld [vmem:[%s6402 + $0x18] sm:$0xff]
    %s6407 = scalar_lea.vmem %s14, 64
    %v6408 = vld [vmem:[%s6407] sm:$0xff]
    %v6409 = vld [vmem:[%s6407 + $0x8] sm:$0xff]
    %v6410 = vld [vmem:[%s6407 + $0x10] sm:$0xff]
    %v6411 = vld [vmem:[%s6407 + $0x18] sm:$0xff]
    %v6412 = vld [vmem:[%s6407 + $0x20] sm:$0xff]
    %v6413 = vld [vmem:[%s6407 + $0x28] sm:$0xff]
    %v6414 = vld [vmem:[%s6407 + $0x30] sm:$0xff]
    %v6415 = vld [vmem:[%s6407 + $0x38] sm:$0xff]
    %s6416 = scalar_lea.vmem %s15, 8
    %v6417 = vld [vmem:[%s6416] sm:$0xff]
    %v6418 = vsel %vm178, %v6390, 0.0
    %6419 = vadd.xlane.f32.xlu0 %v6418
    %v6420 = vpop.xlane.xlu0 %6419
    %v6421 = vsel %vm178, %v6391, 0.0
    %6422 = vadd.xlane.f32.xlu0 %v6421
    %v6423 = vpop.xlane.xlu0 %6422
    %v6424 = vmul.f32 %v6420, %v185
    %v6425 = vmul.f32 %v6423, %v185
    %v6426 = vsub.f32 %v6390, %v6424
    %v6427 = vsub.f32 %v6391, %v6425
    %v6428 = vmul.f32 %v6426, %v6426
    %v6429 = vmul.f32 %v6427, %v6427
    %v6430 = vsel %vm178, %v6428, 0.0
    %6431 = vadd.xlane.f32.xlu0 %v6430
    %v6432 = vpop.xlane.xlu0 %6431
    %v6433 = vsel %vm178, %v6429, 0.0
    %6434 = vadd.xlane.f32.xlu0 %v6433
    %v6435 = vpop.xlane.xlu0 %6434
    %v6436 = vmul.f32 %v6432, %v185
    %v6437 = vmul.f32 %v6435, %v185
    %v6438 = vadd.f32 %v6436, 1e-05
    %v6439 = vadd.f32 %v6437, 1e-05
    %v6440 = vrsqrt.pop %v6438
    %v6441 = vrsqrt.pop %v6439
    %v6442 = vmul.f32 %v6426, %v6440
    %v6443 = vmul.f32 %v6427, %v6441
    %v6444 = vlaneseq
    %v6445 = vshrl.u32 %v6444, 7
    %v6446 = vsub.s32 0, %v6445
    %v6447 = vrot.slane %v6417, %v6446
    %v6448 = vmul.f32 %v6442, %v6447
    %v6449 = vmul.f32 %v6443, %v6447
    %v6450 = vlaneseq
    %v6451 = vshrl.u32 %v6450, 7
    %v6452 = vsub.s32 1, %v6451
    %v6453 = vrot.slane %v6417, %v6452
    %v6454 = vadd.f32 %v6448, %v6453
    %v6455 = vadd.f32 %v6449, %v6453
    %v6456 = vlaneseq
    %v6457 = vshrl.u32 %v6456, 7
    %v6458 = vsub.s32 4, %v6457
    %v6459 = vrot.slane %v6417, %v6458
    %v6461 = vsel %vm178, %v6454, 0
    %v6464 = vsel %vm178, %v6455, 0
    %6466 = vmatprep.subr.mxu0 0.0
    %6467 = vmatpush1.msra.mxu0 %v6393
    %6468 = vmatprep.subr.mxu0 0.0
    %6469 = vmatpush1.msra.mxu0 %v6394
    %6470 = vmatprep.subr.mxu0 0.0
    %6471 = vmatpush1.msra.mxu0 %v6395
    %6472 = vmatprep.subr.mxu0 0.0
    %6473 = vmatpush1.msra.mxu0 %v6396
    %6474 = vmatprep.subr.mxu0 0.0
    %6475 = vmatpush1.msra.mxu0 0.0
    %6476 = vmatprep.subr.mxu0 0.0
    %6477 = vmatpush1.msra.mxu0 0.0
    %6478 = vmatprep.subr.mxu0 0.0
    %6479 = vmatpush1.msra.mxu0 0.0
    %6480 = vmatprep.subr.mxu0 0.0
    %6481 = vmatpush1.msra.mxu0 0.0
    %6482 = vmatprep.subr.mxu0 0.0
    %6483 = vmatpush1.msra.mxu0 0.0
    %6484 = vmatprep.subr.mxu0 0.0
    %6485 = vmatpush1.msra.mxu0 0.0
    %6486 = vmatprep.subr.mxu0 0.0
    %6487 = vmatpush1.msra.mxu0 0.0
    %6488 = vmatprep.subr.mxu0 0.0
    %6489 = vmatpush1.msra.mxu0 0.0
    %6490 = vmatprep.subr.mxu0 0.0
    %6491 = vmatpush1.msra.mxu0 0.0
    %6492 = vmatprep.subr.mxu0 0.0
    %6493 = vmatpush1.msra.mxu0 0.0
    %6494 = vmatprep.subr.mxu0 0.0
    %6495 = vmatpush1.msra.mxu0 0.0
    %6496 = vmatprep.subr.mxu0 0.0
    %6497 = vmatpush1.msra.mxu0 0.0
    %6498 = vmatprep.subr.mxu0 0.0
    %6499 = vmatpush1.msra.mxu0 0.0
    %6500 = vmatprep.subr.mxu0 0.0
    %6501 = vmatpush1.msra.mxu0 0.0
    %6502 = vmatprep.subr.mxu0 0.0
    %6503 = vmatpush1.msra.mxu0 0.0
    %6504 = vmatprep.subr.mxu0 0.0
    %6505 = vmatpush1.msra.mxu0 0.0
    %6506 = vmatprep.subr.mxu0 0.0
    %6507 = vmatpush1.msra.mxu0 0.0
    %6508 = vmatprep.subr.mxu0 0.0
    %6509 = vmatpush1.msra.mxu0 0.0
    %6510 = vmatprep.subr.mxu0 0.0
    %6511 = vmatpush1.msra.mxu0 0.0
    %6512 = vmatprep.subr.mxu0 0.0
    %6513 = vmatpush1.msra.mxu0 0.0
    %6514 = vmatprep.subr.mxu0 0.0
    %6515 = vmatpush1.msra.mxu0 0.0
    %6516 = vmatprep.subr.mxu0 0.0
    %6517 = vmatpush1.msra.mxu0 0.0
    %6518 = vmatprep.subr.mxu0 0.0
    %6519 = vmatpush1.msra.mxu0 0.0
    %6520 = vmatprep.subr.mxu0 0.0
    %6521 = vmatpush1.msra.mxu0 0.0
    %6522 = vmatprep.subr.mxu0 0.0
    %6523 = vmatpush1.msra.mxu0 0.0
    %6524 = vmatprep.subr.mxu0 0.0
    %6525 = vmatpush1.msra.mxu0 0.0
    %6526 = vmatprep.subr.mxu0 0.0
    %6527 = vmatpush1.msra.mxu0 0.0
    %6528 = vmatprep.subr.mxu0 0.0
    %6529 = vmatpush1.msra.mxu0 0.0
    %6530 = vmatprep.mubr.f32.mxu0 0.0
    %6531 = vmatmul.mubr.f32.gmra.mrb[0].mxu0 %v6461
    %v6532 = vpop.f32.mrb[0].mxu0
    %v6533 = vadd.f32 %v6459, %v6532
    %v6534 = vpop.f32.mrb[0].mxu0
    %6535 = vmatprep.mubr.f32.mxu0 0.0
    %6536 = vmatmul.mubr.f32.gmra.mrb[0].mxu0 %v6464
    %v6537 = vpop.f32.mrb[0].mxu0
    %v6538 = vadd.f32 %v6459, %v6537
    %v6539 = vpop.f32.mrb[0].mxu0
    %6540 = vdwg.mxu0
    %6542 = vrot.lane.b32.xlu0 %v6533, 96
    %v6543 = vpop.permute.xlu0 %6542
    %v6544 = vsel %vm369, %v6533, 0
    %v6546 = vsel %vm369, %v6543, 0
    %6548 = vmatprep.subr.mxu0 0.0
    %6549 = vmatpush1.xpose.msra.mxu0 %v6546
    %6550 = vmatprep.subr.mxu0 0.0
    %6551 = vmatpush1.xpose.msra.mxu0 0.0
    %6552 = vmatprep.subr.mxu0 0.0
    %6553 = vmatpush1.xpose.msra.mxu0 0.0
    %6554 = vmatprep.subr.mxu0 0.0
    %6555 = vmatpush1.xpose.msra.mxu0 0.0
    %6556 = vmatprep.subr.mxu0 0.0
    %6557 = vmatpush1.xpose.msra.mxu0 0.0
    %6558 = vmatprep.subr.mxu0 0.0
    %6559 = vmatpush1.xpose.msra.mxu0 0.0
    %6560 = vmatprep.subr.mxu0 0.0
    %6561 = vmatpush1.xpose.msra.mxu0 0.0
    %6562 = vmatprep.subr.mxu0 0.0
    %6563 = vmatpush1.xpose.msra.mxu0 0.0
    %6564 = vmatprep.subr.mxu0 0.0
    %6565 = vmatpush1.xpose.msra.mxu0 0.0
    %6566 = vmatprep.subr.mxu0 0.0
    %6567 = vmatpush1.xpose.msra.mxu0 0.0
    %6568 = vmatprep.subr.mxu0 0.0
    %6569 = vmatpush1.xpose.msra.mxu0 0.0
    %6570 = vmatprep.subr.mxu0 0.0
    %6571 = vmatpush1.xpose.msra.mxu0 0.0
    %6572 = vmatprep.subr.mxu0 0.0
    %6573 = vmatpush1.xpose.msra.mxu0 0.0
    %6574 = vmatprep.subr.mxu0 0.0
    %6575 = vmatpush1.xpose.msra.mxu0 0.0
    %6576 = vmatprep.subr.mxu0 0.0
    %6577 = vmatpush1.xpose.msra.mxu0 0.0
    %6578 = vmatprep.subr.mxu0 0.0
    %6579 = vmatpush1.xpose.msra.mxu0 0.0
    %6580 = vmatprep.subr.mxu0 0.0
    %6581 = vmatpush1.xpose.msra.mxu0 0.0
    %6582 = vmatprep.subr.mxu0 0.0
    %6583 = vmatpush1.xpose.msra.mxu0 0.0
    %6584 = vmatprep.subr.mxu0 0.0
    %6585 = vmatpush1.xpose.msra.mxu0 0.0
    %6586 = vmatprep.subr.mxu0 0.0
    %6587 = vmatpush1.xpose.msra.mxu0 0.0
    %6588 = vmatprep.subr.mxu0 0.0
    %6589 = vmatpush1.xpose.msra.mxu0 0.0
    %6590 = vmatprep.subr.mxu0 0.0
    %6591 = vmatpush1.xpose.msra.mxu0 0.0
    %6592 = vmatprep.subr.mxu0 0.0
    %6593 = vmatpush1.xpose.msra.mxu0 0.0
    %6594 = vmatprep.subr.mxu0 0.0
    %6595 = vmatpush1.xpose.msra.mxu0 0.0
    %6596 = vmatprep.subr.mxu0 0.0
    %6597 = vmatpush1.xpose.msra.mxu0 0.0
    %6598 = vmatprep.subr.mxu0 0.0
    %6599 = vmatpush1.xpose.msra.mxu0 0.0
    %6600 = vmatprep.subr.mxu0 0.0
    %6601 = vmatpush1.xpose.msra.mxu0 0.0
    %6602 = vmatprep.subr.mxu0 0.0
    %6603 = vmatpush1.xpose.msra.mxu0 0.0
    %6604 = vmatprep.subr.mxu0 0.0
    %6605 = vmatpush1.xpose.msra.mxu0 0.0
    %6606 = vmatprep.subr.mxu0 0.0
    %6607 = vmatpush1.xpose.msra.mxu0 0.0
    %6608 = vmatprep.subr.mxu0 0.0
    %6609 = vmatpush1.xpose.msra.mxu0 0.0
    %6610 = vmatprep.subr.mxu0 0.0
    %6611 = vmatpush1.xpose.msra.mxu0 0.0
    %6612 = vmatprep.mubr.f32.mxu0 0.0
    %6613 = vmatmul.mubr.f32.gmra.mrb[0].mxu0 %v6544
    %v6614 = vpop.f32.mrb[0].mxu0
    %v6615 = vadd.f32 %v4366, %v6614
    %v6616 = vpop.f32.mrb[0].mxu0
    %6617 = vdwg.mxu0
    %6619 = vrot.lane.b32.xlu0 %v6538, 96
    %v6620 = vpop.permute.xlu0 %6619
    %v6621 = vsel %vm369, %v6538, 0
    %v6623 = vsel %vm369, %v6620, 0
    %6625 = vmatprep.subr.mxu0 0.0
    %6626 = vmatpush1.xpose.msra.mxu0 %v6623
    %6627 = vmatprep.subr.mxu0 0.0
    %6628 = vmatpush1.xpose.msra.mxu0 0.0
    %6629 = vmatprep.subr.mxu0 0.0
    %6630 = vmatpush1.xpose.msra.mxu0 0.0
    %6631 = vmatprep.subr.mxu0 0.0
    %6632 = vmatpush1.xpose.msra.mxu0 0.0
    %6633 = vmatprep.subr.mxu0 0.0
    %6634 = vmatpush1.xpose.msra.mxu0 0.0
    %6635 = vmatprep.subr.mxu0 0.0
    %6636 = vmatpush1.xpose.msra.mxu0 0.0
    %6637 = vmatprep.subr.mxu0 0.0
    %6638 = vmatpush1.xpose.msra.mxu0 0.0
    %6639 = vmatprep.subr.mxu0 0.0
    %6640 = vmatpush1.xpose.msra.mxu0 0.0
    %6641 = vmatprep.subr.mxu0 0.0
    %6642 = vmatpush1.xpose.msra.mxu0 0.0
    %6643 = vmatprep.subr.mxu0 0.0
    %6644 = vmatpush1.xpose.msra.mxu0 0.0
    %6645 = vmatprep.subr.mxu0 0.0
    %6646 = vmatpush1.xpose.msra.mxu0 0.0
    %6647 = vmatprep.subr.mxu0 0.0
    %6648 = vmatpush1.xpose.msra.mxu0 0.0
    %6649 = vmatprep.subr.mxu0 0.0
    %6650 = vmatpush1.xpose.msra.mxu0 0.0
    %6651 = vmatprep.subr.mxu0 0.0
    %6652 = vmatpush1.xpose.msra.mxu0 0.0
    %6653 = vmatprep.subr.mxu0 0.0
    %6654 = vmatpush1.xpose.msra.mxu0 0.0
    %6655 = vmatprep.subr.mxu0 0.0
    %6656 = vmatpush1.xpose.msra.mxu0 0.0
    %6657 = vmatprep.subr.mxu0 0.0
    %6658 = vmatpush1.xpose.msra.mxu0 0.0
    %6659 = vmatprep.subr.mxu0 0.0
    %6660 = vmatpush1.xpose.msra.mxu0 0.0
    %6661 = vmatprep.subr.mxu0 0.0
    %6662 = vmatpush1.xpose.msra.mxu0 0.0
    %6663 = vmatprep.subr.mxu0 0.0
    %6664 = vmatpush1.xpose.msra.mxu0 0.0
    %6665 = vmatprep.subr.mxu0 0.0
    %6666 = vmatpush1.xpose.msra.mxu0 0.0
    %6667 = vmatprep.subr.mxu0 0.0
    %6668 = vmatpush1.xpose.msra.mxu0 0.0
    %6669 = vmatprep.subr.mxu0 0.0
    %6670 = vmatpush1.xpose.msra.mxu0 0.0
    %6671 = vmatprep.subr.mxu0 0.0
    %6672 = vmatpush1.xpose.msra.mxu0 0.0
    %6673 = vmatprep.subr.mxu0 0.0
    %6674 = vmatpush1.xpose.msra.mxu0 0.0
    %6675 = vmatprep.subr.mxu0 0.0
    %6676 = vmatpush1.xpose.msra.mxu0 0.0
    %6677 = vmatprep.subr.mxu0 0.0
    %6678 = vmatpush1.xpose.msra.mxu0 0.0
    %6679 = vmatprep.subr.mxu0 0.0
    %6680 = vmatpush1.xpose.msra.mxu0 0.0
    %6681 = vmatprep.subr.mxu0 0.0
    %6682 = vmatpush1.xpose.msra.mxu0 0.0
    %6683 = vmatprep.subr.mxu0 0.0
    %6684 = vmatpush1.xpose.msra.mxu0 0.0
    %6685 = vmatprep.subr.mxu0 0.0
    %6686 = vmatpush1.xpose.msra.mxu0 0.0
    %6687 = vmatprep.subr.mxu0 0.0
    %6688 = vmatpush1.xpose.msra.mxu0 0.0
    %6689 = vmatprep.mubr.f32.mxu0 0.0
    %6690 = vmatmul.mubr.f32.gmra.mrb[0].mxu0 %v6621
    %v6691 = vpop.f32.mrb[0].mxu0
    %v6692 = vadd.f32 %v4367, %v6691
    %v6693 = vpop.f32.mrb[0].mxu0
    %6694 = vdwg.mxu0
    %v6695 = vsel %vm369, %v6615, -inf
    %6696 = vmax.xlane.f32.xlu0 %v6695
    %v6697 = vpop.xlane.xlu0 %6696
    %v6698 = vsel %vm369, %v6692, -inf
    %6699 = vmax.xlane.f32.xlu0 %v6698
    %v6700 = vpop.xlane.xlu0 %6699
    %v6701 = vsub.f32 %v6615, %v6697
    %v6702 = vsub.f32 %v6692, %v6700
    %v6703 = vmul.f32 %v6701, 1.442695
    %v6704 = vpow.pop %v6703
    %v6705 = vmul.f32 %v6702, 1.442695
    %v6706 = vpow.pop %v6705
    %v6707 = vsel %vm369, %v6704, 0.0
    %6708 = vadd.xlane.f32.xlu0 %v6707
    %v6709 = vpop.xlane.xlu0 %6708
    %v6710 = vsel %vm369, %v6706, 0.0
    %6711 = vadd.xlane.f32.xlu0 %v6710
    %v6712 = vpop.xlane.xlu0 %6711
    %v6713 = vrcp.pop %v6709
    %v6714 = vrcp.pop %v6712
    %v6715 = vmul.f32 %v6704, %v6713
    %v6716 = vmul.f32 %v6706, %v6714
    %6717 = vrot.lane.b32.xlu0 %v6533, 64
    %v6718 = vpop.permute.xlu0 %6717
    %v6721 = vsel %vm369, %v6715, 0
    %6723 = vmatprep.subr.mxu0 0.0
    %6724 = vmatpush1.msra.mxu0 %v6718
    %6725 = vmatprep.subr.mxu0 0.0
    %6726 = vmatpush1.msra.mxu0 0.0
    %6727 = vmatprep.subr.mxu0 0.0
    %6728 = vmatpush1.msra.mxu0 0.0
    %6729 = vmatprep.subr.mxu0 0.0
    %6730 = vmatpush1.msra.mxu0 0.0
    %6731 = vmatprep.subr.mxu0 0.0
    %6732 = vmatpush1.msra.mxu0 0.0
    %6733 = vmatprep.subr.mxu0 0.0
    %6734 = vmatpush1.msra.mxu0 0.0
    %6735 = vmatprep.subr.mxu0 0.0
    %6736 = vmatpush1.msra.mxu0 0.0
    %6737 = vmatprep.subr.mxu0 0.0
    %6738 = vmatpush1.msra.mxu0 0.0
    %6739 = vmatprep.subr.mxu0 0.0
    %6740 = vmatpush1.msra.mxu0 0.0
    %6741 = vmatprep.subr.mxu0 0.0
    %6742 = vmatpush1.msra.mxu0 0.0
    %6743 = vmatprep.subr.mxu0 0.0
    %6744 = vmatpush1.msra.mxu0 0.0
    %6745 = vmatprep.subr.mxu0 0.0
    %6746 = vmatpush1.msra.mxu0 0.0
    %6747 = vmatprep.subr.mxu0 0.0
    %6748 = vmatpush1.msra.mxu0 0.0
    %6749 = vmatprep.subr.mxu0 0.0
    %6750 = vmatpush1.msra.mxu0 0.0
    %6751 = vmatprep.subr.mxu0 0.0
    %6752 = vmatpush1.msra.mxu0 0.0
    %6753 = vmatprep.subr.mxu0 0.0
    %6754 = vmatpush1.msra.mxu0 0.0
    %6755 = vmatprep.subr.mxu0 0.0
    %6756 = vmatpush1.msra.mxu0 0.0
    %6757 = vmatprep.subr.mxu0 0.0
    %6758 = vmatpush1.msra.mxu0 0.0
    %6759 = vmatprep.subr.mxu0 0.0
    %6760 = vmatpush1.msra.mxu0 0.0
    %6761 = vmatprep.subr.mxu0 0.0
    %6762 = vmatpush1.msra.mxu0 0.0
    %6763 = vmatprep.subr.mxu0 0.0
    %6764 = vmatpush1.msra.mxu0 0.0
    %6765 = vmatprep.subr.mxu0 0.0
    %6766 = vmatpush1.msra.mxu0 0.0
    %6767 = vmatprep.subr.mxu0 0.0
    %6768 = vmatpush1.msra.mxu0 0.0
    %6769 = vmatprep.subr.mxu0 0.0
    %6770 = vmatpush1.msra.mxu0 0.0
    %6771 = vmatprep.subr.mxu0 0.0
    %6772 = vmatpush1.msra.mxu0 0.0
    %6773 = vmatprep.subr.mxu0 0.0
    %6774 = vmatpush1.msra.mxu0 0.0
    %6775 = vmatprep.subr.mxu0 0.0
    %6776 = vmatpush1.msra.mxu0 0.0
    %6777 = vmatprep.subr.mxu0 0.0
    %6778 = vmatpush1.msra.mxu0 0.0
    %6779 = vmatprep.subr.mxu0 0.0
    %6780 = vmatpush1.msra.mxu0 0.0
    %6781 = vmatprep.subr.mxu0 0.0
    %6782 = vmatpush1.msra.mxu0 0.0
    %6783 = vmatprep.subr.mxu0 0.0
    %6784 = vmatpush1.msra.mxu0 0.0
    %6785 = vmatprep.subr.mxu0 0.0
    %6786 = vmatpush1.msra.mxu0 0.0
    %6787 = vmatprep.mubr.f32.mxu0 0.0
    %6788 = vmatmul.mubr.f32.gmra.mrb[0].mxu0 %v6721
    %v6789 = vpop.f32.mrb[0].mxu0
    %v6790 = vadd.f32 0.0, %v6789
    %v6791 = vpop.f32.mrb[0].mxu0
    %6792 = vdwg.mxu0
    %6793 = vrot.lane.b32.xlu0 %v6538, 64
    %v6794 = vpop.permute.xlu0 %6793
    %v6797 = vsel %vm369, %v6716, 0
    %6799 = vmatprep.subr.mxu0 0.0
    %6800 = vmatpush1.msra.mxu0 %v6794
    %6801 = vmatprep.subr.mxu0 0.0
    %6802 = vmatpush1.msra.mxu0 0.0
    %6803 = vmatprep.subr.mxu0 0.0
    %6804 = vmatpush1.msra.mxu0 0.0
    %6805 = vmatprep.subr.mxu0 0.0
    %6806 = vmatpush1.msra.mxu0 0.0
    %6807 = vmatprep.subr.mxu0 0.0
    %6808 = vmatpush1.msra.mxu0 0.0
    %6809 = vmatprep.subr.mxu0 0.0
    %6810 = vmatpush1.msra.mxu0 0.0
    %6811 = vmatprep.subr.mxu0 0.0
    %6812 = vmatpush1.msra.mxu0 0.0
    %6813 = vmatprep.subr.mxu0 0.0
    %6814 = vmatpush1.msra.mxu0 0.0
    %6815 = vmatprep.subr.mxu0 0.0
    %6816 = vmatpush1.msra.mxu0 0.0
    %6817 = vmatprep.subr.mxu0 0.0
    %6818 = vmatpush1.msra.mxu0 0.0
    %6819 = vmatprep.subr.mxu0 0.0
    %6820 = vmatpush1.msra.mxu0 0.0
    %6821 = vmatprep.subr.mxu0 0.0
    %6822 = vmatpush1.msra.mxu0 0.0
    %6823 = vmatprep.subr.mxu0 0.0
    %6824 = vmatpush1.msra.mxu0 0.0
    %6825 = vmatprep.subr.mxu0 0.0
    %6826 = vmatpush1.msra.mxu0 0.0
    %6827 = vmatprep.subr.mxu0 0.0
    %6828 = vmatpush1.msra.mxu0 0.0
    %6829 = vmatprep.subr.mxu0 0.0
    %6830 = vmatpush1.msra.mxu0 0.0
    %6831 = vmatprep.subr.mxu0 0.0
    %6832 = vmatpush1.msra.mxu0 0.0
    %6833 = vmatprep.subr.mxu0 0.0
    %6834 = vmatpush1.msra.mxu0 0.0
    %6835 = vmatprep.subr.mxu0 0.0
    %6836 = vmatpush1.msra.mxu0 0.0
    %6837 = vmatprep.subr.mxu0 0.0
    %6838 = vmatpush1.msra.mxu0 0.0
    %6839 = vmatprep.subr.mxu0 0.0
    %6840 = vmatpush1.msra.mxu0 0.0
    %6841 = vmatprep.subr.mxu0 0.0
    %6842 = vmatpush1.msra.mxu0 0.0
    %6843 = vmatprep.subr.mxu0 0.0
    %6844 = vmatpush1.msra.mxu0 0.0
    %6845 = vmatprep.subr.mxu0 0.0
    %6846 = vmatpush1.msra.mxu0 0.0
    %6847 = vmatprep.subr.mxu0 0.0
    %6848 = vmatpush1.msra.mxu0 0.0
    %6849 = vmatprep.subr.mxu0 0.0
    %6850 = vmatpush1.msra.mxu0 0.0
    %6851 = vmatprep.subr.mxu0 0.0
    %6852 = vmatpush1.msra.mxu0 0.0
    %6853 = vmatprep.subr.mxu0 0.0
    %6854 = vmatpush1.msra.mxu0 0.0
    %6855 = vmatprep.subr.mxu0 0.0
    %6856 = vmatpush1.msra.mxu0 0.0
    %6857 = vmatprep.subr.mxu0 0.0
    %6858 = vmatpush1.msra.mxu0 0.0
    %6859 = vmatprep.subr.mxu0 0.0
    %6860 = vmatpush1.msra.mxu0 0.0
    %6861 = vmatprep.subr.mxu0 0.0
    %6862 = vmatpush1.msra.mxu0 0.0
    %6863 = vmatprep.mubr.f32.mxu0 0.0
    %6864 = vmatmul.mubr.f32.gmra.mrb[0].mxu0 %v6797
    %v6865 = vpop.f32.mrb[0].mxu0
    %v6866 = vadd.f32 0.0, %v6865
    %v6867 = vpop.f32.mrb[0].mxu0
    %6868 = vdwg.mxu0
    %6869 = vrot.lane.b32.xlu0 %v6533, 120
    %v6870 = vpop.permute.xlu0 %6869
    %6871 = vrot.lane.b32.xlu0 %v6533, 88
    %v6872 = vpop.permute.xlu0 %6871
    %v6873 = vsel %vm369, %v6870, 0
    %v6875 = vsel %vm369, %v6872, 0
    %6877 = vmatprep.subr.mxu0 0.0
    %6878 = vmatpush1.xpose.msra.mxu0 %v6875
    %6879 = vmatprep.subr.mxu0 0.0
    %6880 = vmatpush1.xpose.msra.mxu0 0.0
    %6881 = vmatprep.subr.mxu0 0.0
    %6882 = vmatpush1.xpose.msra.mxu0 0.0
    %6883 = vmatprep.subr.mxu0 0.0
    %6884 = vmatpush1.xpose.msra.mxu0 0.0
    %6885 = vmatprep.subr.mxu0 0.0
    %6886 = vmatpush1.xpose.msra.mxu0 0.0
    %6887 = vmatprep.subr.mxu0 0.0
    %6888 = vmatpush1.xpose.msra.mxu0 0.0
    %6889 = vmatprep.subr.mxu0 0.0
    %6890 = vmatpush1.xpose.msra.mxu0 0.0
    %6891 = vmatprep.subr.mxu0 0.0
    %6892 = vmatpush1.xpose.msra.mxu0 0.0
    %6893 = vmatprep.subr.mxu0 0.0
    %6894 = vmatpush1.xpose.msra.mxu0 0.0
    %6895 = vmatprep.subr.mxu0 0.0
    %6896 = vmatpush1.xpose.msra.mxu0 0.0
    %6897 = vmatprep.subr.mxu0 0.0
    %6898 = vmatpush1.xpose.msra.mxu0 0.0
    %6899 = vmatprep.subr.mxu0 0.0
    %6900 = vmatpush1.xpose.msra.mxu0 0.0
    %6901 = vmatprep.subr.mxu0 0.0
    %6902 = vmatpush1.xpose.msra.mxu0 0.0
    %6903 = vmatprep.subr.mxu0 0.0
    %6904 = vmatpush1.xpose.msra.mxu0 0.0
    %6905 = vmatprep.subr.mxu0 0.0
    %6906 = vmatpush1.xpose.msra.mxu0 0.0
    %6907 = vmatprep.subr.mxu0 0.0
    %6908 = vmatpush1.xpose.msra.mxu0 0.0
    %6909 = vmatprep.subr.mxu0 0.0
    %6910 = vmatpush1.xpose.msra.mxu0 0.0
    %6911 = vmatprep.subr.mxu0 0.0
    %6912 = vmatpush1.xpose.msra.mxu0 0.0
    %6913 = vmatprep.subr.mxu0 0.0
    %6914 = vmatpush1.xpose.msra.mxu0 0.0
    %6915 = vmatprep.subr.mxu0 0.0
    %6916 = vmatpush1.xpose.msra.mxu0 0.0
    %6917 = vmatprep.subr.mxu0 0.0
    %6918 = vmatpush1.xpose.msra.mxu0 0.0
    %6919 = vmatprep.subr.mxu0 0.0
    %6920 = vmatpush1.xpose.msra.mxu0 0.0
    %6921 = vmatprep.subr.mxu0 0.0
    %6922 = vmatpush1.xpose.msra.mxu0 0.0
    %6923 = vmatprep.subr.mxu0 0.0
    %6924 = vmatpush1.xpose.msra.mxu0 0.0
    %6925 = vmatprep.subr.mxu0 0.0
    %6926 = vmatpush1.xpose.msra.mxu0 0.0
    %6927 = vmatprep.subr.mxu0 0.0
    %6928 = vmatpush1.xpose.msra.mxu0 0.0
    %6929 = vmatprep.subr.mxu0 0.0
    %6930 = vmatpush1.xpose.msra.mxu0 0.0
    %6931 = vmatprep.subr.mxu0 0.0
    %6932 = vmatpush1.xpose.msra.mxu0 0.0
    %6933 = vmatprep.subr.mxu0 0.0
    %6934 = vmatpush1.xpose.msra.mxu0 0.0
    %6935 = vmatprep.subr.mxu0 0.0
    %6936 = vmatpush1.xpose.msra.mxu0 0.0
    %6937 = vmatprep.subr.mxu0 0.0
    %6938 = vmatpush1.xpose.msra.mxu0 0.0
    %6939 = vmatprep.subr.mxu0 0.0
    %6940 = vmatpush1.xpose.msra.mxu0 0.0
    %6941 = vmatprep.mubr.f32.mxu0 0.0
    %6942 = vmatmul.mubr.f32.gmra.mrb[0].mxu0 %v6873
    %v6943 = vpop.f32.mrb[0].mxu0
    %v6944 = vadd.f32 %v4366, %v6943
    %v6945 = vpop.f32.mrb[0].mxu0
    %6946 = vdwg.mxu0
    %6947 = vrot.lane.b32.xlu0 %v6538, 120
    %v6948 = vpop.permute.xlu0 %6947
    %6949 = vrot.lane.b32.xlu0 %v6538, 88
    %v6950 = vpop.permute.xlu0 %6949
    %v6951 = vsel %vm369, %v6948, 0
    %v6953 = vsel %vm369, %v6950, 0
    %6955 = vmatprep.subr.mxu0 0.0
    %6956 = vmatpush1.xpose.msra.mxu0 %v6953
    %6957 = vmatprep.subr.mxu0 0.0
    %6958 = vmatpush1.xpose.msra.mxu0 0.0
    %6959 = vmatprep.subr.mxu0 0.0
    %6960 = vmatpush1.xpose.msra.mxu0 0.0
    %6961 = vmatprep.subr.mxu0 0.0
    %6962 = vmatpush1.xpose.msra.mxu0 0.0
    %6963 = vmatprep.subr.mxu0 0.0
    %6964 = vmatpush1.xpose.msra.mxu0 0.0
    %6965 = vmatprep.subr.mxu0 0.0
    %6966 = vmatpush1.xpose.msra.mxu0 0.0
    %6967 = vmatprep.subr.mxu0 0.0
    %6968 = vmatpush1.xpose.msra.mxu0 0.0
    %6969 = vmatprep.subr.mxu0 0.0
    %6970 = vmatpush1.xpose.msra.mxu0 0.0
    %6971 = vmatprep.subr.mxu0 0.0
    %6972 = vmatpush1.xpose.msra.mxu0 0.0
    %6973 = vmatprep.subr.mxu0 0.0
    %6974 = vmatpush1.xpose.msra.mxu0 0.0
    %6975 = vmatprep.subr.mxu0 0.0
    %6976 = vmatpush1.xpose.msra.mxu0 0.0
    %6977 = vmatprep.subr.mxu0 0.0
    %6978 = vmatpush1.xpose.msra.mxu0 0.0
    %6979 = vmatprep.subr.mxu0 0.0
    %6980 = vmatpush1.xpose.msra.mxu0 0.0
    %6981 = vmatprep.subr.mxu0 0.0
    %6982 = vmatpush1.xpose.msra.mxu0 0.0
    %6983 = vmatprep.subr.mxu0 0.0
    %6984 = vmatpush1.xpose.msra.mxu0 0.0
    %6985 = vmatprep.subr.mxu0 0.0
    %6986 = vmatpush1.xpose.msra.mxu0 0.0
    %6987 = vmatprep.subr.mxu0 0.0
    %6988 = vmatpush1.xpose.msra.mxu0 0.0
    %6989 = vmatprep.subr.mxu0 0.0
    %6990 = vmatpush1.xpose.msra.mxu0 0.0
    %6991 = vmatprep.subr.mxu0 0.0
    %6992 = vmatpush1.xpose.msra.mxu0 0.0
    %6993 = vmatprep.subr.mxu0 0.0
    %6994 = vmatpush1.xpose.msra.mxu0 0.0
    %6995 = vmatprep.subr.mxu0 0.0
    %6996 = vmatpush1.xpose.msra.mxu0 0.0
    %6997 = vmatprep.subr.mxu0 0.0
    %6998 = vmatpush1.xpose.msra.mxu0 0.0
    %6999 = vmatprep.subr.mxu0 0.0
    %7000 = vmatpush1.xpose.msra.mxu0 0.0
    %7001 = vmatprep.subr.mxu0 0.0
    %7002 = vmatpush1.xpose.msra.mxu0 0.0
    %7003 = vmatprep.subr.mxu0 0.0
    %7004 = vmatpush1.xpose.msra.mxu0 0.0
    %7005 = vmatprep.subr.mxu0 0.0
    %7006 = vmatpush1.xpose.msra.mxu0 0.0
    %7007 = vmatprep.subr.mxu0 0.0
    %7008 = vmatpush1.xpose.msra.mxu0 0.0
    %7009 = vmatprep.subr.mxu0 0.0
    %7010 = vmatpush1.xpose.msra.mxu0 0.0
    %7011 = vmatprep.subr.mxu0 0.0
    %7012 = vmatpush1.xpose.msra.mxu0 0.0
    %7013 = vmatprep.subr.mxu0 0.0
    %7014 = vmatpush1.xpose.msra.mxu0 0.0
    %7015 = vmatprep.subr.mxu0 0.0
    %7016 = vmatpush1.xpose.msra.mxu0 0.0
    %7017 = vmatprep.subr.mxu0 0.0
    %7018 = vmatpush1.xpose.msra.mxu0 0.0
    %7019 = vmatprep.mubr.f32.mxu0 0.0
    %7020 = vmatmul.mubr.f32.gmra.mrb[0].mxu0 %v6951
    %v7021 = vpop.f32.mrb[0].mxu0
    %v7022 = vadd.f32 %v4367, %v7021
    %v7023 = vpop.f32.mrb[0].mxu0
    %7024 = vdwg.mxu0
    %v7025 = vsel %vm369, %v6944, -inf
    %7026 = vmax.xlane.f32.xlu0 %v7025
    %v7027 = vpop.xlane.xlu0 %7026
    %v7028 = vsel %vm369, %v7022, -inf
    %7029 = vmax.xlane.f32.xlu0 %v7028
    %v7030 = vpop.xlane.xlu0 %7029
    %v7031 = vsub.f32 %v6944, %v7027
    %v7032 = vsub.f32 %v7022, %v7030
    %v7033 = vmul.f32 %v7031, 1.442695
    %v7034 = vpow.pop %v7033
    %v7035 = vmul.f32 %v7032, 1.442695
    %v7036 = vpow.pop %v7035
    %v7037 = vsel %vm369, %v7034, 0.0
    %7038 = vadd.xlane.f32.xlu0 %v7037
    %v7039 = vpop.xlane.xlu0 %7038
    %v7040 = vsel %vm369, %v7036, 0.0
    %7041 = vadd.xlane.f32.xlu0 %v7040
    %v7042 = vpop.xlane.xlu0 %7041
    %v7043 = vrcp.pop %v7039
    %v7044 = vrcp.pop %v7042
    %v7045 = vmul.f32 %v7034, %v7043
    %v7046 = vmul.f32 %v7036, %v7044
    %7047 = vrot.lane.b32.xlu0 %v6533, 56
    %v7048 = vpop.permute.xlu0 %7047
    %v7051 = vsel %vm369, %v7045, 0
    %7053 = vmatprep.subr.mxu0 0.0
    %7054 = vmatpush1.msra.mxu0 %v7048
    %7055 = vmatprep.subr.mxu0 0.0
    %7056 = vmatpush1.msra.mxu0 0.0
    %7057 = vmatprep.subr.mxu0 0.0
    %7058 = vmatpush1.msra.mxu0 0.0
    %7059 = vmatprep.subr.mxu0 0.0
    %7060 = vmatpush1.msra.mxu0 0.0
    %7061 = vmatprep.subr.mxu0 0.0
    %7062 = vmatpush1.msra.mxu0 0.0
    %7063 = vmatprep.subr.mxu0 0.0
    %7064 = vmatpush1.msra.mxu0 0.0
    %7065 = vmatprep.subr.mxu0 0.0
    %7066 = vmatpush1.msra.mxu0 0.0
    %7067 = vmatprep.subr.mxu0 0.0
    %7068 = vmatpush1.msra.mxu0 0.0
    %7069 = vmatprep.subr.mxu0 0.0
    %7070 = vmatpush1.msra.mxu0 0.0
    %7071 = vmatprep.subr.mxu0 0.0
    %7072 = vmatpush1.msra.mxu0 0.0
    %7073 = vmatprep.subr.mxu0 0.0
    %7074 = vmatpush1.msra.mxu0 0.0
    %7075 = vmatprep.subr.mxu0 0.0
    %7076 = vmatpush1.msra.mxu0 0.0
    %7077 = vmatprep.subr.mxu0 0.0
    %7078 = vmatpush1.msra.mxu0 0.0
    %7079 = vmatprep.subr.mxu0 0.0
    %7080 = vmatpush1.msra.mxu0 0.0
    %7081 = vmatprep.subr.mxu0 0.0
    %7082 = vmatpush1.msra.mxu0 0.0
    %7083 = vmatprep.subr.mxu0 0.0
    %7084 = vmatpush1.msra.mxu0 0.0
    %7085 = vmatprep.subr.mxu0 0.0
    %7086 = vmatpush1.msra.mxu0 0.0
    %7087 = vmatprep.subr.mxu0 0.0
    %7088 = vmatpush1.msra.mxu0 0.0
    %7089 = vmatprep.subr.mxu0 0.0
    %7090 = vmatpush1.msra.mxu0 0.0
    %7091 = vmatprep.subr.mxu0 0.0
    %7092 = vmatpush1.msra.mxu0 0.0
    %7093 = vmatprep.subr.mxu0 0.0
    %7094 = vmatpush1.msra.mxu0 0.0
    %7095 = vmatprep.subr.mxu0 0.0
    %7096 = vmatpush1.msra.mxu0 0.0
    %7097 = vmatprep.subr.mxu0 0.0
    %7098 = vmatpush1.msra.mxu0 0.0
    %7099 = vmatprep.subr.mxu0 0.0
    %7100 = vmatpush1.msra.mxu0 0.0
    %7101 = vmatprep.subr.mxu0 0.0
    %7102 = vmatpush1.msra.mxu0 0.0
    %7103 = vmatprep.subr.mxu0 0.0
    %7104 = vmatpush1.msra.mxu0 0.0
    %7105 = vmatprep.subr.mxu0 0.0
    %7106 = vmatpush1.msra.mxu0 0.0
    %7107 = vmatprep.subr.mxu0 0.0
    %7108 = vmatpush1.msra.mxu0 0.0
    %7109 = vmatprep.subr.mxu0 0.0
    %7110 = vmatpush1.msra.mxu0 0.0
    %7111 = vmatprep.subr.mxu0 0.0
    %7112 = vmatpush1.msra.mxu0 0.0
    %7113 = vmatprep.subr.mxu0 0.0
    %7114 = vmatpush1.msra.mxu0 0.0
    %7115 = vmatprep.subr.mxu0 0.0
    %7116 = vmatpush1.msra.mxu0 0.0
    %7117 = vmatprep.mubr.f32.mxu0 0.0
    %7118 = vmatmul.mubr.f32.gmra.mrb[0].mxu0 %v7051
    %v7119 = vpop.f32.mrb[0].mxu0
    %v7120 = vadd.f32 0.0, %v7119
    %v7121 = vpop.f32.mrb[0].mxu0
    %7122 = vdwg.mxu0
    %7123 = vrot.lane.b32.xlu0 %v6538, 56
    %v7124 = vpop.permute.xlu0 %7123
    %v7127 = vsel %vm369, %v7046, 0
    %7129 = vmatprep.subr.mxu0 0.0
    %7130 = vmatpush1.msra.mxu0 %v7124
    %7131 = vmatprep.subr.mxu0 0.0
    %7132 = vmatpush1.msra.mxu0 0.0
    %7133 = vmatprep.subr.mxu0 0.0
    %7134 = vmatpush1.msra.mxu0 0.0
    %7135 = vmatprep.subr.mxu0 0.0
    %7136 = vmatpush1.msra.mxu0 0.0
    %7137 = vmatprep.subr.mxu0 0.0
    %7138 = vmatpush1.msra.mxu0 0.0
    %7139 = vmatprep.subr.mxu0 0.0
    %7140 = vmatpush1.msra.mxu0 0.0
    %7141 = vmatprep.subr.mxu0 0.0
    %7142 = vmatpush1.msra.mxu0 0.0
    %7143 = vmatprep.subr.mxu0 0.0
    %7144 = vmatpush1.msra.mxu0 0.0
    %7145 = vmatprep.subr.mxu0 0.0
    %7146 = vmatpush1.msra.mxu0 0.0
    %7147 = vmatprep.subr.mxu0 0.0
    %7148 = vmatpush1.msra.mxu0 0.0
    %7149 = vmatprep.subr.mxu0 0.0
    %7150 = vmatpush1.msra.mxu0 0.0
    %7151 = vmatprep.subr.mxu0 0.0
    %7152 = vmatpush1.msra.mxu0 0.0
    %7153 = vmatprep.subr.mxu0 0.0
    %7154 = vmatpush1.msra.mxu0 0.0
    %7155 = vmatprep.subr.mxu0 0.0
    %7156 = vmatpush1.msra.mxu0 0.0
    %7157 = vmatprep.subr.mxu0 0.0
    %7158 = vmatpush1.msra.mxu0 0.0
    %7159 = vmatprep.subr.mxu0 0.0
    %7160 = vmatpush1.msra.mxu0 0.0
    %7161 = vmatprep.subr.mxu0 0.0
    %7162 = vmatpush1.msra.mxu0 0.0
    %7163 = vmatprep.subr.mxu0 0.0
    %7164 = vmatpush1.msra.mxu0 0.0
    %7165 = vmatprep.subr.mxu0 0.0
    %7166 = vmatpush1.msra.mxu0 0.0
    %7167 = vmatprep.subr.mxu0 0.0
    %7168 = vmatpush1.msra.mxu0 0.0
    %7169 = vmatprep.subr.mxu0 0.0
    %7170 = vmatpush1.msra.mxu0 0.0
    %7171 = vmatprep.subr.mxu0 0.0
    %7172 = vmatpush1.msra.mxu0 0.0
    %7173 = vmatprep.subr.mxu0 0.0
    %7174 = vmatpush1.msra.mxu0 0.0
    %7175 = vmatprep.subr.mxu0 0.0
    %7176 = vmatpush1.msra.mxu0 0.0
    %7177 = vmatprep.subr.mxu0 0.0
    %7178 = vmatpush1.msra.mxu0 0.0
    %7179 = vmatprep.subr.mxu0 0.0
    %7180 = vmatpush1.msra.mxu0 0.0
    %7181 = vmatprep.subr.mxu0 0.0
    %7182 = vmatpush1.msra.mxu0 0.0
    %7183 = vmatprep.subr.mxu0 0.0
    %7184 = vmatpush1.msra.mxu0 0.0
    %7185 = vmatprep.subr.mxu0 0.0
    %7186 = vmatpush1.msra.mxu0 0.0
    %7187 = vmatprep.subr.mxu0 0.0
    %7188 = vmatpush1.msra.mxu0 0.0
    %7189 = vmatprep.subr.mxu0 0.0
    %7190 = vmatpush1.msra.mxu0 0.0
    %7191 = vmatprep.subr.mxu0 0.0
    %7192 = vmatpush1.msra.mxu0 0.0
    %7193 = vmatprep.mubr.f32.mxu0 0.0
    %7194 = vmatmul.mubr.f32.gmra.mrb[0].mxu0 %v7127
    %v7195 = vpop.f32.mrb[0].mxu0
    %v7196 = vadd.f32 0.0, %v7195
    %v7197 = vpop.f32.mrb[0].mxu0
    %7198 = vdwg.mxu0
    %v7200 = vsel %vm369, %v7120, 0
    %v7203 = vsel %vm369, %v7196, 0
    %7205 = vmatprep.subr.mxu0 0.0
    %7206 = vmatpush1.msra.mxu0 %v6399
    %7207 = vmatprep.subr.mxu0 0.0
    %7208 = vmatpush1.msra.mxu0 0.0
    %7209 = vmatprep.subr.mxu0 0.0
    %7210 = vmatpush1.msra.mxu0 0.0
    %7211 = vmatprep.subr.mxu0 0.0
    %7212 = vmatpush1.msra.mxu0 0.0
    %7213 = vmatprep.subr.mxu0 0.0
    %7214 = vmatpush1.msra.mxu0 0.0
    %7215 = vmatprep.subr.mxu0 0.0
    %7216 = vmatpush1.msra.mxu0 0.0
    %7217 = vmatprep.subr.mxu0 0.0
    %7218 = vmatpush1.msra.mxu0 0.0
    %7219 = vmatprep.subr.mxu0 0.0
    %7220 = vmatpush1.msra.mxu0 0.0
    %7221 = vmatprep.subr.mxu0 0.0
    %7222 = vmatpush1.msra.mxu0 0.0
    %7223 = vmatprep.subr.mxu0 0.0
    %7224 = vmatpush1.msra.mxu0 0.0
    %7225 = vmatprep.subr.mxu0 0.0
    %7226 = vmatpush1.msra.mxu0 0.0
    %7227 = vmatprep.subr.mxu0 0.0
    %7228 = vmatpush1.msra.mxu0 0.0
    %7229 = vmatprep.subr.mxu0 0.0
    %7230 = vmatpush1.msra.mxu0 0.0
    %7231 = vmatprep.subr.mxu0 0.0
    %7232 = vmatpush1.msra.mxu0 0.0
    %7233 = vmatprep.subr.mxu0 0.0
    %7234 = vmatpush1.msra.mxu0 0.0
    %7235 = vmatprep.subr.mxu0 0.0
    %7236 = vmatpush1.msra.mxu0 0.0
    %7237 = vmatprep.subr.mxu0 0.0
    %7238 = vmatpush1.msra.mxu0 0.0
    %7239 = vmatprep.subr.mxu0 0.0
    %7240 = vmatpush1.msra.mxu0 0.0
    %7241 = vmatprep.subr.mxu0 0.0
    %7242 = vmatpush1.msra.mxu0 0.0
    %7243 = vmatprep.subr.mxu0 0.0
    %7244 = vmatpush1.msra.mxu0 0.0
    %7245 = vmatprep.subr.mxu0 0.0
    %7246 = vmatpush1.msra.mxu0 0.0
    %7247 = vmatprep.subr.mxu0 0.0
    %7248 = vmatpush1.msra.mxu0 0.0
    %7249 = vmatprep.subr.mxu0 0.0
    %7250 = vmatpush1.msra.mxu0 0.0
    %7251 = vmatprep.subr.mxu0 0.0
    %7252 = vmatpush1.msra.mxu0 0.0
    %7253 = vmatprep.subr.mxu0 0.0
    %7254 = vmatpush1.msra.mxu0 0.0
    %7255 = vmatprep.subr.mxu0 0.0
    %7256 = vmatpush1.msra.mxu0 0.0
    %7257 = vmatprep.subr.mxu0 0.0
    %7258 = vmatpush1.msra.mxu0 0.0
    %7259 = vmatprep.subr.mxu0 0.0
    %7260 = vmatpush1.msra.mxu0 0.0
    %7261 = vmatprep.subr.mxu0 0.0
    %7262 = vmatpush1.msra.mxu0 0.0
    %7263 = vmatprep.subr.mxu0 0.0
    %7264 = vmatpush1.msra.mxu0 0.0
    %7265 = vmatprep.subr.mxu0 0.0
    %7266 = vmatpush1.msra.mxu0 0.0
    %7267 = vmatprep.subr.mxu0 0.0
    %7268 = vmatpush1.msra.mxu0 0.0
    %7269 = vmatprep.mubr.f32.mxu0 0.0
    %7270 = vmatmul.mubr.f32.gmra.mrb[0].mxu0 %v7200
    %v7271 = vpop.f32.mrb[0].mxu0
    %v7272 = vadd.f32 0.0, %v7271
    %v7273 = vpop.f32.mrb[0].mxu0
    %7274 = vmatprep.mubr.f32.mxu0 0.0
    %7275 = vmatmul.mubr.f32.gmra.mrb[0].mxu0 %v7203
    %v7276 = vpop.f32.mrb[0].mxu0
    %v7277 = vadd.f32 0.0, %v7276
    %v7278 = vpop.f32.mrb[0].mxu0
    %7279 = vdwg.mxu0
    %v7281 = vsel %vm369, %v6790, 0
    %v7284 = vsel %vm369, %v6866, 0
    %7286 = vmatprep.subr.mxu0 0.0
    %7287 = vmatpush1.msra.mxu0 %v6398
    %7288 = vmatprep.subr.mxu0 0.0
    %7289 = vmatpush1.msra.mxu0 0.0
    %7290 = vmatprep.subr.mxu0 0.0
    %7291 = vmatpush1.msra.mxu0 0.0
    %7292 = vmatprep.subr.mxu0 0.0
    %7293 = vmatpush1.msra.mxu0 0.0
    %7294 = vmatprep.subr.mxu0 0.0
    %7295 = vmatpush1.msra.mxu0 0.0
    %7296 = vmatprep.subr.mxu0 0.0
    %7297 = vmatpush1.msra.mxu0 0.0
    %7298 = vmatprep.subr.mxu0 0.0
    %7299 = vmatpush1.msra.mxu0 0.0
    %7300 = vmatprep.subr.mxu0 0.0
    %7301 = vmatpush1.msra.mxu0 0.0
    %7302 = vmatprep.subr.mxu0 0.0
    %7303 = vmatpush1.msra.mxu0 0.0
    %7304 = vmatprep.subr.mxu0 0.0
    %7305 = vmatpush1.msra.mxu0 0.0
    %7306 = vmatprep.subr.mxu0 0.0
    %7307 = vmatpush1.msra.mxu0 0.0
    %7308 = vmatprep.subr.mxu0 0.0
    %7309 = vmatpush1.msra.mxu0 0.0
    %7310 = vmatprep.subr.mxu0 0.0
    %7311 = vmatpush1.msra.mxu0 0.0
    %7312 = vmatprep.subr.mxu0 0.0
    %7313 = vmatpush1.msra.mxu0 0.0
    %7314 = vmatprep.subr.mxu0 0.0
    %7315 = vmatpush1.msra.mxu0 0.0
    %7316 = vmatprep.subr.mxu0 0.0
    %7317 = vmatpush1.msra.mxu0 0.0
    %7318 = vmatprep.subr.mxu0 0.0
    %7319 = vmatpush1.msra.mxu0 0.0
    %7320 = vmatprep.subr.mxu0 0.0
    %7321 = vmatpush1.msra.mxu0 0.0
    %7322 = vmatprep.subr.mxu0 0.0
    %7323 = vmatpush1.msra.mxu0 0.0
    %7324 = vmatprep.subr.mxu0 0.0
    %7325 = vmatpush1.msra.mxu0 0.0
    %7326 = vmatprep.subr.mxu0 0.0
    %7327 = vmatpush1.msra.mxu0 0.0
    %7328 = vmatprep.subr.mxu0 0.0
    %7329 = vmatpush1.msra.mxu0 0.0
    %7330 = vmatprep.subr.mxu0 0.0
    %7331 = vmatpush1.msra.mxu0 0.0
    %7332 = vmatprep.subr.mxu0 0.0
    %7333 = vmatpush1.msra.mxu0 0.0
    %7334 = vmatprep.subr.mxu0 0.0
    %7335 = vmatpush1.msra.mxu0 0.0
    %7336 = vmatprep.subr.mxu0 0.0
    %7337 = vmatpush1.msra.mxu0 0.0
    %7338 = vmatprep.subr.mxu0 0.0
    %7339 = vmatpush1.msra.mxu0 0.0
    %7340 = vmatprep.subr.mxu0 0.0
    %7341 = vmatpush1.msra.mxu0 0.0
    %7342 = vmatprep.subr.mxu0 0.0
    %7343 = vmatpush1.msra.mxu0 0.0
    %7344 = vmatprep.subr.mxu0 0.0
    %7345 = vmatpush1.msra.mxu0 0.0
    %7346 = vmatprep.subr.mxu0 0.0
    %7347 = vmatpush1.msra.mxu0 0.0
    %7348 = vmatprep.subr.mxu0 0.0
    %7349 = vmatpush1.msra.mxu0 0.0
    %7350 = vmatprep.mubr.f32.mxu0 0.0
    %7351 = vmatmul.mubr.f32.gmra.mrb[0].mxu0 %v7281
    %v7352 = vpop.f32.mrb[0].mxu0
    %v7353 = vadd.f32 %v7272, %v7352
    %v7354 = vpop.f32.mrb[0].mxu0
    %7355 = vmatprep.mubr.f32.mxu0 0.0
    %7356 = vmatmul.mubr.f32.gmra.mrb[0].mxu0 %v7284
    %v7357 = vpop.f32.mrb[0].mxu0
    %v7358 = vadd.f32 %v7277, %v7357
    %v7359 = vpop.f32.mrb[0].mxu0
    %7360 = vdwg.mxu0
    %7361 = vrot.lane.b32.xlu0 %v6533, 112
    %v7362 = vpop.permute.xlu0 %7361
    %7363 = vrot.lane.b32.xlu0 %v6533, 80
    %v7364 = vpop.permute.xlu0 %7363
    %v7365 = vsel %vm369, %v7362, 0
    %v7367 = vsel %vm369, %v7364, 0
    %7369 = vmatprep.subr.mxu0 0.0
    %7370 = vmatpush1.xpose.msra.mxu0 %v7367
    %7371 = vmatprep.subr.mxu0 0.0
    %7372 = vmatpush1.xpose.msra.mxu0 0.0
    %7373 = vmatprep.subr.mxu0 0.0
    %7374 = vmatpush1.xpose.msra.mxu0 0.0
    %7375 = vmatprep.subr.mxu0 0.0
    %7376 = vmatpush1.xpose.msra.mxu0 0.0
    %7377 = vmatprep.subr.mxu0 0.0
    %7378 = vmatpush1.xpose.msra.mxu0 0.0
    %7379 = vmatprep.subr.mxu0 0.0
    %7380 = vmatpush1.xpose.msra.mxu0 0.0
    %7381 = vmatprep.subr.mxu0 0.0
    %7382 = vmatpush1.xpose.msra.mxu0 0.0
    %7383 = vmatprep.subr.mxu0 0.0
    %7384 = vmatpush1.xpose.msra.mxu0 0.0
    %7385 = vmatprep.subr.mxu0 0.0
    %7386 = vmatpush1.xpose.msra.mxu0 0.0
    %7387 = vmatprep.subr.mxu0 0.0
    %7388 = vmatpush1.xpose.msra.mxu0 0.0
    %7389 = vmatprep.subr.mxu0 0.0
    %7390 = vmatpush1.xpose.msra.mxu0 0.0
    %7391 = vmatprep.subr.mxu0 0.0
    %7392 = vmatpush1.xpose.msra.mxu0 0.0
    %7393 = vmatprep.subr.mxu0 0.0
    %7394 = vmatpush1.xpose.msra.mxu0 0.0
    %7395 = vmatprep.subr.mxu0 0.0
    %7396 = vmatpush1.xpose.msra.mxu0 0.0
    %7397 = vmatprep.subr.mxu0 0.0
    %7398 = vmatpush1.xpose.msra.mxu0 0.0
    %7399 = vmatprep.subr.mxu0 0.0
    %7400 = vmatpush1.xpose.msra.mxu0 0.0
    %7401 = vmatprep.subr.mxu0 0.0
    %7402 = vmatpush1.xpose.msra.mxu0 0.0
    %7403 = vmatprep.subr.mxu0 0.0
    %7404 = vmatpush1.xpose.msra.mxu0 0.0
    %7405 = vmatprep.subr.mxu0 0.0
    %7406 = vmatpush1.xpose.msra.mxu0 0.0
    %7407 = vmatprep.subr.mxu0 0.0
    %7408 = vmatpush1.xpose.msra.mxu0 0.0
    %7409 = vmatprep.subr.mxu0 0.0
    %7410 = vmatpush1.xpose.msra.mxu0 0.0
    %7411 = vmatprep.subr.mxu0 0.0
    %7412 = vmatpush1.xpose.msra.mxu0 0.0
    %7413 = vmatprep.subr.mxu0 0.0
    %7414 = vmatpush1.xpose.msra.mxu0 0.0
    %7415 = vmatprep.subr.mxu0 0.0
    %7416 = vmatpush1.xpose.msra.mxu0 0.0
    %7417 = vmatprep.subr.mxu0 0.0
    %7418 = vmatpush1.xpose.msra.mxu0 0.0
    %7419 = vmatprep.subr.mxu0 0.0
    %7420 = vmatpush1.xpose.msra.mxu0 0.0
    %7421 = vmatprep.subr.mxu0 0.0
    %7422 = vmatpush1.xpose.msra.mxu0 0.0
    %7423 = vmatprep.subr.mxu0 0.0
    %7424 = vmatpush1.xpose.msra.mxu0 0.0
    %7425 = vmatprep.subr.mxu0 0.0
    %7426 = vmatpush1.xpose.msra.mxu0 0.0
    %7427 = vmatprep.subr.mxu0 0.0
    %7428 = vmatpush1.xpose.msra.mxu0 0.0
    %7429 = vmatprep.subr.mxu0 0.0
    %7430 = vmatpush1.xpose.msra.mxu0 0.0
    %7431 = vmatprep.subr.mxu0 0.0
    %7432 = vmatpush1.xpose.msra.mxu0 0.0
    %7433 = vmatprep.mubr.f32.mxu0 0.0
    %7434 = vmatmul.mubr.f32.gmra.mrb[0].mxu0 %v7365
    %v7435 = vpop.f32.mrb[0].mxu0
    %v7436 = vadd.f32 %v4366, %v7435
    %v7437 = vpop.f32.mrb[0].mxu0
    %7438 = vdwg.mxu0
    %7439 = vrot.lane.b32.xlu0 %v6538, 112
    %v7440 = vpop.permute.xlu0 %7439
    %7441 = vrot.lane.b32.xlu0 %v6538, 80
    %v7442 = vpop.permute.xlu0 %7441
    %v7443 = vsel %vm369, %v7440, 0
    %v7445 = vsel %vm369, %v7442, 0
    %7447 = vmatprep.subr.mxu0 0.0
    %7448 = vmatpush1.xpose.msra.mxu0 %v7445
    %7449 = vmatprep.subr.mxu0 0.0
    %7450 = vmatpush1.xpose.msra.mxu0 0.0
    %7451 = vmatprep.subr.mxu0 0.0
    %7452 = vmatpush1.xpose.msra.mxu0 0.0
    %7453 = vmatprep.subr.mxu0 0.0
    %7454 = vmatpush1.xpose.msra.mxu0 0.0
    %7455 = vmatprep.subr.mxu0 0.0
    %7456 = vmatpush1.xpose.msra.mxu0 0.0
    %7457 = vmatprep.subr.mxu0 0.0
    %7458 = vmatpush1.xpose.msra.mxu0 0.0
    %7459 = vmatprep.subr.mxu0 0.0
    %7460 = vmatpush1.xpose.msra.mxu0 0.0
    %7461 = vmatprep.subr.mxu0 0.0
    %7462 = vmatpush1.xpose.msra.mxu0 0.0
    %7463 = vmatprep.subr.mxu0 0.0
    %7464 = vmatpush1.xpose.msra.mxu0 0.0
    %7465 = vmatprep.subr.mxu0 0.0
    %7466 = vmatpush1.xpose.msra.mxu0 0.0
    %7467 = vmatprep.subr.mxu0 0.0
    %7468 = vmatpush1.xpose.msra.mxu0 0.0
    %7469 = vmatprep.subr.mxu0 0.0
    %7470 = vmatpush1.xpose.msra.mxu0 0.0
    %7471 = vmatprep.subr.mxu0 0.0
    %7472 = vmatpush1.xpose.msra.mxu0 0.0
    %7473 = vmatprep.subr.mxu0 0.0
    %7474 = vmatpush1.xpose.msra.mxu0 0.0
    %7475 = vmatprep.subr.mxu0 0.0
    %7476 = vmatpush1.xpose.msra.mxu0 0.0
    %7477 = vmatprep.subr.mxu0 0.0
    %7478 = vmatpush1.xpose.msra.mxu0 0.0
    %7479 = vmatprep.subr.mxu0 0.0
    %7480 = vmatpush1.xpose.msra.mxu0 0.0
    %7481 = vmatprep.subr.mxu0 0.0
    %7482 = vmatpush1.xpose.msra.mxu0 0.0
    %7483 = vmatprep.subr.mxu0 0.0
    %7484 = vmatpush1.xpose.msra.mxu0 0.0
    %7485 = vmatprep.subr.mxu0 0.0
    %7486 = vmatpush1.xpose.msra.mxu0 0.0
    %7487 = vmatprep.subr.mxu0 0.0
    %7488 = vmatpush1.xpose.msra.mxu0 0.0
    %7489 = vmatprep.subr.mxu0 0.0
    %7490 = vmatpush1.xpose.msra.mxu0 0.0
    %7491 = vmatprep.subr.mxu0 0.0
    %7492 = vmatpush1.xpose.msra.mxu0 0.0
    %7493 = vmatprep.subr.mxu0 0.0
    %7494 = vmatpush1.xpose.msra.mxu0 0.0
    %7495 = vmatprep.subr.mxu0 0.0
    %7496 = vmatpush1.xpose.msra.mxu0 0.0
    %7497 = vmatprep.subr.mxu0 0.0
    %7498 = vmatpush1.xpose.msra.mxu0 0.0
    %7499 = vmatprep.subr.mxu0 0.0
    %7500 = vmatpush1.xpose.msra.mxu0 0.0
    %7501 = vmatprep.subr.mxu0 0.0
    %7502 = vmatpush1.xpose.msra.mxu0 0.0
    %7503 = vmatprep.subr.mxu0 0.0
    %7504 = vmatpush1.xpose.msra.mxu0 0.0
    %7505 = vmatprep.subr.mxu0 0.0
    %7506 = vmatpush1.xpose.msra.mxu0 0.0
    %7507 = vmatprep.subr.mxu0 0.0
    %7508 = vmatpush1.xpose.msra.mxu0 0.0
    %7509 = vmatprep.subr.mxu0 0.0
    %7510 = vmatpush1.xpose.msra.mxu0 0.0
    %7511 = vmatprep.mubr.f32.mxu0 0.0
    %7512 = vmatmul.mubr.f32.gmra.mrb[0].mxu0 %v7443
    %v7513 = vpop.f32.mrb[0].mxu0
    %v7514 = vadd.f32 %v4367, %v7513
    %v7515 = vpop.f32.mrb[0].mxu0
    %7516 = vdwg.mxu0
    %v7517 = vsel %vm369, %v7436, -inf
    %7518 = vmax.xlane.f32.xlu0 %v7517
    %v7519 = vpop.xlane.xlu0 %7518
    %v7520 = vsel %vm369, %v7514, -inf
    %7521 = vmax.xlane.f32.xlu0 %v7520
    %v7522 = vpop.xlane.xlu0 %7521
    %v7523 = vsub.f32 %v7436, %v7519
    %v7524 = vsub.f32 %v7514, %v7522
    %v7525 = vmul.f32 %v7523, 1.442695
    %v7526 = vpow.pop %v7525
    %v7527 = vmul.f32 %v7524, 1.442695
    %v7528 = vpow.pop %v7527
    %v7529 = vsel %vm369, %v7526, 0.0
    %7530 = vadd.xlane.f32.xlu0 %v7529
    %v7531 = vpop.xlane.xlu0 %7530
    %v7532 = vsel %vm369, %v7528, 0.0
    %7533 = vadd.xlane.f32.xlu0 %v7532
    %v7534 = vpop.xlane.xlu0 %7533
    %v7535 = vrcp.pop %v7531
    %v7536 = vrcp.pop %v7534
    %v7537 = vmul.f32 %v7526, %v7535
    %v7538 = vmul.f32 %v7528, %v7536
    %7539 = vrot.lane.b32.xlu0 %v6533, 48
    %v7540 = vpop.permute.xlu0 %7539
    %v7543 = vsel %vm369, %v7537, 0
    %7545 = vmatprep.subr.mxu0 0.0
    %7546 = vmatpush1.msra.mxu0 %v7540
    %7547 = vmatprep.subr.mxu0 0.0
    %7548 = vmatpush1.msra.mxu0 0.0
    %7549 = vmatprep.subr.mxu0 0.0
    %7550 = vmatpush1.msra.mxu0 0.0
    %7551 = vmatprep.subr.mxu0 0.0
    %7552 = vmatpush1.msra.mxu0 0.0
    %7553 = vmatprep.subr.mxu0 0.0
    %7554 = vmatpush1.msra.mxu0 0.0
    %7555 = vmatprep.subr.mxu0 0.0
    %7556 = vmatpush1.msra.mxu0 0.0
    %7557 = vmatprep.subr.mxu0 0.0
    %7558 = vmatpush1.msra.mxu0 0.0
    %7559 = vmatprep.subr.mxu0 0.0
    %7560 = vmatpush1.msra.mxu0 0.0
    %7561 = vmatprep.subr.mxu0 0.0
    %7562 = vmatpush1.msra.mxu0 0.0
    %7563 = vmatprep.subr.mxu0 0.0
    %7564 = vmatpush1.msra.mxu0 0.0
    %7565 = vmatprep.subr.mxu0 0.0
    %7566 = vmatpush1.msra.mxu0 0.0
    %7567 = vmatprep.subr.mxu0 0.0
    %7568 = vmatpush1.msra.mxu0 0.0
    %7569 = vmatprep.subr.mxu0 0.0
    %7570 = vmatpush1.msra.mxu0 0.0
    %7571 = vmatprep.subr.mxu0 0.0
    %7572 = vmatpush1.msra.mxu0 0.0
    %7573 = vmatprep.subr.mxu0 0.0
    %7574 = vmatpush1.msra.mxu0 0.0
    %7575 = vmatprep.subr.mxu0 0.0
    %7576 = vmatpush1.msra.mxu0 0.0
    %7577 = vmatprep.subr.mxu0 0.0
    %7578 = vmatpush1.msra.mxu0 0.0
    %7579 = vmatprep.subr.mxu0 0.0
    %7580 = vmatpush1.msra.mxu0 0.0
    %7581 = vmatprep.subr.mxu0 0.0
    %7582 = vmatpush1.msra.mxu0 0.0
    %7583 = vmatprep.subr.mxu0 0.0
    %7584 = vmatpush1.msra.mxu0 0.0
    %7585 = vmatprep.subr.mxu0 0.0
    %7586 = vmatpush1.msra.mxu0 0.0
    %7587 = vmatprep.subr.mxu0 0.0
    %7588 = vmatpush1.msra.mxu0 0.0
    %7589 = vmatprep.subr.mxu0 0.0
    %7590 = vmatpush1.msra.mxu0 0.0
    %7591 = vmatprep.subr.mxu0 0.0
    %7592 = vmatpush1.msra.mxu0 0.0
    %7593 = vmatprep.subr.mxu0 0.0
    %7594 = vmatpush1.msra.mxu0 0.0
    %7595 = vmatprep.subr.mxu0 0.0
    %7596 = vmatpush1.msra.mxu0 0.0
    %7597 = vmatprep.subr.mxu0 0.0
    %7598 = vmatpush1.msra.mxu0 0.0
    %7599 = vmatprep.subr.mxu0 0.0
    %7600 = vmatpush1.msra.mxu0 0.0
    %7601 = vmatprep.subr.mxu0 0.0
    %7602 = vmatpush1.msra.mxu0 0.0
    %7603 = vmatprep.subr.mxu0 0.0
    %7604 = vmatpush1.msra.mxu0 0.0
    %7605 = vmatprep.subr.mxu0 0.0
    %7606 = vmatpush1.msra.mxu0 0.0
    %7607 = vmatprep.subr.mxu0 0.0
    %7608 = vmatpush1.msra.mxu0 0.0
    %7609 = vmatprep.mubr.f32.mxu0 0.0
    %7610 = vmatmul.mubr.f32.gmra.mrb[0].mxu0 %v7543
    %v7611 = vpop.f32.mrb[0].mxu0
    %v7612 = vadd.f32 0.0, %v7611
    %v7613 = vpop.f32.mrb[0].mxu0
    %7614 = vdwg.mxu0
    %7615 = vrot.lane.b32.xlu0 %v6538, 48
    %v7616 = vpop.permute.xlu0 %7615
    %v7619 = vsel %vm369, %v7538, 0
    %7621 = vmatprep.subr.mxu0 0.0
    %7622 = vmatpush1.msra.mxu0 %v7616
    %7623 = vmatprep.subr.mxu0 0.0
    %7624 = vmatpush1.msra.mxu0 0.0
    %7625 = vmatprep.subr.mxu0 0.0
    %7626 = vmatpush1.msra.mxu0 0.0
    %7627 = vmatprep.subr.mxu0 0.0
    %7628 = vmatpush1.msra.mxu0 0.0
    %7629 = vmatprep.subr.mxu0 0.0
    %7630 = vmatpush1.msra.mxu0 0.0
    %7631 = vmatprep.subr.mxu0 0.0
    %7632 = vmatpush1.msra.mxu0 0.0
    %7633 = vmatprep.subr.mxu0 0.0
    %7634 = vmatpush1.msra.mxu0 0.0
    %7635 = vmatprep.subr.mxu0 0.0
    %7636 = vmatpush1.msra.mxu0 0.0
    %7637 = vmatprep.subr.mxu0 0.0
    %7638 = vmatpush1.msra.mxu0 0.0
    %7639 = vmatprep.subr.mxu0 0.0
    %7640 = vmatpush1.msra.mxu0 0.0
    %7641 = vmatprep.subr.mxu0 0.0
    %7642 = vmatpush1.msra.mxu0 0.0
    %7643 = vmatprep.subr.mxu0 0.0
    %7644 = vmatpush1.msra.mxu0 0.0
    %7645 = vmatprep.subr.mxu0 0.0
    %7646 = vmatpush1.msra.mxu0 0.0
    %7647 = vmatprep.subr.mxu0 0.0
    %7648 = vmatpush1.msra.mxu0 0.0
    %7649 = vmatprep.subr.mxu0 0.0
    %7650 = vmatpush1.msra.mxu0 0.0
    %7651 = vmatprep.subr.mxu0 0.0
    %7652 = vmatpush1.msra.mxu0 0.0
    %7653 = vmatprep.subr.mxu0 0.0
    %7654 = vmatpush1.msra.mxu0 0.0
    %7655 = vmatprep.subr.mxu0 0.0
    %7656 = vmatpush1.msra.mxu0 0.0
    %7657 = vmatprep.subr.mxu0 0.0
    %7658 = vmatpush1.msra.mxu0 0.0
    %7659 = vmatprep.subr.mxu0 0.0
    %7660 = vmatpush1.msra.mxu0 0.0
    %7661 = vmatprep.subr.mxu0 0.0
    %7662 = vmatpush1.msra.mxu0 0.0
    %7663 = vmatprep.subr.mxu0 0.0
    %7664 = vmatpush1.msra.mxu0 0.0
    %7665 = vmatprep.subr.mxu0 0.0
    %7666 = vmatpush1.msra.mxu0 0.0
    %7667 = vmatprep.subr.mxu0 0.0
    %7668 = vmatpush1.msra.mxu0 0.0
    %7669 = vmatprep.subr.mxu0 0.0
    %7670 = vmatpush1.msra.mxu0 0.0
    %7671 = vmatprep.subr.mxu0 0.0
    %7672 = vmatpush1.msra.mxu0 0.0
    %7673 = vmatprep.subr.mxu0 0.0
    %7674 = vmatpush1.msra.mxu0 0.0
    %7675 = vmatprep.subr.mxu0 0.0
    %7676 = vmatpush1.msra.mxu0 0.0
    %7677 = vmatprep.subr.mxu0 0.0
    %7678 = vmatpush1.msra.mxu0 0.0
    %7679 = vmatprep.subr.mxu0 0.0
    %7680 = vmatpush1.msra.mxu0 0.0
    %7681 = vmatprep.subr.mxu0 0.0
    %7682 = vmatpush1.msra.mxu0 0.0
    %7683 = vmatprep.subr.mxu0 0.0
    %7684 = vmatpush1.msra.mxu0 0.0
    %7685 = vmatprep.mubr.f32.mxu0 0.0
    %7686 = vmatmul.mubr.f32.gmra.mrb[0].mxu0 %v7619
    %v7687 = vpop.f32.mrb[0].mxu0
    %v7688 = vadd.f32 0.0, %v7687
    %v7689 = vpop.f32.mrb[0].mxu0
    %7690 = vdwg.mxu0
    %v7692 = vsel %vm369, %v7612, 0
    %v7695 = vsel %vm369, %v7688, 0
    %7697 = vmatprep.subr.mxu0 0.0
    %7698 = vmatpush1.msra.mxu0 %v6400
    %7699 = vmatprep.subr.mxu0 0.0
    %7700 = vmatpush1.msra.mxu0 0.0
    %7701 = vmatprep.subr.mxu0 0.0
    %7702 = vmatpush1.msra.mxu0 0.0
    %7703 = vmatprep.subr.mxu0 0.0
    %7704 = vmatpush1.msra.mxu0 0.0
    %7705 = vmatprep.subr.mxu0 0.0
    %7706 = vmatpush1.msra.mxu0 0.0
    %7707 = vmatprep.subr.mxu0 0.0
    %7708 = vmatpush1.msra.mxu0 0.0
    %7709 = vmatprep.subr.mxu0 0.0
    %7710 = vmatpush1.msra.mxu0 0.0
    %7711 = vmatprep.subr.mxu0 0.0
    %7712 = vmatpush1.msra.mxu0 0.0
    %7713 = vmatprep.subr.mxu0 0.0
    %7714 = vmatpush1.msra.mxu0 0.0
    %7715 = vmatprep.subr.mxu0 0.0
    %7716 = vmatpush1.msra.mxu0 0.0
    %7717 = vmatprep.subr.mxu0 0.0
    %7718 = vmatpush1.msra.mxu0 0.0
    %7719 = vmatprep.subr.mxu0 0.0
    %7720 = vmatpush1.msra.mxu0 0.0
    %7721 = vmatprep.subr.mxu0 0.0
    %7722 = vmatpush1.msra.mxu0 0.0
    %7723 = vmatprep.subr.mxu0 0.0
    %7724 = vmatpush1.msra.mxu0 0.0
    %7725 = vmatprep.subr.mxu0 0.0
    %7726 = vmatpush1.msra.mxu0 0.0
    %7727 = vmatprep.subr.mxu0 0.0
    %7728 = vmatpush1.msra.mxu0 0.0
    %7729 = vmatprep.subr.mxu0 0.0
    %7730 = vmatpush1.msra.mxu0 0.0
    %7731 = vmatprep.subr.mxu0 0.0
    %7732 = vmatpush1.msra.mxu0 0.0
    %7733 = vmatprep.subr.mxu0 0.0
    %7734 = vmatpush1.msra.mxu0 0.0
    %7735 = vmatprep.subr.mxu0 0.0
    %7736 = vmatpush1.msra.mxu0 0.0
    %7737 = vmatprep.subr.mxu0 0.0
    %7738 = vmatpush1.msra.mxu0 0.0
    %7739 = vmatprep.subr.mxu0 0.0
    %7740 = vmatpush1.msra.mxu0 0.0
    %7741 = vmatprep.subr.mxu0 0.0
    %7742 = vmatpush1.msra.mxu0 0.0
    %7743 = vmatprep.subr.mxu0 0.0
    %7744 = vmatpush1.msra.mxu0 0.0
    %7745 = vmatprep.subr.mxu0 0.0
    %7746 = vmatpush1.msra.mxu0 0.0
    %7747 = vmatprep.subr.mxu0 0.0
    %7748 = vmatpush1.msra.mxu0 0.0
    %7749 = vmatprep.subr.mxu0 0.0
    %7750 = vmatpush1.msra.mxu0 0.0
    %7751 = vmatprep.subr.mxu0 0.0
    %7752 = vmatpush1.msra.mxu0 0.0
    %7753 = vmatprep.subr.mxu0 0.0
    %7754 = vmatpush1.msra.mxu0 0.0
    %7755 = vmatprep.subr.mxu0 0.0
    %7756 = vmatpush1.msra.mxu0 0.0
    %7757 = vmatprep.subr.mxu0 0.0
    %7758 = vmatpush1.msra.mxu0 0.0
    %7759 = vmatprep.subr.mxu0 0.0
    %7760 = vmatpush1.msra.mxu0 0.0
    %7761 = vmatprep.mubr.f32.mxu0 0.0
    %7762 = vmatmul.mubr.f32.gmra.mrb[0].mxu0 %v7692
    %v7763 = vpop.f32.mrb[0].mxu0
    %v7764 = vadd.f32 0.0, %v7763
    %v7765 = vpop.f32.mrb[0].mxu0
    %7766 = vmatprep.mubr.f32.mxu0 0.0
    %7767 = vmatmul.mubr.f32.gmra.mrb[0].mxu0 %v7695
    %v7768 = vpop.f32.mrb[0].mxu0
    %v7769 = vadd.f32 0.0, %v7768
    %v7770 = vpop.f32.mrb[0].mxu0
    %7771 = vdwg.mxu0
    %v7772 = vadd.f32 %v7353, %v7764
    %v7773 = vadd.f32 %v7358, %v7769
    %7774 = vrot.lane.b32.xlu0 %v6533, 104
    %v7775 = vpop.permute.xlu0 %7774
    %7776 = vrot.lane.b32.xlu0 %v6533, 72
    %v7777 = vpop.permute.xlu0 %7776
    %v7778 = vsel %vm369, %v7775, 0
    %v7780 = vsel %vm369, %v7777, 0
    %7782 = vmatprep.subr.mxu0 0.0
    %7783 = vmatpush1.xpose.msra.mxu0 %v7780
    %7784 = vmatprep.subr.mxu0 0.0
    %7785 = vmatpush1.xpose.msra.mxu0 0.0
    %7786 = vmatprep.subr.mxu0 0.0
    %7787 = vmatpush1.xpose.msra.mxu0 0.0
    %7788 = vmatprep.subr.mxu0 0.0
    %7789 = vmatpush1.xpose.msra.mxu0 0.0
    %7790 = vmatprep.subr.mxu0 0.0
    %7791 = vmatpush1.xpose.msra.mxu0 0.0
    %7792 = vmatprep.subr.mxu0 0.0
    %7793 = vmatpush1.xpose.msra.mxu0 0.0
    %7794 = vmatprep.subr.mxu0 0.0
    %7795 = vmatpush1.xpose.msra.mxu0 0.0
    %7796 = vmatprep.subr.mxu0 0.0
    %7797 = vmatpush1.xpose.msra.mxu0 0.0
    %7798 = vmatprep.subr.mxu0 0.0
    %7799 = vmatpush1.xpose.msra.mxu0 0.0
    %7800 = vmatprep.subr.mxu0 0.0
    %7801 = vmatpush1.xpose.msra.mxu0 0.0
    %7802 = vmatprep.subr.mxu0 0.0
    %7803 = vmatpush1.xpose.msra.mxu0 0.0
    %7804 = vmatprep.subr.mxu0 0.0
    %7805 = vmatpush1.xpose.msra.mxu0 0.0
    %7806 = vmatprep.subr.mxu0 0.0
    %7807 = vmatpush1.xpose.msra.mxu0 0.0
    %7808 = vmatprep.subr.mxu0 0.0
    %7809 = vmatpush1.xpose.msra.mxu0 0.0
    %7810 = vmatprep.subr.mxu0 0.0
    %7811 = vmatpush1.xpose.msra.mxu0 0.0
    %7812 = vmatprep.subr.mxu0 0.0
    %7813 = vmatpush1.xpose.msra.mxu0 0.0
    %7814 = vmatprep.subr.mxu0 0.0
    %7815 = vmatpush1.xpose.msra.mxu0 0.0
    %7816 = vmatprep.subr.mxu0 0.0
    %7817 = vmatpush1.xpose.msra.mxu0 0.0
    %7818 = vmatprep.subr.mxu0 0.0
    %7819 = vmatpush1.xpose.msra.mxu0 0.0
    %7820 = vmatprep.subr.mxu0 0.0
    %7821 = vmatpush1.xpose.msra.mxu0 0.0
    %7822 = vmatprep.subr.mxu0 0.0
    %7823 = vmatpush1.xpose.msra.mxu0 0.0
    %7824 = vmatprep.subr.mxu0 0.0
    %7825 = vmatpush1.xpose.msra.mxu0 0.0
    %7826 = vmatprep.subr.mxu0 0.0
    %7827 = vmatpush1.xpose.msra.mxu0 0.0
    %7828 = vmatprep.subr.mxu0 0.0
    %7829 = vmatpush1.xpose.msra.mxu0 0.0
    %7830 = vmatprep.subr.mxu0 0.0
    %7831 = vmatpush1.xpose.msra.mxu0 0.0
    %7832 = vmatprep.subr.mxu0 0.0
    %7833 = vmatpush1.xpose.msra.mxu0 0.0
    %7834 = vmatprep.subr.mxu0 0.0
    %7835 = vmatpush1.xpose.msra.mxu0 0.0
    %7836 = vmatprep.subr.mxu0 0.0
    %7837 = vmatpush1.xpose.msra.mxu0 0.0
    %7838 = vmatprep.subr.mxu0 0.0
    %7839 = vmatpush1.xpose.msra.mxu0 0.0
    %7840 = vmatprep.subr.mxu0 0.0
    %7841 = vmatpush1.xpose.msra.mxu0 0.0
    %7842 = vmatprep.subr.mxu0 0.0
    %7843 = vmatpush1.xpose.msra.mxu0 0.0
    %7844 = vmatprep.subr.mxu0 0.0
    %7845 = vmatpush1.xpose.msra.mxu0 0.0
    %7846 = vmatprep.mubr.f32.mxu0 0.0
    %7847 = vmatmul.mubr.f32.gmra.mrb[0].mxu0 %v7778
    %v7848 = vpop.f32.mrb[0].mxu0
    %v7849 = vadd.f32 %v4366, %v7848
    %v7850 = vpop.f32.mrb[0].mxu0
    %7851 = vdwg.mxu0
    %7852 = vrot.lane.b32.xlu0 %v6538, 104
    %v7853 = vpop.permute.xlu0 %7852
    %7854 = vrot.lane.b32.xlu0 %v6538, 72
    %v7855 = vpop.permute.xlu0 %7854
    %v7856 = vsel %vm369, %v7853, 0
    %v7858 = vsel %vm369, %v7855, 0
    %7860 = vmatprep.subr.mxu0 0.0
    %7861 = vmatpush1.xpose.msra.mxu0 %v7858
    %7862 = vmatprep.subr.mxu0 0.0
    %7863 = vmatpush1.xpose.msra.mxu0 0.0
    %7864 = vmatprep.subr.mxu0 0.0
    %7865 = vmatpush1.xpose.msra.mxu0 0.0
    %7866 = vmatprep.subr.mxu0 0.0
    %7867 = vmatpush1.xpose.msra.mxu0 0.0
    %7868 = vmatprep.subr.mxu0 0.0
    %7869 = vmatpush1.xpose.msra.mxu0 0.0
    %7870 = vmatprep.subr.mxu0 0.0
    %7871 = vmatpush1.xpose.msra.mxu0 0.0
    %7872 = vmatprep.subr.mxu0 0.0
    %7873 = vmatpush1.xpose.msra.mxu0 0.0
    %7874 = vmatprep.subr.mxu0 0.0
    %7875 = vmatpush1.xpose.msra.mxu0 0.0
    %7876 = vmatprep.subr.mxu0 0.0
    %7877 = vmatpush1.xpose.msra.mxu0 0.0
    %7878 = vmatprep.subr.mxu0 0.0
    %7879 = vmatpush1.xpose.msra.mxu0 0.0
    %7880 = vmatprep.subr.mxu0 0.0
    %7881 = vmatpush1.xpose.msra.mxu0 0.0
    %7882 = vmatprep.subr.mxu0 0.0
    %7883 = vmatpush1.xpose.msra.mxu0 0.0
    %7884 = vmatprep.subr.mxu0 0.0
    %7885 = vmatpush1.xpose.msra.mxu0 0.0
    %7886 = vmatprep.subr.mxu0 0.0
    %7887 = vmatpush1.xpose.msra.mxu0 0.0
    %7888 = vmatprep.subr.mxu0 0.0
    %7889 = vmatpush1.xpose.msra.mxu0 0.0
    %7890 = vmatprep.subr.mxu0 0.0
    %7891 = vmatpush1.xpose.msra.mxu0 0.0
    %7892 = vmatprep.subr.mxu0 0.0
    %7893 = vmatpush1.xpose.msra.mxu0 0.0
    %7894 = vmatprep.subr.mxu0 0.0
    %7895 = vmatpush1.xpose.msra.mxu0 0.0
    %7896 = vmatprep.subr.mxu0 0.0
    %7897 = vmatpush1.xpose.msra.mxu0 0.0
    %7898 = vmatprep.subr.mxu0 0.0
    %7899 = vmatpush1.xpose.msra.mxu0 0.0
    %7900 = vmatprep.subr.mxu0 0.0
    %7901 = vmatpush1.xpose.msra.mxu0 0.0
    %7902 = vmatprep.subr.mxu0 0.0
    %7903 = vmatpush1.xpose.msra.mxu0 0.0
    %7904 = vmatprep.subr.mxu0 0.0
    %7905 = vmatpush1.xpose.msra.mxu0 0.0
    %7906 = vmatprep.subr.mxu0 0.0
    %7907 = vmatpush1.xpose.msra.mxu0 0.0
    %7908 = vmatprep.subr.mxu0 0.0
    %7909 = vmatpush1.xpose.msra.mxu0 0.0
    %7910 = vmatprep.subr.mxu0 0.0
    %7911 = vmatpush1.xpose.msra.mxu0 0.0
    %7912 = vmatprep.subr.mxu0 0.0
    %7913 = vmatpush1.xpose.msra.mxu0 0.0
    %7914 = vmatprep.subr.mxu0 0.0
    %7915 = vmatpush1.xpose.msra.mxu0 0.0
    %7916 = vmatprep.subr.mxu0 0.0
    %7917 = vmatpush1.xpose.msra.mxu0 0.0
    %7918 = vmatprep.subr.mxu0 0.0
    %7919 = vmatpush1.xpose.msra.mxu0 0.0
    %7920 = vmatprep.subr.mxu0 0.0
    %7921 = vmatpush1.xpose.msra.mxu0 0.0
    %7922 = vmatprep.subr.mxu0 0.0
    %7923 = vmatpush1.xpose.msra.mxu0 0.0
    %7924 = vmatprep.mubr.f32.mxu0 0.0
    %7925 = vmatmul.mubr.f32.gmra.mrb[0].mxu0 %v7856
    %v7926 = vpop.f32.mrb[0].mxu0
    %v7927 = vadd.f32 %v4367, %v7926
    %v7928 = vpop.f32.mrb[0].mxu0
    %7929 = vdwg.mxu0
    %v7930 = vsel %vm369, %v7849, -inf
    %7931 = vmax.xlane.f32.xlu0 %v7930
    %v7932 = vpop.xlane.xlu0 %7931
    %v7933 = vsel %vm369, %v7927, -inf
    %7934 = vmax.xlane.f32.xlu0 %v7933
    %v7935 = vpop.xlane.xlu0 %7934
    %v7936 = vsub.f32 %v7849, %v7932
    %v7937 = vsub.f32 %v7927, %v7935
    %v7938 = vmul.f32 %v7936, 1.442695
    %v7939 = vpow.pop %v7938
    %v7940 = vmul.f32 %v7937, 1.442695
    %v7941 = vpow.pop %v7940
    %v7942 = vsel %vm369, %v7939, 0.0
    %7943 = vadd.xlane.f32.xlu0 %v7942
    %v7944 = vpop.xlane.xlu0 %7943
    %v7945 = vsel %vm369, %v7941, 0.0
    %7946 = vadd.xlane.f32.xlu0 %v7945
    %v7947 = vpop.xlane.xlu0 %7946
    %v7948 = vrcp.pop %v7944
    %v7949 = vrcp.pop %v7947
    %v7950 = vmul.f32 %v7939, %v7948
    %v7951 = vmul.f32 %v7941, %v7949
    %7952 = vrot.lane.b32.xlu0 %v6533, 40
    %v7953 = vpop.permute.xlu0 %7952
    %v7956 = vsel %vm369, %v7950, 0
    %7958 = vmatprep.subr.mxu0 0.0
    %7959 = vmatpush1.msra.mxu0 %v7953
    %7960 = vmatprep.subr.mxu0 0.0
    %7961 = vmatpush1.msra.mxu0 0.0
    %7962 = vmatprep.subr.mxu0 0.0
    %7963 = vmatpush1.msra.mxu0 0.0
    %7964 = vmatprep.subr.mxu0 0.0
    %7965 = vmatpush1.msra.mxu0 0.0
    %7966 = vmatprep.subr.mxu0 0.0
    %7967 = vmatpush1.msra.mxu0 0.0
    %7968 = vmatprep.subr.mxu0 0.0
    %7969 = vmatpush1.msra.mxu0 0.0
    %7970 = vmatprep.subr.mxu0 0.0
    %7971 = vmatpush1.msra.mxu0 0.0
    %7972 = vmatprep.subr.mxu0 0.0
    %7973 = vmatpush1.msra.mxu0 0.0
    %7974 = vmatprep.subr.mxu0 0.0
    %7975 = vmatpush1.msra.mxu0 0.0
    %7976 = vmatprep.subr.mxu0 0.0
    %7977 = vmatpush1.msra.mxu0 0.0
    %7978 = vmatprep.subr.mxu0 0.0
    %7979 = vmatpush1.msra.mxu0 0.0
    %7980 = vmatprep.subr.mxu0 0.0
    %7981 = vmatpush1.msra.mxu0 0.0
    %7982 = vmatprep.subr.mxu0 0.0
    %7983 = vmatpush1.msra.mxu0 0.0
    %7984 = vmatprep.subr.mxu0 0.0
    %7985 = vmatpush1.msra.mxu0 0.0
    %7986 = vmatprep.subr.mxu0 0.0
    %7987 = vmatpush1.msra.mxu0 0.0
    %7988 = vmatprep.subr.mxu0 0.0
    %7989 = vmatpush1.msra.mxu0 0.0
    %7990 = vmatprep.subr.mxu0 0.0
    %7991 = vmatpush1.msra.mxu0 0.0
    %7992 = vmatprep.subr.mxu0 0.0
    %7993 = vmatpush1.msra.mxu0 0.0
    %7994 = vmatprep.subr.mxu0 0.0
    %7995 = vmatpush1.msra.mxu0 0.0
    %7996 = vmatprep.subr.mxu0 0.0
    %7997 = vmatpush1.msra.mxu0 0.0
    %7998 = vmatprep.subr.mxu0 0.0
    %7999 = vmatpush1.msra.mxu0 0.0
    %8000 = vmatprep.subr.mxu0 0.0
    %8001 = vmatpush1.msra.mxu0 0.0
    %8002 = vmatprep.subr.mxu0 0.0
    %8003 = vmatpush1.msra.mxu0 0.0
    %8004 = vmatprep.subr.mxu0 0.0
    %8005 = vmatpush1.msra.mxu0 0.0
    %8006 = vmatprep.subr.mxu0 0.0
    %8007 = vmatpush1.msra.mxu0 0.0
    %8008 = vmatprep.subr.mxu0 0.0
    %8009 = vmatpush1.msra.mxu0 0.0
    %8010 = vmatprep.subr.mxu0 0.0
    %8011 = vmatpush1.msra.mxu0 0.0
    %8012 = vmatprep.subr.mxu0 0.0
    %8013 = vmatpush1.msra.mxu0 0.0
    %8014 = vmatprep.subr.mxu0 0.0
    %8015 = vmatpush1.msra.mxu0 0.0
    %8016 = vmatprep.subr.mxu0 0.0
    %8017 = vmatpush1.msra.mxu0 0.0
    %8018 = vmatprep.subr.mxu0 0.0
    %8019 = vmatpush1.msra.mxu0 0.0
    %8020 = vmatprep.subr.mxu0 0.0
    %8021 = vmatpush1.msra.mxu0 0.0
    %8022 = vmatprep.mubr.f32.mxu0 0.0
    %8023 = vmatmul.mubr.f32.gmra.mrb[0].mxu0 %v7956
    %v8024 = vpop.f32.mrb[0].mxu0
    %v8025 = vadd.f32 0.0, %v8024
    %v8026 = vpop.f32.mrb[0].mxu0
    %8027 = vdwg.mxu0
    %8028 = vrot.lane.b32.xlu0 %v6538, 40
    %v8029 = vpop.permute.xlu0 %8028
    %v8032 = vsel %vm369, %v7951, 0
    %8034 = vmatprep.subr.mxu0 0.0
    %8035 = vmatpush1.msra.mxu0 %v8029
    %8036 = vmatprep.subr.mxu0 0.0
    %8037 = vmatpush1.msra.mxu0 0.0
    %8038 = vmatprep.subr.mxu0 0.0
    %8039 = vmatpush1.msra.mxu0 0.0
    %8040 = vmatprep.subr.mxu0 0.0
    %8041 = vmatpush1.msra.mxu0 0.0
    %8042 = vmatprep.subr.mxu0 0.0
    %8043 = vmatpush1.msra.mxu0 0.0
    %8044 = vmatprep.subr.mxu0 0.0
    %8045 = vmatpush1.msra.mxu0 0.0
    %8046 = vmatprep.subr.mxu0 0.0
    %8047 = vmatpush1.msra.mxu0 0.0
    %8048 = vmatprep.subr.mxu0 0.0
    %8049 = vmatpush1.msra.mxu0 0.0
    %8050 = vmatprep.subr.mxu0 0.0
    %8051 = vmatpush1.msra.mxu0 0.0
    %8052 = vmatprep.subr.mxu0 0.0
    %8053 = vmatpush1.msra.mxu0 0.0
    %8054 = vmatprep.subr.mxu0 0.0
    %8055 = vmatpush1.msra.mxu0 0.0
    %8056 = vmatprep.subr.mxu0 0.0
    %8057 = vmatpush1.msra.mxu0 0.0
    %8058 = vmatprep.subr.mxu0 0.0
    %8059 = vmatpush1.msra.mxu0 0.0
    %8060 = vmatprep.subr.mxu0 0.0
    %8061 = vmatpush1.msra.mxu0 0.0
    %8062 = vmatprep.subr.mxu0 0.0
    %8063 = vmatpush1.msra.mxu0 0.0
    %8064 = vmatprep.subr.mxu0 0.0
    %8065 = vmatpush1.msra.mxu0 0.0
    %8066 = vmatprep.subr.mxu0 0.0
    %8067 = vmatpush1.msra.mxu0 0.0
    %8068 = vmatprep.subr.mxu0 0.0
    %8069 = vmatpush1.msra.mxu0 0.0
    %8070 = vmatprep.subr.mxu0 0.0
    %8071 = vmatpush1.msra.mxu0 0.0
    %8072 = vmatprep.subr.mxu0 0.0
    %8073 = vmatpush1.msra.mxu0 0.0
    %8074 = vmatprep.subr.mxu0 0.0
    %8075 = vmatpush1.msra.mxu0 0.0
    %8076 = vmatprep.subr.mxu0 0.0
    %8077 = vmatpush1.msra.mxu0 0.0
    %8078 = vmatprep.subr.mxu0 0.0
    %8079 = vmatpush1.msra.mxu0 0.0
    %8080 = vmatprep.subr.mxu0 0.0
    %8081 = vmatpush1.msra.mxu0 0.0
    %8082 = vmatprep.subr.mxu0 0.0
    %8083 = vmatpush1.msra.mxu0 0.0
    %8084 = vmatprep.subr.mxu0 0.0
    %8085 = vmatpush1.msra.mxu0 0.0
    %8086 = vmatprep.subr.mxu0 0.0
    %8087 = vmatpush1.msra.mxu0 0.0
    %8088 = vmatprep.subr.mxu0 0.0
    %8089 = vmatpush1.msra.mxu0 0.0
    %8090 = vmatprep.subr.mxu0 0.0
    %8091 = vmatpush1.msra.mxu0 0.0
    %8092 = vmatprep.subr.mxu0 0.0
    %8093 = vmatpush1.msra.mxu0 0.0
    %8094 = vmatprep.subr.mxu0 0.0
    %8095 = vmatpush1.msra.mxu0 0.0
    %8096 = vmatprep.subr.mxu0 0.0
    %8097 = vmatpush1.msra.mxu0 0.0
    %8098 = vmatprep.mubr.f32.mxu0 0.0
    %8099 = vmatmul.mubr.f32.gmra.mrb[0].mxu0 %v8032
    %v8100 = vpop.f32.mrb[0].mxu0
    %v8101 = vadd.f32 0.0, %v8100
    %v8102 = vpop.f32.mrb[0].mxu0
    %8103 = vdwg.mxu0
    %v8105 = vsel %vm369, %v8025, 0
    %v8108 = vsel %vm369, %v8101, 0
    %8110 = vmatprep.subr.mxu0 0.0
    %8111 = vmatpush1.msra.mxu0 %v6401
    %8112 = vmatprep.subr.mxu0 0.0
    %8113 = vmatpush1.msra.mxu0 0.0
    %8114 = vmatprep.subr.mxu0 0.0
    %8115 = vmatpush1.msra.mxu0 0.0
    %8116 = vmatprep.subr.mxu0 0.0
    %8117 = vmatpush1.msra.mxu0 0.0
    %8118 = vmatprep.subr.mxu0 0.0
    %8119 = vmatpush1.msra.mxu0 0.0
    %8120 = vmatprep.subr.mxu0 0.0
    %8121 = vmatpush1.msra.mxu0 0.0
    %8122 = vmatprep.subr.mxu0 0.0
    %8123 = vmatpush1.msra.mxu0 0.0
    %8124 = vmatprep.subr.mxu0 0.0
    %8125 = vmatpush1.msra.mxu0 0.0
    %8126 = vmatprep.subr.mxu0 0.0
    %8127 = vmatpush1.msra.mxu0 0.0
    %8128 = vmatprep.subr.mxu0 0.0
    %8129 = vmatpush1.msra.mxu0 0.0
    %8130 = vmatprep.subr.mxu0 0.0
    %8131 = vmatpush1.msra.mxu0 0.0
    %8132 = vmatprep.subr.mxu0 0.0
    %8133 = vmatpush1.msra.mxu0 0.0
    %8134 = vmatprep.subr.mxu0 0.0
    %8135 = vmatpush1.msra.mxu0 0.0
    %8136 = vmatprep.subr.mxu0 0.0
    %8137 = vmatpush1.msra.mxu0 0.0
    %8138 = vmatprep.subr.mxu0 0.0
    %8139 = vmatpush1.msra.mxu0 0.0
    %8140 = vmatprep.subr.mxu0 0.0
    %8141 = vmatpush1.msra.mxu0 0.0
    %8142 = vmatprep.subr.mxu0 0.0
    %8143 = vmatpush1.msra.mxu0 0.0
    %8144 = vmatprep.subr.mxu0 0.0
    %8145 = vmatpush1.msra.mxu0 0.0
    %8146 = vmatprep.subr.mxu0 0.0
    %8147 = vmatpush1.msra.mxu0 0.0
    %8148 = vmatprep.subr.mxu0 0.0
    %8149 = vmatpush1.msra.mxu0 0.0
    %8150 = vmatprep.subr.mxu0 0.0
    %8151 = vmatpush1.msra.mxu0 0.0
    %8152 = vmatprep.subr.mxu0 0.0
    %8153 = vmatpush1.msra.mxu0 0.0
    %8154 = vmatprep.subr.mxu0 0.0
    %8155 = vmatpush1.msra.mxu0 0.0
    %8156 = vmatprep.subr.mxu0 0.0
    %8157 = vmatpush1.msra.mxu0 0.0
    %8158 = vmatprep.subr.mxu0 0.0
    %8159 = vmatpush1.msra.mxu0 0.0
    %8160 = vmatprep.subr.mxu0 0.0
    %8161 = vmatpush1.msra.mxu0 0.0
    %8162 = vmatprep.subr.mxu0 0.0
    %8163 = vmatpush1.msra.mxu0 0.0
    %8164 = vmatprep.subr.mxu0 0.0
    %8165 = vmatpush1.msra.mxu0 0.0
    %8166 = vmatprep.subr.mxu0 0.0
    %8167 = vmatpush1.msra.mxu0 0.0
    %8168 = vmatprep.subr.mxu0 0.0
    %8169 = vmatpush1.msra.mxu0 0.0
    %8170 = vmatprep.subr.mxu0 0.0
    %8171 = vmatpush1.msra.mxu0 0.0
    %8172 = vmatprep.subr.mxu0 0.0
    %8173 = vmatpush1.msra.mxu0 0.0
    %8174 = vmatprep.mubr.f32.mxu0 0.0
    %8175 = vmatmul.mubr.f32.gmra.mrb[0].mxu0 %v8105
    %v8176 = vpop.f32.mrb[0].mxu0
    %v8177 = vadd.f32 0.0, %v8176
    %v8178 = vpop.f32.mrb[0].mxu0
    %8179 = vmatprep.mubr.f32.mxu0 0.0
    %8180 = vmatmul.mubr.f32.gmra.mrb[0].mxu0 %v8108
    %v8181 = vpop.f32.mrb[0].mxu0
    %v8182 = vadd.f32 0.0, %v8181
    %v8183 = vpop.f32.mrb[0].mxu0
    %8184 = vdwg.mxu0
    %v8185 = vadd.f32 %v7772, %v8177
    %v8186 = vadd.f32 %v7773, %v8182
    %v8187 = vadd.f32 %v6390, %v8185
    %v8188 = vadd.f32 %v6391, %v8186
    %v8189 = vlaneseq
    %v8190 = vshrl.u32 %v8189, 7
    %v8191 = vsub.s32 5, %v8190
    %v8192 = vrot.slane %v6417, %v8191
    %v8193 = vadd.f32 %v8187, %v8192
    %v8194 = vadd.f32 %v8188, %v8192
    %v8195 = vsel %vm178, %v8193, 0.0
    %8196 = vadd.xlane.f32.xlu0 %v8195
    %v8197 = vpop.xlane.xlu0 %8196
    %v8198 = vsel %vm178, %v8194, 0.0
    %8199 = vadd.xlane.f32.xlu0 %v8198
    %v8200 = vpop.xlane.xlu0 %8199
    %v8201 = vmul.f32 %v8197, %v185
    %v8202 = vmul.f32 %v8200, %v185
    %v8203 = vsub.f32 %v8193, %v8201
    %v8204 = vsub.f32 %v8194, %v8202
    %v8205 = vmul.f32 %v8203, %v8203
    %v8206 = vmul.f32 %v8204, %v8204
    %v8207 = vsel %vm178, %v8205, 0.0
    %8208 = vadd.xlane.f32.xlu0 %v8207
    %v8209 = vpop.xlane.xlu0 %8208
    %v8210 = vsel %vm178, %v8206, 0.0
    %8211 = vadd.xlane.f32.xlu0 %v8210
    %v8212 = vpop.xlane.xlu0 %8211
    %v8213 = vmul.f32 %v8209, %v185
    %v8214 = vmul.f32 %v8212, %v185
    %v8215 = vadd.f32 %v8213, 1e-05
    %v8216 = vadd.f32 %v8214, 1e-05
    %v8217 = vrsqrt.pop %v8215
    %v8218 = vrsqrt.pop %v8216
    %v8219 = vmul.f32 %v8203, %v8217
    %v8220 = vmul.f32 %v8204, %v8218
    %v8221 = vlaneseq
    %v8222 = vshrl.u32 %v8221, 7
    %v8223 = vsub.s32 2, %v8222
    %v8224 = vrot.slane %v6417, %v8223
    %v8225 = vmul.f32 %v8219, %v8224
    %v8226 = vmul.f32 %v8220, %v8224
    %v8227 = vlaneseq
    %v8228 = vshrl.u32 %v8227, 7
    %v8229 = vsub.s32 3, %v8228
    %v8230 = vrot.slane %v6417, %v8229
    %v8231 = vadd.f32 %v8225, %v8230
    %v8232 = vadd.f32 %v8226, %v8230
    %v8233 = vlaneseq
    %v8234 = vshrl.u32 %v8233, 7
    %v8235 = vsub.s32 6, %v8234
    %v8236 = vrot.slane %v6417, %v8235
    %v8238 = vsel %vm178, %v8231, 0
    %v8241 = vsel %vm178, %v8232, 0
    %8243 = vmatprep.subr.mxu0 0.0
    %8244 = vmatpush1.msra.mxu0 %v6403
    %8245 = vmatprep.subr.mxu0 0.0
    %8246 = vmatpush1.msra.mxu0 %v6404
    %8247 = vmatprep.subr.mxu0 0.0
    %8248 = vmatpush1.msra.mxu0 %v6405
    %8249 = vmatprep.subr.mxu0 0.0
    %8250 = vmatpush1.msra.mxu0 %v6406
    %8251 = vmatprep.subr.mxu0 0.0
    %8252 = vmatpush1.msra.mxu0 0.0
    %8253 = vmatprep.subr.mxu0 0.0
    %8254 = vmatpush1.msra.mxu0 0.0
    %8255 = vmatprep.subr.mxu0 0.0
    %8256 = vmatpush1.msra.mxu0 0.0
    %8257 = vmatprep.subr.mxu0 0.0
    %8258 = vmatpush1.msra.mxu0 0.0
    %8259 = vmatprep.subr.mxu0 0.0
    %8260 = vmatpush1.msra.mxu0 0.0
    %8261 = vmatprep.subr.mxu0 0.0
    %8262 = vmatpush1.msra.mxu0 0.0
    %8263 = vmatprep.subr.mxu0 0.0
    %8264 = vmatpush1.msra.mxu0 0.0
    %8265 = vmatprep.subr.mxu0 0.0
    %8266 = vmatpush1.msra.mxu0 0.0
    %8267 = vmatprep.subr.mxu0 0.0
    %8268 = vmatpush1.msra.mxu0 0.0
    %8269 = vmatprep.subr.mxu0 0.0
    %8270 = vmatpush1.msra.mxu0 0.0
    %8271 = vmatprep.subr.mxu0 0.0
    %8272 = vmatpush1.msra.mxu0 0.0
    %8273 = vmatprep.subr.mxu0 0.0
    %8274 = vmatpush1.msra.mxu0 0.0
    %8275 = vmatprep.subr.mxu0 0.0
    %8276 = vmatpush1.msra.mxu0 0.0
    %8277 = vmatprep.subr.mxu0 0.0
    %8278 = vmatpush1.msra.mxu0 0.0
    %8279 = vmatprep.subr.mxu0 0.0
    %8280 = vmatpush1.msra.mxu0 0.0
    %8281 = vmatprep.subr.mxu0 0.0
    %8282 = vmatpush1.msra.mxu0 0.0
    %8283 = vmatprep.subr.mxu0 0.0
    %8284 = vmatpush1.msra.mxu0 0.0
    %8285 = vmatprep.subr.mxu0 0.0
    %8286 = vmatpush1.msra.mxu0 0.0
    %8287 = vmatprep.subr.mxu0 0.0
    %8288 = vmatpush1.msra.mxu0 0.0
    %8289 = vmatprep.subr.mxu0 0.0
    %8290 = vmatpush1.msra.mxu0 0.0
    %8291 = vmatprep.subr.mxu0 0.0
    %8292 = vmatpush1.msra.mxu0 0.0
    %8293 = vmatprep.subr.mxu0 0.0
    %8294 = vmatpush1.msra.mxu0 0.0
    %8295 = vmatprep.subr.mxu0 0.0
    %8296 = vmatpush1.msra.mxu0 0.0
    %8297 = vmatprep.subr.mxu0 0.0
    %8298 = vmatpush1.msra.mxu0 0.0
    %8299 = vmatprep.subr.mxu0 0.0
    %8300 = vmatpush1.msra.mxu0 0.0
    %8301 = vmatprep.subr.mxu0 0.0
    %8302 = vmatpush1.msra.mxu0 0.0
    %8303 = vmatprep.subr.mxu0 0.0
    %8304 = vmatpush1.msra.mxu0 0.0
    %8305 = vmatprep.subr.mxu0 0.0
    %8306 = vmatpush1.msra.mxu0 0.0
    %8307 = vmatprep.mubr.f32.mxu0 0.0
    %8308 = vmatmul.mubr.f32.gmra.mrb[0].mxu0 %v8238
    %v8309 = vpop.f32.mrb[0].mxu0
    %v8310 = vadd.f32 %v8236, %v8309
    %v8311 = vpop.f32.mrb[0].mxu0
    %8312 = vmatprep.mubr.f32.mxu0 0.0
    %8313 = vmatmul.mubr.f32.gmra.mrb[0].mxu0 %v8241
    %v8314 = vpop.f32.mrb[0].mxu0
    %v8315 = vadd.f32 %v8236, %v8314
    %v8316 = vpop.f32.mrb[0].mxu0
    %8317 = vdwg.mxu0
    %v8318 = vmul.f32 %v8310, 1.702
    %v8319 = vmul.f32 %v8315, 1.702
    %v8320 = vxor.u32 %v8318, 2147483648
    %v8321 = vxor.u32 %v8319, 2147483648
    %v8322 = vmul.f32 %v8320, 1.442695
    %v8323 = vpow.pop %v8322
    %v8324 = vmul.f32 %v8321, 1.442695
    %v8325 = vpow.pop %v8324
    %v8326 = vadd.f32 %v8323, 1.0
    %v8327 = vadd.f32 %v8325, 1.0
    %v8328 = vrcp.pop %v8326
    %v8329 = vmul.f32 1.0, %v8328
    %v8330 = vrcp.pop %v8327
    %v8331 = vmul.f32 1.0, %v8330
    %v8332 = vmul.f32 %v8310, %v8329
    %v8333 = vmul.f32 %v8315, %v8331
    %v8334 = vlaneseq
    %v8335 = vshrl.u32 %v8334, 7
    %v8336 = vsub.s32 7, %v8335
    %v8337 = vrot.slane %v6417, %v8336
    %v8339 = vsel %vm93, %v8332, 0
    %v8342 = vsel %vm93, %v8333, 0
    %8344 = vmatprep.subr.mxu0 0.0
    %8345 = vmatpush1.msra.mxu0 %v6408
    %8346 = vmatprep.subr.mxu0 0.0
    %8347 = vmatpush1.msra.mxu0 %v6409
    %8348 = vmatprep.subr.mxu0 0.0
    %8349 = vmatpush1.msra.mxu0 %v6410
    %8350 = vmatprep.subr.mxu0 0.0
    %8351 = vmatpush1.msra.mxu0 %v6411
    %8352 = vmatprep.subr.mxu0 0.0
    %8353 = vmatpush1.msra.mxu0 %v6412
    %8354 = vmatprep.subr.mxu0 0.0
    %8355 = vmatpush1.msra.mxu0 %v6413
    %8356 = vmatprep.subr.mxu0 0.0
    %8357 = vmatpush1.msra.mxu0 %v6414
    %8358 = vmatprep.subr.mxu0 0.0
    %8359 = vmatpush1.msra.mxu0 %v6415
    %8360 = vmatprep.subr.mxu0 0.0
    %8361 = vmatpush1.msra.mxu0 0.0
    %8362 = vmatprep.subr.mxu0 0.0
    %8363 = vmatpush1.msra.mxu0 0.0
    %8364 = vmatprep.subr.mxu0 0.0
    %8365 = vmatpush1.msra.mxu0 0.0
    %8366 = vmatprep.subr.mxu0 0.0
    %8367 = vmatpush1.msra.mxu0 0.0
    %8368 = vmatprep.subr.mxu0 0.0
    %8369 = vmatpush1.msra.mxu0 0.0
    %8370 = vmatprep.subr.mxu0 0.0
    %8371 = vmatpush1.msra.mxu0 0.0
    %8372 = vmatprep.subr.mxu0 0.0
    %8373 = vmatpush1.msra.mxu0 0.0
    %8374 = vmatprep.subr.mxu0 0.0
    %8375 = vmatpush1.msra.mxu0 0.0
    %8376 = vmatprep.subr.mxu0 0.0
    %8377 = vmatpush1.msra.mxu0 0.0
    %8378 = vmatprep.subr.mxu0 0.0
    %8379 = vmatpush1.msra.mxu0 0.0
    %8380 = vmatprep.subr.mxu0 0.0
    %8381 = vmatpush1.msra.mxu0 0.0
    %8382 = vmatprep.subr.mxu0 0.0
    %8383 = vmatpush1.msra.mxu0 0.0
    %8384 = vmatprep.subr.mxu0 0.0
    %8385 = vmatpush1.msra.mxu0 0.0
    %8386 = vmatprep.subr.mxu0 0.0
    %8387 = vmatpush1.msra.mxu0 0.0
    %8388 = vmatprep.subr.mxu0 0.0
    %8389 = vmatpush1.msra.mxu0 0.0
    %8390 = vmatprep.subr.mxu0 0.0
    %8391 = vmatpush1.msra.mxu0 0.0
    %8392 = vmatprep.subr.mxu0 0.0
    %8393 = vmatpush1.msra.mxu0 0.0
    %8394 = vmatprep.subr.mxu0 0.0
    %8395 = vmatpush1.msra.mxu0 0.0
    %8396 = vmatprep.subr.mxu0 0.0
    %8397 = vmatpush1.msra.mxu0 0.0
    %8398 = vmatprep.subr.mxu0 0.0
    %8399 = vmatpush1.msra.mxu0 0.0
    %8400 = vmatprep.subr.mxu0 0.0
    %8401 = vmatpush1.msra.mxu0 0.0
    %8402 = vmatprep.subr.mxu0 0.0
    %8403 = vmatpush1.msra.mxu0 0.0
    %8404 = vmatprep.subr.mxu0 0.0
    %8405 = vmatpush1.msra.mxu0 0.0
    %8406 = vmatprep.subr.mxu0 0.0
    %8407 = vmatpush1.msra.mxu0 0.0
    %8408 = vmatprep.mubr.f32.mxu0 0.0
    %8409 = vmatmul.mubr.f32.gmra.mrb[0].mxu0 %v8339
    %v8410 = vpop.f32.mrb[0].mxu0
    %v8411 = vadd.f32 %v8337, %v8410
    %v8412 = vpop.f32.mrb[0].mxu0
    %8413 = vmatprep.mubr.f32.mxu0 0.0
    %8414 = vmatmul.mubr.f32.gmra.mrb[0].mxu0 %v8342
    %v8415 = vpop.f32.mrb[0].mxu0
    %v8416 = vadd.f32 %v8337, %v8415
    %v8417 = vpop.f32.mrb[0].mxu0
    %8418 = vdwg.mxu0
    %v8419 = vadd.f32 %v8193, %v8411
    %v8420 = vadd.f32 %v8194, %v8416
    %v8421 = vld [vmem:[%s10] sm:$0x3]
    %v8422 = vlaneseq
    %v8423 = vshrl.u32 %v8422, 7
    %v8424 = vsub.s32 0, %v8423
    %v8425 = vrot.slane %v8421, %v8424
    %8427 = vbcast.lane.b32.xlu0 %v8425, 256
    %v8428 = vpop.permute.xlu0 %8427
    %v8429 = vlaneseq
    %v8430 = vshrl.u32 %v8429, 7
    %v8431 = vsub.s32 1, %v8430
    %v8432 = vrot.slane %v8421, %v8431
    %8434 = vbcast.lane.b32.xlu0 %v8432, 256
    %v8435 = vpop.permute.xlu0 %8434
    %v8436 = vmul.f32 %v8428, %v8419
    %v8437 = vmul.f32 %v8435, %v8420
    %v8438 = vsel %vm178, %v8436, 0.0
    %v8439 = vrot.slane %v8438, 4
    %v8440 = vadd.f32 %v8438, %v8439
    %v8441 = vrot.slane %v8440, 2
    %v8442 = vadd.f32 %v8440, %v8441
    %v8443 = vrot.slane %v8442, 1
    %v8444 = vadd.f32 %v8442, %v8443
    %v8445 = vsel %vm178, %v8437, 0.0
    %v8446 = vrot.slane %v8445, 4
    %v8447 = vadd.f32 %v8445, %v8446
    %v8448 = vrot.slane %v8447, 2
    %v8449 = vadd.f32 %v8447, %v8448
    %v8450 = vrot.slane %v8449, 1
    %v8451 = vadd.f32 %v8449, %v8450
    %v8454 = vsel %vm4279, %v8451, %v8444
    %v8456 = vsel %vm4282, %v8454, 0.0
    %8457 = vadd.xlane.f32.xlu0 %v8456
    %v8458 = vpop.xlane.xlu0 %8457
    %v8459 = vmul.f32 %v8458, %v185
    %v8461 = vrot.slane %v8459, 1
    %v8464 = vsub.f32 %v8444, %v8459
    %v8465 = vsub.f32 %v8451, %v8461
    %v8466 = vmul.f32 %v8464, %v8464
    %v8467 = vmul.f32 %v8465, %v8465
    %v8470 = vrot.slane %v8467, 7
    %v8471 = vsel %vm4279, %v8470, %v8466
    %v8473 = vsel %vm4282, %v8471, 0.0
    %8474 = vadd.xlane.f32.xlu0 %v8473
    %v8475 = vpop.xlane.xlu0 %8474
    %v8476 = vmul.f32 %v8475, %v185
    %v8477 = vadd.f32 %v8476, 1e-05
    %v8478 = vrsqrt.pop %v8477
    %v8480 = vrot.slane %v8478, 1
    %v8483 = vmul.f32 %v8464, %v8478
    %v8484 = vmul.f32 %v8465, %v8480
    %v8485 = vlaneseq
    %v8486 = vshrl.u32 %v8485, 7
    %v8487 = vsub.s32 4, %v8486
    %v8488 = vrot.slane %v64, %v8487
    %v8489 = vmul.f32 %v8483, %v8488
    %v8490 = vmul.f32 %v8484, %v8488
    %v8491 = vlaneseq
    %v8492 = vshrl.u32 %v8491, 7
    %v8493 = vsub.s32 5, %v8492
    %v8494 = vrot.slane %v64, %v8493
    %v8495 = vadd.f32 %v8489, %v8494
    %v8496 = vadd.f32 %v8490, %v8494
    %v8497 = vld [vmem:[%s16] sm:$0xff]
    %v8498 = vld [vmem:[%s16 + $0x8] sm:$0xff]
    %v8499 = vld [vmem:[%s16 + $0x10] sm:$0xff]
    %v8500 = vld [vmem:[%s16 + $0x18] sm:$0xff]
    %v8503 = vrot.slane %v4323, 7
    %v8504 = vsel %vm4279, %v8503, %v4322
    %v8505 = vsel %vm178, %v8504, 0
    %8507 = vmatprep.subr.mxu0 0.0
    %8508 = vmatpush1.msra.mxu0 %v8497
    %8509 = vmatprep.subr.mxu0 0.0
    %8510 = vmatpush1.msra.mxu0 %v8498
    %8511 = vmatprep.subr.mxu0 0.0
    %8512 = vmatpush1.msra.mxu0 %v8499
    %8513 = vmatprep.subr.mxu0 0.0
    %8514 = vmatpush1.msra.mxu0 %v8500
    %8515 = vmatprep.subr.mxu0 0.0
    %8516 = vmatpush1.msra.mxu0 0.0
    %8517 = vmatprep.subr.mxu0 0.0
    %8518 = vmatpush1.msra.mxu0 0.0
    %8519 = vmatprep.subr.mxu0 0.0
    %8520 = vmatpush1.msra.mxu0 0.0
    %8521 = vmatprep.subr.mxu0 0.0
    %8522 = vmatpush1.msra.mxu0 0.0
    %8523 = vmatprep.subr.mxu0 0.0
    %8524 = vmatpush1.msra.mxu0 0.0
    %8525 = vmatprep.subr.mxu0 0.0
    %8526 = vmatpush1.msra.mxu0 0.0
    %8527 = vmatprep.subr.mxu0 0.0
    %8528 = vmatpush1.msra.mxu0 0.0
    %8529 = vmatprep.subr.mxu0 0.0
    %8530 = vmatpush1.msra.mxu0 0.0
    %8531 = vmatprep.subr.mxu0 0.0
    %8532 = vmatpush1.msra.mxu0 0.0
    %8533 = vmatprep.subr.mxu0 0.0
    %8534 = vmatpush1.msra.mxu0 0.0
    %8535 = vmatprep.subr.mxu0 0.0
    %8536 = vmatpush1.msra.mxu0 0.0
    %8537 = vmatprep.subr.mxu0 0.0
    %8538 = vmatpush1.msra.mxu0 0.0
    %8539 = vmatprep.subr.mxu0 0.0
    %8540 = vmatpush1.msra.mxu0 0.0
    %8541 = vmatprep.subr.mxu0 0.0
    %8542 = vmatpush1.msra.mxu0 0.0
    %8543 = vmatprep.subr.mxu0 0.0
    %8544 = vmatpush1.msra.mxu0 0.0
    %8545 = vmatprep.subr.mxu0 0.0
    %8546 = vmatpush1.msra.mxu0 0.0
    %8547 = vmatprep.subr.mxu0 0.0
    %8548 = vmatpush1.msra.mxu0 0.0
    %8549 = vmatprep.subr.mxu0 0.0
    %8550 = vmatpush1.msra.mxu0 0.0
    %8551 = vmatprep.subr.mxu0 0.0
    %8552 = vmatpush1.msra.mxu0 0.0
    %8553 = vmatprep.subr.mxu0 0.0
    %8554 = vmatpush1.msra.mxu0 0.0
    %8555 = vmatprep.subr.mxu0 0.0
    %8556 = vmatpush1.msra.mxu0 0.0
    %8557 = vmatprep.subr.mxu0 0.0
    %8558 = vmatpush1.msra.mxu0 0.0
    %8559 = vmatprep.subr.mxu0 0.0
    %8560 = vmatpush1.msra.mxu0 0.0
    %8561 = vmatprep.subr.mxu0 0.0
    %8562 = vmatpush1.msra.mxu0 0.0
    %8563 = vmatprep.subr.mxu0 0.0
    %8564 = vmatpush1.msra.mxu0 0.0
    %8565 = vmatprep.subr.mxu0 0.0
    %8566 = vmatpush1.msra.mxu0 0.0
    %8567 = vmatprep.subr.mxu0 0.0
    %8568 = vmatpush1.msra.mxu0 0.0
    %8569 = vmatprep.subr.mxu0 0.0
    %8570 = vmatpush1.msra.mxu0 0.0
    %8571 = vmatprep.mubr.f32.mxu0 0.0
    %8572 = vmatmul.mubr.f32.gmra.mrb[0].mxu0 %v8505
    %v8573 = vpop.f32.mrb[0].mxu0
    %v8574 = vadd.f32 0.0, %v8573
    %v8575 = vpop.f32.mrb[0].mxu0
    %8576 = vdwg.mxu0
    %v8579 = vrot.slane %v8496, 7
    %v8580 = vsel %vm4279, %v8579, %v8495
    %8585 = vrot.lane.b32.xlu0 %v8497, 112
    %v8586 = vpop.permute.xlu0 %8585
    %8587 = vrot.lane.b32.xlu0 %v8498, 112
    %v8588 = vpop.permute.xlu0 %8587
    %8589 = vrot.lane.b32.xlu0 %v8499, 112
    %v8590 = vpop.permute.xlu0 %8589
    %8591 = vrot.lane.b32.xlu0 %v8500, 112
    %v8592 = vpop.permute.xlu0 %8591
    %v8597 = vsel %vm178, %v8580, 0
    %8599 = vmatprep.subr.mxu0 0.0
    %8600 = vmatpush1.msra.mxu0 %v8586
    %8601 = vmatprep.subr.mxu0 0.0
    %8602 = vmatpush1.msra.mxu0 %v8588
    %8603 = vmatprep.subr.mxu0 0.0
    %8604 = vmatpush1.msra.mxu0 %v8590
    %8605 = vmatprep.subr.mxu0 0.0
    %8606 = vmatpush1.msra.mxu0 %v8592
    %8607 = vmatprep.subr.mxu0 0.0
    %8608 = vmatpush1.msra.mxu0 0.0
    %8609 = vmatprep.subr.mxu0 0.0
    %8610 = vmatpush1.msra.mxu0 0.0
    %8611 = vmatprep.subr.mxu0 0.0
    %8612 = vmatpush1.msra.mxu0 0.0
    %8613 = vmatprep.subr.mxu0 0.0
    %8614 = vmatpush1.msra.mxu0 0.0
    %8615 = vmatprep.subr.mxu0 0.0
    %8616 = vmatpush1.msra.mxu0 0.0
    %8617 = vmatprep.subr.mxu0 0.0
    %8618 = vmatpush1.msra.mxu0 0.0
    %8619 = vmatprep.subr.mxu0 0.0
    %8620 = vmatpush1.msra.mxu0 0.0
    %8621 = vmatprep.subr.mxu0 0.0
    %8622 = vmatpush1.msra.mxu0 0.0
    %8623 = vmatprep.subr.mxu0 0.0
    %8624 = vmatpush1.msra.mxu0 0.0
    %8625 = vmatprep.subr.mxu0 0.0
    %8626 = vmatpush1.msra.mxu0 0.0
    %8627 = vmatprep.subr.mxu0 0.0
    %8628 = vmatpush1.msra.mxu0 0.0
    %8629 = vmatprep.subr.mxu0 0.0
    %8630 = vmatpush1.msra.mxu0 0.0
    %8631 = vmatprep.subr.mxu0 0.0
    %8632 = vmatpush1.msra.mxu0 0.0
    %8633 = vmatprep.subr.mxu0 0.0
    %8634 = vmatpush1.msra.mxu0 0.0
    %8635 = vmatprep.subr.mxu0 0.0
    %8636 = vmatpush1.msra.mxu0 0.0
    %8637 = vmatprep.subr.mxu0 0.0
    %8638 = vmatpush1.msra.mxu0 0.0
    %8639 = vmatprep.subr.mxu0 0.0
    %8640 = vmatpush1.msra.mxu0 0.0
    %8641 = vmatprep.subr.mxu0 0.0
    %8642 = vmatpush1.msra.mxu0 0.0
    %8643 = vmatprep.subr.mxu0 0.0
    %8644 = vmatpush1.msra.mxu0 0.0
    %8645 = vmatprep.subr.mxu0 0.0
    %8646 = vmatpush1.msra.mxu0 0.0
    %8647 = vmatprep.subr.mxu0 0.0
    %8648 = vmatpush1.msra.mxu0 0.0
    %8649 = vmatprep.subr.mxu0 0.0
    %8650 = vmatpush1.msra.mxu0 0.0
    %8651 = vmatprep.subr.mxu0 0.0
    %8652 = vmatpush1.msra.mxu0 0.0
    %8653 = vmatprep.subr.mxu0 0.0
    %8654 = vmatpush1.msra.mxu0 0.0
    %8655 = vmatprep.subr.mxu0 0.0
    %8656 = vmatpush1.msra.mxu0 0.0
    %8657 = vmatprep.subr.mxu0 0.0
    %8658 = vmatpush1.msra.mxu0 0.0
    %8659 = vmatprep.subr.mxu0 0.0
    %8660 = vmatpush1.msra.mxu0 0.0
    %8661 = vmatprep.subr.mxu0 0.0
    %8662 = vmatpush1.msra.mxu0 0.0
    %8663 = vmatprep.mubr.f32.mxu0 0.0
    %8664 = vmatmul.mubr.f32.gmra.mrb[0].mxu0 %v8597
    %v8665 = vpop.f32.mrb[0].mxu0
    %v8666 = vadd.f32 0.0, %v8665
    %v8667 = vpop.f32.mrb[0].mxu0
    %8668 = vdwg.mxu0
    %v8669 = vmul.f32 %v8574, %v8574
    %vm8670 = vcmask 123904
    %v8671 = vsel %vm8670, %v8669, 0.0
    %8672 = vadd.xlane.f32.xlu0 %v8671
    %v8673 = vpop.xlane.xlu0 %8672
    %v8674 = vadd.f32 %v8673, 1e-12
    %v8675 = vrsqrt.pop %v8674
    %v8676 = vmul.f32 %v8574, %v8675
    %v8677 = vmul.f32 %v8666, %v8666
    %v8678 = vsel %vm8670, %v8677, 0.0
    %8679 = vadd.xlane.f32.xlu0 %v8678
    %v8680 = vpop.xlane.xlu0 %8679
    %v8681 = vadd.f32 %v8680, 1e-12
    %v8682 = vrsqrt.pop %v8681
    %v8683 = vmul.f32 %v8666, %v8682
    %v8684 = vmul.f32 %v64, 1.442695
    %v8685 = vpow.pop %v8684
    %vm8686 = vcmask 130048
    %v8688 = vsel %vm8686, %v8683, 0
    %v8691 = vsel %vm8686, %v8676, 0
    %8693 = vmatprep.subr.mxu0 0.0
    %8694 = vmatpush1.xpose.msra.mxu0 %v8691
    %8695 = vmatprep.subr.mxu0 0.0
    %8696 = vmatpush1.xpose.msra.mxu0 0.0
    %8697 = vmatprep.subr.mxu0 0.0
    %8698 = vmatpush1.xpose.msra.mxu0 0.0
    %8699 = vmatprep.subr.mxu0 0.0
    %8700 = vmatpush1.xpose.msra.mxu0 0.0
    %8701 = vmatprep.subr.mxu0 0.0
    %8702 = vmatpush1.xpose.msra.mxu0 0.0
    %8703 = vmatprep.subr.mxu0 0.0
    %8704 = vmatpush1.xpose.msra.mxu0 0.0
    %8705 = vmatprep.subr.mxu0 0.0
    %8706 = vmatpush1.xpose.msra.mxu0 0.0
    %8707 = vmatprep.subr.mxu0 0.0
    %8708 = vmatpush1.xpose.msra.mxu0 0.0
    %8709 = vmatprep.subr.mxu0 0.0
    %8710 = vmatpush1.xpose.msra.mxu0 0.0
    %8711 = vmatprep.subr.mxu0 0.0
    %8712 = vmatpush1.xpose.msra.mxu0 0.0
    %8713 = vmatprep.subr.mxu0 0.0
    %8714 = vmatpush1.xpose.msra.mxu0 0.0
    %8715 = vmatprep.subr.mxu0 0.0
    %8716 = vmatpush1.xpose.msra.mxu0 0.0
    %8717 = vmatprep.subr.mxu0 0.0
    %8718 = vmatpush1.xpose.msra.mxu0 0.0
    %8719 = vmatprep.subr.mxu0 0.0
    %8720 = vmatpush1.xpose.msra.mxu0 0.0
    %8721 = vmatprep.subr.mxu0 0.0
    %8722 = vmatpush1.xpose.msra.mxu0 0.0
    %8723 = vmatprep.subr.mxu0 0.0
    %8724 = vmatpush1.xpose.msra.mxu0 0.0
    %8725 = vmatprep.subr.mxu0 0.0
    %8726 = vmatpush1.xpose.msra.mxu0 0.0
    %8727 = vmatprep.subr.mxu0 0.0
    %8728 = vmatpush1.xpose.msra.mxu0 0.0
    %8729 = vmatprep.subr.mxu0 0.0
    %8730 = vmatpush1.xpose.msra.mxu0 0.0
    %8731 = vmatprep.subr.mxu0 0.0
    %8732 = vmatpush1.xpose.msra.mxu0 0.0
    %8733 = vmatprep.subr.mxu0 0.0
    %8734 = vmatpush1.xpose.msra.mxu0 0.0
    %8735 = vmatprep.subr.mxu0 0.0
    %8736 = vmatpush1.xpose.msra.mxu0 0.0
    %8737 = vmatprep.subr.mxu0 0.0
    %8738 = vmatpush1.xpose.msra.mxu0 0.0
    %8739 = vmatprep.subr.mxu0 0.0
    %8740 = vmatpush1.xpose.msra.mxu0 0.0
    %8741 = vmatprep.subr.mxu0 0.0
    %8742 = vmatpush1.xpose.msra.mxu0 0.0
    %8743 = vmatprep.subr.mxu0 0.0
    %8744 = vmatpush1.xpose.msra.mxu0 0.0
    %8745 = vmatprep.subr.mxu0 0.0
    %8746 = vmatpush1.xpose.msra.mxu0 0.0
    %8747 = vmatprep.subr.mxu0 0.0
    %8748 = vmatpush1.xpose.msra.mxu0 0.0
    %8749 = vmatprep.subr.mxu0 0.0
    %8750 = vmatpush1.xpose.msra.mxu0 0.0
    %8751 = vmatprep.subr.mxu0 0.0
    %8752 = vmatpush1.xpose.msra.mxu0 0.0
    %8753 = vmatprep.subr.mxu0 0.0
    %8754 = vmatpush1.xpose.msra.mxu0 0.0
    %8755 = vmatprep.subr.mxu0 0.0
    %8756 = vmatpush1.xpose.msra.mxu0 0.0
    %8757 = vmatprep.mubr.f32.mxu0 0.0
    %8758 = vmatmul.mubr.f32.gmra.mrb[0].mxu0 %v8688
    %v8759 = vpop.f32.mrb[0].mxu0
    %v8760 = vadd.f32 0.0, %v8759
    %v8761 = vpop.f32.mrb[0].mxu0
    %8762 = vdwg.mxu0
    %v8764 = vrot.slane %v8685, 6
    %s8765 = vtos %v8764
    %v8766 = vstv %s8765
    %v8768 = vmul.f32 %v8760, %v8766
    %8769 = vst.msk [vmem:[#allocation2] sm:$0x3] %vm8670, %v8676
    %8770 = vst.msk [vmem:[#allocation4] sm:$0x3] %vm8670, %v8683
    %vm8771 = vcmask 9216
    %8772 = vst.msk [vmem:[%s20] sm:$0x3] %vm8771, %v8768
    // Predicated region
    $region74: #{clip_forward.1} parent=1 // pred_check
      _
    $region75: #{clip_forward.1} parent=1 // pred_check_branch
      %8774 = sbr.rel (0) target = $region77
    $region76: #{clip_forward.1} parent=1 // pred_region
      %s8776 = ssub.s32 32, 32
      %8777 = vsyncadd [#allocation3], %s8776
      %s8779 = sshll.u32 [#allocation2], 4
      %s8780 = int_to_ptr.vmem [resolvable:$true] %s8779
      %8782 = dma.vmem_to_hbm [thread:$0]  %s8780, 32, %s18, [#allocation3]
    $region77: #{clip_forward.1} parent=1 // pred_fallthru
      _
    // Predicated region
    $region78: #{clip_forward.1} parent=1 // pred_check
      _
    $region79: #{clip_forward.1} parent=1 // pred_check_branch
      %8784 = sbr.rel (0) target = $region81
    $region80: #{clip_forward.1} parent=1 // pred_region
      %s8786 = ssub.s32 32, 32
      %8787 = vsyncadd [#allocation5], %s8786
      %s8789 = sshll.u32 [#allocation4], 4
      %s8790 = int_to_ptr.vmem [resolvable:$true] %s8789
      %8792 = dma.vmem_to_hbm [thread:$0]  %s8790, 32, %s19, [#allocation5]
    $region81: #{clip_forward.1} parent=1 // pred_fallthru
      _
    // Predicated region
    $region82: #{clip_forward.1} parent=1 // pred_check
      _
    $region83: #{clip_forward.1} parent=1 // pred_check_branch
      %8794 = sbr.rel (0) target = $region85
    $region84: #{clip_forward.1} parent=1 // pred_region
      _
    $region85: #{clip_forward.1} parent=1 // pred_fallthru
      _
    // Predicated region
    $region86: #{clip_forward.1} parent=1 // pred_check
      _
    $region87: #{clip_forward.1} parent=1 // pred_check_branch
      %8796 = sbr.rel (0) target = $region89
    $region88: #{clip_forward.1} parent=1 // pred_region
      %8797 = dma.done [#allocation3], 32
    $region89: #{clip_forward.1} parent=1 // pred_fallthru
      _
    // Predicated region
    $region90: #{clip_forward.1} parent=1 // pred_check
      _
    $region91: #{clip_forward.1} parent=1 // pred_check_branch
      %8799 = sbr.rel (0) target = $region93
    $region92: #{clip_forward.1} parent=1 // pred_region
      %8800 = dma.done [#allocation5], 32
    $region93: #{clip_forward.1} parent=1 // pred_fallthru
      _
    // Predicated region
    $region94: #{clip_forward.1} parent=1 // pred_check
      _
    $region95: #{clip_forward.1} parent=1 // pred_check_branch
      %8802 = sbr.rel (0) target = $region97
    $region96: #{clip_forward.1} parent=1 // pred_region
      _
    $region97: #{clip_forward.1} parent=1 // pred_fallthru
      _
    %8803 = vsyncpa [#allocation3], 1
    %8804 = vsyncpa [#allocation5], 1

</llo_original>
